<compile_context>
chip_gen: v6e
topology: v6e:2x2x1
jax: 0.10.0
libtpu: 0.0.40
codegen_flags: <defaults>
</compile_context>

<pallas_src>
import functools

import jax
import jax.numpy as jnp
from jax import lax
from jax.experimental import pallas as pl
from jax.experimental.pallas import tpu as pltpu

RADIUS = 2.0          # locality radius for "local" attention
LN_EPS = 1e-5         # PyTorch LayerNorm default
NEG_INF = -1e9
WEIGHT_DTYPE = jnp.bfloat16       # MXU-native operand dtype; accumulation is f32
VMEM_LIMIT = 64 * 1024 * 1024     # explicit scoped-VMEM limit (<= physical on all chips)


def _round_up(x, m):
    return ((x + m - 1) // m) * m


def _pick_block_b(B, V, target_rows=256):
    """Pick the batch block so R = block_b*V fills the MXU row dimension.

    Smallest divisor of B with block_b*V >= target_rows; otherwise block_b = B
    (single-TC chips prefer fewer serial grid steps).  If the whole batch is
    needed anyway but B//2 still gives >= target_rows, keep >= 2 grid steps so
    v7x's two TensorCores both get work.
    """
    block_b = B
    for d in range(1, B + 1):
        if B % d == 0 and d * V >= target_rows:
            block_b = d
            break
    if block_b == B and B % 2 == 0 and (B // 2) * V >= target_rows:
        block_b = B // 2
    return block_b


# ---------------------------------------------------------------------------
# Locality / padding attention bias (computed ONCE per forward, reused by all
# encoder layers).  All batches folded into a single grid step; output bf16.
# ---------------------------------------------------------------------------
def _locality_bias_kernel(pos_ref, mask_ref, o_ref):
    p = pos_ref[...].astype(jnp.float32)                       # [B, V, DP]
    key_masked = mask_ref[...]                                  # [B, 1, V]
    psq = p * p
    # Pairwise squared distances via the batched Gram matrix (no eye() trick,
    # no explicit transposes: column norms come from a tiny ones-matmul).
    pp = lax.dot_general(p, p, (((2,), (2,)), ((0,), (0,))),
                         preferred_element_type=jnp.float32)    # [B, V, V]
    nrm_i = jnp.sum(psq, axis=-1, keepdims=True)                # [B, V, 1]
    ones = jnp.ones((p.shape[0], 1, p.shape[2]), jnp.float32)
    nrm_j = lax.dot_general(ones, psq, (((2,), (2,)), ((0,), (0,))),
                            preferred_element_type=jnp.float32)  # [B, 1, V]
    d2 = nrm_i + nrm_j - 2.0 * pp
    allowed = (d2 <= RADIUS * RADIUS).astype(jnp.float32) * (1.0 - key_masked)
    o_ref[...] = ((1.0 - allowed) * NEG_INF).astype(o_ref.dtype)


def locality_bias(positions, mask_f):
    """positions: [B, V, DP]; mask_f: [B, 1, V] f32 -> [B, V, V] bf16 bias."""
    B, V, DP = positions.shape
    return pl.pallas_call(
        _locality_bias_kernel,
        out_shape=jax.ShapeDtypeStruct((B, V, V), jnp.bfloat16),
        grid=(1,),
        in_specs=[
            pl.BlockSpec((B, V, DP), lambda i: (0, 0, 0)),
            pl.BlockSpec((B, 1, V), lambda i: (0, 0, 0)),
        ],
        out_specs=pl.BlockSpec((B, V, V), lambda i: (0, 0, 0)),
        compiler_params=pltpu.CompilerParams(vmem_limit_bytes=VMEM_LIMIT),
    )(positions, mask_f)


# ---------------------------------------------------------------------------
# Fused MLP (all linear layers of one MLP in a single kernel, row-tiled grid)
# ---------------------------------------------------------------------------
def _mlp_kernel(*refs, n_layers):
    x_ref, o_ref = refs[0], refs[-1]
    h = x_ref[...]
    for i in range(n_layers):
        w = refs[1 + 2 * i][...]          # bf16 weight, resident in VMEM
        b = refs[2 + 2 * i][...]          # f32 bias [1, dout]
        h = jnp.dot(h.astype(w.dtype), w, preferred_element_type=jnp.float32) + b
        if i < n_layers - 1:
            h = jnp.maximum(h, 0.0)       # ReLU in f32
    o_ref[...] = h.astype(o_ref.dtype)


def mlp_forward(layers, x2d, out_dtype, block_rows=512):
    """Fused MLP over rows. layers: list of (w [din,dout] bf16, b [1,dout] f32)."""
    n, din = x2d.shape
    layers = list(layers)
    dout = layers[-1][0].shape[1]

    # Lane-dense output: pad the final layer's width to a multiple of 128 so the
    # output stores are full-width vst (not masked partial stores); slice after.
    dout_pad = _round_up(dout, 128)
    if dout_pad != dout:
        w_last, b_last = layers[-1]
        layers[-1] = (jnp.pad(w_last, ((0, 0), (0, dout_pad - dout))),
                      jnp.pad(b_last, ((0, 0), (0, dout_pad - dout))))

    # Large row tiles (amortize the ~0.35us/step overhead toward HBM roofline);
    # n >= 2*block_rows automatically gives >= 2 grid steps for v7x's 2 TCs.
    tm = min(block_rows, _round_up(n, 8))
    n_pad = _round_up(n, tm)
    if n_pad != n:
        x2d = jnp.pad(x2d, ((0, n_pad - n), (0, 0)))

    in_specs = [pl.BlockSpec((tm, din), lambda i: (i, 0))]
    args = [x2d]
    for w, b in layers:
        # Constant index map -> weights stay resident across the row grid.
        # TODO(synk): at production sizes on v7x (64 MiB VMEM) add
        # pipeline_mode=pl.Buffered(1) here to stop double-buffering constants.
        in_specs.append(pl.BlockSpec(w.shape, lambda i: (0, 0)))
        in_specs.append(pl.BlockSpec(b.shape, lambda i: (0, 0)))
        args.extend([w, b])

    out = pl.pallas_call(
        functools.partial(_mlp_kernel, n_layers=len(layers)),
        out_shape=jax.ShapeDtypeStruct((n_pad, dout_pad), out_dtype),
        grid=(n_pad // tm,),
        in_specs=in_specs,
        out_specs=pl.BlockSpec((tm, dout_pad), lambda i: (i, 0)),
        compiler_params=pltpu.CompilerParams(
            dimension_semantics=("parallel",),
            vmem_limit_bytes=VMEM_LIMIT),
    )(*args)
    out = out[:n] if n_pad != n else out
    return out[:, :dout] if dout_pad != dout else out


# ---------------------------------------------------------------------------
# Fused encoder layer: attention + add&norm + FFN + add&norm in ONE kernel
# ---------------------------------------------------------------------------
def _layernorm(h, g, b):
    mu = jnp.mean(h, axis=-1, keepdims=True)
    var = jnp.mean(jnp.square(h - mu), axis=-1, keepdims=True)
    return (h - mu) * lax.rsqrt(var + LN_EPS) * g + b


def _encoder_layer_kernel(x_ref, bias_ref, wqkv_ref, bqkv_ref, wo_ref, bo_ref,
                          g1_ref, b1_ref, wf1_ref, bf1_ref, wf2_ref, bf2_ref,
                          g2_ref, b2_ref, o_ref, *, nhead):
    Bt, V, DM = x_ref.shape
    dh = DM // nhead
    R = Bt * V
    cdt = x_ref.dtype                       # matmul operand dtype (bf16)

    x = x_ref[...].reshape(R, DM)           # [R, DM] — all rows of this block
    x32 = x.astype(jnp.float32)

    # --- multi-head local attention -------------------------------------
    # Packed full-width QKV projection over all R = Bt*V rows (MXU row fill).
    qkv = (jnp.dot(x, wqkv_ref[...], preferred_element_type=jnp.float32)
           + bqkv_ref[...])                                   # [R, 3DM] f32
    scale = 1.0 / float(dh) ** 0.5
    # Slice + cast to bf16 immediately: the f32 [R, 3DM] qkv is dead after this
    # (bounds live ranges once R grows to 128-512 rows).
    q3 = (qkv[:, 0 * DM:1 * DM] * scale).astype(cdt).reshape(Bt, V, DM)
    k3 = qkv[:, 1 * DM:2 * DM].astype(cdt).reshape(Bt, V, DM)
    v3 = qkv[:, 2 * DM:3 * DM].astype(cdt).reshape(Bt, V, DM)

    bias = bias_ref[...].astype(jnp.float32)                  # [Bt, V, V]
    wo = wo_ref[...]                                          # [DM, DM] bf16

    # Per-head attention, batched over Bt (single dot_general per head, no
    # Python batch loop, no explicit K transpose), with the output projection
    # FOLDED per head: attn += (softmax(q_h k_h^T + bias) v_h) @ Wo[h*dh:(h+1)*dh]
    # — so there is no head concatenation; Wo row slices are sublane-aligned.
    attn = bo_ref[...]                                        # [1, DM] f32
    for h in range(nhead):
        c0 = h * dh
        # TODO(synk): dh=32 column slices are not 128-lane aligned at this demo
        # size (they are at production dh>=128); switch to a head-batched
        # [Bt*nhead, V, dh] dot_general if relayout shows up hot in the bundle.
        qh = q3[:, :, c0:c0 + dh]                             # [Bt, V, dh]
        kh = k3[:, :, c0:c0 + dh]
        vh = v3[:, :, c0:c0 + dh]
        s = jnp.einsum('bqd,bkd->bqk', qh, kh,
                       preferred_element_type=jnp.float32) + bias
        # TODO(synk): queries with no allowed key fall back to a uniform
        # distribution over all keys; match exact reference semantics once
        # CustomTransformerEncoderLayer's source is known.
        s = s - jnp.max(s, axis=-1, keepdims=True)
        e = jnp.exp(s)
        p = e * pl.reciprocal(jnp.sum(e, axis=-1, keepdims=True), approx=True)
        ctx_h = jnp.einsum('bqk,bkd->bqd', p.astype(cdt), vh,
                           preferred_element_type=jnp.float32)  # [Bt, V, dh]
        attn = attn + jnp.dot(ctx_h.reshape(R, dh).astype(cdt),
                              wo[c0:c0 + dh, :],
                              preferred_element_type=jnp.float32)

    # --- add & norm 1 -----------------------------------------------------
    h1 = _layernorm(attn + x32, g1_ref[...], b1_ref[...])      # [R, DM] f32

    # --- feed-forward -----------------------------------------------------
    f = (jnp.dot(h1.astype(cdt), wf1_ref[...],
                 preferred_element_type=jnp.float32) + bf1_ref[...])
    f = jnp.maximum(f, 0.0)
    f = (jnp.dot(f.astype(cdt), wf2_ref[...],
                 preferred_element_type=jnp.float32) + bf2_ref[...])

    # --- add & norm 2 -----------------------------------------------------
    y = _layernorm(f + h1, g2_ref[...], b2_ref[...])
    o_ref[...] = y.reshape(Bt, V, DM).astype(o_ref.dtype)


def encoder_layer(feat, bias, lp, nhead, block_b):
    """feat: [B, V, DM] (bf16), bias: [B, V, V] bf16 -> [B, V, DM]."""
    B, V, DM = feat.shape
    assert B % block_b == 0 and DM % nhead == 0
    dff = lp["w_ff1"].shape[1]

    def wspec(shape):
        # Constant index map -> weight stays resident in VMEM across the grid.
        # TODO(synk): at production d_model/dff on v7x (64 MiB VMEM) add
        # pipeline_mode=pl.Buffered(1) to halve the resident-weight footprint.
        return pl.BlockSpec(shape, lambda b: (0, 0))

    return pl.pallas_call(
        functools.partial(_encoder_layer_kernel, nhead=nhead),
        out_shape=jax.ShapeDtypeStruct((B, V, DM), feat.dtype),
        grid=(B // block_b,),
        in_specs=[
            pl.BlockSpec((block_b, V, DM), lambda b: (b, 0, 0)),   # x
            pl.BlockSpec((block_b, V, V), lambda b: (b, 0, 0)),    # attention bias
            wspec((DM, 3 * DM)),    # packed Wqkv
            wspec((1, 3 * DM)),     # packed bqkv
            wspec((DM, DM)),        # Wo
            wspec((1, DM)),         # bo
            wspec((1, DM)),         # ln1 gamma
            wspec((1, DM)),         # ln1 beta
            wspec((DM, dff)),       # W_ff1
            wspec((1, dff)),        # b_ff1
            wspec((dff, DM)),       # W_ff2
            wspec((1, DM)),         # b_ff2
            wspec((1, DM)),         # ln2 gamma
            wspec((1, DM)),         # ln2 beta
        ],
        out_specs=pl.BlockSpec((block_b, V, DM), lambda b: (b, 0, 0)),
        input_output_aliases={0: 0},   # update feat in place across layers
        compiler_params=pltpu.CompilerParams(
            dimension_semantics=("parallel",),
            vmem_limit_bytes=VMEM_LIMIT),
    )(feat, bias, lp["wqkv"], lp["bqkv"], lp["wo"], lp["bo"],
      lp["ln1_g"], lp["ln1_b"], lp["w_ff1"], lp["b_ff1"],
      lp["w_ff2"], lp["b_ff2"], lp["ln2_g"], lp["ln2_b"])


# ---------------------------------------------------------------------------
# Parameter init (deterministic, PyTorch-Linear-style uniform fan-in)
# ---------------------------------------------------------------------------
def init_linear_params(key, din, dout):
    kw, kb = jax.random.split(key)
    s = 1.0 / jnp.sqrt(jnp.float32(din))
    w = jax.random.uniform(kw, (din, dout), jnp.float32, -s, s).astype(WEIGHT_DTYPE)
    b = jax.random.uniform(kb, (1, dout), jnp.float32, -s, s)   # biases kept f32
    return w, b


def init_mlp_params(key, din, hidden_dims, dout):
    dims = [din] + list(hidden_dims) + [dout]
    keys = jax.random.split(key, len(dims) - 1)
    return [init_linear_params(k, dims[i], dims[i + 1]) for i, k in enumerate(keys)]


def init_encoder_layer_params(key, d_model, dff):
    ks = jax.random.split(key, 6)
    wq, bq = init_linear_params(ks[0], d_model, d_model)
    wk, bk = init_linear_params(ks[1], d_model, d_model)
    wv, bv = init_linear_params(ks[2], d_model, d_model)
    wo, bo = init_linear_params(ks[3], d_model, d_model)
    w_ff1, b_ff1 = init_linear_params(ks[4], d_model, dff)
    w_ff2, b_ff2 = init_linear_params(ks[5], dff, d_model)
    return {
        "wqkv": jnp.concatenate([wq, wk, wv], axis=1),   # packed [DM, 3*DM]
        "bqkv": jnp.concatenate([bq, bk, bv], axis=1),   # packed [1, 3*DM]
        "wo": wo, "bo": bo,
        "w_ff1": w_ff1, "b_ff1": b_ff1, "w_ff2": w_ff2, "b_ff2": b_ff2,
        "ln1_g": jnp.ones((1, d_model), jnp.float32),
        "ln1_b": jnp.zeros((1, d_model), jnp.float32),
        "ln2_g": jnp.ones((1, d_model), jnp.float32),
        "ln2_b": jnp.zeros((1, d_model), jnp.float32),
    }


def init_block_params(key, input_dim, output_dim, mlp_hidden, d_model, dff, n_layers):
    k_in, k_out, k_layers = jax.random.split(key, 3)
    layer_keys = jax.random.split(k_layers, n_layers)
    return {
        "in_mlp": init_mlp_params(k_in, input_dim, mlp_hidden, d_model),
        "out_mlp": init_mlp_params(k_out, d_model, mlp_hidden, output_dim),
        "layers": [init_encoder_layer_params(k, d_model, dff) for k in layer_keys],
    }


# ---------------------------------------------------------------------------
# Forward pass
# ---------------------------------------------------------------------------
@functools.partial(jax.jit, static_argnames=("nhead",))
def custom_attention_transformer_block(params, input_seq, positions,
                                       masked_elements, *, nhead):
    """input_seq: [B, V, input_dim]; positions: [B, V, D];
    masked_elements: [B, V] bool. Returns [B, V, output_dim] (f32)."""
    B, V, _ = input_seq.shape
    mask_f = masked_elements.astype(jnp.float32).reshape(B, 1, V)

    # Locality / padding attention bias — computed ONCE (bf16), reused by every layer.
    bias = locality_bias(positions, mask_f)

    # in_mlp (fused, row-tiled); activations carried in bf16 between kernels.
    feat2d = mlp_forward(params["in_mlp"], input_seq.reshape(B * V, -1),
                         out_dtype=WEIGHT_DTYPE)
    d_model = feat2d.shape[-1]
    feat = feat2d.reshape(B, V, d_model)

    # Encoder layers: ONE fused pallas_call per layer, block_b batches per step
    # so each matmul sees R = block_b*V rows.
    block_b = _pick_block_b(B, V)
    for lp in params["layers"]:
        feat = encoder_layer(feat, bias, lp, nhead, block_b)

    # out_mlp (fused, row-tiled, lane-dense padded output); final output in f32.
    out2d = mlp_forward(params["out_mlp"], feat.reshape(B * V, d_model),
                        out_dtype=jnp.float32)
    return out2d.reshape(B, V, -1)


# ---------------------------------------------------------------------------
if __name__ == "__main__":
    B, V = 2, 16
    INPUT_DIM, OUTPUT_DIM, POS_DIM = 6, 4, 3
    D_MODEL, NHEAD, DFF = 128, 4, 256      # lane-dense (multiples of 128) model dims
    MLP_HIDDEN = [128]
    NUM_LAYERS = 2

    root = jax.random.PRNGKey(0)
    k_params, k_x, k_pos = jax.random.split(root, 3)

    params = init_block_params(k_params, INPUT_DIM, OUTPUT_DIM, MLP_HIDDEN,
                               D_MODEL, DFF, NUM_LAYERS)

    input_seq = jax.random.normal(k_x, (B, V, INPUT_DIM), jnp.float32)
    positions = jax.random.normal(k_pos, (B, V, POS_DIM), jnp.float32)
    masked_elements = jnp.zeros((B, V), jnp.bool_).at[:, -1].set(True)

    out = custom_attention_transformer_block(params, input_seq, positions,
                                             masked_elements, nhead=NHEAD)
    out = jax.block_until_ready(out)
    assert out.shape == (B, V, OUTPUT_DIM)
    assert bool(jnp.all(jnp.isfinite(out)))
    print("KERNEL_OK")
</pallas_src>

<mosaic_0001>
module attributes {stable_mosaic.version = 11 : i64} {
  func.func @_locality_bias_kernel(%arg0: i32, %arg1: memref<2x16x3xf32, #tpu.memory_space<vmem>>, %arg2: memref<2x1x16xf32, #tpu.memory_space<vmem>>, %arg3: memref<2x16x16xbf16, #tpu.memory_space<vmem>>) attributes {dimension_semantics = [#tpu.dimension_semantics<arbitrary>], iteration_bounds = array<i64: 1>, scalar_prefetch = 0 : i64, scratch_operands = 0 : i64, tpu.core_type = #tpu.core_type<tc>, window_params = [{pipeline_mode = #tpu.pipeline_mode<synchronous>, transform_indices = @transform_0, window_bounds = array<i64: 2, 16, 3>}, {pipeline_mode = #tpu.pipeline_mode<synchronous>, transform_indices = @transform_1, window_bounds = array<i64: 2, 1, 16>}, {pipeline_mode = #tpu.pipeline_mode<synchronous>, transform_indices = @transform_2, window_bounds = array<i64: 2, 16, 16>}]} {
    %c0 = arith.constant 0 : index
    %c0_0 = arith.constant 0 : index
    %c0_1 = arith.constant 0 : index
    %0 = vector.load %arg1[%c0, %c0_0, %c0_1] : memref<2x16x3xf32, #tpu.memory_space<vmem>>, vector<2x16x3xf32>
    %c0_2 = arith.constant 0 : index
    %c0_3 = arith.constant 0 : index
    %c0_4 = arith.constant 0 : index
    %1 = vector.load %arg2[%c0_2, %c0_3, %c0_4] : memref<2x1x16xf32, #tpu.memory_space<vmem>>, vector<2x1x16xf32>
    %2 = arith.mulf %0, %0 : vector<2x16x3xf32>
    %cst = arith.constant dense<0.000000e+00> : vector<2x16x16xf32>
    %3 = tpu.matmul %0, %0, %cst {dimension_numbers = #tpu.dot_dimension_numbers<[2], [2], [1], [1], [0, 0, 0, 1, 1, 1], [0], [0]>} : vector<2x16x3xf32>, vector<2x16x3xf32>, vector<2x16x16xf32> -> vector<2x16x16xf32>
    %cst_5 = arith.constant dense<0.000000e+00> : vector<2x16xf32>
    %4 = vector.multi_reduction <add>, %2, %cst_5 [2] : vector<2x16x3xf32> to vector<2x16xf32>
    %5 = vector.shape_cast %4 : vector<2x16xf32> to vector<2x16x1xf32>
    %cst_6 = arith.constant 1.000000e+00 : f32
    %6 = vector.broadcast %cst_6 : f32 to vector<2x1x3xf32>
    %cst_7 = arith.constant dense<0.000000e+00> : vector<2x1x16xf32>
    %7 = tpu.matmul %6, %2, %cst_7 {dimension_numbers = #tpu.dot_dimension_numbers<[2], [2], [1], [1], [0, 0, 0, 1, 1, 1], [0], [0]>} : vector<2x1x3xf32>, vector<2x16x3xf32>, vector<2x1x16xf32> -> vector<2x1x16xf32>
    %8 = vector.broadcast %5 : vector<2x16x1xf32> to vector<2x16x16xf32>
    %9 = vector.broadcast %7 : vector<2x1x16xf32> to vector<2x16x16xf32>
    %10 = arith.addf %8, %9 : vector<2x16x16xf32>
    %cst_8 = arith.constant 2.000000e+00 : f32
    %11 = vector.broadcast %cst_8 : f32 to vector<2x16x16xf32>
    %12 = arith.mulf %11, %3 : vector<2x16x16xf32>
    %13 = arith.subf %10, %12 : vector<2x16x16xf32>
    %cst_9 = arith.constant 4.000000e+00 : f32
    %14 = vector.broadcast %cst_9 : f32 to vector<2x16x16xf32>
    %15 = arith.cmpf ole, %13, %14 : vector<2x16x16xf32>
    %16 = arith.extui %15 : vector<2x16x16xi1> to vector<2x16x16xi32>
    %17 = arith.sitofp %16 : vector<2x16x16xi32> to vector<2x16x16xf32>
    %cst_10 = arith.constant 1.000000e+00 : f32
    %18 = vector.broadcast %cst_10 : f32 to vector<2x1x16xf32>
    %19 = arith.subf %18, %1 : vector<2x1x16xf32>
    %20 = vector.broadcast %19 : vector<2x1x16xf32> to vector<2x16x16xf32>
    %21 = arith.mulf %17, %20 : vector<2x16x16xf32>
    %cst_11 = arith.constant 1.000000e+00 : f32
    %22 = vector.broadcast %cst_11 : f32 to vector<2x16x16xf32>
    %23 = arith.subf %22, %21 : vector<2x16x16xf32>
    %cst_12 = arith.constant -1.000000e+09 : f32
    %24 = vector.broadcast %cst_12 : f32 to vector<2x16x16xf32>
    %25 = arith.mulf %23, %24 : vector<2x16x16xf32>
    %26 = arith.truncf %25 : vector<2x16x16xf32> to vector<2x16x16xbf16>
    %c0_13 = arith.constant 0 : index
    %c0_14 = arith.constant 0 : index
    %c0_15 = arith.constant 0 : index
    %27 = vector.load %arg3[%c0_13, %c0_14, %c0_15] : memref<2x16x16xbf16, #tpu.memory_space<vmem>>, vector<2x16x16xbf16>
    tpu.vector_store %arg3[%c0_13, %c0_14, %c0_15], %26 {strides = array<i32>} : memref<2x16x16xbf16, #tpu.memory_space<vmem>>, vector<2x16x16xbf16>,
    return
  }
  func.func @transform_0(%arg0: i32) -> (i32, i32, i32) {
    %c0_i32 = arith.constant 0 : i32
    %c0_i32_0 = arith.constant 0 : i32
    %c0_i32_1 = arith.constant 0 : i32
    %c0_i32_2 = arith.constant 0 : i32
    return %c0_i32, %c0_i32_0, %c0_i32_1 : i32, i32, i32
  }
  func.func @transform_1(%arg0: i32) -> (i32, i32, i32) {
    %c0_i32 = arith.constant 0 : i32
    %c0_i32_0 = arith.constant 0 : i32
    %c0_i32_1 = arith.constant 0 : i32
    %c0_i32_2 = arith.constant 0 : i32
    return %c0_i32, %c0_i32_0, %c0_i32_1 : i32, i32, i32
  }
  func.func @transform_2(%arg0: i32) -> (i32, i32, i32) {
    %c0_i32 = arith.constant 0 : i32
    %c0_i32_0 = arith.constant 0 : i32
    %c0_i32_1 = arith.constant 0 : i32
    %c0_i32_2 = arith.constant 0 : i32
    return %c0_i32, %c0_i32_0, %c0_i32_1 : i32, i32, i32
  }
}

module attributes {stable_mosaic.version = 11 : i64} {
  func.func @_mlp_kernel(%arg0: i32, %arg1: memref<32x6xf32, #tpu.memory_space<vmem>>, %arg2: memref<6x128xbf16, #tpu.memory_space<vmem>>, %arg3: memref<1x128xf32, #tpu.memory_space<vmem>>, %arg4: memref<128x128xbf16, #tpu.memory_space<vmem>>, %arg5: memref<1x128xf32, #tpu.memory_space<vmem>>, %arg6: memref<32x128xbf16, #tpu.memory_space<vmem>>) attributes {dimension_semantics = [#tpu.dimension_semantics<parallel>], iteration_bounds = array<i64: 1>, scalar_prefetch = 0 : i64, scratch_operands = 0 : i64, tpu.core_type = #tpu.core_type<tc>, window_params = [{transform_indices = @transform_0, window_bounds = array<i64: 32, 6>}, {pipeline_mode = #tpu.pipeline_mode<synchronous>, transform_indices = @transform_1, window_bounds = array<i64: 6, 128>}, {pipeline_mode = #tpu.pipeline_mode<synchronous>, transform_indices = @transform_2, window_bounds = array<i64: 1, 128>}, {pipeline_mode = #tpu.pipeline_mode<synchronous>, transform_indices = @transform_3, window_bounds = array<i64: 128, 128>}, {pipeline_mode = #tpu.pipeline_mode<synchronous>, transform_indices = @transform_4, window_bounds = array<i64: 1, 128>}, {transform_indices = @transform_5, window_bounds = array<i64: 32, 128>}]} {
    %c0 = arith.constant 0 : index
    %c0_0 = arith.constant 0 : index
    %0 = vector.load %arg1[%c0, %c0_0] : memref<32x6xf32, #tpu.memory_space<vmem>>, vector<32x6xf32>
    %c0_1 = arith.constant 0 : index
    %c0_2 = arith.constant 0 : index
    %1 = vector.load %arg2[%c0_1, %c0_2] : memref<6x128xbf16, #tpu.memory_space<vmem>>, vector<6x128xbf16>
    %c0_3 = arith.constant 0 : index
    %c0_4 = arith.constant 0 : index
    %2 = vector.load %arg3[%c0_3, %c0_4] : memref<1x128xf32, #tpu.memory_space<vmem>>, vector<1x128xf32>
    %3 = arith.truncf %0 : vector<32x6xf32> to vector<32x6xbf16>
    %cst = arith.constant dense<0.000000e+00> : vector<32x128xf32>
    %4 = tpu.matmul %3, %1, %cst {dimension_numbers = #tpu.dot_dimension_numbers<[1], [0], [0], [1], [0, 0, 1, 1], [], []>} : vector<32x6xbf16>, vector<6x128xbf16>, vector<32x128xf32> -> vector<32x128xf32>
    %5 = vector.broadcast %2 : vector<1x128xf32> to vector<32x128xf32>
    %6 = arith.addf %4, %5 : vector<32x128xf32>
    %cst_5 = arith.constant 0.000000e+00 : f32
    %7 = vector.broadcast %cst_5 : f32 to vector<32x128xf32>
    %8 = arith.maximumf %6, %7 : vector<32x128xf32>
    %c0_6 = arith.constant 0 : index
    %c0_7 = arith.constant 0 : index
    %9 = vector.load %arg4[%c0_6, %c0_7] : memref<128x128xbf16, #tpu.memory_space<vmem>>, vector<128x128xbf16>
    %c0_8 = arith.constant 0 : index
    %c0_9 = arith.constant 0 : index
    %10 = vector.load %arg5[%c0_8, %c0_9] : memref<1x128xf32, #tpu.memory_space<vmem>>, vector<1x128xf32>
    %11 = arith.truncf %8 : vector<32x128xf32> to vector<32x128xbf16>
    %cst_10 = arith.constant dense<0.000000e+00> : vector<32x128xf32>
    %12 = tpu.matmul %11, %9, %cst_10 {dimension_numbers = #tpu.dot_dimension_numbers<[1], [0], [0], [1], [0, 0, 1, 1], [], []>} : vector<32x128xbf16>, vector<128x128xbf16>, vector<32x128xf32> -> vector<32x128xf32>
    %13 = vector.broadcast %10 : vector<1x128xf32> to vector<32x128xf32>
    %14 = arith.addf %12, %13 : vector<32x128xf32>
    %15 = arith.truncf %14 : vector<32x128xf32> to vector<32x128xbf16>
    %c0_11 = arith.constant 0 : index
    %c0_12 = arith.constant 0 : index
    %16 = vector.load %arg6[%c0_11, %c0_12] : memref<32x128xbf16, #tpu.memory_space<vmem>>, vector<32x128xbf16>
    tpu.vector_store %arg6[%c0_11, %c0_12], %15 {strides = array<i32>} : memref<32x128xbf16, #tpu.memory_space<vmem>>, vector<32x128xbf16>,
    return
  }
  func.func @transform_0(%arg0: i32) -> (i32, i32) {
    %c0_i32 = arith.constant 0 : i32
    %c0_i32_0 = arith.constant 0 : i32
    return %arg0, %c0_i32 : i32, i32
  }
  func.func @transform_1(%arg0: i32) -> (i32, i32) {
    %c0_i32 = arith.constant 0 : i32
    %c0_i32_0 = arith.constant 0 : i32
    %c0_i32_1 = arith.constant 0 : i32
    return %c0_i32, %c0_i32_0 : i32, i32
  }
  func.func @transform_2(%arg0: i32) -> (i32, i32) {
    %c0_i32 = arith.constant 0 : i32
    %c0_i32_0 = arith.constant 0 : i32
    %c0_i32_1 = arith.constant 0 : i32
    return %c0_i32, %c0_i32_0 : i32, i32
  }
  func.func @transform_3(%arg0: i32) -> (i32, i32) {
    %c0_i32 = arith.constant 0 : i32
    %c0_i32_0 = arith.constant 0 : i32
    %c0_i32_1 = arith.constant 0 : i32
    return %c0_i32, %c0_i32_0 : i32, i32
  }
  func.func @transform_4(%arg0: i32) -> (i32, i32) {
    %c0_i32 = arith.constant 0 : i32
    %c0_i32_0 = arith.constant 0 : i32
    %c0_i32_1 = arith.constant 0 : i32
    return %c0_i32, %c0_i32_0 : i32, i32
  }
  func.func @transform_5(%arg0: i32) -> (i32, i32) {
    %c0_i32 = arith.constant 0 : i32
    %c0_i32_0 = arith.constant 0 : i32
    return %arg0, %c0_i32 : i32, i32
  }
}

module attributes {stable_mosaic.version = 11 : i64} {
  func.func @_encoder_layer_kernel(%arg0: i32, %arg1: memref<2x16x128xbf16, #tpu.memory_space<vmem>>, %arg2: memref<2x16x16xbf16, #tpu.memory_space<vmem>>, %arg3: memref<128x384xbf16, #tpu.memory_space<vmem>>, %arg4: memref<1x384xf32, #tpu.memory_space<vmem>>, %arg5: memref<128x128xbf16, #tpu.memory_space<vmem>>, %arg6: memref<1x128xf32, #tpu.memory_space<vmem>>, %arg7: memref<1x128xf32, #tpu.memory_space<vmem>>, %arg8: memref<1x128xf32, #tpu.memory_space<vmem>>, %arg9: memref<128x256xbf16, #tpu.memory_space<vmem>>, %arg10: memref<1x256xf32, #tpu.memory_space<vmem>>, %arg11: memref<256x128xbf16, #tpu.memory_space<vmem>>, %arg12: memref<1x128xf32, #tpu.memory_space<vmem>>, %arg13: memref<1x128xf32, #tpu.memory_space<vmem>>, %arg14: memref<1x128xf32, #tpu.memory_space<vmem>>, %arg15: memref<2x16x128xbf16, #tpu.memory_space<vmem>>) attributes {dimension_semantics = [#tpu.dimension_semantics<parallel>], iteration_bounds = array<i64: 1>, scalar_prefetch = 0 : i64, scratch_operands = 0 : i64, tpu.core_type = #tpu.core_type<tc>, window_params = [{transform_indices = @transform_0, window_bounds = array<i64: 2, 16, 128>}, {transform_indices = @transform_1, window_bounds = array<i64: 2, 16, 16>}, {pipeline_mode = #tpu.pipeline_mode<synchronous>, transform_indices = @transform_2, window_bounds = array<i64: 128, 384>}, {pipeline_mode = #tpu.pipeline_mode<synchronous>, transform_indices = @transform_3, window_bounds = array<i64: 1, 384>}, {pipeline_mode = #tpu.pipeline_mode<synchronous>, transform_indices = @transform_4, window_bounds = array<i64: 128, 128>}, {pipeline_mode = #tpu.pipeline_mode<synchronous>, transform_indices = @transform_5, window_bounds = array<i64: 1, 128>}, {pipeline_mode = #tpu.pipeline_mode<synchronous>, transform_indices = @transform_6, window_bounds = array<i64: 1, 128>}, {pipeline_mode = #tpu.pipeline_mode<synchronous>, transform_indices = @transform_7, window_bounds = array<i64: 1, 128>}, {pipeline_mode = #tpu.pipeline_mode<synchronous>, transform_indices = @transform_8, window_bounds = array<i64: 128, 256>}, {pipeline_mode = #tpu.pipeline_mode<synchronous>, transform_indices = @transform_9, window_bounds = array<i64: 1, 256>}, {pipeline_mode = #tpu.pipeline_mode<synchronous>, transform_indices = @transform_10, window_bounds = array<i64: 256, 128>}, {pipeline_mode = #tpu.pipeline_mode<synchronous>, transform_indices = @transform_11, window_bounds = array<i64: 1, 128>}, {pipeline_mode = #tpu.pipeline_mode<synchronous>, transform_indices = @transform_12, window_bounds = array<i64: 1, 128>}, {pipeline_mode = #tpu.pipeline_mode<synchronous>, transform_indices = @transform_13, window_bounds = array<i64: 1, 128>}, {transform_indices = @transform_14, window_bounds = array<i64: 2, 16, 128>}]} {
    %c0 = arith.constant 0 : index
    %c0_0 = arith.constant 0 : index
    %c0_1 = arith.constant 0 : index
    %0 = vector.load %arg1[%c0, %c0_0, %c0_1] : memref<2x16x128xbf16, #tpu.memory_space<vmem>>, vector<2x16x128xbf16>
    %1 = vector.shape_cast %0 : vector<2x16x128xbf16> to vector<32x128xbf16>
    %2 = arith.extf %1 : vector<32x128xbf16> to vector<32x128xf32>
    %c0_2 = arith.constant 0 : index
    %c0_3 = arith.constant 0 : index
    %3 = vector.load %arg3[%c0_2, %c0_3] : memref<128x384xbf16, #tpu.memory_space<vmem>>, vector<128x384xbf16>
    %cst = arith.constant dense<0.000000e+00> : vector<32x384xf32>
    %4 = tpu.matmul %1, %3, %cst {dimension_numbers = #tpu.dot_dimension_numbers<[1], [0], [0], [1], [0, 0, 1, 1], [], []>} : vector<32x128xbf16>, vector<128x384xbf16>, vector<32x384xf32> -> vector<32x384xf32>
    %c0_4 = arith.constant 0 : index
    %c0_5 = arith.constant 0 : index
    %5 = vector.load %arg4[%c0_4, %c0_5] : memref<1x384xf32, #tpu.memory_space<vmem>>, vector<1x384xf32>
    %6 = vector.broadcast %5 : vector<1x384xf32> to vector<32x384xf32>
    %7 = arith.addf %4, %6 : vector<32x384xf32>
    %8 = vector.extract_strided_slice %7 {offsets = [0, 0], sizes = [32, 128], strides = [1, 1]} : vector<32x384xf32> to vector<32x128xf32>
    %cst_6 = arith.constant 0.176776692 : f32
    %9 = vector.broadcast %cst_6 : f32 to vector<32x128xf32>
    %10 = arith.mulf %8, %9 : vector<32x128xf32>
    %11 = arith.truncf %10 : vector<32x128xf32> to vector<32x128xbf16>
    %12 = vector.shape_cast %11 : vector<32x128xbf16> to vector<2x16x128xbf16>
    %13 = vector.extract_strided_slice %7 {offsets = [0, 128], sizes = [32, 128], strides = [1, 1]} : vector<32x384xf32> to vector<32x128xf32>
    %14 = arith.truncf %13 : vector<32x128xf32> to vector<32x128xbf16>
    %15 = vector.shape_cast %14 : vector<32x128xbf16> to vector<2x16x128xbf16>
    %16 = vector.extract_strided_slice %7 {offsets = [0, 256], sizes = [32, 128], strides = [1, 1]} : vector<32x384xf32> to vector<32x128xf32>
    %17 = arith.truncf %16 : vector<32x128xf32> to vector<32x128xbf16>
    %18 = vector.shape_cast %17 : vector<32x128xbf16> to vector<2x16x128xbf16>
    %c0_7 = arith.constant 0 : index
    %c0_8 = arith.constant 0 : index
    %c0_9 = arith.constant 0 : index
    %19 = vector.load %arg2[%c0_7, %c0_8, %c0_9] : memref<2x16x16xbf16, #tpu.memory_space<vmem>>, vector<2x16x16xbf16>
    %20 = arith.extf %19 : vector<2x16x16xbf16> to vector<2x16x16xf32>
    %c0_10 = arith.constant 0 : index
    %c0_11 = arith.constant 0 : index
    %21 = vector.load %arg5[%c0_10, %c0_11] : memref<128x128xbf16, #tpu.memory_space<vmem>>, vector<128x128xbf16>
    %c0_12 = arith.constant 0 : index
    %c0_13 = arith.constant 0 : index
    %22 = vector.load %arg6[%c0_12, %c0_13] : memref<1x128xf32, #tpu.memory_space<vmem>>, vector<1x128xf32>
    %23 = vector.extract_strided_slice %12 {offsets = [0, 0, 0], sizes = [2, 16, 32], strides = [1, 1, 1]} : vector<2x16x128xbf16> to vector<2x16x32xbf16>
    %24 = vector.extract_strided_slice %15 {offsets = [0, 0, 0], sizes = [2, 16, 32], strides = [1, 1, 1]} : vector<2x16x128xbf16> to vector<2x16x32xbf16>
    %25 = vector.extract_strided_slice %18 {offsets = [0, 0, 0], sizes = [2, 16, 32], strides = [1, 1, 1]} : vector<2x16x128xbf16> to vector<2x16x32xbf16>
    "tpu.trace_start"() <{level = 10 : i32, message = "bqd,bkd->bqk"}> : () -> ()
    %cst_14 = arith.constant dense<0.000000e+00> : vector<2x16x16xf32>
    %26 = tpu.matmul %23, %24, %cst_14 {dimension_numbers = #tpu.dot_dimension_numbers<[2], [2], [1], [1], [0, 0, 0, 1, 1, 1], [0], [0]>} : vector<2x16x32xbf16>, vector<2x16x32xbf16>, vector<2x16x16xf32> -> vector<2x16x16xf32>
    "tpu.trace_stop"() : () -> ()
    %27 = arith.addf %26, %20 : vector<2x16x16xf32>
    %cst_15 = arith.constant dense<0xFF800000> : vector<2x16xf32>
    %28 = vector.multi_reduction <maximumf>, %27, %cst_15 [2] : vector<2x16x16xf32> to vector<2x16xf32>
    %29 = vector.shape_cast %28 : vector<2x16xf32> to vector<2x16x1xf32>
    %30 = vector.broadcast %29 : vector<2x16x1xf32> to vector<2x16x16xf32>
    %31 = arith.subf %27, %30 : vector<2x16x16xf32>
    %32 = math.exp %31 : vector<2x16x16xf32>
    %cst_16 = arith.constant dense<0.000000e+00> : vector<2x16xf32>
    %33 = vector.multi_reduction <add>, %32, %cst_16 [2] : vector<2x16x16xf32> to vector<2x16xf32>
    %34 = vector.shape_cast %33 : vector<2x16xf32> to vector<2x16x1xf32>
    %35 = tpu.reciprocal %34 {approx = true} : vector<2x16x1xf32> -> vector<2x16x1xf32>
    %36 = vector.broadcast %35 : vector<2x16x1xf32> to vector<2x16x16xf32>
    %37 = arith.mulf %32, %36 : vector<2x16x16xf32>
    %38 = arith.truncf %37 : vector<2x16x16xf32> to vector<2x16x16xbf16>
    "tpu.trace_start"() <{level = 10 : i32, message = "bqk,bkd->bqd"}> : () -> ()
    %cst_17 = arith.constant dense<0.000000e+00> : vector<2x16x32xf32>
    %39 = tpu.matmul %38, %25, %cst_17 {dimension_numbers = #tpu.dot_dimension_numbers<[2], [1], [1], [2], [0, 0, 0, 1, 1, 2], [0], [0]>} : vector<2x16x16xbf16>, vector<2x16x32xbf16>, vector<2x16x32xf32> -> vector<2x16x32xf32>
    "tpu.trace_stop"() : () -> ()
    %40 = vector.shape_cast %39 : vector<2x16x32xf32> to vector<32x32xf32>
    %41 = arith.truncf %40 : vector<32x32xf32> to vector<32x32xbf16>
    %42 = vector.extract_strided_slice %21 {offsets = [0, 0], sizes = [32, 128], strides = [1, 1]} : vector<128x128xbf16> to vector<32x128xbf16>
    %cst_18 = arith.constant dense<0.000000e+00> : vector<32x128xf32>
    %43 = tpu.matmul %41, %42, %cst_18 {dimension_numbers = #tpu.dot_dimension_numbers<[1], [0], [0], [1], [0, 0, 1, 1], [], []>} : vector<32x32xbf16>, vector<32x128xbf16>, vector<32x128xf32> -> vector<32x128xf32>
    %44 = vector.broadcast %22 : vector<1x128xf32> to vector<32x128xf32>
    %45 = arith.addf %44, %43 : vector<32x128xf32>
    %46 = vector.extract_strided_slice %12 {offsets = [0, 0, 32], sizes = [2, 16, 32], strides = [1, 1, 1]} : vector<2x16x128xbf16> to vector<2x16x32xbf16>
    %47 = vector.extract_strided_slice %15 {offsets = [0, 0, 32], sizes = [2, 16, 32], strides = [1, 1, 1]} : vector<2x16x128xbf16> to vector<2x16x32xbf16>
    %48 = vector.extract_strided_slice %18 {offsets = [0, 0, 32], sizes = [2, 16, 32], strides = [1, 1, 1]} : vector<2x16x128xbf16> to vector<2x16x32xbf16>
    "tpu.trace_start"() <{level = 10 : i32, message = "bqd,bkd->bqk"}> : () -> ()
    %cst_19 = arith.constant dense<0.000000e+00> : vector<2x16x16xf32>
    %49 = tpu.matmul %46, %47, %cst_19 {dimension_numbers = #tpu.dot_dimension_numbers<[2], [2], [1], [1], [0, 0, 0, 1, 1, 1], [0], [0]>} : vector<2x16x32xbf16>, vector<2x16x32xbf16>, vector<2x16x16xf32> -> vector<2x16x16xf32>
    "tpu.trace_stop"() : () -> ()
    %50 = arith.addf %49, %20 : vector<2x16x16xf32>
    %cst_20 = arith.constant dense<0xFF800000> : vector<2x16xf32>
    %51 = vector.multi_reduction <maximumf>, %50, %cst_20 [2] : vector<2x16x16xf32> to vector<2x16xf32>
    %52 = vector.shape_cast %51 : vector<2x16xf32> to vector<2x16x1xf32>
    %53 = vector.broadcast %52 : vector<2x16x1xf32> to vector<2x16x16xf32>
    %54 = arith.subf %50, %53 : vector<2x16x16xf32>
    %55 = math.exp %54 : vector<2x16x16xf32>
    %cst_21 = arith.constant dense<0.000000e+00> : vector<2x16xf32>
    %56 = vector.multi_reduction <add>, %55, %cst_21 [2] : vector<2x16x16xf32> to vector<2x16xf32>
    %57 = vector.shape_cast %56 : vector<2x16xf32> to vector<2x16x1xf32>
    %58 = tpu.reciprocal %57 {approx = true} : vector<2x16x1xf32> -> vector<2x16x1xf32>
    %59 = vector.broadcast %58 : vector<2x16x1xf32> to vector<2x16x16xf32>
    %60 = arith.mulf %55, %59 : vector<2x16x16xf32>
    %61 = arith.truncf %60 : vector<2x16x16xf32> to vector<2x16x16xbf16>
    "tpu.trace_start"() <{level = 10 : i32, message = "bqk,bkd->bqd"}> : () -> ()
    %cst_22 = arith.constant dense<0.000000e+00> : vector<2x16x32xf32>
    %62 = tpu.matmul %61, %48, %cst_22 {dimension_numbers = #tpu.dot_dimension_numbers<[2], [1], [1], [2], [0, 0, 0, 1, 1, 2], [0], [0]>} : vector<2x16x16xbf16>, vector<2x16x32xbf16>, vector<2x16x32xf32> -> vector<2x16x32xf32>
    "tpu.trace_stop"() : () -> ()
    %63 = vector.shape_cast %62 : vector<2x16x32xf32> to vector<32x32xf32>
    %64 = arith.truncf %63 : vector<32x32xf32> to vector<32x32xbf16>
    %65 = vector.extract_strided_slice %21 {offsets = [32, 0], sizes = [32, 128], strides = [1, 1]} : vector<128x128xbf16> to vector<32x128xbf16>
    %cst_23 = arith.constant dense<0.000000e+00> : vector<32x128xf32>
    %66 = tpu.matmul %64, %65, %cst_23 {dimension_numbers = #tpu.dot_dimension_numbers<[1], [0], [0], [1], [0, 0, 1, 1], [], []>} : vector<32x32xbf16>, vector<32x128xbf16>, vector<32x128xf32> -> vector<32x128xf32>
    %67 = arith.addf %45, %66 : vector<32x128xf32>
    %68 = vector.extract_strided_slice %12 {offsets = [0, 0, 64], sizes = [2, 16, 32], strides = [1, 1, 1]} : vector<2x16x128xbf16> to vector<2x16x32xbf16>
    %69 = vector.extract_strided_slice %15 {offsets = [0, 0, 64], sizes = [2, 16, 32], strides = [1, 1, 1]} : vector<2x16x128xbf16> to vector<2x16x32xbf16>
    %70 = vector.extract_strided_slice %18 {offsets = [0, 0, 64], sizes = [2, 16, 32], strides = [1, 1, 1]} : vector<2x16x128xbf16> to vector<2x16x32xbf16>
    "tpu.trace_start"() <{level = 10 : i32, message = "bqd,bkd->bqk"}> : () -> ()
    %cst_24 = arith.constant dense<0.000000e+00> : vector<2x16x16xf32>
    %71 = tpu.matmul %68, %69, %cst_24 {dimension_numbers = #tpu.dot_dimension_numbers<[2], [2], [1], [1], [0, 0, 0, 1, 1, 1], [0], [0]>} : vector<2x16x32xbf16>, vector<2x16x32xbf16>, vector<2x16x16xf32> -> vector<2x16x16xf32>
    "tpu.trace_stop"() : () -> ()
    %72 = arith.addf %71, %20 : vector<2x16x16xf32>
    %cst_25 = arith.constant dense<0xFF800000> : vector<2x16xf32>
    %73 = vector.multi_reduction <maximumf>, %72, %cst_25 [2] : vector<2x16x16xf32> to vector<2x16xf32>
    %74 = vector.shape_cast %73 : vector<2x16xf32> to vector<2x16x1xf32>
    %75 = vector.broadcast %74 : vector<2x16x1xf32> to vector<2x16x16xf32>
    %76 = arith.subf %72, %75 : vector<2x16x16xf32>
    %77 = math.exp %76 : vector<2x16x16xf32>
    %cst_26 = arith.constant dense<0.000000e+00> : vector<2x16xf32>
    %78 = vector.multi_reduction <add>, %77, %cst_26 [2] : vector<2x16x16xf32> to vector<2x16xf32>
    %79 = vector.shape_cast %78 : vector<2x16xf32> to vector<2x16x1xf32>
    %80 = tpu.reciprocal %79 {approx = true} : vector<2x16x1xf32> -> vector<2x16x1xf32>
    %81 = vector.broadcast %80 : vector<2x16x1xf32> to vector<2x16x16xf32>
    %82 = arith.mulf %77, %81 : vector<2x16x16xf32>
    %83 = arith.truncf %82 : vector<2x16x16xf32> to vector<2x16x16xbf16>
    "tpu.trace_start"() <{level = 10 : i32, message = "bqk,bkd->bqd"}> : () -> ()
    %cst_27 = arith.constant dense<0.000000e+00> : vector<2x16x32xf32>
    %84 = tpu.matmul %83, %70, %cst_27 {dimension_numbers = #tpu.dot_dimension_numbers<[2], [1], [1], [2], [0, 0, 0, 1, 1, 2], [0], [0]>} : vector<2x16x16xbf16>, vector<2x16x32xbf16>, vector<2x16x32xf32> -> vector<2x16x32xf32>
    "tpu.trace_stop"() : () -> ()
    %85 = vector.shape_cast %84 : vector<2x16x32xf32> to vector<32x32xf32>
    %86 = arith.truncf %85 : vector<32x32xf32> to vector<32x32xbf16>
    %87 = vector.extract_strided_slice %21 {offsets = [64, 0], sizes = [32, 128], strides = [1, 1]} : vector<128x128xbf16> to vector<32x128xbf16>
    %cst_28 = arith.constant dense<0.000000e+00> : vector<32x128xf32>
    %88 = tpu.matmul %86, %87, %cst_28 {dimension_numbers = #tpu.dot_dimension_numbers<[1], [0], [0], [1], [0, 0, 1, 1], [], []>} : vector<32x32xbf16>, vector<32x128xbf16>, vector<32x128xf32> -> vector<32x128xf32>
    %89 = arith.addf %67, %88 : vector<32x128xf32>
    %90 = vector.extract_strided_slice %12 {offsets = [0, 0, 96], sizes = [2, 16, 32], strides = [1, 1, 1]} : vector<2x16x128xbf16> to vector<2x16x32xbf16>
    %91 = vector.extract_strided_slice %15 {offsets = [0, 0, 96], sizes = [2, 16, 32], strides = [1, 1, 1]} : vector<2x16x128xbf16> to vector<2x16x32xbf16>
    %92 = vector.extract_strided_slice %18 {offsets = [0, 0, 96], sizes = [2, 16, 32], strides = [1, 1, 1]} : vector<2x16x128xbf16> to vector<2x16x32xbf16>
    "tpu.trace_start"() <{level = 10 : i32, message = "bqd,bkd->bqk"}> : () -> ()
    %cst_29 = arith.constant dense<0.000000e+00> : vector<2x16x16xf32>
    %93 = tpu.matmul %90, %91, %cst_29 {dimension_numbers = #tpu.dot_dimension_numbers<[2], [2], [1], [1], [0, 0, 0, 1, 1, 1], [0], [0]>} : vector<2x16x32xbf16>, vector<2x16x32xbf16>, vector<2x16x16xf32> -> vector<2x16x16xf32>
    "tpu.trace_stop"() : () -> ()
    %94 = arith.addf %93, %20 : vector<2x16x16xf32>
    %cst_30 = arith.constant dense<0xFF800000> : vector<2x16xf32>
    %95 = vector.multi_reduction <maximumf>, %94, %cst_30 [2] : vector<2x16x16xf32> to vector<2x16xf32>
    %96 = vector.shape_cast %95 : vector<2x16xf32> to vector<2x16x1xf32>
    %97 = vector.broadcast %96 : vector<2x16x1xf32> to vector<2x16x16xf32>
    %98 = arith.subf %94, %97 : vector<2x16x16xf32>
    %99 = math.exp %98 : vector<2x16x16xf32>
    %cst_31 = arith.constant dense<0.000000e+00> : vector<2x16xf32>
    %100 = vector.multi_reduction <add>, %99, %cst_31 [2] : vector<2x16x16xf32> to vector<2x16xf32>
    %101 = vector.shape_cast %100 : vector<2x16xf32> to vector<2x16x1xf32>
    %102 = tpu.reciprocal %101 {approx = true} : vector<2x16x1xf32> -> vector<2x16x1xf32>
    %103 = vector.broadcast %102 : vector<2x16x1xf32> to vector<2x16x16xf32>
    %104 = arith.mulf %99, %103 : vector<2x16x16xf32>
    %105 = arith.truncf %104 : vector<2x16x16xf32> to vector<2x16x16xbf16>
    "tpu.trace_start"() <{level = 10 : i32, message = "bqk,bkd->bqd"}> : () -> ()
    %cst_32 = arith.constant dense<0.000000e+00> : vector<2x16x32xf32>
    %106 = tpu.matmul %105, %92, %cst_32 {dimension_numbers = #tpu.dot_dimension_numbers<[2], [1], [1], [2], [0, 0, 0, 1, 1, 2], [0], [0]>} : vector<2x16x16xbf16>, vector<2x16x32xbf16>, vector<2x16x32xf32> -> vector<2x16x32xf32>
    "tpu.trace_stop"() : () -> ()
    %107 = vector.shape_cast %106 : vector<2x16x32xf32> to vector<32x32xf32>
    %108 = arith.truncf %107 : vector<32x32xf32> to vector<32x32xbf16>
    %109 = vector.extract_strided_slice %21 {offsets = [96, 0], sizes = [32, 128], strides = [1, 1]} : vector<128x128xbf16> to vector<32x128xbf16>
    %cst_33 = arith.constant dense<0.000000e+00> : vector<32x128xf32>
    %110 = tpu.matmul %108, %109, %cst_33 {dimension_numbers = #tpu.dot_dimension_numbers<[1], [0], [0], [1], [0, 0, 1, 1], [], []>} : vector<32x32xbf16>, vector<32x128xbf16>, vector<32x128xf32> -> vector<32x128xf32>
    %111 = arith.addf %89, %110 : vector<32x128xf32>
    %112 = arith.addf %111, %2 : vector<32x128xf32>
    %c0_34 = arith.constant 0 : index
    %c0_35 = arith.constant 0 : index
    %113 = vector.load %arg7[%c0_34, %c0_35] : memref<1x128xf32, #tpu.memory_space<vmem>>, vector<1x128xf32>
    %c0_36 = arith.constant 0 : index
    %c0_37 = arith.constant 0 : index
    %114 = vector.load %arg8[%c0_36, %c0_37] : memref<1x128xf32, #tpu.memory_space<vmem>>, vector<1x128xf32>
    %cst_38 = arith.constant dense<0.000000e+00> : vector<32xf32>
    %115 = vector.multi_reduction <add>, %112, %cst_38 [1] : vector<32x128xf32> to vector<32xf32>
    %116 = vector.shape_cast %115 : vector<32xf32> to vector<32x1xf32>
    %cst_39 = arith.constant 1.280000e+02 : f32
    %117 = vector.broadcast %cst_39 : f32 to vector<32x1xf32>
    %118 = arith.divf %116, %117 : vector<32x1xf32>
    %119 = vector.broadcast %118 : vector<32x1xf32> to vector<32x128xf32>
    %120 = arith.subf %112, %119 : vector<32x128xf32>
    %121 = arith.mulf %120, %120 : vector<32x128xf32>
    %cst_40 = arith.constant dense<0.000000e+00> : vector<32xf32>
    %122 = vector.multi_reduction <add>, %121, %cst_40 [1] : vector<32x128xf32> to vector<32xf32>
    %123 = vector.shape_cast %122 : vector<32xf32> to vector<32x1xf32>
    %cst_41 = arith.constant 1.280000e+02 : f32
    %124 = vector.broadcast %cst_41 : f32 to vector<32x1xf32>
    %125 = arith.divf %123, %124 : vector<32x1xf32>
    %126 = vector.broadcast %118 : vector<32x1xf32> to vector<32x128xf32>
    %127 = arith.subf %112, %126 : vector<32x128xf32>
    %cst_42 = arith.constant 9.99999974E-6 : f32
    %128 = vector.broadcast %cst_42 : f32 to vector<32x1xf32>
    %129 = arith.addf %125, %128 : vector<32x1xf32>
    %130 = math.rsqrt %129 : vector<32x1xf32>
    %131 = vector.broadcast %130 : vector<32x1xf32> to vector<32x128xf32>
    %132 = arith.mulf %127, %131 : vector<32x128xf32>
    %133 = vector.broadcast %113 : vector<1x128xf32> to vector<32x128xf32>
    %134 = arith.mulf %132, %133 : vector<32x128xf32>
    %135 = vector.broadcast %114 : vector<1x128xf32> to vector<32x128xf32>
    %136 = arith.addf %134, %135 : vector<32x128xf32>
    %137 = arith.truncf %136 : vector<32x128xf32> to vector<32x128xbf16>
    %c0_43 = arith.constant 0 : index
    %c0_44 = arith.constant 0 : index
    %138 = vector.load %arg9[%c0_43, %c0_44] : memref<128x256xbf16, #tpu.memory_space<vmem>>, vector<128x256xbf16>
    %cst_45 = arith.constant dense<0.000000e+00> : vector<32x256xf32>
    %139 = tpu.matmul %137, %138, %cst_45 {dimension_numbers = #tpu.dot_dimension_numbers<[1], [0], [0], [1], [0, 0, 1, 1], [], []>} : vector<32x128xbf16>, vector<128x256xbf16>, vector<32x256xf32> -> vector<32x256xf32>
    %c0_46 = arith.constant 0 : index
    %c0_47 = arith.constant 0 : index
    %140 = vector.load %arg10[%c0_46, %c0_47] : memref<1x256xf32, #tpu.memory_space<vmem>>, vector<1x256xf32>
    %141 = vector.broadcast %140 : vector<1x256xf32> to vector<32x256xf32>
    %142 = arith.addf %139, %141 : vector<32x256xf32>
    %cst_48 = arith.constant 0.000000e+00 : f32
    %143 = vector.broadcast %cst_48 : f32 to vector<32x256xf32>
    %144 = arith.maximumf %142, %143 : vector<32x256xf32>
    %145 = arith.truncf %144 : vector<32x256xf32> to vector<32x256xbf16>
    %c0_49 = arith.constant 0 : index
    %c0_50 = arith.constant 0 : index
    %146 = vector.load %arg11[%c0_49, %c0_50] : memref<256x128xbf16, #tpu.memory_space<vmem>>, vector<256x128xbf16>
    %cst_51 = arith.constant dense<0.000000e+00> : vector<32x128xf32>
    %147 = tpu.matmul %145, %146, %cst_51 {dimension_numbers = #tpu.dot_dimension_numbers<[1], [0], [0], [1], [0, 0, 1, 1], [], []>} : vector<32x256xbf16>, vector<256x128xbf16>, vector<32x128xf32> -> vector<32x128xf32>
    %c0_52 = arith.constant 0 : index
    %c0_53 = arith.constant 0 : index
    %148 = vector.load %arg12[%c0_52, %c0_53] : memref<1x128xf32, #tpu.memory_space<vmem>>, vector<1x128xf32>
    %149 = vector.broadcast %148 : vector<1x128xf32> to vector<32x128xf32>
    %150 = arith.addf %147, %149 : vector<32x128xf32>
    %151 = arith.addf %150, %136 : vector<32x128xf32>
    %c0_54 = arith.constant 0 : index
    %c0_55 = arith.constant 0 : index
    %152 = vector.load %arg13[%c0_54, %c0_55] : memref<1x128xf32, #tpu.memory_space<vmem>>, vector<1x128xf32>
    %c0_56 = arith.constant 0 : index
    %c0_57 = arith.constant 0 : index
    %153 = vector.load %arg14[%c0_56, %c0_57] : memref<1x128xf32, #tpu.memory_space<vmem>>, vector<1x128xf32>
    %cst_58 = arith.constant dense<0.000000e+00> : vector<32xf32>
    %154 = vector.multi_reduction <add>, %151, %cst_58 [1] : vector<32x128xf32> to vector<32xf32>
    %155 = vector.shape_cast %154 : vector<32xf32> to vector<32x1xf32>
    %cst_59 = arith.constant 1.280000e+02 : f32
    %156 = vector.broadcast %cst_59 : f32 to vector<32x1xf32>
    %157 = arith.divf %155, %156 : vector<32x1xf32>
    %158 = vector.broadcast %157 : vector<32x1xf32> to vector<32x128xf32>
    %159 = arith.subf %151, %158 : vector<32x128xf32>
    %160 = arith.mulf %159, %159 : vector<32x128xf32>
    %cst_60 = arith.constant dense<0.000000e+00> : vector<32xf32>
    %161 = vector.multi_reduction <add>, %160, %cst_60 [1] : vector<32x128xf32> to vector<32xf32>
    %162 = vector.shape_cast %161 : vector<32xf32> to vector<32x1xf32>
    %cst_61 = arith.constant 1.280000e+02 : f32
    %163 = vector.broadcast %cst_61 : f32 to vector<32x1xf32>
    %164 = arith.divf %162, %163 : vector<32x1xf32>
    %165 = vector.broadcast %157 : vector<32x1xf32> to vector<32x128xf32>
    %166 = arith.subf %151, %165 : vector<32x128xf32>
    %cst_62 = arith.constant 9.99999974E-6 : f32
    %167 = vector.broadcast %cst_62 : f32 to vector<32x1xf32>
    %168 = arith.addf %164, %167 : vector<32x1xf32>
    %169 = math.rsqrt %168 : vector<32x1xf32>
    %170 = vector.broadcast %169 : vector<32x1xf32> to vector<32x128xf32>
    %171 = arith.mulf %166, %170 : vector<32x128xf32>
    %172 = vector.broadcast %152 : vector<1x128xf32> to vector<32x128xf32>
    %173 = arith.mulf %171, %172 : vector<32x128xf32>
    %174 = vector.broadcast %153 : vector<1x128xf32> to vector<32x128xf32>
    %175 = arith.addf %173, %174 : vector<32x128xf32>
    %176 = vector.shape_cast %175 : vector<32x128xf32> to vector<2x16x128xf32>
    %177 = arith.truncf %176 : vector<2x16x128xf32> to vector<2x16x128xbf16>
    %c0_63 = arith.constant 0 : index
    %c0_64 = arith.constant 0 : index
    %c0_65 = arith.constant 0 : index
    %178 = vector.load %arg15[%c0_63, %c0_64, %c0_65] : memref<2x16x128xbf16, #tpu.memory_space<vmem>>, vector<2x16x128xbf16>
    tpu.vector_store %arg15[%c0_63, %c0_64, %c0_65], %177 {strides = array<i32>} : memref<2x16x128xbf16, #tpu.memory_space<vmem>>, vector<2x16x128xbf16>,
    return
  }
  func.func @transform_0(%arg0: i32) -> (i32, i32, i32) {
    %c0_i32 = arith.constant 0 : i32
    %c0_i32_0 = arith.constant 0 : i32
    %c0_i32_1 = arith.constant 0 : i32
    return %arg0, %c0_i32, %c0_i32_0 : i32, i32, i32
  }
  func.func @transform_1(%arg0: i32) -> (i32, i32, i32) {
    %c0_i32 = arith.constant 0 : i32
    %c0_i32_0 = arith.constant 0 : i32
    %c0_i32_1 = arith.constant 0 : i32
    return %arg0, %c0_i32, %c0_i32_0 : i32, i32, i32
  }
  func.func @transform_2(%arg0: i32) -> (i32, i32) {
    %c0_i32 = arith.constant 0 : i32
    %c0_i32_0 = arith.constant 0 : i32
    %c0_i32_1 = arith.constant 0 : i32
    return %c0_i32, %c0_i32_0 : i32, i32
  }
  func.func @transform_3(%arg0: i32) -> (i32, i32) {
    %c0_i32 = arith.constant 0 : i32
    %c0_i32_0 = arith.constant 0 : i32
    %c0_i32_1 = arith.constant 0 : i32
    return %c0_i32, %c0_i32_0 : i32, i32
  }
  func.func @transform_4(%arg0: i32) -> (i32, i32) {
    %c0_i32 = arith.constant 0 : i32
    %c0_i32_0 = arith.constant 0 : i32
    %c0_i32_1 = arith.constant 0 : i32
    return %c0_i32, %c0_i32_0 : i32, i32
  }
  func.func @transform_5(%arg0: i32) -> (i32, i32) {
    %c0_i32 = arith.constant 0 : i32
    %c0_i32_0 = arith.constant 0 : i32
    %c0_i32_1 = arith.constant 0 : i32
    return %c0_i32, %c0_i32_0 : i32, i32
  }
  func.func @transform_6(%arg0: i32) -> (i32, i32) {
    %c0_i32 = arith.constant 0 : i32
    %c0_i32_0 = arith.constant 0 : i32
    %c0_i32_1 = arith.constant 0 : i32
    return %c0_i32, %c0_i32_0 : i32, i32
  }
  func.func @transform_7(%arg0: i32) -> (i32, i32) {
    %c0_i32 = arith.constant 0 : i32
    %c0_i32_0 = arith.constant 0 : i32
    %c0_i32_1 = arith.constant 0 : i32
    return %c0_i32, %c0_i32_0 : i32, i32
  }
  func.func @transform_8(%arg0: i32) -> (i32, i32) {
    %c0_i32 = arith.constant 0 : i32
    %c0_i32_0 = arith.constant 0 : i32
    %c0_i32_1 = arith.constant 0 : i32
    return %c0_i32, %c0_i32_0 : i32, i32
  }
  func.func @transform_9(%arg0: i32) -> (i32, i32) {
    %c0_i32 = arith.constant 0 : i32
    %c0_i32_0 = arith.constant 0 : i32
    %c0_i32_1 = arith.constant 0 : i32
    return %c0_i32, %c0_i32_0 : i32, i32
  }
  func.func @transform_10(%arg0: i32) -> (i32, i32) {
    %c0_i32 = arith.constant 0 : i32
    %c0_i32_0 = arith.constant 0 : i32
    %c0_i32_1 = arith.constant 0 : i32
    return %c0_i32, %c0_i32_0 : i32, i32
  }
  func.func @transform_11(%arg0: i32) -> (i32, i32) {
    %c0_i32 = arith.constant 0 : i32
    %c0_i32_0 = arith.constant 0 : i32
    %c0_i32_1 = arith.constant 0 : i32
    return %c0_i32, %c0_i32_0 : i32, i32
  }
  func.func @transform_12(%arg0: i32) -> (i32, i32) {
    %c0_i32 = arith.constant 0 : i32
    %c0_i32_0 = arith.constant 0 : i32
    %c0_i32_1 = arith.constant 0 : i32
    return %c0_i32, %c0_i32_0 : i32, i32
  }
  func.func @transform_13(%arg0: i32) -> (i32, i32) {
    %c0_i32 = arith.constant 0 : i32
    %c0_i32_0 = arith.constant 0 : i32
    %c0_i32_1 = arith.constant 0 : i32
    return %c0_i32, %c0_i32_0 : i32, i32
  }
  func.func @transform_14(%arg0: i32) -> (i32, i32, i32) {
    %c0_i32 = arith.constant 0 : i32
    %c0_i32_0 = arith.constant 0 : i32
    %c0_i32_1 = arith.constant 0 : i32
    return %arg0, %c0_i32, %c0_i32_0 : i32, i32, i32
  }
}

module attributes {stable_mosaic.version = 11 : i64} {
  func.func @_encoder_layer_kernel(%arg0: i32, %arg1: memref<2x16x128xbf16, #tpu.memory_space<vmem>>, %arg2: memref<2x16x16xbf16, #tpu.memory_space<vmem>>, %arg3: memref<128x384xbf16, #tpu.memory_space<vmem>>, %arg4: memref<1x384xf32, #tpu.memory_space<vmem>>, %arg5: memref<128x128xbf16, #tpu.memory_space<vmem>>, %arg6: memref<1x128xf32, #tpu.memory_space<vmem>>, %arg7: memref<1x128xf32, #tpu.memory_space<vmem>>, %arg8: memref<1x128xf32, #tpu.memory_space<vmem>>, %arg9: memref<128x256xbf16, #tpu.memory_space<vmem>>, %arg10: memref<1x256xf32, #tpu.memory_space<vmem>>, %arg11: memref<256x128xbf16, #tpu.memory_space<vmem>>, %arg12: memref<1x128xf32, #tpu.memory_space<vmem>>, %arg13: memref<1x128xf32, #tpu.memory_space<vmem>>, %arg14: memref<1x128xf32, #tpu.memory_space<vmem>>, %arg15: memref<2x16x128xbf16, #tpu.memory_space<vmem>>) attributes {dimension_semantics = [#tpu.dimension_semantics<parallel>], iteration_bounds = array<i64: 1>, scalar_prefetch = 0 : i64, scratch_operands = 0 : i64, tpu.core_type = #tpu.core_type<tc>, window_params = [{transform_indices = @transform_0, window_bounds = array<i64: 2, 16, 128>}, {transform_indices = @transform_1, window_bounds = array<i64: 2, 16, 16>}, {pipeline_mode = #tpu.pipeline_mode<synchronous>, transform_indices = @transform_2, window_bounds = array<i64: 128, 384>}, {pipeline_mode = #tpu.pipeline_mode<synchronous>, transform_indices = @transform_3, window_bounds = array<i64: 1, 384>}, {pipeline_mode = #tpu.pipeline_mode<synchronous>, transform_indices = @transform_4, window_bounds = array<i64: 128, 128>}, {pipeline_mode = #tpu.pipeline_mode<synchronous>, transform_indices = @transform_5, window_bounds = array<i64: 1, 128>}, {pipeline_mode = #tpu.pipeline_mode<synchronous>, transform_indices = @transform_6, window_bounds = array<i64: 1, 128>}, {pipeline_mode = #tpu.pipeline_mode<synchronous>, transform_indices = @transform_7, window_bounds = array<i64: 1, 128>}, {pipeline_mode = #tpu.pipeline_mode<synchronous>, transform_indices = @transform_8, window_bounds = array<i64: 128, 256>}, {pipeline_mode = #tpu.pipeline_mode<synchronous>, transform_indices = @transform_9, window_bounds = array<i64: 1, 256>}, {pipeline_mode = #tpu.pipeline_mode<synchronous>, transform_indices = @transform_10, window_bounds = array<i64: 256, 128>}, {pipeline_mode = #tpu.pipeline_mode<synchronous>, transform_indices = @transform_11, window_bounds = array<i64: 1, 128>}, {pipeline_mode = #tpu.pipeline_mode<synchronous>, transform_indices = @transform_12, window_bounds = array<i64: 1, 128>}, {pipeline_mode = #tpu.pipeline_mode<synchronous>, transform_indices = @transform_13, window_bounds = array<i64: 1, 128>}, {transform_indices = @transform_14, window_bounds = array<i64: 2, 16, 128>}]} {
    %c0 = arith.constant 0 : index
    %c0_0 = arith.constant 0 : index
    %c0_1 = arith.constant 0 : index
    %0 = vector.load %arg1[%c0, %c0_0, %c0_1] : memref<2x16x128xbf16, #tpu.memory_space<vmem>>, vector<2x16x128xbf16>
    %1 = vector.shape_cast %0 : vector<2x16x128xbf16> to vector<32x128xbf16>
    %2 = arith.extf %1 : vector<32x128xbf16> to vector<32x128xf32>
    %c0_2 = arith.constant 0 : index
    %c0_3 = arith.constant 0 : index
    %3 = vector.load %arg3[%c0_2, %c0_3] : memref<128x384xbf16, #tpu.memory_space<vmem>>, vector<128x384xbf16>
    %cst = arith.constant dense<0.000000e+00> : vector<32x384xf32>
    %4 = tpu.matmul %1, %3, %cst {dimension_numbers = #tpu.dot_dimension_numbers<[1], [0], [0], [1], [0, 0, 1, 1], [], []>} : vector<32x128xbf16>, vector<128x384xbf16>, vector<32x384xf32> -> vector<32x384xf32>
    %c0_4 = arith.constant 0 : index
    %c0_5 = arith.constant 0 : index
    %5 = vector.load %arg4[%c0_4, %c0_5] : memref<1x384xf32, #tpu.memory_space<vmem>>, vector<1x384xf32>
    %6 = vector.broadcast %5 : vector<1x384xf32> to vector<32x384xf32>
    %7 = arith.addf %4, %6 : vector<32x384xf32>
    %8 = vector.extract_strided_slice %7 {offsets = [0, 0], sizes = [32, 128], strides = [1, 1]} : vector<32x384xf32> to vector<32x128xf32>
    %cst_6 = arith.constant 0.176776692 : f32
    %9 = vector.broadcast %cst_6 : f32 to vector<32x128xf32>
    %10 = arith.mulf %8, %9 : vector<32x128xf32>
    %11 = arith.truncf %10 : vector<32x128xf32> to vector<32x128xbf16>
    %12 = vector.shape_cast %11 : vector<32x128xbf16> to vector<2x16x128xbf16>
    %13 = vector.extract_strided_slice %7 {offsets = [0, 128], sizes = [32, 128], strides = [1, 1]} : vector<32x384xf32> to vector<32x128xf32>
    %14 = arith.truncf %13 : vector<32x128xf32> to vector<32x128xbf16>
    %15 = vector.shape_cast %14 : vector<32x128xbf16> to vector<2x16x128xbf16>
    %16 = vector.extract_strided_slice %7 {offsets = [0, 256], sizes = [32, 128], strides = [1, 1]} : vector<32x384xf32> to vector<32x128xf32>
    %17 = arith.truncf %16 : vector<32x128xf32> to vector<32x128xbf16>
    %18 = vector.shape_cast %17 : vector<32x128xbf16> to vector<2x16x128xbf16>
    %c0_7 = arith.constant 0 : index
    %c0_8 = arith.constant 0 : index
    %c0_9 = arith.constant 0 : index
    %19 = vector.load %arg2[%c0_7, %c0_8, %c0_9] : memref<2x16x16xbf16, #tpu.memory_space<vmem>>, vector<2x16x16xbf16>
    %20 = arith.extf %19 : vector<2x16x16xbf16> to vector<2x16x16xf32>
    %c0_10 = arith.constant 0 : index
    %c0_11 = arith.constant 0 : index
    %21 = vector.load %arg5[%c0_10, %c0_11] : memref<128x128xbf16, #tpu.memory_space<vmem>>, vector<128x128xbf16>
    %c0_12 = arith.constant 0 : index
    %c0_13 = arith.constant 0 : index
    %22 = vector.load %arg6[%c0_12, %c0_13] : memref<1x128xf32, #tpu.memory_space<vmem>>, vector<1x128xf32>
    %23 = vector.extract_strided_slice %12 {offsets = [0, 0, 0], sizes = [2, 16, 32], strides = [1, 1, 1]} : vector<2x16x128xbf16> to vector<2x16x32xbf16>
    %24 = vector.extract_strided_slice %15 {offsets = [0, 0, 0], sizes = [2, 16, 32], strides = [1, 1, 1]} : vector<2x16x128xbf16> to vector<2x16x32xbf16>
    %25 = vector.extract_strided_slice %18 {offsets = [0, 0, 0], sizes = [2, 16, 32], strides = [1, 1, 1]} : vector<2x16x128xbf16> to vector<2x16x32xbf16>
    "tpu.trace_start"() <{level = 10 : i32, message = "bqd,bkd->bqk"}> : () -> ()
    %cst_14 = arith.constant dense<0.000000e+00> : vector<2x16x16xf32>
    %26 = tpu.matmul %23, %24, %cst_14 {dimension_numbers = #tpu.dot_dimension_numbers<[2], [2], [1], [1], [0, 0, 0, 1, 1, 1], [0], [0]>} : vector<2x16x32xbf16>, vector<2x16x32xbf16>, vector<2x16x16xf32> -> vector<2x16x16xf32>
    "tpu.trace_stop"() : () -> ()
    %27 = arith.addf %26, %20 : vector<2x16x16xf32>
    %cst_15 = arith.constant dense<0xFF800000> : vector<2x16xf32>
    %28 = vector.multi_reduction <maximumf>, %27, %cst_15 [2] : vector<2x16x16xf32> to vector<2x16xf32>
    %29 = vector.shape_cast %28 : vector<2x16xf32> to vector<2x16x1xf32>
    %30 = vector.broadcast %29 : vector<2x16x1xf32> to vector<2x16x16xf32>
    %31 = arith.subf %27, %30 : vector<2x16x16xf32>
    %32 = math.exp %31 : vector<2x16x16xf32>
    %cst_16 = arith.constant dense<0.000000e+00> : vector<2x16xf32>
    %33 = vector.multi_reduction <add>, %32, %cst_16 [2] : vector<2x16x16xf32> to vector<2x16xf32>
    %34 = vector.shape_cast %33 : vector<2x16xf32> to vector<2x16x1xf32>
    %35 = tpu.reciprocal %34 {approx = true} : vector<2x16x1xf32> -> vector<2x16x1xf32>
    %36 = vector.broadcast %35 : vector<2x16x1xf32> to vector<2x16x16xf32>
    %37 = arith.mulf %32, %36 : vector<2x16x16xf32>
    %38 = arith.truncf %37 : vector<2x16x16xf32> to vector<2x16x16xbf16>
    "tpu.trace_start"() <{level = 10 : i32, message = "bqk,bkd->bqd"}> : () -> ()
    %cst_17 = arith.constant dense<0.000000e+00> : vector<2x16x32xf32>
    %39 = tpu.matmul %38, %25, %cst_17 {dimension_numbers = #tpu.dot_dimension_numbers<[2], [1], [1], [2], [0, 0, 0, 1, 1, 2], [0], [0]>} : vector<2x16x16xbf16>, vector<2x16x32xbf16>, vector<2x16x32xf32> -> vector<2x16x32xf32>
    "tpu.trace_stop"() : () -> ()
    %40 = vector.shape_cast %39 : vector<2x16x32xf32> to vector<32x32xf32>
    %41 = arith.truncf %40 : vector<32x32xf32> to vector<32x32xbf16>
    %42 = vector.extract_strided_slice %21 {offsets = [0, 0], sizes = [32, 128], strides = [1, 1]} : vector<128x128xbf16> to vector<32x128xbf16>
    %cst_18 = arith.constant dense<0.000000e+00> : vector<32x128xf32>
    %43 = tpu.matmul %41, %42, %cst_18 {dimension_numbers = #tpu.dot_dimension_numbers<[1], [0], [0], [1], [0, 0, 1, 1], [], []>} : vector<32x32xbf16>, vector<32x128xbf16>, vector<32x128xf32> -> vector<32x128xf32>
    %44 = vector.broadcast %22 : vector<1x128xf32> to vector<32x128xf32>
    %45 = arith.addf %44, %43 : vector<32x128xf32>
    %46 = vector.extract_strided_slice %12 {offsets = [0, 0, 32], sizes = [2, 16, 32], strides = [1, 1, 1]} : vector<2x16x128xbf16> to vector<2x16x32xbf16>
    %47 = vector.extract_strided_slice %15 {offsets = [0, 0, 32], sizes = [2, 16, 32], strides = [1, 1, 1]} : vector<2x16x128xbf16> to vector<2x16x32xbf16>
    %48 = vector.extract_strided_slice %18 {offsets = [0, 0, 32], sizes = [2, 16, 32], strides = [1, 1, 1]} : vector<2x16x128xbf16> to vector<2x16x32xbf16>
    "tpu.trace_start"() <{level = 10 : i32, message = "bqd,bkd->bqk"}> : () -> ()
    %cst_19 = arith.constant dense<0.000000e+00> : vector<2x16x16xf32>
    %49 = tpu.matmul %46, %47, %cst_19 {dimension_numbers = #tpu.dot_dimension_numbers<[2], [2], [1], [1], [0, 0, 0, 1, 1, 1], [0], [0]>} : vector<2x16x32xbf16>, vector<2x16x32xbf16>, vector<2x16x16xf32> -> vector<2x16x16xf32>
    "tpu.trace_stop"() : () -> ()
    %50 = arith.addf %49, %20 : vector<2x16x16xf32>
    %cst_20 = arith.constant dense<0xFF800000> : vector<2x16xf32>
    %51 = vector.multi_reduction <maximumf>, %50, %cst_20 [2] : vector<2x16x16xf32> to vector<2x16xf32>
    %52 = vector.shape_cast %51 : vector<2x16xf32> to vector<2x16x1xf32>
    %53 = vector.broadcast %52 : vector<2x16x1xf32> to vector<2x16x16xf32>
    %54 = arith.subf %50, %53 : vector<2x16x16xf32>
    %55 = math.exp %54 : vector<2x16x16xf32>
    %cst_21 = arith.constant dense<0.000000e+00> : vector<2x16xf32>
    %56 = vector.multi_reduction <add>, %55, %cst_21 [2] : vector<2x16x16xf32> to vector<2x16xf32>
    %57 = vector.shape_cast %56 : vector<2x16xf32> to vector<2x16x1xf32>
    %58 = tpu.reciprocal %57 {approx = true} : vector<2x16x1xf32> -> vector<2x16x1xf32>
    %59 = vector.broadcast %58 : vector<2x16x1xf32> to vector<2x16x16xf32>
    %60 = arith.mulf %55, %59 : vector<2x16x16xf32>
    %61 = arith.truncf %60 : vector<2x16x16xf32> to vector<2x16x16xbf16>
    "tpu.trace_start"() <{level = 10 : i32, message = "bqk,bkd->bqd"}> : () -> ()
    %cst_22 = arith.constant dense<0.000000e+00> : vector<2x16x32xf32>
    %62 = tpu.matmul %61, %48, %cst_22 {dimension_numbers = #tpu.dot_dimension_numbers<[2], [1], [1], [2], [0, 0, 0, 1, 1, 2], [0], [0]>} : vector<2x16x16xbf16>, vector<2x16x32xbf16>, vector<2x16x32xf32> -> vector<2x16x32xf32>
    "tpu.trace_stop"() : () -> ()
    %63 = vector.shape_cast %62 : vector<2x16x32xf32> to vector<32x32xf32>
    %64 = arith.truncf %63 : vector<32x32xf32> to vector<32x32xbf16>
    %65 = vector.extract_strided_slice %21 {offsets = [32, 0], sizes = [32, 128], strides = [1, 1]} : vector<128x128xbf16> to vector<32x128xbf16>
    %cst_23 = arith.constant dense<0.000000e+00> : vector<32x128xf32>
    %66 = tpu.matmul %64, %65, %cst_23 {dimension_numbers = #tpu.dot_dimension_numbers<[1], [0], [0], [1], [0, 0, 1, 1], [], []>} : vector<32x32xbf16>, vector<32x128xbf16>, vector<32x128xf32> -> vector<32x128xf32>
    %67 = arith.addf %45, %66 : vector<32x128xf32>
    %68 = vector.extract_strided_slice %12 {offsets = [0, 0, 64], sizes = [2, 16, 32], strides = [1, 1, 1]} : vector<2x16x128xbf16> to vector<2x16x32xbf16>
    %69 = vector.extract_strided_slice %15 {offsets = [0, 0, 64], sizes = [2, 16, 32], strides = [1, 1, 1]} : vector<2x16x128xbf16> to vector<2x16x32xbf16>
    %70 = vector.extract_strided_slice %18 {offsets = [0, 0, 64], sizes = [2, 16, 32], strides = [1, 1, 1]} : vector<2x16x128xbf16> to vector<2x16x32xbf16>
    "tpu.trace_start"() <{level = 10 : i32, message = "bqd,bkd->bqk"}> : () -> ()
    %cst_24 = arith.constant dense<0.000000e+00> : vector<2x16x16xf32>
    %71 = tpu.matmul %68, %69, %cst_24 {dimension_numbers = #tpu.dot_dimension_numbers<[2], [2], [1], [1], [0, 0, 0, 1, 1, 1], [0], [0]>} : vector<2x16x32xbf16>, vector<2x16x32xbf16>, vector<2x16x16xf32> -> vector<2x16x16xf32>
    "tpu.trace_stop"() : () -> ()
    %72 = arith.addf %71, %20 : vector<2x16x16xf32>
    %cst_25 = arith.constant dense<0xFF800000> : vector<2x16xf32>
    %73 = vector.multi_reduction <maximumf>, %72, %cst_25 [2] : vector<2x16x16xf32> to vector<2x16xf32>
    %74 = vector.shape_cast %73 : vector<2x16xf32> to vector<2x16x1xf32>
    %75 = vector.broadcast %74 : vector<2x16x1xf32> to vector<2x16x16xf32>
    %76 = arith.subf %72, %75 : vector<2x16x16xf32>
    %77 = math.exp %76 : vector<2x16x16xf32>
    %cst_26 = arith.constant dense<0.000000e+00> : vector<2x16xf32>
    %78 = vector.multi_reduction <add>, %77, %cst_26 [2] : vector<2x16x16xf32> to vector<2x16xf32>
    %79 = vector.shape_cast %78 : vector<2x16xf32> to vector<2x16x1xf32>
    %80 = tpu.reciprocal %79 {approx = true} : vector<2x16x1xf32> -> vector<2x16x1xf32>
    %81 = vector.broadcast %80 : vector<2x16x1xf32> to vector<2x16x16xf32>
    %82 = arith.mulf %77, %81 : vector<2x16x16xf32>
    %83 = arith.truncf %82 : vector<2x16x16xf32> to vector<2x16x16xbf16>
    "tpu.trace_start"() <{level = 10 : i32, message = "bqk,bkd->bqd"}> : () -> ()
    %cst_27 = arith.constant dense<0.000000e+00> : vector<2x16x32xf32>
    %84 = tpu.matmul %83, %70, %cst_27 {dimension_numbers = #tpu.dot_dimension_numbers<[2], [1], [1], [2], [0, 0, 0, 1, 1, 2], [0], [0]>} : vector<2x16x16xbf16>, vector<2x16x32xbf16>, vector<2x16x32xf32> -> vector<2x16x32xf32>
    "tpu.trace_stop"() : () -> ()
    %85 = vector.shape_cast %84 : vector<2x16x32xf32> to vector<32x32xf32>
    %86 = arith.truncf %85 : vector<32x32xf32> to vector<32x32xbf16>
    %87 = vector.extract_strided_slice %21 {offsets = [64, 0], sizes = [32, 128], strides = [1, 1]} : vector<128x128xbf16> to vector<32x128xbf16>
    %cst_28 = arith.constant dense<0.000000e+00> : vector<32x128xf32>
    %88 = tpu.matmul %86, %87, %cst_28 {dimension_numbers = #tpu.dot_dimension_numbers<[1], [0], [0], [1], [0, 0, 1, 1], [], []>} : vector<32x32xbf16>, vector<32x128xbf16>, vector<32x128xf32> -> vector<32x128xf32>
    %89 = arith.addf %67, %88 : vector<32x128xf32>
    %90 = vector.extract_strided_slice %12 {offsets = [0, 0, 96], sizes = [2, 16, 32], strides = [1, 1, 1]} : vector<2x16x128xbf16> to vector<2x16x32xbf16>
    %91 = vector.extract_strided_slice %15 {offsets = [0, 0, 96], sizes = [2, 16, 32], strides = [1, 1, 1]} : vector<2x16x128xbf16> to vector<2x16x32xbf16>
    %92 = vector.extract_strided_slice %18 {offsets = [0, 0, 96], sizes = [2, 16, 32], strides = [1, 1, 1]} : vector<2x16x128xbf16> to vector<2x16x32xbf16>
    "tpu.trace_start"() <{level = 10 : i32, message = "bqd,bkd->bqk"}> : () -> ()
    %cst_29 = arith.constant dense<0.000000e+00> : vector<2x16x16xf32>
    %93 = tpu.matmul %90, %91, %cst_29 {dimension_numbers = #tpu.dot_dimension_numbers<[2], [2], [1], [1], [0, 0, 0, 1, 1, 1], [0], [0]>} : vector<2x16x32xbf16>, vector<2x16x32xbf16>, vector<2x16x16xf32> -> vector<2x16x16xf32>
    "tpu.trace_stop"() : () -> ()
    %94 = arith.addf %93, %20 : vector<2x16x16xf32>
    %cst_30 = arith.constant dense<0xFF800000> : vector<2x16xf32>
    %95 = vector.multi_reduction <maximumf>, %94, %cst_30 [2] : vector<2x16x16xf32> to vector<2x16xf32>
    %96 = vector.shape_cast %95 : vector<2x16xf32> to vector<2x16x1xf32>
    %97 = vector.broadcast %96 : vector<2x16x1xf32> to vector<2x16x16xf32>
    %98 = arith.subf %94, %97 : vector<2x16x16xf32>
    %99 = math.exp %98 : vector<2x16x16xf32>
    %cst_31 = arith.constant dense<0.000000e+00> : vector<2x16xf32>
    %100 = vector.multi_reduction <add>, %99, %cst_31 [2] : vector<2x16x16xf32> to vector<2x16xf32>
    %101 = vector.shape_cast %100 : vector<2x16xf32> to vector<2x16x1xf32>
    %102 = tpu.reciprocal %101 {approx = true} : vector<2x16x1xf32> -> vector<2x16x1xf32>
    %103 = vector.broadcast %102 : vector<2x16x1xf32> to vector<2x16x16xf32>
    %104 = arith.mulf %99, %103 : vector<2x16x16xf32>
    %105 = arith.truncf %104 : vector<2x16x16xf32> to vector<2x16x16xbf16>
    "tpu.trace_start"() <{level = 10 : i32, message = "bqk,bkd->bqd"}> : () -> ()
    %cst_32 = arith.constant dense<0.000000e+00> : vector<2x16x32xf32>
    %106 = tpu.matmul %105, %92, %cst_32 {dimension_numbers = #tpu.dot_dimension_numbers<[2], [1], [1], [2], [0, 0, 0, 1, 1, 2], [0], [0]>} : vector<2x16x16xbf16>, vector<2x16x32xbf16>, vector<2x16x32xf32> -> vector<2x16x32xf32>
    "tpu.trace_stop"() : () -> ()
    %107 = vector.shape_cast %106 : vector<2x16x32xf32> to vector<32x32xf32>
    %108 = arith.truncf %107 : vector<32x32xf32> to vector<32x32xbf16>
    %109 = vector.extract_strided_slice %21 {offsets = [96, 0], sizes = [32, 128], strides = [1, 1]} : vector<128x128xbf16> to vector<32x128xbf16>
    %cst_33 = arith.constant dense<0.000000e+00> : vector<32x128xf32>
    %110 = tpu.matmul %108, %109, %cst_33 {dimension_numbers = #tpu.dot_dimension_numbers<[1], [0], [0], [1], [0, 0, 1, 1], [], []>} : vector<32x32xbf16>, vector<32x128xbf16>, vector<32x128xf32> -> vector<32x128xf32>
    %111 = arith.addf %89, %110 : vector<32x128xf32>
    %112 = arith.addf %111, %2 : vector<32x128xf32>
    %c0_34 = arith.constant 0 : index
    %c0_35 = arith.constant 0 : index
    %113 = vector.load %arg7[%c0_34, %c0_35] : memref<1x128xf32, #tpu.memory_space<vmem>>, vector<1x128xf32>
    %c0_36 = arith.constant 0 : index
    %c0_37 = arith.constant 0 : index
    %114 = vector.load %arg8[%c0_36, %c0_37] : memref<1x128xf32, #tpu.memory_space<vmem>>, vector<1x128xf32>
    %cst_38 = arith.constant dense<0.000000e+00> : vector<32xf32>
    %115 = vector.multi_reduction <add>, %112, %cst_38 [1] : vector<32x128xf32> to vector<32xf32>
    %116 = vector.shape_cast %115 : vector<32xf32> to vector<32x1xf32>
    %cst_39 = arith.constant 1.280000e+02 : f32
    %117 = vector.broadcast %cst_39 : f32 to vector<32x1xf32>
    %118 = arith.divf %116, %117 : vector<32x1xf32>
    %119 = vector.broadcast %118 : vector<32x1xf32> to vector<32x128xf32>
    %120 = arith.subf %112, %119 : vector<32x128xf32>
    %121 = arith.mulf %120, %120 : vector<32x128xf32>
    %cst_40 = arith.constant dense<0.000000e+00> : vector<32xf32>
    %122 = vector.multi_reduction <add>, %121, %cst_40 [1] : vector<32x128xf32> to vector<32xf32>
    %123 = vector.shape_cast %122 : vector<32xf32> to vector<32x1xf32>
    %cst_41 = arith.constant 1.280000e+02 : f32
    %124 = vector.broadcast %cst_41 : f32 to vector<32x1xf32>
    %125 = arith.divf %123, %124 : vector<32x1xf32>
    %126 = vector.broadcast %118 : vector<32x1xf32> to vector<32x128xf32>
    %127 = arith.subf %112, %126 : vector<32x128xf32>
    %cst_42 = arith.constant 9.99999974E-6 : f32
    %128 = vector.broadcast %cst_42 : f32 to vector<32x1xf32>
    %129 = arith.addf %125, %128 : vector<32x1xf32>
    %130 = math.rsqrt %129 : vector<32x1xf32>
    %131 = vector.broadcast %130 : vector<32x1xf32> to vector<32x128xf32>
    %132 = arith.mulf %127, %131 : vector<32x128xf32>
    %133 = vector.broadcast %113 : vector<1x128xf32> to vector<32x128xf32>
    %134 = arith.mulf %132, %133 : vector<32x128xf32>
    %135 = vector.broadcast %114 : vector<1x128xf32> to vector<32x128xf32>
    %136 = arith.addf %134, %135 : vector<32x128xf32>
    %137 = arith.truncf %136 : vector<32x128xf32> to vector<32x128xbf16>
    %c0_43 = arith.constant 0 : index
    %c0_44 = arith.constant 0 : index
    %138 = vector.load %arg9[%c0_43, %c0_44] : memref<128x256xbf16, #tpu.memory_space<vmem>>, vector<128x256xbf16>
    %cst_45 = arith.constant dense<0.000000e+00> : vector<32x256xf32>
    %139 = tpu.matmul %137, %138, %cst_45 {dimension_numbers = #tpu.dot_dimension_numbers<[1], [0], [0], [1], [0, 0, 1, 1], [], []>} : vector<32x128xbf16>, vector<128x256xbf16>, vector<32x256xf32> -> vector<32x256xf32>
    %c0_46 = arith.constant 0 : index
    %c0_47 = arith.constant 0 : index
    %140 = vector.load %arg10[%c0_46, %c0_47] : memref<1x256xf32, #tpu.memory_space<vmem>>, vector<1x256xf32>
    %141 = vector.broadcast %140 : vector<1x256xf32> to vector<32x256xf32>
    %142 = arith.addf %139, %141 : vector<32x256xf32>
    %cst_48 = arith.constant 0.000000e+00 : f32
    %143 = vector.broadcast %cst_48 : f32 to vector<32x256xf32>
    %144 = arith.maximumf %142, %143 : vector<32x256xf32>
    %145 = arith.truncf %144 : vector<32x256xf32> to vector<32x256xbf16>
    %c0_49 = arith.constant 0 : index
    %c0_50 = arith.constant 0 : index
    %146 = vector.load %arg11[%c0_49, %c0_50] : memref<256x128xbf16, #tpu.memory_space<vmem>>, vector<256x128xbf16>
    %cst_51 = arith.constant dense<0.000000e+00> : vector<32x128xf32>
    %147 = tpu.matmul %145, %146, %cst_51 {dimension_numbers = #tpu.dot_dimension_numbers<[1], [0], [0], [1], [0, 0, 1, 1], [], []>} : vector<32x256xbf16>, vector<256x128xbf16>, vector<32x128xf32> -> vector<32x128xf32>
    %c0_52 = arith.constant 0 : index
    %c0_53 = arith.constant 0 : index
    %148 = vector.load %arg12[%c0_52, %c0_53] : memref<1x128xf32, #tpu.memory_space<vmem>>, vector<1x128xf32>
    %149 = vector.broadcast %148 : vector<1x128xf32> to vector<32x128xf32>
    %150 = arith.addf %147, %149 : vector<32x128xf32>
    %151 = arith.addf %150, %136 : vector<32x128xf32>
    %c0_54 = arith.constant 0 : index
    %c0_55 = arith.constant 0 : index
    %152 = vector.load %arg13[%c0_54, %c0_55] : memref<1x128xf32, #tpu.memory_space<vmem>>, vector<1x128xf32>
    %c0_56 = arith.constant 0 : index
    %c0_57 = arith.constant 0 : index
    %153 = vector.load %arg14[%c0_56, %c0_57] : memref<1x128xf32, #tpu.memory_space<vmem>>, vector<1x128xf32>
    %cst_58 = arith.constant dense<0.000000e+00> : vector<32xf32>
    %154 = vector.multi_reduction <add>, %151, %cst_58 [1] : vector<32x128xf32> to vector<32xf32>
    %155 = vector.shape_cast %154 : vector<32xf32> to vector<32x1xf32>
    %cst_59 = arith.constant 1.280000e+02 : f32
    %156 = vector.broadcast %cst_59 : f32 to vector<32x1xf32>
    %157 = arith.divf %155, %156 : vector<32x1xf32>
    %158 = vector.broadcast %157 : vector<32x1xf32> to vector<32x128xf32>
    %159 = arith.subf %151, %158 : vector<32x128xf32>
    %160 = arith.mulf %159, %159 : vector<32x128xf32>
    %cst_60 = arith.constant dense<0.000000e+00> : vector<32xf32>
    %161 = vector.multi_reduction <add>, %160, %cst_60 [1] : vector<32x128xf32> to vector<32xf32>
    %162 = vector.shape_cast %161 : vector<32xf32> to vector<32x1xf32>
    %cst_61 = arith.constant 1.280000e+02 : f32
    %163 = vector.broadcast %cst_61 : f32 to vector<32x1xf32>
    %164 = arith.divf %162, %163 : vector<32x1xf32>
    %165 = vector.broadcast %157 : vector<32x1xf32> to vector<32x128xf32>
    %166 = arith.subf %151, %165 : vector<32x128xf32>
    %cst_62 = arith.constant 9.99999974E-6 : f32
    %167 = vector.broadcast %cst_62 : f32 to vector<32x1xf32>
    %168 = arith.addf %164, %167 : vector<32x1xf32>
    %169 = math.rsqrt %168 : vector<32x1xf32>
    %170 = vector.broadcast %169 : vector<32x1xf32> to vector<32x128xf32>
    %171 = arith.mulf %166, %170 : vector<32x128xf32>
    %172 = vector.broadcast %152 : vector<1x128xf32> to vector<32x128xf32>
    %173 = arith.mulf %171, %172 : vector<32x128xf32>
    %174 = vector.broadcast %153 : vector<1x128xf32> to vector<32x128xf32>
    %175 = arith.addf %173, %174 : vector<32x128xf32>
    %176 = vector.shape_cast %175 : vector<32x128xf32> to vector<2x16x128xf32>
    %177 = arith.truncf %176 : vector<2x16x128xf32> to vector<2x16x128xbf16>
    %c0_63 = arith.constant 0 : index
    %c0_64 = arith.constant 0 : index
    %c0_65 = arith.constant 0 : index
    %178 = vector.load %arg15[%c0_63, %c0_64, %c0_65] : memref<2x16x128xbf16, #tpu.memory_space<vmem>>, vector<2x16x128xbf16>
    tpu.vector_store %arg15[%c0_63, %c0_64, %c0_65], %177 {strides = array<i32>} : memref<2x16x128xbf16, #tpu.memory_space<vmem>>, vector<2x16x128xbf16>,
    return
  }
  func.func @transform_0(%arg0: i32) -> (i32, i32, i32) {
    %c0_i32 = arith.constant 0 : i32
    %c0_i32_0 = arith.constant 0 : i32
    %c0_i32_1 = arith.constant 0 : i32
    return %arg0, %c0_i32, %c0_i32_0 : i32, i32, i32
  }
  func.func @transform_1(%arg0: i32) -> (i32, i32, i32) {
    %c0_i32 = arith.constant 0 : i32
    %c0_i32_0 = arith.constant 0 : i32
    %c0_i32_1 = arith.constant 0 : i32
    return %arg0, %c0_i32, %c0_i32_0 : i32, i32, i32
  }
  func.func @transform_2(%arg0: i32) -> (i32, i32) {
    %c0_i32 = arith.constant 0 : i32
    %c0_i32_0 = arith.constant 0 : i32
    %c0_i32_1 = arith.constant 0 : i32
    return %c0_i32, %c0_i32_0 : i32, i32
  }
  func.func @transform_3(%arg0: i32) -> (i32, i32) {
    %c0_i32 = arith.constant 0 : i32
    %c0_i32_0 = arith.constant 0 : i32
    %c0_i32_1 = arith.constant 0 : i32
    return %c0_i32, %c0_i32_0 : i32, i32
  }
  func.func @transform_4(%arg0: i32) -> (i32, i32) {
    %c0_i32 = arith.constant 0 : i32
    %c0_i32_0 = arith.constant 0 : i32
    %c0_i32_1 = arith.constant 0 : i32
    return %c0_i32, %c0_i32_0 : i32, i32
  }
  func.func @transform_5(%arg0: i32) -> (i32, i32) {
    %c0_i32 = arith.constant 0 : i32
    %c0_i32_0 = arith.constant 0 : i32
    %c0_i32_1 = arith.constant 0 : i32
    return %c0_i32, %c0_i32_0 : i32, i32
  }
  func.func @transform_6(%arg0: i32) -> (i32, i32) {
    %c0_i32 = arith.constant 0 : i32
    %c0_i32_0 = arith.constant 0 : i32
    %c0_i32_1 = arith.constant 0 : i32
    return %c0_i32, %c0_i32_0 : i32, i32
  }
  func.func @transform_7(%arg0: i32) -> (i32, i32) {
    %c0_i32 = arith.constant 0 : i32
    %c0_i32_0 = arith.constant 0 : i32
    %c0_i32_1 = arith.constant 0 : i32
    return %c0_i32, %c0_i32_0 : i32, i32
  }
  func.func @transform_8(%arg0: i32) -> (i32, i32) {
    %c0_i32 = arith.constant 0 : i32
    %c0_i32_0 = arith.constant 0 : i32
    %c0_i32_1 = arith.constant 0 : i32
    return %c0_i32, %c0_i32_0 : i32, i32
  }
  func.func @transform_9(%arg0: i32) -> (i32, i32) {
    %c0_i32 = arith.constant 0 : i32
    %c0_i32_0 = arith.constant 0 : i32
    %c0_i32_1 = arith.constant 0 : i32
    return %c0_i32, %c0_i32_0 : i32, i32
  }
  func.func @transform_10(%arg0: i32) -> (i32, i32) {
    %c0_i32 = arith.constant 0 : i32
    %c0_i32_0 = arith.constant 0 : i32
    %c0_i32_1 = arith.constant 0 : i32
    return %c0_i32, %c0_i32_0 : i32, i32
  }
  func.func @transform_11(%arg0: i32) -> (i32, i32) {
    %c0_i32 = arith.constant 0 : i32
    %c0_i32_0 = arith.constant 0 : i32
    %c0_i32_1 = arith.constant 0 : i32
    return %c0_i32, %c0_i32_0 : i32, i32
  }
  func.func @transform_12(%arg0: i32) -> (i32, i32) {
    %c0_i32 = arith.constant 0 : i32
    %c0_i32_0 = arith.constant 0 : i32
    %c0_i32_1 = arith.constant 0 : i32
    return %c0_i32, %c0_i32_0 : i32, i32
  }
  func.func @transform_13(%arg0: i32) -> (i32, i32) {
    %c0_i32 = arith.constant 0 : i32
    %c0_i32_0 = arith.constant 0 : i32
    %c0_i32_1 = arith.constant 0 : i32
    return %c0_i32, %c0_i32_0 : i32, i32
  }
  func.func @transform_14(%arg0: i32) -> (i32, i32, i32) {
    %c0_i32 = arith.constant 0 : i32
    %c0_i32_0 = arith.constant 0 : i32
    %c0_i32_1 = arith.constant 0 : i32
    return %arg0, %c0_i32, %c0_i32_0 : i32, i32, i32
  }
}

module attributes {stable_mosaic.version = 11 : i64} {
  func.func @_mlp_kernel(%arg0: i32, %arg1: memref<32x128xbf16, #tpu.memory_space<vmem>>, %arg2: memref<128x128xbf16, #tpu.memory_space<vmem>>, %arg3: memref<1x128xf32, #tpu.memory_space<vmem>>, %arg4: memref<128x128xbf16, #tpu.memory_space<vmem>>, %arg5: memref<1x128xf32, #tpu.memory_space<vmem>>, %arg6: memref<32x128xf32, #tpu.memory_space<vmem>>) attributes {dimension_semantics = [#tpu.dimension_semantics<parallel>], iteration_bounds = array<i64: 1>, scalar_prefetch = 0 : i64, scratch_operands = 0 : i64, tpu.core_type = #tpu.core_type<tc>, window_params = [{transform_indices = @transform_0, window_bounds = array<i64: 32, 128>}, {pipeline_mode = #tpu.pipeline_mode<synchronous>, transform_indices = @transform_1, window_bounds = array<i64: 128, 128>}, {pipeline_mode = #tpu.pipeline_mode<synchronous>, transform_indices = @transform_2, window_bounds = array<i64: 1, 128>}, {pipeline_mode = #tpu.pipeline_mode<synchronous>, transform_indices = @transform_3, window_bounds = array<i64: 128, 128>}, {pipeline_mode = #tpu.pipeline_mode<synchronous>, transform_indices = @transform_4, window_bounds = array<i64: 1, 128>}, {transform_indices = @transform_5, window_bounds = array<i64: 32, 128>}]} {
    %c0 = arith.constant 0 : index
    %c0_0 = arith.constant 0 : index
    %0 = vector.load %arg1[%c0, %c0_0] : memref<32x128xbf16, #tpu.memory_space<vmem>>, vector<32x128xbf16>
    %c0_1 = arith.constant 0 : index
    %c0_2 = arith.constant 0 : index
    %1 = vector.load %arg2[%c0_1, %c0_2] : memref<128x128xbf16, #tpu.memory_space<vmem>>, vector<128x128xbf16>
    %c0_3 = arith.constant 0 : index
    %c0_4 = arith.constant 0 : index
    %2 = vector.load %arg3[%c0_3, %c0_4] : memref<1x128xf32, #tpu.memory_space<vmem>>, vector<1x128xf32>
    %cst = arith.constant dense<0.000000e+00> : vector<32x128xf32>
    %3 = tpu.matmul %0, %1, %cst {dimension_numbers = #tpu.dot_dimension_numbers<[1], [0], [0], [1], [0, 0, 1, 1], [], []>} : vector<32x128xbf16>, vector<128x128xbf16>, vector<32x128xf32> -> vector<32x128xf32>
    %4 = vector.broadcast %2 : vector<1x128xf32> to vector<32x128xf32>
    %5 = arith.addf %3, %4 : vector<32x128xf32>
    %cst_5 = arith.constant 0.000000e+00 : f32
    %6 = vector.broadcast %cst_5 : f32 to vector<32x128xf32>
    %7 = arith.maximumf %5, %6 : vector<32x128xf32>
    %c0_6 = arith.constant 0 : index
    %c0_7 = arith.constant 0 : index
    %8 = vector.load %arg4[%c0_6, %c0_7] : memref<128x128xbf16, #tpu.memory_space<vmem>>, vector<128x128xbf16>
    %c0_8 = arith.constant 0 : index
    %c0_9 = arith.constant 0 : index
    %9 = vector.load %arg5[%c0_8, %c0_9] : memref<1x128xf32, #tpu.memory_space<vmem>>, vector<1x128xf32>
    %10 = arith.truncf %7 : vector<32x128xf32> to vector<32x128xbf16>
    %cst_10 = arith.constant dense<0.000000e+00> : vector<32x128xf32>
    %11 = tpu.matmul %10, %8, %cst_10 {dimension_numbers = #tpu.dot_dimension_numbers<[1], [0], [0], [1], [0, 0, 1, 1], [], []>} : vector<32x128xbf16>, vector<128x128xbf16>, vector<32x128xf32> -> vector<32x128xf32>
    %12 = vector.broadcast %9 : vector<1x128xf32> to vector<32x128xf32>
    %13 = arith.addf %11, %12 : vector<32x128xf32>
    %c0_11 = arith.constant 0 : index
    %c0_12 = arith.constant 0 : index
    %14 = vector.load %arg6[%c0_11, %c0_12] : memref<32x128xf32, #tpu.memory_space<vmem>>, vector<32x128xf32>
    tpu.vector_store %arg6[%c0_11, %c0_12], %13 {strides = array<i32>} : memref<32x128xf32, #tpu.memory_space<vmem>>, vector<32x128xf32>,
    return
  }
  func.func @transform_0(%arg0: i32) -> (i32, i32) {
    %c0_i32 = arith.constant 0 : i32
    %c0_i32_0 = arith.constant 0 : i32
    return %arg0, %c0_i32 : i32, i32
  }
  func.func @transform_1(%arg0: i32) -> (i32, i32) {
    %c0_i32 = arith.constant 0 : i32
    %c0_i32_0 = arith.constant 0 : i32
    %c0_i32_1 = arith.constant 0 : i32
    return %c0_i32, %c0_i32_0 : i32, i32
  }
  func.func @transform_2(%arg0: i32) -> (i32, i32) {
    %c0_i32 = arith.constant 0 : i32
    %c0_i32_0 = arith.constant 0 : i32
    %c0_i32_1 = arith.constant 0 : i32
    return %c0_i32, %c0_i32_0 : i32, i32
  }
  func.func @transform_3(%arg0: i32) -> (i32, i32) {
    %c0_i32 = arith.constant 0 : i32
    %c0_i32_0 = arith.constant 0 : i32
    %c0_i32_1 = arith.constant 0 : i32
    return %c0_i32, %c0_i32_0 : i32, i32
  }
  func.func @transform_4(%arg0: i32) -> (i32, i32) {
    %c0_i32 = arith.constant 0 : i32
    %c0_i32_0 = arith.constant 0 : i32
    %c0_i32_1 = arith.constant 0 : i32
    return %c0_i32, %c0_i32_0 : i32, i32
  }
  func.func @transform_5(%arg0: i32) -> (i32, i32) {
    %c0_i32 = arith.constant 0 : i32
    %c0_i32_0 = arith.constant 0 : i32
    return %arg0, %c0_i32 : i32, i32
  }
}

</mosaic_0001>

<llo_original>
// kernel: custom_attention_transformer_block.6
$region0: #{custom_attention_transformer_block.6}
  #allocation0 [shape = 'u32[]', space=smem, size = 0x4, offset = 0x4, fixed_abs, tag = 'smem constant byte address 0x4 - core index']
  #allocation1 [shape = 'u32[144,128]{1,0:T(1,128)}', space=vmem, size = 0x12000, scoped, tag = 'internal scratch']
  %s0 = inlined_call_operand.vmem [shape: f32[32,6], index: 0, kind: input, shape index: {}]
  %s1 = inlined_call_operand.vmem [shape: bf16[6,128], index: 1, kind: input, shape index: {}]
  %s2 = inlined_call_operand.vmem [shape: f32[1,128], index: 2, kind: input, shape index: {}]
  %s3 = inlined_call_operand.vmem [shape: bf16[128,128], index: 3, kind: input, shape index: {}]
  %s4 = inlined_call_operand.vmem [shape: f32[1,128], index: 4, kind: input, shape index: {}]
  %s5 = inlined_call_operand.vmem [shape: bf16[32,128], index: 5, kind: output, shape index: {}]
  %s6 = sld [smem:[#allocation0]]
  $region30: #{custom_attention_transformer_block.6} parent=0
    _
  %s8 = ssub.s32 1, %s6
  %s9 = scalar_select 0, %s8, %s6
  // Predicated region
  $region2: #{custom_attention_transformer_block.6} parent=0 // pred_check
    _
  $region3: #{custom_attention_transformer_block.6} parent=0 // pred_check_branch
    %11 = sbr.rel (0) target = $region5
  $region4: #{custom_attention_transformer_block.6} parent=0 // pred_region
    _
  $region5: #{custom_attention_transformer_block.6} parent=0 // pred_fallthru
    _
  // Predicated region
  $region6: #{custom_attention_transformer_block.6} parent=0 // pred_check
    _
  $region7: #{custom_attention_transformer_block.6} parent=0 // pred_check_branch
    %13 = sbr.rel (0) target = $region9
  $region8: #{custom_attention_transformer_block.6} parent=0 // pred_region
    _
  $region9: #{custom_attention_transformer_block.6} parent=0 // pred_fallthru
    _
  // Predicated region
  $region10: #{custom_attention_transformer_block.6} parent=0 // pred_check
    _
  $region11: #{custom_attention_transformer_block.6} parent=0 // pred_check_branch
    %15 = sbr.rel (0) target = $region13
  $region12: #{custom_attention_transformer_block.6} parent=0 // pred_region
    _
  $region13: #{custom_attention_transformer_block.6} parent=0 // pred_fallthru
    _
  // Predicated region
  $region14: #{custom_attention_transformer_block.6} parent=0 // pred_check
    _
  $region15: #{custom_attention_transformer_block.6} parent=0 // pred_check_branch
    %17 = sbr.rel (0) target = $region17
  $region16: #{custom_attention_transformer_block.6} parent=0 // pred_region
    _
  $region17: #{custom_attention_transformer_block.6} parent=0 // pred_fallthru
    _
  // Predicated region
  $region18: #{custom_attention_transformer_block.6} parent=0 // pred_check
    _
  $region19: #{custom_attention_transformer_block.6} parent=0 // pred_check_branch
    %19 = sbr.rel (0) target = $region21
  $region20: #{custom_attention_transformer_block.6} parent=0 // pred_region
    _
  $region21: #{custom_attention_transformer_block.6} parent=0 // pred_fallthru
    _
  %v21 = vld [vmem:[%s0] sm:$0xff]
  %v22 = vld [vmem:[%s0 + $0x8] sm:$0xff]
  %v23 = vld [vmem:[%s0 + $0x10] sm:$0xff]
  %v24 = vld [vmem:[%s0 + $0x18] sm:$0xff]
  %v25 = vld [vmem:[%s1] sm:$0x7]
  %v26 = vld [vmem:[%s2] sm:$0x1]
  %v27 = vpack.c.bf16 %v22, %v21
  %v28 = vpack.c.bf16 %v24, %v23
  %v30 = vlaneseq
  %v31 = vshrl.u32 %v30, 7
  %v32 = vsub.s32 0, %v31
  %v33 = vrot.slane %v26, %v32
  %vm35 = vcmask 48128
  %v37 = vsel %vm35, %v27, 0
  %v40 = vsel %vm35, %v28, 0
  %vm42 = vcmask 1042432
  %v44 = vsel %vm42, %v25, 0
  %46 = vmatprep.subr.bf16.mxu0 0
  %47 = vmatpush1.bf16.msra.mxu0 0
  %48 = vmatprep.subr.bf16.mxu0 0
  %49 = vmatpush1.bf16.msra.mxu0 0
  %50 = vmatprep.subr.bf16.mxu0 0
  %51 = vmatpush1.bf16.msra.mxu0 0
  %52 = vmatprep.subr.bf16.mxu0 0
  %53 = vmatpush1.bf16.msra.mxu0 0
  %54 = vmatprep.subr.bf16.mxu0 0
  %55 = vmatpush1.bf16.msra.mxu0 0
  %56 = vmatprep.subr.bf16.mxu0 0
  %57 = vmatpush1.bf16.msra.mxu0 0
  %58 = vmatprep.subr.bf16.mxu0 0
  %59 = vmatpush1.bf16.msra.mxu0 0
  %60 = vmatprep.subr.bf16.mxu0 0
  %61 = vmatpush1.bf16.msra.mxu0 %v44
  %62 = vmatprep.subr.bf16.mxu0 0
  %63 = vmatpush2.bf16.msra.mxu0 0
  %64 = vmatprep.subr.bf16.mxu0 0
  %65 = vmatpush2.bf16.msra.mxu0 0
  %66 = vmatprep.subr.bf16.mxu0 0
  %67 = vmatpush2.bf16.msra.mxu0 0
  %68 = vmatprep.subr.bf16.mxu0 0
  %69 = vmatpush2.bf16.msra.mxu0 0
  %70 = vmatprep.subr.bf16.mxu0 0
  %71 = vmatpush2.bf16.msra.mxu0 0
  %72 = vmatprep.subr.bf16.mxu0 0
  %73 = vmatpush2.bf16.msra.mxu0 0
  %74 = vmatprep.subr.bf16.mxu0 0
  %75 = vmatpush2.bf16.msra.mxu0 0
  %76 = vmatprep.subr.bf16.mxu0 0
  %77 = vmatpush2.bf16.msra.mxu0 0
  %78 = vmatprep.mubr.bf16.mxu0 0
  %79 = vmatmul.mubr.bf16.gmra.mxu0 %v37
  %v80 = vpop.f32.mrf.mxu0
  %v81 = vadd.f32 %v33, %v80
  %v82 = vpop.f32.mrf.mxu0
  %v83 = vpop.f32.mrf.mxu0
  %v84 = vadd.f32 %v33, %v83
  %v85 = vpop.f32.mrf.mxu0
  %86 = vmatprep.mubr.bf16.mxu0 0
  %87 = vmatmul.mubr.bf16.gmra.mxu0 %v40
  %v88 = vpop.f32.mrf.mxu0
  %v89 = vadd.f32 %v33, %v88
  %v90 = vpop.f32.mrf.mxu0
  %v91 = vpop.f32.mrf.mxu0
  %v92 = vadd.f32 %v33, %v91
  %v93 = vpop.f32.mrf.mxu0
  %94 = vdwg.mxu0
  %v95 = vmax.f32 %v81, 0.0
  %v96 = vmax.f32 %v84, 0.0
  %v97 = vmax.f32 %v89, 0.0
  %v98 = vmax.f32 %v92, 0.0
  %v99 = vld [vmem:[%s3] sm:$0xf]
  %v100 = vld [vmem:[%s3 + $0x4] sm:$0xf]
  %v101 = vld [vmem:[%s3 + $0x8] sm:$0xf]
  %v102 = vld [vmem:[%s3 + $0xc] sm:$0xf]
  %v103 = vld [vmem:[%s3 + $0x10] sm:$0xf]
  %v104 = vld [vmem:[%s3 + $0x14] sm:$0xf]
  %v105 = vld [vmem:[%s3 + $0x18] sm:$0xf]
  %v106 = vld [vmem:[%s3 + $0x1c] sm:$0xf]
  %v107 = vld [vmem:[%s3 + $0x20] sm:$0xf]
  %v108 = vld [vmem:[%s3 + $0x24] sm:$0xf]
  %v109 = vld [vmem:[%s3 + $0x28] sm:$0xf]
  %v110 = vld [vmem:[%s3 + $0x2c] sm:$0xf]
  %v111 = vld [vmem:[%s3 + $0x30] sm:$0xf]
  %v112 = vld [vmem:[%s3 + $0x34] sm:$0xf]
  %v113 = vld [vmem:[%s3 + $0x38] sm:$0xf]
  %v114 = vld [vmem:[%s3 + $0x3c] sm:$0xf]
  %v115 = vld [vmem:[%s4] sm:$0x1]
  %v116 = vpack.c.bf16 %v96, %v95
  %v117 = vpack.c.bf16 %v98, %v97
  %v119 = vlaneseq
  %v120 = vshrl.u32 %v119, 7
  %v121 = vsub.s32 0, %v120
  %v122 = vrot.slane %v115, %v121
  %v140 = vunpack.c.l.b16 %v99
  %v141 = vunpack.c.l.b16 %v100
  %v142 = vunpack.c.l.b16 %v101
  %v143 = vunpack.c.l.b16 %v102
  %v144 = vunpack.c.l.b16 %v103
  %v145 = vunpack.c.l.b16 %v104
  %v146 = vunpack.c.l.b16 %v105
  %v147 = vunpack.c.l.b16 %v106
  %v148 = vunpack.c.l.b16 %v107
  %v149 = vunpack.c.l.b16 %v108
  %v150 = vunpack.c.l.b16 %v109
  %v151 = vunpack.c.l.b16 %v110
  %v152 = vunpack.c.l.b16 %v111
  %v153 = vunpack.c.l.b16 %v112
  %v154 = vunpack.c.l.b16 %v113
  %v155 = vunpack.c.l.b16 %v114
  %v156 = vpack.c.b16 %v141, %v140
  %v157 = vpack.c.b16 %v143, %v142
  %v158 = vpack.c.b16 %v145, %v144
  %v159 = vpack.c.b16 %v147, %v146
  %v160 = vpack.c.b16 %v149, %v148
  %v161 = vpack.c.b16 %v151, %v150
  %v162 = vpack.c.b16 %v153, %v152
  %v163 = vpack.c.b16 %v155, %v154
  %172 = vmatprep.subr.bf16.mxu0 0
  %173 = vmatpush1.bf16.msra.mxu0 %v163
  %174 = vmatprep.subr.bf16.mxu0 0
  %175 = vmatpush1.bf16.msra.mxu0 %v162
  %176 = vmatprep.subr.bf16.mxu0 0
  %177 = vmatpush1.bf16.msra.mxu0 %v161
  %178 = vmatprep.subr.bf16.mxu0 0
  %179 = vmatpush1.bf16.msra.mxu0 %v160
  %180 = vmatprep.subr.bf16.mxu0 0
  %181 = vmatpush1.bf16.msra.mxu0 %v159
  %182 = vmatprep.subr.bf16.mxu0 0
  %183 = vmatpush1.bf16.msra.mxu0 %v158
  %184 = vmatprep.subr.bf16.mxu0 0
  %185 = vmatpush1.bf16.msra.mxu0 %v157
  %186 = vmatprep.subr.bf16.mxu0 0
  %187 = vmatpush1.bf16.msra.mxu0 %v156
  %188 = vmatprep.subr.bf16.mxu0 0
  %189 = vmatpush2.bf16.msra.mxu0 0
  %190 = vmatprep.subr.bf16.mxu0 0
  %191 = vmatpush2.bf16.msra.mxu0 0
  %192 = vmatprep.subr.bf16.mxu0 0
  %193 = vmatpush2.bf16.msra.mxu0 0
  %194 = vmatprep.subr.bf16.mxu0 0
  %195 = vmatpush2.bf16.msra.mxu0 0
  %196 = vmatprep.subr.bf16.mxu0 0
  %197 = vmatpush2.bf16.msra.mxu0 0
  %198 = vmatprep.subr.bf16.mxu0 0
  %199 = vmatpush2.bf16.msra.mxu0 0
  %200 = vmatprep.subr.bf16.mxu0 0
  %201 = vmatpush2.bf16.msra.mxu0 0
  %202 = vmatprep.subr.bf16.mxu0 0
  %203 = vmatpush2.bf16.msra.mxu0 0
  %204 = vmatprep.mubr.bf16.mxu0 0
  %205 = vmatmul.mubr.bf16.gmra.mxu0 %v116
  %v206 = vpop.f32.mrf.mxu0
  %v207 = vadd.f32 %v122, %v206
  %v208 = vpop.f32.mrf.mxu0
  %v209 = vpop.f32.mrf.mxu0
  %v210 = vadd.f32 %v122, %v209
  %v211 = vpop.f32.mrf.mxu0
  %212 = vmatprep.mubr.bf16.mxu0 0
  %213 = vmatmul.mubr.bf16.gmra.mxu0 %v117
  %v214 = vpop.f32.mrf.mxu0
  %v215 = vadd.f32 %v122, %v214
  %v216 = vpop.f32.mrf.mxu0
  %v217 = vpop.f32.mrf.mxu0
  %v218 = vadd.f32 %v122, %v217
  %v219 = vpop.f32.mrf.mxu0
  %220 = vdwg.mxu0
  %v221 = vpack.c.bf16 %v210, %v207
  %v222 = vpack.c.bf16 %v218, %v215
  %v225 = vunpack.c.l.b16 %v221
  %v226 = vunpack.c.h.b16 %v221
  %v227 = vunpack.c.l.b16 %v222
  %v228 = vunpack.c.h.b16 %v222
  %v229 = vpack.c.b16 %v225, %v225
  %v230 = vpack.c.b16 %v226, %v226
  %v231 = vpack.c.b16 %v227, %v227
  %v232 = vpack.c.b16 %v228, %v228
  %237 = vst [vmem:[%s5] sm:$0xf] %v229
  %238 = vst [vmem:[%s5 + $0x4] sm:$0xf] %v230
  %239 = vst [vmem:[%s5 + $0x8] sm:$0xf] %v231
  %240 = vst [vmem:[%s5 + $0xc] sm:$0xf] %v232
  // Predicated region
  $region22: #{custom_attention_transformer_block.6} parent=0 // pred_check
    _
  $region23: #{custom_attention_transformer_block.6} parent=0 // pred_check_branch
    %242 = sbr.rel (0) target = $region25
  $region24: #{custom_attention_transformer_block.6} parent=0 // pred_region
    _
  $region25: #{custom_attention_transformer_block.6} parent=0 // pred_fallthru
    _
  // Predicated region
  $region26: #{custom_attention_transformer_block.6} parent=0 // pred_check
    _
  $region27: #{custom_attention_transformer_block.6} parent=0 // pred_check_branch
    %244 = sbr.rel (0) target = $region29
  $region28: #{custom_attention_transformer_block.6} parent=0 // pred_region
    _
  $region29: #{custom_attention_transformer_block.6} parent=0 // pred_fallthru
    _

// kernel: custom_attention_transformer_block.5
$region0: #{custom_attention_transformer_block.5}
  #allocation0 [shape = 'u32[]', space=smem, size = 0x4, offset = 0x4, fixed_abs, tag = 'smem constant byte address 0x4 - core index']
  #allocation1 [shape = 'u32[144,128]{1,0:T(1,128)}', space=vmem, size = 0x12000, scoped, tag = 'internal scratch']
  %s0 = inlined_call_operand.vmem [shape: f32[2,16,3], index: 0, kind: input, shape index: {}]
  %s1 = inlined_call_operand.vmem [shape: f32[2,1,16], index: 1, kind: input, shape index: {}]
  %s2 = inlined_call_operand.vmem [shape: bf16[2,16,16], index: 2, kind: output, shape index: {}]
  %s3 = sld [smem:[#allocation0]]
  $region18: #{custom_attention_transformer_block.5} parent=0
    _
  %s5 = ssub.s32 1, %s3
  %s6 = scalar_select 0, %s5, %s3
  // Predicated region
  $region2: #{custom_attention_transformer_block.5} parent=0 // pred_check
    _
  $region3: #{custom_attention_transformer_block.5} parent=0 // pred_check_branch
    %8 = sbr.rel (0) target = $region5
  $region4: #{custom_attention_transformer_block.5} parent=0 // pred_region
    _
  $region5: #{custom_attention_transformer_block.5} parent=0 // pred_fallthru
    _
  // Predicated region
  $region6: #{custom_attention_transformer_block.5} parent=0 // pred_check
    _
  $region7: #{custom_attention_transformer_block.5} parent=0 // pred_check_branch
    %10 = sbr.rel (0) target = $region9
  $region8: #{custom_attention_transformer_block.5} parent=0 // pred_region
    _
  $region9: #{custom_attention_transformer_block.5} parent=0 // pred_fallthru
    _
  %v11 = vld [vmem:[%s0] sm:$0xff]
  %v12 = vld [vmem:[%s0 + $0x8] sm:$0xff]
  %v13 = vld [vmem:[%s0 + $0x10] sm:$0xff]
  %v14 = vld [vmem:[%s0 + $0x18] sm:$0xff]
  %v15 = vld [vmem:[%s1] sm:$0x1]
  %v16 = vld [vmem:[%s1 + $0x1] sm:$0x1]
  %v17 = vmul.f32 %v11, %v11
  %v18 = vmul.f32 %v12, %v12
  %v19 = vmul.f32 %v13, %v13
  %v20 = vmul.f32 %v14, %v14
  %vm21 = vcmask 23552
  %v23 = vsel %vm21, %v11, 0
  %v26 = vsel %vm21, %v12, 0
  %28 = vmatprep.subr.mxu0 0.0
  %29 = vmatpush1.xpose.msra.mxu0 0.0
  %30 = vmatprep.subr.mxu0 0.0
  %31 = vmatpush1.xpose.msra.mxu0 0.0
  %32 = vmatprep.subr.mxu0 0.0
  %33 = vmatpush1.xpose.msra.mxu0 0.0
  %34 = vmatprep.subr.mxu0 0.0
  %35 = vmatpush1.xpose.msra.mxu0 0.0
  %36 = vmatprep.subr.mxu0 0.0
  %37 = vmatpush1.xpose.msra.mxu0 0.0
  %38 = vmatprep.subr.mxu0 0.0
  %39 = vmatpush1.xpose.msra.mxu0 0.0
  %40 = vmatprep.subr.mxu0 0.0
  %41 = vmatpush1.xpose.msra.mxu0 0.0
  %42 = vmatprep.subr.mxu0 0.0
  %43 = vmatpush1.xpose.msra.mxu0 0.0
  %44 = vmatprep.subr.mxu0 0.0
  %45 = vmatpush1.xpose.msra.mxu0 0.0
  %46 = vmatprep.subr.mxu0 0.0
  %47 = vmatpush1.xpose.msra.mxu0 0.0
  %48 = vmatprep.subr.mxu0 0.0
  %49 = vmatpush1.xpose.msra.mxu0 0.0
  %50 = vmatprep.subr.mxu0 0.0
  %51 = vmatpush1.xpose.msra.mxu0 0.0
  %52 = vmatprep.subr.mxu0 0.0
  %53 = vmatpush1.xpose.msra.mxu0 0.0
  %54 = vmatprep.subr.mxu0 0.0
  %55 = vmatpush1.xpose.msra.mxu0 0.0
  %56 = vmatprep.subr.mxu0 0.0
  %57 = vmatpush1.xpose.msra.mxu0 %v26
  %58 = vmatprep.subr.mxu0 0.0
  %59 = vmatpush1.xpose.msra.mxu0 %v23
  %60 = vmatprep.subr.mxu0 0.0
  %61 = vmatpush2.xpose.msra.mxu0 0.0
  %62 = vmatprep.subr.mxu0 0.0
  %63 = vmatpush2.xpose.msra.mxu0 0.0
  %64 = vmatprep.subr.mxu0 0.0
  %65 = vmatpush2.xpose.msra.mxu0 0.0
  %66 = vmatprep.subr.mxu0 0.0
  %67 = vmatpush2.xpose.msra.mxu0 0.0
  %68 = vmatprep.subr.mxu0 0.0
  %69 = vmatpush2.xpose.msra.mxu0 0.0
  %70 = vmatprep.subr.mxu0 0.0
  %71 = vmatpush2.xpose.msra.mxu0 0.0
  %72 = vmatprep.subr.mxu0 0.0
  %73 = vmatpush2.xpose.msra.mxu0 0.0
  %74 = vmatprep.subr.mxu0 0.0
  %75 = vmatpush2.xpose.msra.mxu0 0.0
  %76 = vmatprep.subr.mxu0 0.0
  %77 = vmatpush2.xpose.msra.mxu0 0.0
  %78 = vmatprep.subr.mxu0 0.0
  %79 = vmatpush2.xpose.msra.mxu0 0.0
  %80 = vmatprep.subr.mxu0 0.0
  %81 = vmatpush2.xpose.msra.mxu0 0.0
  %82 = vmatprep.subr.mxu0 0.0
  %83 = vmatpush2.xpose.msra.mxu0 0.0
  %84 = vmatprep.subr.mxu0 0.0
  %85 = vmatpush2.xpose.msra.mxu0 0.0
  %86 = vmatprep.subr.mxu0 0.0
  %87 = vmatpush2.xpose.msra.mxu0 0.0
  %88 = vmatprep.subr.mxu0 0.0
  %89 = vmatpush2.xpose.msra.mxu0 0.0
  %90 = vmatprep.subr.mxu0 0.0
  %91 = vmatpush2.xpose.msra.mxu0 0.0
  %92 = vmatprep.mubr.f32.mxu0 0.0
  %93 = vmatmul.mubr.f32.gmra.mxu0 %v23
  %v94 = vpop.f32.mrf.mxu0
  %v95 = vadd.f32 0.0, %v94
  %v96 = vpop.f32.mrf.mxu0
  %97 = vmatprep.mubr.f32.mxu0 0.0
  %98 = vmatmul.mubr.f32.gmra.mxu0 %v26
  %v99 = vpop.f32.mrf.mxu0
  %v100 = vadd.f32 0.0, %v99
  %v101 = vpop.f32.mrf.mxu0
  %102 = vdwg.mxu0
  %v104 = vsel %vm21, %v13, 0
  %v107 = vsel %vm21, %v14, 0
  %109 = vmatprep.subr.mxu0 0.0
  %110 = vmatpush1.xpose.msra.mxu0 0.0
  %111 = vmatprep.subr.mxu0 0.0
  %112 = vmatpush1.xpose.msra.mxu0 0.0
  %113 = vmatprep.subr.mxu0 0.0
  %114 = vmatpush1.xpose.msra.mxu0 0.0
  %115 = vmatprep.subr.mxu0 0.0
  %116 = vmatpush1.xpose.msra.mxu0 0.0
  %117 = vmatprep.subr.mxu0 0.0
  %118 = vmatpush1.xpose.msra.mxu0 0.0
  %119 = vmatprep.subr.mxu0 0.0
  %120 = vmatpush1.xpose.msra.mxu0 0.0
  %121 = vmatprep.subr.mxu0 0.0
  %122 = vmatpush1.xpose.msra.mxu0 0.0
  %123 = vmatprep.subr.mxu0 0.0
  %124 = vmatpush1.xpose.msra.mxu0 0.0
  %125 = vmatprep.subr.mxu0 0.0
  %126 = vmatpush1.xpose.msra.mxu0 0.0
  %127 = vmatprep.subr.mxu0 0.0
  %128 = vmatpush1.xpose.msra.mxu0 0.0
  %129 = vmatprep.subr.mxu0 0.0
  %130 = vmatpush1.xpose.msra.mxu0 0.0
  %131 = vmatprep.subr.mxu0 0.0
  %132 = vmatpush1.xpose.msra.mxu0 0.0
  %133 = vmatprep.subr.mxu0 0.0
  %134 = vmatpush1.xpose.msra.mxu0 0.0
  %135 = vmatprep.subr.mxu0 0.0
  %136 = vmatpush1.xpose.msra.mxu0 0.0
  %137 = vmatprep.subr.mxu0 0.0
  %138 = vmatpush1.xpose.msra.mxu0 %v107
  %139 = vmatprep.subr.mxu0 0.0
  %140 = vmatpush1.xpose.msra.mxu0 %v104
  %141 = vmatprep.subr.mxu0 0.0
  %142 = vmatpush2.xpose.msra.mxu0 0.0
  %143 = vmatprep.subr.mxu0 0.0
  %144 = vmatpush2.xpose.msra.mxu0 0.0
  %145 = vmatprep.subr.mxu0 0.0
  %146 = vmatpush2.xpose.msra.mxu0 0.0
  %147 = vmatprep.subr.mxu0 0.0
  %148 = vmatpush2.xpose.msra.mxu0 0.0
  %149 = vmatprep.subr.mxu0 0.0
  %150 = vmatpush2.xpose.msra.mxu0 0.0
  %151 = vmatprep.subr.mxu0 0.0
  %152 = vmatpush2.xpose.msra.mxu0 0.0
  %153 = vmatprep.subr.mxu0 0.0
  %154 = vmatpush2.xpose.msra.mxu0 0.0
  %155 = vmatprep.subr.mxu0 0.0
  %156 = vmatpush2.xpose.msra.mxu0 0.0
  %157 = vmatprep.subr.mxu0 0.0
  %158 = vmatpush2.xpose.msra.mxu0 0.0
  %159 = vmatprep.subr.mxu0 0.0
  %160 = vmatpush2.xpose.msra.mxu0 0.0
  %161 = vmatprep.subr.mxu0 0.0
  %162 = vmatpush2.xpose.msra.mxu0 0.0
  %163 = vmatprep.subr.mxu0 0.0
  %164 = vmatpush2.xpose.msra.mxu0 0.0
  %165 = vmatprep.subr.mxu0 0.0
  %166 = vmatpush2.xpose.msra.mxu0 0.0
  %167 = vmatprep.subr.mxu0 0.0
  %168 = vmatpush2.xpose.msra.mxu0 0.0
  %169 = vmatprep.subr.mxu0 0.0
  %170 = vmatpush2.xpose.msra.mxu0 0.0
  %171 = vmatprep.subr.mxu0 0.0
  %172 = vmatpush2.xpose.msra.mxu0 0.0
  %173 = vmatprep.mubr.f32.mxu0 0.0
  %174 = vmatmul.mubr.f32.gmra.mxu0 %v104
  %v175 = vpop.f32.mrf.mxu0
  %v176 = vadd.f32 0.0, %v175
  %v177 = vpop.f32.mrf.mxu0
  %178 = vmatprep.mubr.f32.mxu0 0.0
  %179 = vmatmul.mubr.f32.gmra.mxu0 %v107
  %v180 = vpop.f32.mrf.mxu0
  %v181 = vadd.f32 0.0, %v180
  %v182 = vpop.f32.mrf.mxu0
  %183 = vdwg.mxu0
  %v184 = vsel %vm21, %v17, 0.0
  %185 = vadd.xlane.f32.xlu0 %v184
  %v186 = vpop.xlane.xlu0 %185
  %v187 = vsel %vm21, %v18, 0.0
  %188 = vadd.xlane.f32.xlu0 %v187
  %v189 = vpop.xlane.xlu0 %188
  %v190 = vsel %vm21, %v19, 0.0
  %191 = vadd.xlane.f32.xlu0 %v190
  %v192 = vpop.xlane.xlu0 %191
  %v193 = vsel %vm21, %v20, 0.0
  %194 = vadd.xlane.f32.xlu0 %v193
  %v195 = vpop.xlane.xlu0 %194
  %v197 = vsel %vm21, 1.0, 0
  %v200 = vsel %vm21, %v17, 0
  %v203 = vsel %vm21, %v18, 0
  %205 = vmatprep.subr.mxu0 0.0
  %206 = vmatpush1.xpose.msra.mxu0 0.0
  %207 = vmatprep.subr.mxu0 0.0
  %208 = vmatpush1.xpose.msra.mxu0 0.0
  %209 = vmatprep.subr.mxu0 0.0
  %210 = vmatpush1.xpose.msra.mxu0 0.0
  %211 = vmatprep.subr.mxu0 0.0
  %212 = vmatpush1.xpose.msra.mxu0 0.0
  %213 = vmatprep.subr.mxu0 0.0
  %214 = vmatpush1.xpose.msra.mxu0 0.0
  %215 = vmatprep.subr.mxu0 0.0
  %216 = vmatpush1.xpose.msra.mxu0 0.0
  %217 = vmatprep.subr.mxu0 0.0
  %218 = vmatpush1.xpose.msra.mxu0 0.0
  %219 = vmatprep.subr.mxu0 0.0
  %220 = vmatpush1.xpose.msra.mxu0 0.0
  %221 = vmatprep.subr.mxu0 0.0
  %222 = vmatpush1.xpose.msra.mxu0 0.0
  %223 = vmatprep.subr.mxu0 0.0
  %224 = vmatpush1.xpose.msra.mxu0 0.0
  %225 = vmatprep.subr.mxu0 0.0
  %226 = vmatpush1.xpose.msra.mxu0 0.0
  %227 = vmatprep.subr.mxu0 0.0
  %228 = vmatpush1.xpose.msra.mxu0 0.0
  %229 = vmatprep.subr.mxu0 0.0
  %230 = vmatpush1.xpose.msra.mxu0 0.0
  %231 = vmatprep.subr.mxu0 0.0
  %232 = vmatpush1.xpose.msra.mxu0 0.0
  %233 = vmatprep.subr.mxu0 0.0
  %234 = vmatpush1.xpose.msra.mxu0 %v203
  %235 = vmatprep.subr.mxu0 0.0
  %236 = vmatpush1.xpose.msra.mxu0 %v200
  %237 = vmatprep.subr.mxu0 0.0
  %238 = vmatpush2.xpose.msra.mxu0 0.0
  %239 = vmatprep.subr.mxu0 0.0
  %240 = vmatpush2.xpose.msra.mxu0 0.0
  %241 = vmatprep.subr.mxu0 0.0
  %242 = vmatpush2.xpose.msra.mxu0 0.0
  %243 = vmatprep.subr.mxu0 0.0
  %244 = vmatpush2.xpose.msra.mxu0 0.0
  %245 = vmatprep.subr.mxu0 0.0
  %246 = vmatpush2.xpose.msra.mxu0 0.0
  %247 = vmatprep.subr.mxu0 0.0
  %248 = vmatpush2.xpose.msra.mxu0 0.0
  %249 = vmatprep.subr.mxu0 0.0
  %250 = vmatpush2.xpose.msra.mxu0 0.0
  %251 = vmatprep.subr.mxu0 0.0
  %252 = vmatpush2.xpose.msra.mxu0 0.0
  %253 = vmatprep.subr.mxu0 0.0
  %254 = vmatpush2.xpose.msra.mxu0 0.0
  %255 = vmatprep.subr.mxu0 0.0
  %256 = vmatpush2.xpose.msra.mxu0 0.0
  %257 = vmatprep.subr.mxu0 0.0
  %258 = vmatpush2.xpose.msra.mxu0 0.0
  %259 = vmatprep.subr.mxu0 0.0
  %260 = vmatpush2.xpose.msra.mxu0 0.0
  %261 = vmatprep.subr.mxu0 0.0
  %262 = vmatpush2.xpose.msra.mxu0 0.0
  %263 = vmatprep.subr.mxu0 0.0
  %264 = vmatpush2.xpose.msra.mxu0 0.0
  %265 = vmatprep.subr.mxu0 0.0
  %266 = vmatpush2.xpose.msra.mxu0 0.0
  %267 = vmatprep.subr.mxu0 0.0
  %268 = vmatpush2.xpose.msra.mxu0 0.0
  %269 = vmatprep.mubr.f32.mxu0 0.0
  %270 = vmatmul.mubr.f32.gmra.mxu0 %v197
  %v271 = vpop.f32.mrf.mxu0
  %v272 = vadd.f32 0.0, %v271
  %v273 = vpop.f32.mrf.mxu0
  %274 = vdwg.mxu0
  %v276 = vsel %vm21, %v19, 0
  %v279 = vsel %vm21, %v20, 0
  %281 = vmatprep.subr.mxu0 0.0
  %282 = vmatpush1.xpose.msra.mxu0 0.0
  %283 = vmatprep.subr.mxu0 0.0
  %284 = vmatpush1.xpose.msra.mxu0 0.0
  %285 = vmatprep.subr.mxu0 0.0
  %286 = vmatpush1.xpose.msra.mxu0 0.0
  %287 = vmatprep.subr.mxu0 0.0
  %288 = vmatpush1.xpose.msra.mxu0 0.0
  %289 = vmatprep.subr.mxu0 0.0
  %290 = vmatpush1.xpose.msra.mxu0 0.0
  %291 = vmatprep.subr.mxu0 0.0
  %292 = vmatpush1.xpose.msra.mxu0 0.0
  %293 = vmatprep.subr.mxu0 0.0
  %294 = vmatpush1.xpose.msra.mxu0 0.0
  %295 = vmatprep.subr.mxu0 0.0
  %296 = vmatpush1.xpose.msra.mxu0 0.0
  %297 = vmatprep.subr.mxu0 0.0
  %298 = vmatpush1.xpose.msra.mxu0 0.0
  %299 = vmatprep.subr.mxu0 0.0
  %300 = vmatpush1.xpose.msra.mxu0 0.0
  %301 = vmatprep.subr.mxu0 0.0
  %302 = vmatpush1.xpose.msra.mxu0 0.0
  %303 = vmatprep.subr.mxu0 0.0
  %304 = vmatpush1.xpose.msra.mxu0 0.0
  %305 = vmatprep.subr.mxu0 0.0
  %306 = vmatpush1.xpose.msra.mxu0 0.0
  %307 = vmatprep.subr.mxu0 0.0
  %308 = vmatpush1.xpose.msra.mxu0 0.0
  %309 = vmatprep.subr.mxu0 0.0
  %310 = vmatpush1.xpose.msra.mxu0 %v279
  %311 = vmatprep.subr.mxu0 0.0
  %312 = vmatpush1.xpose.msra.mxu0 %v276
  %313 = vmatprep.subr.mxu0 0.0
  %314 = vmatpush2.xpose.msra.mxu0 0.0
  %315 = vmatprep.subr.mxu0 0.0
  %316 = vmatpush2.xpose.msra.mxu0 0.0
  %317 = vmatprep.subr.mxu0 0.0
  %318 = vmatpush2.xpose.msra.mxu0 0.0
  %319 = vmatprep.subr.mxu0 0.0
  %320 = vmatpush2.xpose.msra.mxu0 0.0
  %321 = vmatprep.subr.mxu0 0.0
  %322 = vmatpush2.xpose.msra.mxu0 0.0
  %323 = vmatprep.subr.mxu0 0.0
  %324 = vmatpush2.xpose.msra.mxu0 0.0
  %325 = vmatprep.subr.mxu0 0.0
  %326 = vmatpush2.xpose.msra.mxu0 0.0
  %327 = vmatprep.subr.mxu0 0.0
  %328 = vmatpush2.xpose.msra.mxu0 0.0
  %329 = vmatprep.subr.mxu0 0.0
  %330 = vmatpush2.xpose.msra.mxu0 0.0
  %331 = vmatprep.subr.mxu0 0.0
  %332 = vmatpush2.xpose.msra.mxu0 0.0
  %333 = vmatprep.subr.mxu0 0.0
  %334 = vmatpush2.xpose.msra.mxu0 0.0
  %335 = vmatprep.subr.mxu0 0.0
  %336 = vmatpush2.xpose.msra.mxu0 0.0
  %337 = vmatprep.subr.mxu0 0.0
  %338 = vmatpush2.xpose.msra.mxu0 0.0
  %339 = vmatprep.subr.mxu0 0.0
  %340 = vmatpush2.xpose.msra.mxu0 0.0
  %341 = vmatprep.subr.mxu0 0.0
  %342 = vmatpush2.xpose.msra.mxu0 0.0
  %343 = vmatprep.subr.mxu0 0.0
  %344 = vmatpush2.xpose.msra.mxu0 0.0
  %345 = vmatprep.mubr.f32.mxu0 0.0
  %346 = vmatmul.mubr.f32.gmra.mxu0 %v197
  %v347 = vpop.f32.mrf.mxu0
  %v348 = vadd.f32 0.0, %v347
  %v349 = vpop.f32.mrf.mxu0
  %350 = vdwg.mxu0
  %v351 = vlaneseq
  %v352 = vshrl.u32 %v351, 7
  %v353 = vsub.s32 0, %v352
  %v354 = vrot.slane %v272, %v353
  %v355 = vlaneseq
  %v356 = vshrl.u32 %v355, 7
  %v357 = vsub.s32 0, %v356
  %v358 = vrot.slane %v348, %v357
  %v359 = vadd.f32 %v186, %v354
  %v360 = vadd.f32 %v189, %v354
  %v361 = vadd.f32 %v192, %v358
  %v362 = vadd.f32 %v195, %v358
  %v363 = vmul.f32 %v95, 2.0
  %v364 = vmul.f32 %v100, 2.0
  %v365 = vmul.f32 %v176, 2.0
  %v366 = vmul.f32 %v181, 2.0
  %v367 = vsub.f32 %v359, %v363
  %v368 = vsub.f32 %v360, %v364
  %v369 = vsub.f32 %v361, %v365
  %v370 = vsub.f32 %v362, %v366
  %vm371 = vcmp.le.f32.partialorder %v367, 4.0
  %vm372 = vcmp.le.f32.partialorder %v368, 4.0
  %vm373 = vcmp.le.f32.partialorder %v369, 4.0
  %vm374 = vcmp.le.f32.partialorder %v370, 4.0
  %v375 = vsel %vm371, 1, 0
  %v376 = vsel %vm372, 1, 0
  %v377 = vsel %vm373, 1, 0
  %v378 = vsel %vm374, 1, 0
  %v379 = vcvt.s32.f32 %v375
  %v380 = vcvt.s32.f32 %v376
  %v381 = vcvt.s32.f32 %v377
  %v382 = vcvt.s32.f32 %v378
  %v383 = vsub.f32 1.0, %v15
  %v384 = vsub.f32 1.0, %v16
  %v387 = vlaneseq
  %v388 = vshrl.u32 %v387, 7
  %v389 = vsub.s32 0, %v388
  %v390 = vrot.slane %v383, %v389
  %v391 = vlaneseq
  %v392 = vshrl.u32 %v391, 7
  %v393 = vsub.s32 0, %v392
  %v394 = vrot.slane %v384, %v393
  %v397 = vmul.f32 %v379, %v390
  %v398 = vmul.f32 %v380, %v390
  %v399 = vmul.f32 %v381, %v394
  %v400 = vmul.f32 %v382, %v394
  %v401 = vsub.f32 1.0, %v397
  %v402 = vsub.f32 1.0, %v398
  %v403 = vsub.f32 1.0, %v399
  %v404 = vsub.f32 1.0, %v400
  %v405 = vmul.f32 %v401, -1e+09
  %v406 = vmul.f32 %v402, -1e+09
  %v407 = vmul.f32 %v403, -1e+09
  %v408 = vmul.f32 %v404, -1e+09
  %v409 = vpack.c.bf16 %v406, %v405
  %v410 = vpack.c.bf16 %v408, %v407
  %v413 = vunpack.c.l.b16 %v409
  %v414 = vunpack.c.h.b16 %v409
  %v415 = vunpack.c.l.b16 %v410
  %v416 = vunpack.c.h.b16 %v410
  %v417 = vpack.c.b16 %v413, %v413
  %v418 = vpack.c.b16 %v414, %v414
  %v419 = vpack.c.b16 %v415, %v415
  %v420 = vpack.c.b16 %v416, %v416
  %vm425 = vcmask 125952
  %426 = vst.msk [vmem:[%s2] sm:$0xf] %vm425, %v417
  %427 = vst.msk [vmem:[%s2 + $0x4] sm:$0xf] %vm425, %v418
  %428 = vst.msk [vmem:[%s2 + $0x8] sm:$0xf] %vm425, %v419
  %429 = vst.msk [vmem:[%s2 + $0xc] sm:$0xf] %vm425, %v420
  // Predicated region
  $region10: #{custom_attention_transformer_block.5} parent=0 // pred_check
    _
  $region11: #{custom_attention_transformer_block.5} parent=0 // pred_check_branch
    %431 = sbr.rel (0) target = $region13
  $region12: #{custom_attention_transformer_block.5} parent=0 // pred_region
    _
  $region13: #{custom_attention_transformer_block.5} parent=0 // pred_fallthru
    _
  // Predicated region
  $region14: #{custom_attention_transformer_block.5} parent=0 // pred_check
    _
  $region15: #{custom_attention_transformer_block.5} parent=0 // pred_check_branch
    %433 = sbr.rel (0) target = $region17
  $region16: #{custom_attention_transformer_block.5} parent=0 // pred_region
    _
  $region17: #{custom_attention_transformer_block.5} parent=0 // pred_fallthru
    _

// kernel: custom_attention_transformer_block.8
$region0: #{custom_attention_transformer_block.8}
  #allocation0 [shape = 'u32[]', space=smem, size = 0x4, offset = 0x4, fixed_abs, tag = 'smem constant byte address 0x4 - core index']
  #allocation1 [shape = 'u32[144,128]{1,0:T(1,128)}', space=vmem, size = 0x12000, scoped, tag = 'internal scratch']
  %s0 = inlined_call_operand.vmem [shape: bf16[2,16,128], index: 0, kind: input, shape index: {}, may-alias: {0,14}]
  %s1 = inlined_call_operand.vmem [shape: bf16[2,16,16], index: 1, kind: input, shape index: {}]
  %s2 = inlined_call_operand.vmem [shape: bf16[128,384], index: 2, kind: input, shape index: {}]
  %s3 = inlined_call_operand.vmem [shape: f32[1,384], index: 3, kind: input, shape index: {}]
  %s4 = inlined_call_operand.vmem [shape: bf16[128,128], index: 4, kind: input, shape index: {}]
  %s5 = inlined_call_operand.vmem [shape: f32[1,128], index: 5, kind: input, shape index: {}]
  %s6 = inlined_call_operand.vmem [shape: f32[1,128], index: 6, kind: input, shape index: {}]
  %s7 = inlined_call_operand.vmem [shape: f32[1,128], index: 7, kind: input, shape index: {}]
  %s8 = inlined_call_operand.vmem [shape: bf16[128,256], index: 8, kind: input, shape index: {}]
  %s9 = inlined_call_operand.vmem [shape: f32[1,256], index: 9, kind: input, shape index: {}]
  %s10 = inlined_call_operand.vmem [shape: bf16[256,128], index: 10, kind: input, shape index: {}]
  %s11 = inlined_call_operand.vmem [shape: f32[1,128], index: 11, kind: input, shape index: {}]
  %s12 = inlined_call_operand.vmem [shape: f32[1,128], index: 12, kind: input, shape index: {}]
  %s13 = inlined_call_operand.vmem [shape: f32[1,128], index: 13, kind: input, shape index: {}]
  %s14 = inlined_call_operand.vmem [shape: bf16[2,16,128], index: 14, kind: output, shape index: {}, may-alias: {0,14}]
  %s15 = sld [smem:[#allocation0]]
  $region66: #{custom_attention_transformer_block.8} parent=0
    _
  %s17 = ssub.s32 1, %s15
  %s18 = scalar_select 0, %s17, %s15
  // Predicated region
  $region2: #{custom_attention_transformer_block.8} parent=0 // pred_check
    _
  $region3: #{custom_attention_transformer_block.8} parent=0 // pred_check_branch
    %20 = sbr.rel (0) target = $region5
  $region4: #{custom_attention_transformer_block.8} parent=0 // pred_region
    _
  $region5: #{custom_attention_transformer_block.8} parent=0 // pred_fallthru
    _
  // Predicated region
  $region6: #{custom_attention_transformer_block.8} parent=0 // pred_check
    _
  $region7: #{custom_attention_transformer_block.8} parent=0 // pred_check_branch
    %22 = sbr.rel (0) target = $region9
  $region8: #{custom_attention_transformer_block.8} parent=0 // pred_region
    _
  $region9: #{custom_attention_transformer_block.8} parent=0 // pred_fallthru
    _
  // Predicated region
  $region10: #{custom_attention_transformer_block.8} parent=0 // pred_check
    _
  $region11: #{custom_attention_transformer_block.8} parent=0 // pred_check_branch
    %24 = sbr.rel (0) target = $region13
  $region12: #{custom_attention_transformer_block.8} parent=0 // pred_region
    _
  $region13: #{custom_attention_transformer_block.8} parent=0 // pred_fallthru
    _
  // Predicated region
  $region14: #{custom_attention_transformer_block.8} parent=0 // pred_check
    _
  $region15: #{custom_attention_transformer_block.8} parent=0 // pred_check_branch
    %26 = sbr.rel (0) target = $region17
  $region16: #{custom_attention_transformer_block.8} parent=0 // pred_region
    _
  $region17: #{custom_attention_transformer_block.8} parent=0 // pred_fallthru
    _
  // Predicated region
  $region18: #{custom_attention_transformer_block.8} parent=0 // pred_check
    _
  $region19: #{custom_attention_transformer_block.8} parent=0 // pred_check_branch
    %28 = sbr.rel (0) target = $region21
  $region20: #{custom_attention_transformer_block.8} parent=0 // pred_region
    _
  $region21: #{custom_attention_transformer_block.8} parent=0 // pred_fallthru
    _
  // Predicated region
  $region22: #{custom_attention_transformer_block.8} parent=0 // pred_check
    _
  $region23: #{custom_attention_transformer_block.8} parent=0 // pred_check_branch
    %30 = sbr.rel (0) target = $region25
  $region24: #{custom_attention_transformer_block.8} parent=0 // pred_region
    _
  $region25: #{custom_attention_transformer_block.8} parent=0 // pred_fallthru
    _
  // Predicated region
  $region26: #{custom_attention_transformer_block.8} parent=0 // pred_check
    _
  $region27: #{custom_attention_transformer_block.8} parent=0 // pred_check_branch
    %32 = sbr.rel (0) target = $region29
  $region28: #{custom_attention_transformer_block.8} parent=0 // pred_region
    _
  $region29: #{custom_attention_transformer_block.8} parent=0 // pred_fallthru
    _
  // Predicated region
  $region30: #{custom_attention_transformer_block.8} parent=0 // pred_check
    _
  $region31: #{custom_attention_transformer_block.8} parent=0 // pred_check_branch
    %34 = sbr.rel (0) target = $region33
  $region32: #{custom_attention_transformer_block.8} parent=0 // pred_region
    _
  $region33: #{custom_attention_transformer_block.8} parent=0 // pred_fallthru
    _
  // Predicated region
  $region34: #{custom_attention_transformer_block.8} parent=0 // pred_check
    _
  $region35: #{custom_attention_transformer_block.8} parent=0 // pred_check_branch
    %36 = sbr.rel (0) target = $region37
  $region36: #{custom_attention_transformer_block.8} parent=0 // pred_region
    _
  $region37: #{custom_attention_transformer_block.8} parent=0 // pred_fallthru
    _
  // Predicated region
  $region38: #{custom_attention_transformer_block.8} parent=0 // pred_check
    _
  $region39: #{custom_attention_transformer_block.8} parent=0 // pred_check_branch
    %38 = sbr.rel (0) target = $region41
  $region40: #{custom_attention_transformer_block.8} parent=0 // pred_region
    _
  $region41: #{custom_attention_transformer_block.8} parent=0 // pred_fallthru
    _
  // Predicated region
  $region42: #{custom_attention_transformer_block.8} parent=0 // pred_check
    _
  $region43: #{custom_attention_transformer_block.8} parent=0 // pred_check_branch
    %40 = sbr.rel (0) target = $region45
  $region44: #{custom_attention_transformer_block.8} parent=0 // pred_region
    _
  $region45: #{custom_attention_transformer_block.8} parent=0 // pred_fallthru
    _
  // Predicated region
  $region46: #{custom_attention_transformer_block.8} parent=0 // pred_check
    _
  $region47: #{custom_attention_transformer_block.8} parent=0 // pred_check_branch
    %42 = sbr.rel (0) target = $region49
  $region48: #{custom_attention_transformer_block.8} parent=0 // pred_region
    _
  $region49: #{custom_attention_transformer_block.8} parent=0 // pred_fallthru
    _
  // Predicated region
  $region50: #{custom_attention_transformer_block.8} parent=0 // pred_check
    _
  $region51: #{custom_attention_transformer_block.8} parent=0 // pred_check_branch
    %44 = sbr.rel (0) target = $region53
  $region52: #{custom_attention_transformer_block.8} parent=0 // pred_region
    _
  $region53: #{custom_attention_transformer_block.8} parent=0 // pred_fallthru
    _
  // Predicated region
  $region54: #{custom_attention_transformer_block.8} parent=0 // pred_check
    _
  $region55: #{custom_attention_transformer_block.8} parent=0 // pred_check_branch
    %46 = sbr.rel (0) target = $region57
  $region56: #{custom_attention_transformer_block.8} parent=0 // pred_region
    _
  $region57: #{custom_attention_transformer_block.8} parent=0 // pred_fallthru
    _
  %v48 = vld [vmem:[%s0] sm:$0xf]
  %v49 = vld [vmem:[%s0 + $0x4] sm:$0xf]
  %v50 = vld [vmem:[%s0 + $0x8] sm:$0xf]
  %v51 = vld [vmem:[%s0 + $0xc] sm:$0xf]
  %v52 = vunpack.c.l.bf16 %v48
  %v53 = vunpack.c.l.bf16 %v49
  %v54 = vunpack.c.l.bf16 %v50
  %v55 = vunpack.c.l.bf16 %v51
  %v56 = vld [vmem:[%s2] sm:$0xff]
  %v57 = vld [vmem:[%s2 + $0x8] sm:$0xf]
  %v58 = vld [vmem:[%s2 + $0xc] sm:$0xff]
  %v59 = vld [vmem:[%s2 + $0x14] sm:$0xf]
  %v60 = vld [vmem:[%s2 + $0x18] sm:$0xff]
  %v61 = vld [vmem:[%s2 + $0x20] sm:$0xf]
  %v62 = vld [vmem:[%s2 + $0x24] sm:$0xff]
  %v63 = vld [vmem:[%s2 + $0x2c] sm:$0xf]
  %v64 = vld [vmem:[%s2 + $0x30] sm:$0xff]
  %v65 = vld [vmem:[%s2 + $0x38] sm:$0xf]
  %v66 = vld [vmem:[%s2 + $0x3c] sm:$0xff]
  %v67 = vld [vmem:[%s2 + $0x44] sm:$0xf]
  %v68 = vld [vmem:[%s2 + $0x48] sm:$0xff]
  %v69 = vld [vmem:[%s2 + $0x50] sm:$0xf]
  %v70 = vld [vmem:[%s2 + $0x54] sm:$0xff]
  %v71 = vld [vmem:[%s2 + $0x5c] sm:$0xf]
  %v72 = vld [vmem:[%s2 + $0x60] sm:$0xff]
  %v73 = vld [vmem:[%s2 + $0x68] sm:$0xf]
  %v74 = vld [vmem:[%s2 + $0x6c] sm:$0xff]
  %v75 = vld [vmem:[%s2 + $0x74] sm:$0xf]
  %v76 = vld [vmem:[%s2 + $0x78] sm:$0xff]
  %v77 = vld [vmem:[%s2 + $0x80] sm:$0xf]
  %v78 = vld [vmem:[%s2 + $0x84] sm:$0xff]
  %v79 = vld [vmem:[%s2 + $0x8c] sm:$0xf]
  %v80 = vld [vmem:[%s2 + $0x90] sm:$0xff]
  %v81 = vld [vmem:[%s2 + $0x98] sm:$0xf]
  %v82 = vld [vmem:[%s2 + $0x9c] sm:$0xff]
  %v83 = vld [vmem:[%s2 + $0xa4] sm:$0xf]
  %v84 = vld [vmem:[%s2 + $0xa8] sm:$0xff]
  %v85 = vld [vmem:[%s2 + $0xb0] sm:$0xf]
  %v86 = vld [vmem:[%s2 + $0xb4] sm:$0xff]
  %v87 = vld [vmem:[%s2 + $0xbc] sm:$0xf]
  %v88 = vld [vmem:[%s3] sm:$0x7]
  %v90 = vlaneseq
  %v91 = vshrl.u32 %v90, 7
  %v92 = vsub.s32 0, %v91
  %v93 = vrot.slane %v88, %v92
  %v94 = vlaneseq
  %v95 = vshrl.u32 %v94, 7
  %v96 = vsub.s32 1, %v95
  %v97 = vrot.slane %v88, %v96
  %v98 = vlaneseq
  %v99 = vshrl.u32 %v98, 7
  %v100 = vsub.s32 2, %v99
  %v101 = vrot.slane %v88, %v100
  %v109 = vunpack.c.l.b16 %v48
  %v110 = vunpack.c.l.b16 %v49
  %v111 = vunpack.c.l.b16 %v50
  %v112 = vunpack.c.l.b16 %v51
  %v113 = vpack.c.b16 %v110, %v109
  %v114 = vpack.c.b16 %v112, %v111
  %v149 = vunpack.c.l.b16 %v56
  %v150 = vunpack.c.h.b16 %v56
  %v151 = vunpack.c.l.b16 %v57
  %v152 = vunpack.c.l.b16 %v58
  %v153 = vunpack.c.h.b16 %v58
  %v154 = vunpack.c.l.b16 %v59
  %v155 = vunpack.c.l.b16 %v60
  %v156 = vunpack.c.h.b16 %v60
  %v157 = vunpack.c.l.b16 %v61
  %v158 = vunpack.c.l.b16 %v62
  %v159 = vunpack.c.h.b16 %v62
  %v160 = vunpack.c.l.b16 %v63
  %v161 = vunpack.c.l.b16 %v64
  %v162 = vunpack.c.h.b16 %v64
  %v163 = vunpack.c.l.b16 %v65
  %v164 = vunpack.c.l.b16 %v66
  %v165 = vunpack.c.h.b16 %v66
  %v166 = vunpack.c.l.b16 %v67
  %v167 = vunpack.c.l.b16 %v68
  %v168 = vunpack.c.h.b16 %v68
  %v169 = vunpack.c.l.b16 %v69
  %v170 = vunpack.c.l.b16 %v70
  %v171 = vunpack.c.h.b16 %v70
  %v172 = vunpack.c.l.b16 %v71
  %v173 = vunpack.c.l.b16 %v72
  %v174 = vunpack.c.h.b16 %v72
  %v175 = vunpack.c.l.b16 %v73
  %v176 = vunpack.c.l.b16 %v74
  %v177 = vunpack.c.h.b16 %v74
  %v178 = vunpack.c.l.b16 %v75
  %v179 = vunpack.c.l.b16 %v76
  %v180 = vunpack.c.h.b16 %v76
  %v181 = vunpack.c.l.b16 %v77
  %v182 = vunpack.c.l.b16 %v78
  %v183 = vunpack.c.h.b16 %v78
  %v184 = vunpack.c.l.b16 %v79
  %v185 = vunpack.c.l.b16 %v80
  %v186 = vunpack.c.h.b16 %v80
  %v187 = vunpack.c.l.b16 %v81
  %v188 = vunpack.c.l.b16 %v82
  %v189 = vunpack.c.h.b16 %v82
  %v190 = vunpack.c.l.b16 %v83
  %v191 = vunpack.c.l.b16 %v84
  %v192 = vunpack.c.h.b16 %v84
  %v193 = vunpack.c.l.b16 %v85
  %v194 = vunpack.c.l.b16 %v86
  %v195 = vunpack.c.h.b16 %v86
  %v196 = vunpack.c.l.b16 %v87
  %v197 = vpack.c.b16 %v152, %v149
  %v198 = vpack.c.b16 %v153, %v150
  %v199 = vpack.c.b16 %v154, %v151
  %v200 = vpack.c.b16 %v158, %v155
  %v201 = vpack.c.b16 %v159, %v156
  %v202 = vpack.c.b16 %v160, %v157
  %v203 = vpack.c.b16 %v164, %v161
  %v204 = vpack.c.b16 %v165, %v162
  %v205 = vpack.c.b16 %v166, %v163
  %v206 = vpack.c.b16 %v170, %v167
  %v207 = vpack.c.b16 %v171, %v168
  %v208 = vpack.c.b16 %v172, %v169
  %v209 = vpack.c.b16 %v176, %v173
  %v210 = vpack.c.b16 %v177, %v174
  %v211 = vpack.c.b16 %v178, %v175
  %v212 = vpack.c.b16 %v182, %v179
  %v213 = vpack.c.b16 %v183, %v180
  %v214 = vpack.c.b16 %v184, %v181
  %v215 = vpack.c.b16 %v188, %v185
  %v216 = vpack.c.b16 %v189, %v186
  %v217 = vpack.c.b16 %v190, %v187
  %v218 = vpack.c.b16 %v194, %v191
  %v219 = vpack.c.b16 %v195, %v192
  %v220 = vpack.c.b16 %v196, %v193
  %245 = vmatprep.subr.bf16.mxu0 %v219
  %246 = vmatpush1.bf16.msra.mxu0 %v218
  %247 = vmatprep.subr.bf16.mxu0 %v216
  %248 = vmatpush1.bf16.msra.mxu0 %v215
  %249 = vmatprep.subr.bf16.mxu0 %v213
  %250 = vmatpush1.bf16.msra.mxu0 %v212
  %251 = vmatprep.subr.bf16.mxu0 %v210
  %252 = vmatpush1.bf16.msra.mxu0 %v209
  %253 = vmatprep.subr.bf16.mxu0 %v207
  %254 = vmatpush1.bf16.msra.mxu0 %v206
  %255 = vmatprep.subr.bf16.mxu0 %v204
  %256 = vmatpush1.bf16.msra.mxu0 %v203
  %257 = vmatprep.subr.bf16.mxu0 %v201
  %258 = vmatpush1.bf16.msra.mxu0 %v200
  %259 = vmatprep.subr.bf16.mxu0 %v198
  %260 = vmatpush1.bf16.msra.mxu0 %v197
  %261 = vmatprep.subr.bf16.mxu0 0
  %262 = vmatpush2.bf16.msra.mxu0 0
  %263 = vmatprep.subr.bf16.mxu0 0
  %264 = vmatpush2.bf16.msra.mxu0 0
  %265 = vmatprep.subr.bf16.mxu0 0
  %266 = vmatpush2.bf16.msra.mxu0 0
  %267 = vmatprep.subr.bf16.mxu0 0
  %268 = vmatpush2.bf16.msra.mxu0 0
  %269 = vmatprep.subr.bf16.mxu0 0
  %270 = vmatpush2.bf16.msra.mxu0 0
  %271 = vmatprep.subr.bf16.mxu0 0
  %272 = vmatpush2.bf16.msra.mxu0 0
  %273 = vmatprep.subr.bf16.mxu0 0
  %274 = vmatpush2.bf16.msra.mxu0 0
  %275 = vmatprep.subr.bf16.mxu0 0
  %276 = vmatpush2.bf16.msra.mxu0 0
  %277 = vmatprep.mubr.bf16.mxu0 0
  %278 = vmatmul.mubr.bf16.gmra.mxu0 %v113
  %v279 = vpop.f32.mrf.mxu0
  %v280 = vadd.f32 %v93, %v279
  %v281 = vpop.f32.mrf.mxu0
  %v282 = vadd.f32 %v97, %v281
  %v283 = vpop.f32.mrf.mxu0
  %v284 = vadd.f32 %v93, %v283
  %v285 = vpop.f32.mrf.mxu0
  %v286 = vadd.f32 %v97, %v285
  %287 = vmatprep.mubr.bf16.mxu0 0
  %288 = vmatmul.mubr.bf16.gmra.mxu0 %v114
  %v289 = vpop.f32.mrf.mxu0
  %v290 = vadd.f32 %v93, %v289
  %v291 = vpop.f32.mrf.mxu0
  %v292 = vadd.f32 %v97, %v291
  %v293 = vpop.f32.mrf.mxu0
  %v294 = vadd.f32 %v93, %v293
  %v295 = vpop.f32.mrf.mxu0
  %v296 = vadd.f32 %v97, %v295
  %297 = vdwg.mxu0
  %298 = vmatprep.subr.bf16.mxu0 0
  %299 = vmatpush1.bf16.msra.mxu0 %v220
  %300 = vmatprep.subr.bf16.mxu0 0
  %301 = vmatpush1.bf16.msra.mxu0 %v217
  %302 = vmatprep.subr.bf16.mxu0 0
  %303 = vmatpush1.bf16.msra.mxu0 %v214
  %304 = vmatprep.subr.bf16.mxu0 0
  %305 = vmatpush1.bf16.msra.mxu0 %v211
  %306 = vmatprep.subr.bf16.mxu0 0
  %307 = vmatpush1.bf16.msra.mxu0 %v208
  %308 = vmatprep.subr.bf16.mxu0 0
  %309 = vmatpush1.bf16.msra.mxu0 %v205
  %310 = vmatprep.subr.bf16.mxu0 0
  %311 = vmatpush1.bf16.msra.mxu0 %v202
  %312 = vmatprep.subr.bf16.mxu0 0
  %313 = vmatpush1.bf16.msra.mxu0 %v199
  %314 = vmatprep.subr.bf16.mxu0 0
  %315 = vmatpush2.bf16.msra.mxu0 0
  %316 = vmatprep.subr.bf16.mxu0 0
  %317 = vmatpush2.bf16.msra.mxu0 0
  %318 = vmatprep.subr.bf16.mxu0 0
  %319 = vmatpush2.bf16.msra.mxu0 0
  %320 = vmatprep.subr.bf16.mxu0 0
  %321 = vmatpush2.bf16.msra.mxu0 0
  %322 = vmatprep.subr.bf16.mxu0 0
  %323 = vmatpush2.bf16.msra.mxu0 0
  %324 = vmatprep.subr.bf16.mxu0 0
  %325 = vmatpush2.bf16.msra.mxu0 0
  %326 = vmatprep.subr.bf16.mxu0 0
  %327 = vmatpush2.bf16.msra.mxu0 0
  %328 = vmatprep.subr.bf16.mxu0 0
  %329 = vmatpush2.bf16.msra.mxu0 0
  %330 = vmatprep.mubr.bf16.mxu0 0
  %331 = vmatmul.mubr.bf16.gmra.mxu0 %v113
  %v332 = vpop.f32.mrf.mxu0
  %v333 = vadd.f32 %v101, %v332
  %v334 = vpop.f32.mrf.mxu0
  %v335 = vpop.f32.mrf.mxu0
  %v336 = vadd.f32 %v101, %v335
  %v337 = vpop.f32.mrf.mxu0
  %338 = vmatprep.mubr.bf16.mxu0 0
  %339 = vmatmul.mubr.bf16.gmra.mxu0 %v114
  %v340 = vpop.f32.mrf.mxu0
  %v341 = vadd.f32 %v101, %v340
  %v342 = vpop.f32.mrf.mxu0
  %v343 = vpop.f32.mrf.mxu0
  %v344 = vadd.f32 %v101, %v343
  %v345 = vpop.f32.mrf.mxu0
  %346 = vdwg.mxu0
  %v347 = vmul.f32 %v280, 0.17677669
  %v348 = vmul.f32 %v284, 0.17677669
  %v349 = vmul.f32 %v290, 0.17677669
  %v350 = vmul.f32 %v294, 0.17677669
  %v351 = vpack.c.bf16 %v348, %v347
  %v352 = vpack.c.bf16 %v350, %v349
  %v353 = vpack.c.bf16 %v286, %v282
  %v354 = vpack.c.bf16 %v296, %v292
  %v355 = vpack.c.bf16 %v336, %v333
  %v356 = vpack.c.bf16 %v344, %v341
  %v357 = vld [vmem:[%s1] sm:$0xf]
  %v358 = vld [vmem:[%s1 + $0x4] sm:$0xf]
  %v359 = vld [vmem:[%s1 + $0x8] sm:$0xf]
  %v360 = vld [vmem:[%s1 + $0xc] sm:$0xf]
  %v361 = vunpack.c.l.bf16 %v357
  %v362 = vunpack.c.l.bf16 %v358
  %v363 = vunpack.c.l.bf16 %v359
  %v364 = vunpack.c.l.bf16 %v360
  %v365 = vld [vmem:[%s4] sm:$0xf]
  %v366 = vld [vmem:[%s4 + $0x4] sm:$0xf]
  %v367 = vld [vmem:[%s4 + $0x8] sm:$0xf]
  %v368 = vld [vmem:[%s4 + $0xc] sm:$0xf]
  %v369 = vld [vmem:[%s4 + $0x10] sm:$0xf]
  %v370 = vld [vmem:[%s4 + $0x14] sm:$0xf]
  %v371 = vld [vmem:[%s4 + $0x18] sm:$0xf]
  %v372 = vld [vmem:[%s4 + $0x1c] sm:$0xf]
  %v373 = vld [vmem:[%s4 + $0x20] sm:$0xf]
  %v374 = vld [vmem:[%s4 + $0x24] sm:$0xf]
  %v375 = vld [vmem:[%s4 + $0x28] sm:$0xf]
  %v376 = vld [vmem:[%s4 + $0x2c] sm:$0xf]
  %v377 = vld [vmem:[%s4 + $0x30] sm:$0xf]
  %v378 = vld [vmem:[%s4 + $0x34] sm:$0xf]
  %v379 = vld [vmem:[%s4 + $0x38] sm:$0xf]
  %v380 = vld [vmem:[%s4 + $0x3c] sm:$0xf]
  %v381 = vld [vmem:[%s5] sm:$0x1]
  %vm382 = vcmask 261120
  %v384 = vsel %vm382, %v351, 0
  %v387 = vsel %vm382, %v353, 0
  %389 = vmatprep.subr.bf16.mxu0 0
  %390 = vmatpush1.bf16.xpose.msra.mxu0 0
  %391 = vmatprep.subr.bf16.mxu0 0
  %392 = vmatpush1.bf16.xpose.msra.mxu0 0
  %393 = vmatprep.subr.bf16.mxu0 0
  %394 = vmatpush1.bf16.xpose.msra.mxu0 0
  %395 = vmatprep.subr.bf16.mxu0 0
  %396 = vmatpush1.bf16.xpose.msra.mxu0 0
  %397 = vmatprep.subr.bf16.mxu0 0
  %398 = vmatpush1.bf16.xpose.msra.mxu0 0
  %399 = vmatprep.subr.bf16.mxu0 0
  %400 = vmatpush1.bf16.xpose.msra.mxu0 0
  %401 = vmatprep.subr.bf16.mxu0 0
  %402 = vmatpush1.bf16.xpose.msra.mxu0 0
  %403 = vmatprep.subr.bf16.mxu0 0
  %404 = vmatpush1.bf16.xpose.msra.mxu0 %v387
  %405 = vmatprep.subr.bf16.mxu0 0
  %406 = vmatpush2.bf16.xpose.msra.mxu0 0
  %407 = vmatprep.subr.bf16.mxu0 0
  %408 = vmatpush2.bf16.xpose.msra.mxu0 0
  %409 = vmatprep.subr.bf16.mxu0 0
  %410 = vmatpush2.bf16.xpose.msra.mxu0 0
  %411 = vmatprep.subr.bf16.mxu0 0
  %412 = vmatpush2.bf16.xpose.msra.mxu0 0
  %413 = vmatprep.subr.bf16.mxu0 0
  %414 = vmatpush2.bf16.xpose.msra.mxu0 0
  %415 = vmatprep.subr.bf16.mxu0 0
  %416 = vmatpush2.bf16.xpose.msra.mxu0 0
  %417 = vmatprep.subr.bf16.mxu0 0
  %418 = vmatpush2.bf16.xpose.msra.mxu0 0
  %419 = vmatprep.subr.bf16.mxu0 0
  %420 = vmatpush2.bf16.xpose.msra.mxu0 0
  %421 = vmatprep.mubr.bf16.mxu0 0
  %422 = vmatmul.mubr.bf16.gmra.mxu0 %v384
  %v423 = vpop.f32.mrf.mxu0
  %v424 = vadd.f32 %v361, %v423
  %v425 = vpop.f32.mrf.mxu0
  %v426 = vpop.f32.mrf.mxu0
  %v427 = vadd.f32 %v362, %v426
  %v428 = vpop.f32.mrf.mxu0
  %429 = vdwg.mxu0
  %v431 = vsel %vm382, %v352, 0
  %v434 = vsel %vm382, %v354, 0
  %436 = vmatprep.subr.bf16.mxu0 0
  %437 = vmatpush1.bf16.xpose.msra.mxu0 0
  %438 = vmatprep.subr.bf16.mxu0 0
  %439 = vmatpush1.bf16.xpose.msra.mxu0 0
  %440 = vmatprep.subr.bf16.mxu0 0
  %441 = vmatpush1.bf16.xpose.msra.mxu0 0
  %442 = vmatprep.subr.bf16.mxu0 0
  %443 = vmatpush1.bf16.xpose.msra.mxu0 0
  %444 = vmatprep.subr.bf16.mxu0 0
  %445 = vmatpush1.bf16.xpose.msra.mxu0 0
  %446 = vmatprep.subr.bf16.mxu0 0
  %447 = vmatpush1.bf16.xpose.msra.mxu0 0
  %448 = vmatprep.subr.bf16.mxu0 0
  %449 = vmatpush1.bf16.xpose.msra.mxu0 0
  %450 = vmatprep.subr.bf16.mxu0 0
  %451 = vmatpush1.bf16.xpose.msra.mxu0 %v434
  %452 = vmatprep.subr.bf16.mxu0 0
  %453 = vmatpush2.bf16.xpose.msra.mxu0 0
  %454 = vmatprep.subr.bf16.mxu0 0
  %455 = vmatpush2.bf16.xpose.msra.mxu0 0
  %456 = vmatprep.subr.bf16.mxu0 0
  %457 = vmatpush2.bf16.xpose.msra.mxu0 0
  %458 = vmatprep.subr.bf16.mxu0 0
  %459 = vmatpush2.bf16.xpose.msra.mxu0 0
  %460 = vmatprep.subr.bf16.mxu0 0
  %461 = vmatpush2.bf16.xpose.msra.mxu0 0
  %462 = vmatprep.subr.bf16.mxu0 0
  %463 = vmatpush2.bf16.xpose.msra.mxu0 0
  %464 = vmatprep.subr.bf16.mxu0 0
  %465 = vmatpush2.bf16.xpose.msra.mxu0 0
  %466 = vmatprep.subr.bf16.mxu0 0
  %467 = vmatpush2.bf16.xpose.msra.mxu0 0
  %468 = vmatprep.mubr.bf16.mxu0 0
  %469 = vmatmul.mubr.bf16.gmra.mxu0 %v431
  %v470 = vpop.f32.mrf.mxu0
  %v471 = vadd.f32 %v363, %v470
  %v472 = vpop.f32.mrf.mxu0
  %v473 = vpop.f32.mrf.mxu0
  %v474 = vadd.f32 %v364, %v473
  %v475 = vpop.f32.mrf.mxu0
  %476 = vdwg.mxu0
  %vm477 = vcmask 130048
  %v478 = vsel %vm477, %v424, -inf
  %479 = vmax.xlane.f32.xlu0 %v478
  %v480 = vpop.xlane.xlu0 %479
  %v481 = vsel %vm477, %v427, -inf
  %482 = vmax.xlane.f32.xlu0 %v481
  %v483 = vpop.xlane.xlu0 %482
  %v484 = vsel %vm477, %v471, -inf
  %485 = vmax.xlane.f32.xlu0 %v484
  %v486 = vpop.xlane.xlu0 %485
  %v487 = vsel %vm477, %v474, -inf
  %488 = vmax.xlane.f32.xlu0 %v487
  %v489 = vpop.xlane.xlu0 %488
  %v490 = vsub.f32 %v424, %v480
  %v491 = vsub.f32 %v427, %v483
  %v492 = vsub.f32 %v471, %v486
  %v493 = vsub.f32 %v474, %v489
  %v494 = vmul.f32 %v490, 1.442695
  %v495 = vpow.pop %v494
  %v496 = vmul.f32 %v491, 1.442695
  %v497 = vpow.pop %v496
  %v498 = vmul.f32 %v492, 1.442695
  %v499 = vpow.pop %v498
  %v500 = vmul.f32 %v493, 1.442695
  %v501 = vpow.pop %v500
  %v502 = vsel %vm477, %v495, 0.0
  %503 = vadd.xlane.f32.xlu0 %v502
  %v504 = vpop.xlane.xlu0 %503
  %v505 = vsel %vm477, %v497, 0.0
  %506 = vadd.xlane.f32.xlu0 %v505
  %v507 = vpop.xlane.xlu0 %506
  %v508 = vsel %vm477, %v499, 0.0
  %509 = vadd.xlane.f32.xlu0 %v508
  %v510 = vpop.xlane.xlu0 %509
  %v511 = vsel %vm477, %v501, 0.0
  %512 = vadd.xlane.f32.xlu0 %v511
  %v513 = vpop.xlane.xlu0 %512
  %v514 = vrcp.pop %v504
  %v515 = vrcp.pop %v507
  %v516 = vrcp.pop %v510
  %v517 = vrcp.pop %v513
  %v518 = vmul.f32 %v495, %v514
  %v519 = vmul.f32 %v497, %v515
  %v520 = vmul.f32 %v499, %v516
  %v521 = vmul.f32 %v501, %v517
  %v522 = vpack.c.bf16 %v519, %v518
  %v523 = vpack.c.bf16 %v521, %v520
  %v525 = vsel %vm477, %v522, 0
  %527 = vmatprep.subr.bf16.mxu0 0
  %528 = vmatpush1.bf16.msra.mxu0 0
  %529 = vmatprep.subr.bf16.mxu0 0
  %530 = vmatpush1.bf16.msra.mxu0 0
  %531 = vmatprep.subr.bf16.mxu0 0
  %532 = vmatpush1.bf16.msra.mxu0 0
  %533 = vmatprep.subr.bf16.mxu0 0
  %534 = vmatpush1.bf16.msra.mxu0 0
  %535 = vmatprep.subr.bf16.mxu0 0
  %536 = vmatpush1.bf16.msra.mxu0 0
  %537 = vmatprep.subr.bf16.mxu0 0
  %538 = vmatpush1.bf16.msra.mxu0 0
  %539 = vmatprep.subr.bf16.mxu0 0
  %540 = vmatpush1.bf16.msra.mxu0 0
  %541 = vmatprep.subr.bf16.mxu0 0
  %542 = vmatpush1.bf16.msra.mxu0 %v355
  %543 = vmatprep.subr.bf16.mxu0 0
  %544 = vmatpush2.bf16.msra.mxu0 0
  %545 = vmatprep.subr.bf16.mxu0 0
  %546 = vmatpush2.bf16.msra.mxu0 0
  %547 = vmatprep.subr.bf16.mxu0 0
  %548 = vmatpush2.bf16.msra.mxu0 0
  %549 = vmatprep.subr.bf16.mxu0 0
  %550 = vmatpush2.bf16.msra.mxu0 0
  %551 = vmatprep.subr.bf16.mxu0 0
  %552 = vmatpush2.bf16.msra.mxu0 0
  %553 = vmatprep.subr.bf16.mxu0 0
  %554 = vmatpush2.bf16.msra.mxu0 0
  %555 = vmatprep.subr.bf16.mxu0 0
  %556 = vmatpush2.bf16.msra.mxu0 0
  %557 = vmatprep.subr.bf16.mxu0 0
  %558 = vmatpush2.bf16.msra.mxu0 0
  %559 = vmatprep.mubr.bf16.mxu0 0
  %560 = vmatmul.mubr.bf16.gmra.mxu0 %v525
  %v561 = vpop.f32.mrf.mxu0
  %v562 = vadd.f32 0.0, %v561
  %v563 = vpop.f32.mrf.mxu0
  %v564 = vpop.f32.mrf.mxu0
  %v565 = vadd.f32 0.0, %v564
  %v566 = vpop.f32.mrf.mxu0
  %567 = vdwg.mxu0
  %v569 = vsel %vm477, %v523, 0
  %571 = vmatprep.subr.bf16.mxu0 0
  %572 = vmatpush1.bf16.msra.mxu0 0
  %573 = vmatprep.subr.bf16.mxu0 0
  %574 = vmatpush1.bf16.msra.mxu0 0
  %575 = vmatprep.subr.bf16.mxu0 0
  %576 = vmatpush1.bf16.msra.mxu0 0
  %577 = vmatprep.subr.bf16.mxu0 0
  %578 = vmatpush1.bf16.msra.mxu0 0
  %579 = vmatprep.subr.bf16.mxu0 0
  %580 = vmatpush1.bf16.msra.mxu0 0
  %581 = vmatprep.subr.bf16.mxu0 0
  %582 = vmatpush1.bf16.msra.mxu0 0
  %583 = vmatprep.subr.bf16.mxu0 0
  %584 = vmatpush1.bf16.msra.mxu0 0
  %585 = vmatprep.subr.bf16.mxu0 0
  %586 = vmatpush1.bf16.msra.mxu0 %v356
  %587 = vmatprep.subr.bf16.mxu0 0
  %588 = vmatpush2.bf16.msra.mxu0 0
  %589 = vmatprep.subr.bf16.mxu0 0
  %590 = vmatpush2.bf16.msra.mxu0 0
  %591 = vmatprep.subr.bf16.mxu0 0
  %592 = vmatpush2.bf16.msra.mxu0 0
  %593 = vmatprep.subr.bf16.mxu0 0
  %594 = vmatpush2.bf16.msra.mxu0 0
  %595 = vmatprep.subr.bf16.mxu0 0
  %596 = vmatpush2.bf16.msra.mxu0 0
  %597 = vmatprep.subr.bf16.mxu0 0
  %598 = vmatpush2.bf16.msra.mxu0 0
  %599 = vmatprep.subr.bf16.mxu0 0
  %600 = vmatpush2.bf16.msra.mxu0 0
  %601 = vmatprep.subr.bf16.mxu0 0
  %602 = vmatpush2.bf16.msra.mxu0 0
  %603 = vmatprep.mubr.bf16.mxu0 0
  %604 = vmatmul.mubr.bf16.gmra.mxu0 %v569
  %v605 = vpop.f32.mrf.mxu0
  %v606 = vadd.f32 0.0, %v605
  %v607 = vpop.f32.mrf.mxu0
  %v608 = vpop.f32.mrf.mxu0
  %v609 = vadd.f32 0.0, %v608
  %v610 = vpop.f32.mrf.mxu0
  %611 = vdwg.mxu0
  %v612 = vpack.c.bf16 %v565, %v562
  %v613 = vpack.c.bf16 %v609, %v606
  %v618 = vunpack.c.l.b16 %v365
  %v619 = vunpack.c.l.b16 %v366
  %v620 = vunpack.c.l.b16 %v367
  %v621 = vunpack.c.l.b16 %v368
  %v622 = vpack.c.b16 %v619, %v618
  %v623 = vpack.c.b16 %v621, %v620
  %v627 = vsel %vm382, %v612, 0
  %v630 = vsel %vm382, %v613, 0
  %632 = vmatprep.subr.bf16.mxu0 0
  %633 = vmatpush1.bf16.msra.mxu0 0
  %634 = vmatprep.subr.bf16.mxu0 0
  %635 = vmatpush1.bf16.msra.mxu0 0
  %636 = vmatprep.subr.bf16.mxu0 0
  %637 = vmatpush1.bf16.msra.mxu0 0
  %638 = vmatprep.subr.bf16.mxu0 0
  %639 = vmatpush1.bf16.msra.mxu0 0
  %640 = vmatprep.subr.bf16.mxu0 0
  %641 = vmatpush1.bf16.msra.mxu0 0
  %642 = vmatprep.subr.bf16.mxu0 0
  %643 = vmatpush1.bf16.msra.mxu0 0
  %644 = vmatprep.subr.bf16.mxu0 0
  %645 = vmatpush1.bf16.msra.mxu0 %v623
  %646 = vmatprep.subr.bf16.mxu0 0
  %647 = vmatpush1.bf16.msra.mxu0 %v622
  %648 = vmatprep.subr.bf16.mxu0 0
  %649 = vmatpush2.bf16.msra.mxu0 0
  %650 = vmatprep.subr.bf16.mxu0 0
  %651 = vmatpush2.bf16.msra.mxu0 0
  %652 = vmatprep.subr.bf16.mxu0 0
  %653 = vmatpush2.bf16.msra.mxu0 0
  %654 = vmatprep.subr.bf16.mxu0 0
  %655 = vmatpush2.bf16.msra.mxu0 0
  %656 = vmatprep.subr.bf16.mxu0 0
  %657 = vmatpush2.bf16.msra.mxu0 0
  %658 = vmatprep.subr.bf16.mxu0 0
  %659 = vmatpush2.bf16.msra.mxu0 0
  %660 = vmatprep.subr.bf16.mxu0 0
  %661 = vmatpush2.bf16.msra.mxu0 0
  %662 = vmatprep.subr.bf16.mxu0 0
  %663 = vmatpush2.bf16.msra.mxu0 0
  %664 = vmatprep.mubr.bf16.mxu0 0
  %665 = vmatmul.mubr.bf16.gmra.mxu0 %v627
  %v666 = vpop.f32.mrf.mxu0
  %v667 = vadd.f32 0.0, %v666
  %v668 = vpop.f32.mrf.mxu0
  %v669 = vpop.f32.mrf.mxu0
  %v670 = vadd.f32 0.0, %v669
  %v671 = vpop.f32.mrf.mxu0
  %672 = vmatprep.mubr.bf16.mxu0 0
  %673 = vmatmul.mubr.bf16.gmra.mxu0 %v630
  %v674 = vpop.f32.mrf.mxu0
  %v675 = vadd.f32 0.0, %v674
  %v676 = vpop.f32.mrf.mxu0
  %v677 = vpop.f32.mrf.mxu0
  %v678 = vadd.f32 0.0, %v677
  %v679 = vpop.f32.mrf.mxu0
  %680 = vdwg.mxu0
  %v682 = vlaneseq
  %v683 = vshrl.u32 %v682, 7
  %v684 = vsub.s32 0, %v683
  %v685 = vrot.slane %v381, %v684
  %v687 = vadd.f32 %v685, %v667
  %v688 = vadd.f32 %v685, %v670
  %v689 = vadd.f32 %v685, %v675
  %v690 = vadd.f32 %v685, %v678
  %692 = vrot.lane.b32.xlu0 %v351, 96
  %v693 = vpop.permute.xlu0 %692
  %695 = vrot.lane.b32.xlu0 %v353, 96
  %v696 = vpop.permute.xlu0 %695
  %v698 = vsel %vm382, %v693, 0
  %v701 = vsel %vm382, %v696, 0
  %703 = vmatprep.subr.bf16.mxu0 0
  %704 = vmatpush1.bf16.xpose.msra.mxu0 0
  %705 = vmatprep.subr.bf16.mxu0 0
  %706 = vmatpush1.bf16.xpose.msra.mxu0 0
  %707 = vmatprep.subr.bf16.mxu0 0
  %708 = vmatpush1.bf16.xpose.msra.mxu0 0
  %709 = vmatprep.subr.bf16.mxu0 0
  %710 = vmatpush1.bf16.xpose.msra.mxu0 0
  %711 = vmatprep.subr.bf16.mxu0 0
  %712 = vmatpush1.bf16.xpose.msra.mxu0 0
  %713 = vmatprep.subr.bf16.mxu0 0
  %714 = vmatpush1.bf16.xpose.msra.mxu0 0
  %715 = vmatprep.subr.bf16.mxu0 0
  %716 = vmatpush1.bf16.xpose.msra.mxu0 0
  %717 = vmatprep.subr.bf16.mxu0 0
  %718 = vmatpush1.bf16.xpose.msra.mxu0 %v701
  %719 = vmatprep.subr.bf16.mxu0 0
  %720 = vmatpush2.bf16.xpose.msra.mxu0 0
  %721 = vmatprep.subr.bf16.mxu0 0
  %722 = vmatpush2.bf16.xpose.msra.mxu0 0
  %723 = vmatprep.subr.bf16.mxu0 0
  %724 = vmatpush2.bf16.xpose.msra.mxu0 0
  %725 = vmatprep.subr.bf16.mxu0 0
  %726 = vmatpush2.bf16.xpose.msra.mxu0 0
  %727 = vmatprep.subr.bf16.mxu0 0
  %728 = vmatpush2.bf16.xpose.msra.mxu0 0
  %729 = vmatprep.subr.bf16.mxu0 0
  %730 = vmatpush2.bf16.xpose.msra.mxu0 0
  %731 = vmatprep.subr.bf16.mxu0 0
  %732 = vmatpush2.bf16.xpose.msra.mxu0 0
  %733 = vmatprep.subr.bf16.mxu0 0
  %734 = vmatpush2.bf16.xpose.msra.mxu0 0
  %735 = vmatprep.mubr.bf16.mxu0 0
  %736 = vmatmul.mubr.bf16.gmra.mxu0 %v698
  %v737 = vpop.f32.mrf.mxu0
  %v738 = vadd.f32 %v361, %v737
  %v739 = vpop.f32.mrf.mxu0
  %v740 = vpop.f32.mrf.mxu0
  %v741 = vadd.f32 %v362, %v740
  %v742 = vpop.f32.mrf.mxu0
  %743 = vdwg.mxu0
  %745 = vrot.lane.b32.xlu0 %v352, 96
  %v746 = vpop.permute.xlu0 %745
  %748 = vrot.lane.b32.xlu0 %v354, 96
  %v749 = vpop.permute.xlu0 %748
  %v751 = vsel %vm382, %v746, 0
  %v754 = vsel %vm382, %v749, 0
  %756 = vmatprep.subr.bf16.mxu0 0
  %757 = vmatpush1.bf16.xpose.msra.mxu0 0
  %758 = vmatprep.subr.bf16.mxu0 0
  %759 = vmatpush1.bf16.xpose.msra.mxu0 0
  %760 = vmatprep.subr.bf16.mxu0 0
  %761 = vmatpush1.bf16.xpose.msra.mxu0 0
  %762 = vmatprep.subr.bf16.mxu0 0
  %763 = vmatpush1.bf16.xpose.msra.mxu0 0
  %764 = vmatprep.subr.bf16.mxu0 0
  %765 = vmatpush1.bf16.xpose.msra.mxu0 0
  %766 = vmatprep.subr.bf16.mxu0 0
  %767 = vmatpush1.bf16.xpose.msra.mxu0 0
  %768 = vmatprep.subr.bf16.mxu0 0
  %769 = vmatpush1.bf16.xpose.msra.mxu0 0
  %770 = vmatprep.subr.bf16.mxu0 0
  %771 = vmatpush1.bf16.xpose.msra.mxu0 %v754
  %772 = vmatprep.subr.bf16.mxu0 0
  %773 = vmatpush2.bf16.xpose.msra.mxu0 0
  %774 = vmatprep.subr.bf16.mxu0 0
  %775 = vmatpush2.bf16.xpose.msra.mxu0 0
  %776 = vmatprep.subr.bf16.mxu0 0
  %777 = vmatpush2.bf16.xpose.msra.mxu0 0
  %778 = vmatprep.subr.bf16.mxu0 0
  %779 = vmatpush2.bf16.xpose.msra.mxu0 0
  %780 = vmatprep.subr.bf16.mxu0 0
  %781 = vmatpush2.bf16.xpose.msra.mxu0 0
  %782 = vmatprep.subr.bf16.mxu0 0
  %783 = vmatpush2.bf16.xpose.msra.mxu0 0
  %784 = vmatprep.subr.bf16.mxu0 0
  %785 = vmatpush2.bf16.xpose.msra.mxu0 0
  %786 = vmatprep.subr.bf16.mxu0 0
  %787 = vmatpush2.bf16.xpose.msra.mxu0 0
  %788 = vmatprep.mubr.bf16.mxu0 0
  %789 = vmatmul.mubr.bf16.gmra.mxu0 %v751
  %v790 = vpop.f32.mrf.mxu0
  %v791 = vadd.f32 %v363, %v790
  %v792 = vpop.f32.mrf.mxu0
  %v793 = vpop.f32.mrf.mxu0
  %v794 = vadd.f32 %v364, %v793
  %v795 = vpop.f32.mrf.mxu0
  %796 = vdwg.mxu0
  %v797 = vsel %vm477, %v738, -inf
  %798 = vmax.xlane.f32.xlu0 %v797
  %v799 = vpop.xlane.xlu0 %798
  %v800 = vsel %vm477, %v741, -inf
  %801 = vmax.xlane.f32.xlu0 %v800
  %v802 = vpop.xlane.xlu0 %801
  %v803 = vsel %vm477, %v791, -inf
  %804 = vmax.xlane.f32.xlu0 %v803
  %v805 = vpop.xlane.xlu0 %804
  %v806 = vsel %vm477, %v794, -inf
  %807 = vmax.xlane.f32.xlu0 %v806
  %v808 = vpop.xlane.xlu0 %807
  %v809 = vsub.f32 %v738, %v799
  %v810 = vsub.f32 %v741, %v802
  %v811 = vsub.f32 %v791, %v805
  %v812 = vsub.f32 %v794, %v808
  %v813 = vmul.f32 %v809, 1.442695
  %v814 = vpow.pop %v813
  %v815 = vmul.f32 %v810, 1.442695
  %v816 = vpow.pop %v815
  %v817 = vmul.f32 %v811, 1.442695
  %v818 = vpow.pop %v817
  %v819 = vmul.f32 %v812, 1.442695
  %v820 = vpow.pop %v819
  %v821 = vsel %vm477, %v814, 0.0
  %822 = vadd.xlane.f32.xlu0 %v821
  %v823 = vpop.xlane.xlu0 %822
  %v824 = vsel %vm477, %v816, 0.0
  %825 = vadd.xlane.f32.xlu0 %v824
  %v826 = vpop.xlane.xlu0 %825
  %v827 = vsel %vm477, %v818, 0.0
  %828 = vadd.xlane.f32.xlu0 %v827
  %v829 = vpop.xlane.xlu0 %828
  %v830 = vsel %vm477, %v820, 0.0
  %831 = vadd.xlane.f32.xlu0 %v830
  %v832 = vpop.xlane.xlu0 %831
  %v833 = vrcp.pop %v823
  %v834 = vrcp.pop %v826
  %v835 = vrcp.pop %v829
  %v836 = vrcp.pop %v832
  %v837 = vmul.f32 %v814, %v833
  %v838 = vmul.f32 %v816, %v834
  %v839 = vmul.f32 %v818, %v835
  %v840 = vmul.f32 %v820, %v836
  %v841 = vpack.c.bf16 %v838, %v837
  %v842 = vpack.c.bf16 %v840, %v839
  %844 = vrot.lane.b32.xlu0 %v355, 96
  %v845 = vpop.permute.xlu0 %844
  %v848 = vsel %vm477, %v841, 0
  %850 = vmatprep.subr.bf16.mxu0 0
  %851 = vmatpush1.bf16.msra.mxu0 0
  %852 = vmatprep.subr.bf16.mxu0 0
  %853 = vmatpush1.bf16.msra.mxu0 0
  %854 = vmatprep.subr.bf16.mxu0 0
  %855 = vmatpush1.bf16.msra.mxu0 0
  %856 = vmatprep.subr.bf16.mxu0 0
  %857 = vmatpush1.bf16.msra.mxu0 0
  %858 = vmatprep.subr.bf16.mxu0 0
  %859 = vmatpush1.bf16.msra.mxu0 0
  %860 = vmatprep.subr.bf16.mxu0 0
  %861 = vmatpush1.bf16.msra.mxu0 0
  %862 = vmatprep.subr.bf16.mxu0 0
  %863 = vmatpush1.bf16.msra.mxu0 0
  %864 = vmatprep.subr.bf16.mxu0 0
  %865 = vmatpush1.bf16.msra.mxu0 %v845
  %866 = vmatprep.subr.bf16.mxu0 0
  %867 = vmatpush2.bf16.msra.mxu0 0
  %868 = vmatprep.subr.bf16.mxu0 0
  %869 = vmatpush2.bf16.msra.mxu0 0
  %870 = vmatprep.subr.bf16.mxu0 0
  %871 = vmatpush2.bf16.msra.mxu0 0
  %872 = vmatprep.subr.bf16.mxu0 0
  %873 = vmatpush2.bf16.msra.mxu0 0
  %874 = vmatprep.subr.bf16.mxu0 0
  %875 = vmatpush2.bf16.msra.mxu0 0
  %876 = vmatprep.subr.bf16.mxu0 0
  %877 = vmatpush2.bf16.msra.mxu0 0
  %878 = vmatprep.subr.bf16.mxu0 0
  %879 = vmatpush2.bf16.msra.mxu0 0
  %880 = vmatprep.subr.bf16.mxu0 0
  %881 = vmatpush2.bf16.msra.mxu0 0
  %882 = vmatprep.mubr.bf16.mxu0 0
  %883 = vmatmul.mubr.bf16.gmra.mxu0 %v848
  %v884 = vpop.f32.mrf.mxu0
  %v885 = vadd.f32 0.0, %v884
  %v886 = vpop.f32.mrf.mxu0
  %v887 = vpop.f32.mrf.mxu0
  %v888 = vadd.f32 0.0, %v887
  %v889 = vpop.f32.mrf.mxu0
  %890 = vdwg.mxu0
  %892 = vrot.lane.b32.xlu0 %v356, 96
  %v893 = vpop.permute.xlu0 %892
  %v896 = vsel %vm477, %v842, 0
  %898 = vmatprep.subr.bf16.mxu0 0
  %899 = vmatpush1.bf16.msra.mxu0 0
  %900 = vmatprep.subr.bf16.mxu0 0
  %901 = vmatpush1.bf16.msra.mxu0 0
  %902 = vmatprep.subr.bf16.mxu0 0
  %903 = vmatpush1.bf16.msra.mxu0 0
  %904 = vmatprep.subr.bf16.mxu0 0
  %905 = vmatpush1.bf16.msra.mxu0 0
  %906 = vmatprep.subr.bf16.mxu0 0
  %907 = vmatpush1.bf16.msra.mxu0 0
  %908 = vmatprep.subr.bf16.mxu0 0
  %909 = vmatpush1.bf16.msra.mxu0 0
  %910 = vmatprep.subr.bf16.mxu0 0
  %911 = vmatpush1.bf16.msra.mxu0 0
  %912 = vmatprep.subr.bf16.mxu0 0
  %913 = vmatpush1.bf16.msra.mxu0 %v893
  %914 = vmatprep.subr.bf16.mxu0 0
  %915 = vmatpush2.bf16.msra.mxu0 0
  %916 = vmatprep.subr.bf16.mxu0 0
  %917 = vmatpush2.bf16.msra.mxu0 0
  %918 = vmatprep.subr.bf16.mxu0 0
  %919 = vmatpush2.bf16.msra.mxu0 0
  %920 = vmatprep.subr.bf16.mxu0 0
  %921 = vmatpush2.bf16.msra.mxu0 0
  %922 = vmatprep.subr.bf16.mxu0 0
  %923 = vmatpush2.bf16.msra.mxu0 0
  %924 = vmatprep.subr.bf16.mxu0 0
  %925 = vmatpush2.bf16.msra.mxu0 0
  %926 = vmatprep.subr.bf16.mxu0 0
  %927 = vmatpush2.bf16.msra.mxu0 0
  %928 = vmatprep.subr.bf16.mxu0 0
  %929 = vmatpush2.bf16.msra.mxu0 0
  %930 = vmatprep.mubr.bf16.mxu0 0
  %931 = vmatmul.mubr.bf16.gmra.mxu0 %v896
  %v932 = vpop.f32.mrf.mxu0
  %v933 = vadd.f32 0.0, %v932
  %v934 = vpop.f32.mrf.mxu0
  %v935 = vpop.f32.mrf.mxu0
  %v936 = vadd.f32 0.0, %v935
  %v937 = vpop.f32.mrf.mxu0
  %938 = vdwg.mxu0
  %v939 = vpack.c.bf16 %v888, %v885
  %v940 = vpack.c.bf16 %v936, %v933
  %v945 = vunpack.c.l.b16 %v369
  %v946 = vunpack.c.l.b16 %v370
  %v947 = vunpack.c.l.b16 %v371
  %v948 = vunpack.c.l.b16 %v372
  %v949 = vpack.c.b16 %v946, %v945
  %v950 = vpack.c.b16 %v948, %v947
  %v954 = vsel %vm382, %v939, 0
  %v957 = vsel %vm382, %v940, 0
  %959 = vmatprep.subr.bf16.mxu0 0
  %960 = vmatpush1.bf16.msra.mxu0 0
  %961 = vmatprep.subr.bf16.mxu0 0
  %962 = vmatpush1.bf16.msra.mxu0 0
  %963 = vmatprep.subr.bf16.mxu0 0
  %964 = vmatpush1.bf16.msra.mxu0 0
  %965 = vmatprep.subr.bf16.mxu0 0
  %966 = vmatpush1.bf16.msra.mxu0 0
  %967 = vmatprep.subr.bf16.mxu0 0
  %968 = vmatpush1.bf16.msra.mxu0 0
  %969 = vmatprep.subr.bf16.mxu0 0
  %970 = vmatpush1.bf16.msra.mxu0 0
  %971 = vmatprep.subr.bf16.mxu0 0
  %972 = vmatpush1.bf16.msra.mxu0 %v950
  %973 = vmatprep.subr.bf16.mxu0 0
  %974 = vmatpush1.bf16.msra.mxu0 %v949
  %975 = vmatprep.subr.bf16.mxu0 0
  %976 = vmatpush2.bf16.msra.mxu0 0
  %977 = vmatprep.subr.bf16.mxu0 0
  %978 = vmatpush2.bf16.msra.mxu0 0
  %979 = vmatprep.subr.bf16.mxu0 0
  %980 = vmatpush2.bf16.msra.mxu0 0
  %981 = vmatprep.subr.bf16.mxu0 0
  %982 = vmatpush2.bf16.msra.mxu0 0
  %983 = vmatprep.subr.bf16.mxu0 0
  %984 = vmatpush2.bf16.msra.mxu0 0
  %985 = vmatprep.subr.bf16.mxu0 0
  %986 = vmatpush2.bf16.msra.mxu0 0
  %987 = vmatprep.subr.bf16.mxu0 0
  %988 = vmatpush2.bf16.msra.mxu0 0
  %989 = vmatprep.subr.bf16.mxu0 0
  %990 = vmatpush2.bf16.msra.mxu0 0
  %991 = vmatprep.mubr.bf16.mxu0 0
  %992 = vmatmul.mubr.bf16.gmra.mxu0 %v954
  %v993 = vpop.f32.mrf.mxu0
  %v994 = vadd.f32 0.0, %v993
  %v995 = vpop.f32.mrf.mxu0
  %v996 = vpop.f32.mrf.mxu0
  %v997 = vadd.f32 0.0, %v996
  %v998 = vpop.f32.mrf.mxu0
  %999 = vmatprep.mubr.bf16.mxu0 0
  %1000 = vmatmul.mubr.bf16.gmra.mxu0 %v957
  %v1001 = vpop.f32.mrf.mxu0
  %v1002 = vadd.f32 0.0, %v1001
  %v1003 = vpop.f32.mrf.mxu0
  %v1004 = vpop.f32.mrf.mxu0
  %v1005 = vadd.f32 0.0, %v1004
  %v1006 = vpop.f32.mrf.mxu0
  %1007 = vdwg.mxu0
  %v1008 = vadd.f32 %v687, %v994
  %v1009 = vadd.f32 %v688, %v997
  %v1010 = vadd.f32 %v689, %v1002
  %v1011 = vadd.f32 %v690, %v1005
  %1012 = vrot.lane.b32.xlu0 %v351, 64
  %v1013 = vpop.permute.xlu0 %1012
  %1014 = vrot.lane.b32.xlu0 %v353, 64
  %v1015 = vpop.permute.xlu0 %1014
  %v1017 = vsel %vm382, %v1013, 0
  %v1020 = vsel %vm382, %v1015, 0
  %1022 = vmatprep.subr.bf16.mxu0 0
  %1023 = vmatpush1.bf16.xpose.msra.mxu0 0
  %1024 = vmatprep.subr.bf16.mxu0 0
  %1025 = vmatpush1.bf16.xpose.msra.mxu0 0
  %1026 = vmatprep.subr.bf16.mxu0 0
  %1027 = vmatpush1.bf16.xpose.msra.mxu0 0
  %1028 = vmatprep.subr.bf16.mxu0 0
  %1029 = vmatpush1.bf16.xpose.msra.mxu0 0
  %1030 = vmatprep.subr.bf16.mxu0 0
  %1031 = vmatpush1.bf16.xpose.msra.mxu0 0
  %1032 = vmatprep.subr.bf16.mxu0 0
  %1033 = vmatpush1.bf16.xpose.msra.mxu0 0
  %1034 = vmatprep.subr.bf16.mxu0 0
  %1035 = vmatpush1.bf16.xpose.msra.mxu0 0
  %1036 = vmatprep.subr.bf16.mxu0 0
  %1037 = vmatpush1.bf16.xpose.msra.mxu0 %v1020
  %1038 = vmatprep.subr.bf16.mxu0 0
  %1039 = vmatpush2.bf16.xpose.msra.mxu0 0
  %1040 = vmatprep.subr.bf16.mxu0 0
  %1041 = vmatpush2.bf16.xpose.msra.mxu0 0
  %1042 = vmatprep.subr.bf16.mxu0 0
  %1043 = vmatpush2.bf16.xpose.msra.mxu0 0
  %1044 = vmatprep.subr.bf16.mxu0 0
  %1045 = vmatpush2.bf16.xpose.msra.mxu0 0
  %1046 = vmatprep.subr.bf16.mxu0 0
  %1047 = vmatpush2.bf16.xpose.msra.mxu0 0
  %1048 = vmatprep.subr.bf16.mxu0 0
  %1049 = vmatpush2.bf16.xpose.msra.mxu0 0
  %1050 = vmatprep.subr.bf16.mxu0 0
  %1051 = vmatpush2.bf16.xpose.msra.mxu0 0
  %1052 = vmatprep.subr.bf16.mxu0 0
  %1053 = vmatpush2.bf16.xpose.msra.mxu0 0
  %1054 = vmatprep.mubr.bf16.mxu0 0
  %1055 = vmatmul.mubr.bf16.gmra.mxu0 %v1017
  %v1056 = vpop.f32.mrf.mxu0
  %v1057 = vadd.f32 %v361, %v1056
  %v1058 = vpop.f32.mrf.mxu0
  %v1059 = vpop.f32.mrf.mxu0
  %v1060 = vadd.f32 %v362, %v1059
  %v1061 = vpop.f32.mrf.mxu0
  %1062 = vdwg.mxu0
  %1063 = vrot.lane.b32.xlu0 %v352, 64
  %v1064 = vpop.permute.xlu0 %1063
  %1065 = vrot.lane.b32.xlu0 %v354, 64
  %v1066 = vpop.permute.xlu0 %1065
  %v1068 = vsel %vm382, %v1064, 0
  %v1071 = vsel %vm382, %v1066, 0
  %1073 = vmatprep.subr.bf16.mxu0 0
  %1074 = vmatpush1.bf16.xpose.msra.mxu0 0
  %1075 = vmatprep.subr.bf16.mxu0 0
  %1076 = vmatpush1.bf16.xpose.msra.mxu0 0
  %1077 = vmatprep.subr.bf16.mxu0 0
  %1078 = vmatpush1.bf16.xpose.msra.mxu0 0
  %1079 = vmatprep.subr.bf16.mxu0 0
  %1080 = vmatpush1.bf16.xpose.msra.mxu0 0
  %1081 = vmatprep.subr.bf16.mxu0 0
  %1082 = vmatpush1.bf16.xpose.msra.mxu0 0
  %1083 = vmatprep.subr.bf16.mxu0 0
  %1084 = vmatpush1.bf16.xpose.msra.mxu0 0
  %1085 = vmatprep.subr.bf16.mxu0 0
  %1086 = vmatpush1.bf16.xpose.msra.mxu0 0
  %1087 = vmatprep.subr.bf16.mxu0 0
  %1088 = vmatpush1.bf16.xpose.msra.mxu0 %v1071
  %1089 = vmatprep.subr.bf16.mxu0 0
  %1090 = vmatpush2.bf16.xpose.msra.mxu0 0
  %1091 = vmatprep.subr.bf16.mxu0 0
  %1092 = vmatpush2.bf16.xpose.msra.mxu0 0
  %1093 = vmatprep.subr.bf16.mxu0 0
  %1094 = vmatpush2.bf16.xpose.msra.mxu0 0
  %1095 = vmatprep.subr.bf16.mxu0 0
  %1096 = vmatpush2.bf16.xpose.msra.mxu0 0
  %1097 = vmatprep.subr.bf16.mxu0 0
  %1098 = vmatpush2.bf16.xpose.msra.mxu0 0
  %1099 = vmatprep.subr.bf16.mxu0 0
  %1100 = vmatpush2.bf16.xpose.msra.mxu0 0
  %1101 = vmatprep.subr.bf16.mxu0 0
  %1102 = vmatpush2.bf16.xpose.msra.mxu0 0
  %1103 = vmatprep.subr.bf16.mxu0 0
  %1104 = vmatpush2.bf16.xpose.msra.mxu0 0
  %1105 = vmatprep.mubr.bf16.mxu0 0
  %1106 = vmatmul.mubr.bf16.gmra.mxu0 %v1068
  %v1107 = vpop.f32.mrf.mxu0
  %v1108 = vadd.f32 %v363, %v1107
  %v1109 = vpop.f32.mrf.mxu0
  %v1110 = vpop.f32.mrf.mxu0
  %v1111 = vadd.f32 %v364, %v1110
  %v1112 = vpop.f32.mrf.mxu0
  %1113 = vdwg.mxu0
  %v1114 = vsel %vm477, %v1057, -inf
  %1115 = vmax.xlane.f32.xlu0 %v1114
  %v1116 = vpop.xlane.xlu0 %1115
  %v1117 = vsel %vm477, %v1060, -inf
  %1118 = vmax.xlane.f32.xlu0 %v1117
  %v1119 = vpop.xlane.xlu0 %1118
  %v1120 = vsel %vm477, %v1108, -inf
  %1121 = vmax.xlane.f32.xlu0 %v1120
  %v1122 = vpop.xlane.xlu0 %1121
  %v1123 = vsel %vm477, %v1111, -inf
  %1124 = vmax.xlane.f32.xlu0 %v1123
  %v1125 = vpop.xlane.xlu0 %1124
  %v1126 = vsub.f32 %v1057, %v1116
  %v1127 = vsub.f32 %v1060, %v1119
  %v1128 = vsub.f32 %v1108, %v1122
  %v1129 = vsub.f32 %v1111, %v1125
  %v1130 = vmul.f32 %v1126, 1.442695
  %v1131 = vpow.pop %v1130
  %v1132 = vmul.f32 %v1127, 1.442695
  %v1133 = vpow.pop %v1132
  %v1134 = vmul.f32 %v1128, 1.442695
  %v1135 = vpow.pop %v1134
  %v1136 = vmul.f32 %v1129, 1.442695
  %v1137 = vpow.pop %v1136
  %v1138 = vsel %vm477, %v1131, 0.0
  %1139 = vadd.xlane.f32.xlu0 %v1138
  %v1140 = vpop.xlane.xlu0 %1139
  %v1141 = vsel %vm477, %v1133, 0.0
  %1142 = vadd.xlane.f32.xlu0 %v1141
  %v1143 = vpop.xlane.xlu0 %1142
  %v1144 = vsel %vm477, %v1135, 0.0
  %1145 = vadd.xlane.f32.xlu0 %v1144
  %v1146 = vpop.xlane.xlu0 %1145
  %v1147 = vsel %vm477, %v1137, 0.0
  %1148 = vadd.xlane.f32.xlu0 %v1147
  %v1149 = vpop.xlane.xlu0 %1148
  %v1150 = vrcp.pop %v1140
  %v1151 = vrcp.pop %v1143
  %v1152 = vrcp.pop %v1146
  %v1153 = vrcp.pop %v1149
  %v1154 = vmul.f32 %v1131, %v1150
  %v1155 = vmul.f32 %v1133, %v1151
  %v1156 = vmul.f32 %v1135, %v1152
  %v1157 = vmul.f32 %v1137, %v1153
  %v1158 = vpack.c.bf16 %v1155, %v1154
  %v1159 = vpack.c.bf16 %v1157, %v1156
  %1160 = vrot.lane.b32.xlu0 %v355, 64
  %v1161 = vpop.permute.xlu0 %1160
  %v1164 = vsel %vm477, %v1158, 0
  %1166 = vmatprep.subr.bf16.mxu0 0
  %1167 = vmatpush1.bf16.msra.mxu0 0
  %1168 = vmatprep.subr.bf16.mxu0 0
  %1169 = vmatpush1.bf16.msra.mxu0 0
  %1170 = vmatprep.subr.bf16.mxu0 0
  %1171 = vmatpush1.bf16.msra.mxu0 0
  %1172 = vmatprep.subr.bf16.mxu0 0
  %1173 = vmatpush1.bf16.msra.mxu0 0
  %1174 = vmatprep.subr.bf16.mxu0 0
  %1175 = vmatpush1.bf16.msra.mxu0 0
  %1176 = vmatprep.subr.bf16.mxu0 0
  %1177 = vmatpush1.bf16.msra.mxu0 0
  %1178 = vmatprep.subr.bf16.mxu0 0
  %1179 = vmatpush1.bf16.msra.mxu0 0
  %1180 = vmatprep.subr.bf16.mxu0 0
  %1181 = vmatpush1.bf16.msra.mxu0 %v1161
  %1182 = vmatprep.subr.bf16.mxu0 0
  %1183 = vmatpush2.bf16.msra.mxu0 0
  %1184 = vmatprep.subr.bf16.mxu0 0
  %1185 = vmatpush2.bf16.msra.mxu0 0
  %1186 = vmatprep.subr.bf16.mxu0 0
  %1187 = vmatpush2.bf16.msra.mxu0 0
  %1188 = vmatprep.subr.bf16.mxu0 0
  %1189 = vmatpush2.bf16.msra.mxu0 0
  %1190 = vmatprep.subr.bf16.mxu0 0
  %1191 = vmatpush2.bf16.msra.mxu0 0
  %1192 = vmatprep.subr.bf16.mxu0 0
  %1193 = vmatpush2.bf16.msra.mxu0 0
  %1194 = vmatprep.subr.bf16.mxu0 0
  %1195 = vmatpush2.bf16.msra.mxu0 0
  %1196 = vmatprep.subr.bf16.mxu0 0
  %1197 = vmatpush2.bf16.msra.mxu0 0
  %1198 = vmatprep.mubr.bf16.mxu0 0
  %1199 = vmatmul.mubr.bf16.gmra.mxu0 %v1164
  %v1200 = vpop.f32.mrf.mxu0
  %v1201 = vadd.f32 0.0, %v1200
  %v1202 = vpop.f32.mrf.mxu0
  %v1203 = vpop.f32.mrf.mxu0
  %v1204 = vadd.f32 0.0, %v1203
  %v1205 = vpop.f32.mrf.mxu0
  %1206 = vdwg.mxu0
  %1207 = vrot.lane.b32.xlu0 %v356, 64
  %v1208 = vpop.permute.xlu0 %1207
  %v1211 = vsel %vm477, %v1159, 0
  %1213 = vmatprep.subr.bf16.mxu0 0
  %1214 = vmatpush1.bf16.msra.mxu0 0
  %1215 = vmatprep.subr.bf16.mxu0 0
  %1216 = vmatpush1.bf16.msra.mxu0 0
  %1217 = vmatprep.subr.bf16.mxu0 0
  %1218 = vmatpush1.bf16.msra.mxu0 0
  %1219 = vmatprep.subr.bf16.mxu0 0
  %1220 = vmatpush1.bf16.msra.mxu0 0
  %1221 = vmatprep.subr.bf16.mxu0 0
  %1222 = vmatpush1.bf16.msra.mxu0 0
  %1223 = vmatprep.subr.bf16.mxu0 0
  %1224 = vmatpush1.bf16.msra.mxu0 0
  %1225 = vmatprep.subr.bf16.mxu0 0
  %1226 = vmatpush1.bf16.msra.mxu0 0
  %1227 = vmatprep.subr.bf16.mxu0 0
  %1228 = vmatpush1.bf16.msra.mxu0 %v1208
  %1229 = vmatprep.subr.bf16.mxu0 0
  %1230 = vmatpush2.bf16.msra.mxu0 0
  %1231 = vmatprep.subr.bf16.mxu0 0
  %1232 = vmatpush2.bf16.msra.mxu0 0
  %1233 = vmatprep.subr.bf16.mxu0 0
  %1234 = vmatpush2.bf16.msra.mxu0 0
  %1235 = vmatprep.subr.bf16.mxu0 0
  %1236 = vmatpush2.bf16.msra.mxu0 0
  %1237 = vmatprep.subr.bf16.mxu0 0
  %1238 = vmatpush2.bf16.msra.mxu0 0
  %1239 = vmatprep.subr.bf16.mxu0 0
  %1240 = vmatpush2.bf16.msra.mxu0 0
  %1241 = vmatprep.subr.bf16.mxu0 0
  %1242 = vmatpush2.bf16.msra.mxu0 0
  %1243 = vmatprep.subr.bf16.mxu0 0
  %1244 = vmatpush2.bf16.msra.mxu0 0
  %1245 = vmatprep.mubr.bf16.mxu0 0
  %1246 = vmatmul.mubr.bf16.gmra.mxu0 %v1211
  %v1247 = vpop.f32.mrf.mxu0
  %v1248 = vadd.f32 0.0, %v1247
  %v1249 = vpop.f32.mrf.mxu0
  %v1250 = vpop.f32.mrf.mxu0
  %v1251 = vadd.f32 0.0, %v1250
  %v1252 = vpop.f32.mrf.mxu0
  %1253 = vdwg.mxu0
  %v1254 = vpack.c.bf16 %v1204, %v1201
  %v1255 = vpack.c.bf16 %v1251, %v1248
  %v1260 = vunpack.c.l.b16 %v373
  %v1261 = vunpack.c.l.b16 %v374
  %v1262 = vunpack.c.l.b16 %v375
  %v1263 = vunpack.c.l.b16 %v376
  %v1264 = vpack.c.b16 %v1261, %v1260
  %v1265 = vpack.c.b16 %v1263, %v1262
  %v1269 = vsel %vm382, %v1254, 0
  %v1272 = vsel %vm382, %v1255, 0
  %1274 = vmatprep.subr.bf16.mxu0 0
  %1275 = vmatpush1.bf16.msra.mxu0 0
  %1276 = vmatprep.subr.bf16.mxu0 0
  %1277 = vmatpush1.bf16.msra.mxu0 0
  %1278 = vmatprep.subr.bf16.mxu0 0
  %1279 = vmatpush1.bf16.msra.mxu0 0
  %1280 = vmatprep.subr.bf16.mxu0 0
  %1281 = vmatpush1.bf16.msra.mxu0 0
  %1282 = vmatprep.subr.bf16.mxu0 0
  %1283 = vmatpush1.bf16.msra.mxu0 0
  %1284 = vmatprep.subr.bf16.mxu0 0
  %1285 = vmatpush1.bf16.msra.mxu0 0
  %1286 = vmatprep.subr.bf16.mxu0 0
  %1287 = vmatpush1.bf16.msra.mxu0 %v1265
  %1288 = vmatprep.subr.bf16.mxu0 0
  %1289 = vmatpush1.bf16.msra.mxu0 %v1264
  %1290 = vmatprep.subr.bf16.mxu0 0
  %1291 = vmatpush2.bf16.msra.mxu0 0
  %1292 = vmatprep.subr.bf16.mxu0 0
  %1293 = vmatpush2.bf16.msra.mxu0 0
  %1294 = vmatprep.subr.bf16.mxu0 0
  %1295 = vmatpush2.bf16.msra.mxu0 0
  %1296 = vmatprep.subr.bf16.mxu0 0
  %1297 = vmatpush2.bf16.msra.mxu0 0
  %1298 = vmatprep.subr.bf16.mxu0 0
  %1299 = vmatpush2.bf16.msra.mxu0 0
  %1300 = vmatprep.subr.bf16.mxu0 0
  %1301 = vmatpush2.bf16.msra.mxu0 0
  %1302 = vmatprep.subr.bf16.mxu0 0
  %1303 = vmatpush2.bf16.msra.mxu0 0
  %1304 = vmatprep.subr.bf16.mxu0 0
  %1305 = vmatpush2.bf16.msra.mxu0 0
  %1306 = vmatprep.mubr.bf16.mxu0 0
  %1307 = vmatmul.mubr.bf16.gmra.mxu0 %v1269
  %v1308 = vpop.f32.mrf.mxu0
  %v1309 = vadd.f32 0.0, %v1308
  %v1310 = vpop.f32.mrf.mxu0
  %v1311 = vpop.f32.mrf.mxu0
  %v1312 = vadd.f32 0.0, %v1311
  %v1313 = vpop.f32.mrf.mxu0
  %1314 = vmatprep.mubr.bf16.mxu0 0
  %1315 = vmatmul.mubr.bf16.gmra.mxu0 %v1272
  %v1316 = vpop.f32.mrf.mxu0
  %v1317 = vadd.f32 0.0, %v1316
  %v1318 = vpop.f32.mrf.mxu0
  %v1319 = vpop.f32.mrf.mxu0
  %v1320 = vadd.f32 0.0, %v1319
  %v1321 = vpop.f32.mrf.mxu0
  %1322 = vdwg.mxu0
  %v1323 = vadd.f32 %v1008, %v1309
  %v1324 = vadd.f32 %v1009, %v1312
  %v1325 = vadd.f32 %v1010, %v1317
  %v1326 = vadd.f32 %v1011, %v1320
  %1327 = vrot.lane.b32.xlu0 %v351, 32
  %v1328 = vpop.permute.xlu0 %1327
  %1329 = vrot.lane.b32.xlu0 %v353, 32
  %v1330 = vpop.permute.xlu0 %1329
  %v1332 = vsel %vm382, %v1328, 0
  %v1335 = vsel %vm382, %v1330, 0
  %1337 = vmatprep.subr.bf16.mxu0 0
  %1338 = vmatpush1.bf16.xpose.msra.mxu0 0
  %1339 = vmatprep.subr.bf16.mxu0 0
  %1340 = vmatpush1.bf16.xpose.msra.mxu0 0
  %1341 = vmatprep.subr.bf16.mxu0 0
  %1342 = vmatpush1.bf16.xpose.msra.mxu0 0
  %1343 = vmatprep.subr.bf16.mxu0 0
  %1344 = vmatpush1.bf16.xpose.msra.mxu0 0
  %1345 = vmatprep.subr.bf16.mxu0 0
  %1346 = vmatpush1.bf16.xpose.msra.mxu0 0
  %1347 = vmatprep.subr.bf16.mxu0 0
  %1348 = vmatpush1.bf16.xpose.msra.mxu0 0
  %1349 = vmatprep.subr.bf16.mxu0 0
  %1350 = vmatpush1.bf16.xpose.msra.mxu0 0
  %1351 = vmatprep.subr.bf16.mxu0 0
  %1352 = vmatpush1.bf16.xpose.msra.mxu0 %v1335
  %1353 = vmatprep.subr.bf16.mxu0 0
  %1354 = vmatpush2.bf16.xpose.msra.mxu0 0
  %1355 = vmatprep.subr.bf16.mxu0 0
  %1356 = vmatpush2.bf16.xpose.msra.mxu0 0
  %1357 = vmatprep.subr.bf16.mxu0 0
  %1358 = vmatpush2.bf16.xpose.msra.mxu0 0
  %1359 = vmatprep.subr.bf16.mxu0 0
  %1360 = vmatpush2.bf16.xpose.msra.mxu0 0
  %1361 = vmatprep.subr.bf16.mxu0 0
  %1362 = vmatpush2.bf16.xpose.msra.mxu0 0
  %1363 = vmatprep.subr.bf16.mxu0 0
  %1364 = vmatpush2.bf16.xpose.msra.mxu0 0
  %1365 = vmatprep.subr.bf16.mxu0 0
  %1366 = vmatpush2.bf16.xpose.msra.mxu0 0
  %1367 = vmatprep.subr.bf16.mxu0 0
  %1368 = vmatpush2.bf16.xpose.msra.mxu0 0
  %1369 = vmatprep.mubr.bf16.mxu0 0
  %1370 = vmatmul.mubr.bf16.gmra.mxu0 %v1332
  %v1371 = vpop.f32.mrf.mxu0
  %v1372 = vadd.f32 %v361, %v1371
  %v1373 = vpop.f32.mrf.mxu0
  %v1374 = vpop.f32.mrf.mxu0
  %v1375 = vadd.f32 %v362, %v1374
  %v1376 = vpop.f32.mrf.mxu0
  %1377 = vdwg.mxu0
  %1378 = vrot.lane.b32.xlu0 %v352, 32
  %v1379 = vpop.permute.xlu0 %1378
  %1380 = vrot.lane.b32.xlu0 %v354, 32
  %v1381 = vpop.permute.xlu0 %1380
  %v1383 = vsel %vm382, %v1379, 0
  %v1386 = vsel %vm382, %v1381, 0
  %1388 = vmatprep.subr.bf16.mxu0 0
  %1389 = vmatpush1.bf16.xpose.msra.mxu0 0
  %1390 = vmatprep.subr.bf16.mxu0 0
  %1391 = vmatpush1.bf16.xpose.msra.mxu0 0
  %1392 = vmatprep.subr.bf16.mxu0 0
  %1393 = vmatpush1.bf16.xpose.msra.mxu0 0
  %1394 = vmatprep.subr.bf16.mxu0 0
  %1395 = vmatpush1.bf16.xpose.msra.mxu0 0
  %1396 = vmatprep.subr.bf16.mxu0 0
  %1397 = vmatpush1.bf16.xpose.msra.mxu0 0
  %1398 = vmatprep.subr.bf16.mxu0 0
  %1399 = vmatpush1.bf16.xpose.msra.mxu0 0
  %1400 = vmatprep.subr.bf16.mxu0 0
  %1401 = vmatpush1.bf16.xpose.msra.mxu0 0
  %1402 = vmatprep.subr.bf16.mxu0 0
  %1403 = vmatpush1.bf16.xpose.msra.mxu0 %v1386
  %1404 = vmatprep.subr.bf16.mxu0 0
  %1405 = vmatpush2.bf16.xpose.msra.mxu0 0
  %1406 = vmatprep.subr.bf16.mxu0 0
  %1407 = vmatpush2.bf16.xpose.msra.mxu0 0
  %1408 = vmatprep.subr.bf16.mxu0 0
  %1409 = vmatpush2.bf16.xpose.msra.mxu0 0
  %1410 = vmatprep.subr.bf16.mxu0 0
  %1411 = vmatpush2.bf16.xpose.msra.mxu0 0
  %1412 = vmatprep.subr.bf16.mxu0 0
  %1413 = vmatpush2.bf16.xpose.msra.mxu0 0
  %1414 = vmatprep.subr.bf16.mxu0 0
  %1415 = vmatpush2.bf16.xpose.msra.mxu0 0
  %1416 = vmatprep.subr.bf16.mxu0 0
  %1417 = vmatpush2.bf16.xpose.msra.mxu0 0
  %1418 = vmatprep.subr.bf16.mxu0 0
  %1419 = vmatpush2.bf16.xpose.msra.mxu0 0
  %1420 = vmatprep.mubr.bf16.mxu0 0
  %1421 = vmatmul.mubr.bf16.gmra.mxu0 %v1383
  %v1422 = vpop.f32.mrf.mxu0
  %v1423 = vadd.f32 %v363, %v1422
  %v1424 = vpop.f32.mrf.mxu0
  %v1425 = vpop.f32.mrf.mxu0
  %v1426 = vadd.f32 %v364, %v1425
  %v1427 = vpop.f32.mrf.mxu0
  %1428 = vdwg.mxu0
  %v1429 = vsel %vm477, %v1372, -inf
  %1430 = vmax.xlane.f32.xlu0 %v1429
  %v1431 = vpop.xlane.xlu0 %1430
  %v1432 = vsel %vm477, %v1375, -inf
  %1433 = vmax.xlane.f32.xlu0 %v1432
  %v1434 = vpop.xlane.xlu0 %1433
  %v1435 = vsel %vm477, %v1423, -inf
  %1436 = vmax.xlane.f32.xlu0 %v1435
  %v1437 = vpop.xlane.xlu0 %1436
  %v1438 = vsel %vm477, %v1426, -inf
  %1439 = vmax.xlane.f32.xlu0 %v1438
  %v1440 = vpop.xlane.xlu0 %1439
  %v1441 = vsub.f32 %v1372, %v1431
  %v1442 = vsub.f32 %v1375, %v1434
  %v1443 = vsub.f32 %v1423, %v1437
  %v1444 = vsub.f32 %v1426, %v1440
  %v1445 = vmul.f32 %v1441, 1.442695
  %v1446 = vpow.pop %v1445
  %v1447 = vmul.f32 %v1442, 1.442695
  %v1448 = vpow.pop %v1447
  %v1449 = vmul.f32 %v1443, 1.442695
  %v1450 = vpow.pop %v1449
  %v1451 = vmul.f32 %v1444, 1.442695
  %v1452 = vpow.pop %v1451
  %v1453 = vsel %vm477, %v1446, 0.0
  %1454 = vadd.xlane.f32.xlu0 %v1453
  %v1455 = vpop.xlane.xlu0 %1454
  %v1456 = vsel %vm477, %v1448, 0.0
  %1457 = vadd.xlane.f32.xlu0 %v1456
  %v1458 = vpop.xlane.xlu0 %1457
  %v1459 = vsel %vm477, %v1450, 0.0
  %1460 = vadd.xlane.f32.xlu0 %v1459
  %v1461 = vpop.xlane.xlu0 %1460
  %v1462 = vsel %vm477, %v1452, 0.0
  %1463 = vadd.xlane.f32.xlu0 %v1462
  %v1464 = vpop.xlane.xlu0 %1463
  %v1465 = vrcp.pop %v1455
  %v1466 = vrcp.pop %v1458
  %v1467 = vrcp.pop %v1461
  %v1468 = vrcp.pop %v1464
  %v1469 = vmul.f32 %v1446, %v1465
  %v1470 = vmul.f32 %v1448, %v1466
  %v1471 = vmul.f32 %v1450, %v1467
  %v1472 = vmul.f32 %v1452, %v1468
  %v1473 = vpack.c.bf16 %v1470, %v1469
  %v1474 = vpack.c.bf16 %v1472, %v1471
  %1475 = vrot.lane.b32.xlu0 %v355, 32
  %v1476 = vpop.permute.xlu0 %1475
  %v1479 = vsel %vm477, %v1473, 0
  %1481 = vmatprep.subr.bf16.mxu0 0
  %1482 = vmatpush1.bf16.msra.mxu0 0
  %1483 = vmatprep.subr.bf16.mxu0 0
  %1484 = vmatpush1.bf16.msra.mxu0 0
  %1485 = vmatprep.subr.bf16.mxu0 0
  %1486 = vmatpush1.bf16.msra.mxu0 0
  %1487 = vmatprep.subr.bf16.mxu0 0
  %1488 = vmatpush1.bf16.msra.mxu0 0
  %1489 = vmatprep.subr.bf16.mxu0 0
  %1490 = vmatpush1.bf16.msra.mxu0 0
  %1491 = vmatprep.subr.bf16.mxu0 0
  %1492 = vmatpush1.bf16.msra.mxu0 0
  %1493 = vmatprep.subr.bf16.mxu0 0
  %1494 = vmatpush1.bf16.msra.mxu0 0
  %1495 = vmatprep.subr.bf16.mxu0 0
  %1496 = vmatpush1.bf16.msra.mxu0 %v1476
  %1497 = vmatprep.subr.bf16.mxu0 0
  %1498 = vmatpush2.bf16.msra.mxu0 0
  %1499 = vmatprep.subr.bf16.mxu0 0
  %1500 = vmatpush2.bf16.msra.mxu0 0
  %1501 = vmatprep.subr.bf16.mxu0 0
  %1502 = vmatpush2.bf16.msra.mxu0 0
  %1503 = vmatprep.subr.bf16.mxu0 0
  %1504 = vmatpush2.bf16.msra.mxu0 0
  %1505 = vmatprep.subr.bf16.mxu0 0
  %1506 = vmatpush2.bf16.msra.mxu0 0
  %1507 = vmatprep.subr.bf16.mxu0 0
  %1508 = vmatpush2.bf16.msra.mxu0 0
  %1509 = vmatprep.subr.bf16.mxu0 0
  %1510 = vmatpush2.bf16.msra.mxu0 0
  %1511 = vmatprep.subr.bf16.mxu0 0
  %1512 = vmatpush2.bf16.msra.mxu0 0
  %1513 = vmatprep.mubr.bf16.mxu0 0
  %1514 = vmatmul.mubr.bf16.gmra.mxu0 %v1479
  %v1515 = vpop.f32.mrf.mxu0
  %v1516 = vadd.f32 0.0, %v1515
  %v1517 = vpop.f32.mrf.mxu0
  %v1518 = vpop.f32.mrf.mxu0
  %v1519 = vadd.f32 0.0, %v1518
  %v1520 = vpop.f32.mrf.mxu0
  %1521 = vdwg.mxu0
  %1522 = vrot.lane.b32.xlu0 %v356, 32
  %v1523 = vpop.permute.xlu0 %1522
  %v1526 = vsel %vm477, %v1474, 0
  %1528 = vmatprep.subr.bf16.mxu0 0
  %1529 = vmatpush1.bf16.msra.mxu0 0
  %1530 = vmatprep.subr.bf16.mxu0 0
  %1531 = vmatpush1.bf16.msra.mxu0 0
  %1532 = vmatprep.subr.bf16.mxu0 0
  %1533 = vmatpush1.bf16.msra.mxu0 0
  %1534 = vmatprep.subr.bf16.mxu0 0
  %1535 = vmatpush1.bf16.msra.mxu0 0
  %1536 = vmatprep.subr.bf16.mxu0 0
  %1537 = vmatpush1.bf16.msra.mxu0 0
  %1538 = vmatprep.subr.bf16.mxu0 0
  %1539 = vmatpush1.bf16.msra.mxu0 0
  %1540 = vmatprep.subr.bf16.mxu0 0
  %1541 = vmatpush1.bf16.msra.mxu0 0
  %1542 = vmatprep.subr.bf16.mxu0 0
  %1543 = vmatpush1.bf16.msra.mxu0 %v1523
  %1544 = vmatprep.subr.bf16.mxu0 0
  %1545 = vmatpush2.bf16.msra.mxu0 0
  %1546 = vmatprep.subr.bf16.mxu0 0
  %1547 = vmatpush2.bf16.msra.mxu0 0
  %1548 = vmatprep.subr.bf16.mxu0 0
  %1549 = vmatpush2.bf16.msra.mxu0 0
  %1550 = vmatprep.subr.bf16.mxu0 0
  %1551 = vmatpush2.bf16.msra.mxu0 0
  %1552 = vmatprep.subr.bf16.mxu0 0
  %1553 = vmatpush2.bf16.msra.mxu0 0
  %1554 = vmatprep.subr.bf16.mxu0 0
  %1555 = vmatpush2.bf16.msra.mxu0 0
  %1556 = vmatprep.subr.bf16.mxu0 0
  %1557 = vmatpush2.bf16.msra.mxu0 0
  %1558 = vmatprep.subr.bf16.mxu0 0
  %1559 = vmatpush2.bf16.msra.mxu0 0
  %1560 = vmatprep.mubr.bf16.mxu0 0
  %1561 = vmatmul.mubr.bf16.gmra.mxu0 %v1526
  %v1562 = vpop.f32.mrf.mxu0
  %v1563 = vadd.f32 0.0, %v1562
  %v1564 = vpop.f32.mrf.mxu0
  %v1565 = vpop.f32.mrf.mxu0
  %v1566 = vadd.f32 0.0, %v1565
  %v1567 = vpop.f32.mrf.mxu0
  %1568 = vdwg.mxu0
  %v1569 = vpack.c.bf16 %v1519, %v1516
  %v1570 = vpack.c.bf16 %v1566, %v1563
  %v1575 = vunpack.c.l.b16 %v377
  %v1576 = vunpack.c.l.b16 %v378
  %v1577 = vunpack.c.l.b16 %v379
  %v1578 = vunpack.c.l.b16 %v380
  %v1579 = vpack.c.b16 %v1576, %v1575
  %v1580 = vpack.c.b16 %v1578, %v1577
  %v1584 = vsel %vm382, %v1569, 0
  %v1587 = vsel %vm382, %v1570, 0
  %1589 = vmatprep.subr.bf16.mxu0 0
  %1590 = vmatpush1.bf16.msra.mxu0 0
  %1591 = vmatprep.subr.bf16.mxu0 0
  %1592 = vmatpush1.bf16.msra.mxu0 0
  %1593 = vmatprep.subr.bf16.mxu0 0
  %1594 = vmatpush1.bf16.msra.mxu0 0
  %1595 = vmatprep.subr.bf16.mxu0 0
  %1596 = vmatpush1.bf16.msra.mxu0 0
  %1597 = vmatprep.subr.bf16.mxu0 0
  %1598 = vmatpush1.bf16.msra.mxu0 0
  %1599 = vmatprep.subr.bf16.mxu0 0
  %1600 = vmatpush1.bf16.msra.mxu0 0
  %1601 = vmatprep.subr.bf16.mxu0 0
  %1602 = vmatpush1.bf16.msra.mxu0 %v1580
  %1603 = vmatprep.subr.bf16.mxu0 0
  %1604 = vmatpush1.bf16.msra.mxu0 %v1579
  %1605 = vmatprep.subr.bf16.mxu0 0
  %1606 = vmatpush2.bf16.msra.mxu0 0
  %1607 = vmatprep.subr.bf16.mxu0 0
  %1608 = vmatpush2.bf16.msra.mxu0 0
  %1609 = vmatprep.subr.bf16.mxu0 0
  %1610 = vmatpush2.bf16.msra.mxu0 0
  %1611 = vmatprep.subr.bf16.mxu0 0
  %1612 = vmatpush2.bf16.msra.mxu0 0
  %1613 = vmatprep.subr.bf16.mxu0 0
  %1614 = vmatpush2.bf16.msra.mxu0 0
  %1615 = vmatprep.subr.bf16.mxu0 0
  %1616 = vmatpush2.bf16.msra.mxu0 0
  %1617 = vmatprep.subr.bf16.mxu0 0
  %1618 = vmatpush2.bf16.msra.mxu0 0
  %1619 = vmatprep.subr.bf16.mxu0 0
  %1620 = vmatpush2.bf16.msra.mxu0 0
  %1621 = vmatprep.mubr.bf16.mxu0 0
  %1622 = vmatmul.mubr.bf16.gmra.mxu0 %v1584
  %v1623 = vpop.f32.mrf.mxu0
  %v1624 = vadd.f32 0.0, %v1623
  %v1625 = vpop.f32.mrf.mxu0
  %v1626 = vpop.f32.mrf.mxu0
  %v1627 = vadd.f32 0.0, %v1626
  %v1628 = vpop.f32.mrf.mxu0
  %1629 = vmatprep.mubr.bf16.mxu0 0
  %1630 = vmatmul.mubr.bf16.gmra.mxu0 %v1587
  %v1631 = vpop.f32.mrf.mxu0
  %v1632 = vadd.f32 0.0, %v1631
  %v1633 = vpop.f32.mrf.mxu0
  %v1634 = vpop.f32.mrf.mxu0
  %v1635 = vadd.f32 0.0, %v1634
  %v1636 = vpop.f32.mrf.mxu0
  %1637 = vdwg.mxu0
  %v1638 = vadd.f32 %v1323, %v1624
  %v1639 = vadd.f32 %v1324, %v1627
  %v1640 = vadd.f32 %v1325, %v1632
  %v1641 = vadd.f32 %v1326, %v1635
  %v1642 = vadd.f32 %v1638, %v52
  %v1643 = vadd.f32 %v1639, %v53
  %v1644 = vadd.f32 %v1640, %v54
  %v1645 = vadd.f32 %v1641, %v55
  %v1646 = vld [vmem:[%s6] sm:$0x1]
  %v1647 = vld [vmem:[%s7] sm:$0x1]
  %1648 = vadd.xlane.f32.xlu0 %v1642
  %v1649 = vpop.xlane.xlu0 %1648
  %1650 = vadd.xlane.f32.xlu0 %v1643
  %v1651 = vpop.xlane.xlu0 %1650
  %1652 = vadd.xlane.f32.xlu0 %v1644
  %v1653 = vpop.xlane.xlu0 %1652
  %1654 = vadd.xlane.f32.xlu0 %v1645
  %v1655 = vpop.xlane.xlu0 %1654
  %v1656 = vrcp.pop 128.0
  %v1657 = vmul.f32 %v1649, %v1656
  %v1658 = vmul.f32 %v1651, %v1656
  %v1659 = vmul.f32 %v1653, %v1656
  %v1660 = vmul.f32 %v1655, %v1656
  %v1661 = vsub.f32 %v1642, %v1657
  %v1662 = vsub.f32 %v1643, %v1658
  %v1663 = vsub.f32 %v1644, %v1659
  %v1664 = vsub.f32 %v1645, %v1660
  %v1665 = vmul.f32 %v1661, %v1661
  %v1666 = vmul.f32 %v1662, %v1662
  %v1667 = vmul.f32 %v1663, %v1663
  %v1668 = vmul.f32 %v1664, %v1664
  %1669 = vadd.xlane.f32.xlu0 %v1665
  %v1670 = vpop.xlane.xlu0 %1669
  %1671 = vadd.xlane.f32.xlu0 %v1666
  %v1672 = vpop.xlane.xlu0 %1671
  %1673 = vadd.xlane.f32.xlu0 %v1667
  %v1674 = vpop.xlane.xlu0 %1673
  %1675 = vadd.xlane.f32.xlu0 %v1668
  %v1676 = vpop.xlane.xlu0 %1675
  %v1677 = vmul.f32 %v1670, %v1656
  %v1678 = vmul.f32 %v1672, %v1656
  %v1679 = vmul.f32 %v1674, %v1656
  %v1680 = vmul.f32 %v1676, %v1656
  %v1681 = vadd.f32 %v1677, 1e-05
  %v1682 = vadd.f32 %v1678, 1e-05
  %v1683 = vadd.f32 %v1679, 1e-05
  %v1684 = vadd.f32 %v1680, 1e-05
  %v1685 = vrsqrt.pop %v1681
  %v1686 = vrsqrt.pop %v1682
  %v1687 = vrsqrt.pop %v1683
  %v1688 = vrsqrt.pop %v1684
  %v1689 = vmul.f32 %v1661, %v1685
  %v1690 = vmul.f32 %v1662, %v1686
  %v1691 = vmul.f32 %v1663, %v1687
  %v1692 = vmul.f32 %v1664, %v1688
  %v1694 = vlaneseq
  %v1695 = vshrl.u32 %v1694, 7
  %v1696 = vsub.s32 0, %v1695
  %v1697 = vrot.slane %v1646, %v1696
  %v1699 = vmul.f32 %v1689, %v1697
  %v1700 = vmul.f32 %v1690, %v1697
  %v1701 = vmul.f32 %v1691, %v1697
  %v1702 = vmul.f32 %v1692, %v1697
  %v1704 = vlaneseq
  %v1705 = vshrl.u32 %v1704, 7
  %v1706 = vsub.s32 0, %v1705
  %v1707 = vrot.slane %v1647, %v1706
  %v1709 = vadd.f32 %v1699, %v1707
  %v1710 = vadd.f32 %v1700, %v1707
  %v1711 = vadd.f32 %v1701, %v1707
  %v1712 = vadd.f32 %v1702, %v1707
  %v1713 = vpack.c.bf16 %v1710, %v1709
  %v1714 = vpack.c.bf16 %v1712, %v1711
  %v1715 = vld [vmem:[%s8] sm:$0xff]
  %v1716 = vld [vmem:[%s8 + $0x8] sm:$0xff]
  %v1717 = vld [vmem:[%s8 + $0x10] sm:$0xff]
  %v1718 = vld [vmem:[%s8 + $0x18] sm:$0xff]
  %v1719 = vld [vmem:[%s8 + $0x20] sm:$0xff]
  %v1720 = vld [vmem:[%s8 + $0x28] sm:$0xff]
  %v1721 = vld [vmem:[%s8 + $0x30] sm:$0xff]
  %v1722 = vld [vmem:[%s8 + $0x38] sm:$0xff]
  %v1723 = vld [vmem:[%s8 + $0x40] sm:$0xff]
  %v1724 = vld [vmem:[%s8 + $0x48] sm:$0xff]
  %v1725 = vld [vmem:[%s8 + $0x50] sm:$0xff]
  %v1726 = vld [vmem:[%s8 + $0x58] sm:$0xff]
  %v1727 = vld [vmem:[%s8 + $0x60] sm:$0xff]
  %v1728 = vld [vmem:[%s8 + $0x68] sm:$0xff]
  %v1729 = vld [vmem:[%s8 + $0x70] sm:$0xff]
  %v1730 = vld [vmem:[%s8 + $0x78] sm:$0xff]
  %v1731 = vld [vmem:[%s9] sm:$0x3]
  %v1733 = vlaneseq
  %v1734 = vshrl.u32 %v1733, 7
  %v1735 = vsub.s32 0, %v1734
  %v1736 = vrot.slane %v1731, %v1735
  %v1737 = vlaneseq
  %v1738 = vshrl.u32 %v1737, 7
  %v1739 = vsub.s32 1, %v1738
  %v1740 = vrot.slane %v1731, %v1739
  %v1759 = vunpack.c.l.b16 %v1715
  %v1760 = vunpack.c.h.b16 %v1715
  %v1761 = vunpack.c.l.b16 %v1716
  %v1762 = vunpack.c.h.b16 %v1716
  %v1763 = vunpack.c.l.b16 %v1717
  %v1764 = vunpack.c.h.b16 %v1717
  %v1765 = vunpack.c.l.b16 %v1718
  %v1766 = vunpack.c.h.b16 %v1718
  %v1767 = vunpack.c.l.b16 %v1719
  %v1768 = vunpack.c.h.b16 %v1719
  %v1769 = vunpack.c.l.b16 %v1720
  %v1770 = vunpack.c.h.b16 %v1720
  %v1771 = vunpack.c.l.b16 %v1721
  %v1772 = vunpack.c.h.b16 %v1721
  %v1773 = vunpack.c.l.b16 %v1722
  %v1774 = vunpack.c.h.b16 %v1722
  %v1775 = vunpack.c.l.b16 %v1723
  %v1776 = vunpack.c.h.b16 %v1723
  %v1777 = vunpack.c.l.b16 %v1724
  %v1778 = vunpack.c.h.b16 %v1724
  %v1779 = vunpack.c.l.b16 %v1725
  %v1780 = vunpack.c.h.b16 %v1725
  %v1781 = vunpack.c.l.b16 %v1726
  %v1782 = vunpack.c.h.b16 %v1726
  %v1783 = vunpack.c.l.b16 %v1727
  %v1784 = vunpack.c.h.b16 %v1727
  %v1785 = vunpack.c.l.b16 %v1728
  %v1786 = vunpack.c.h.b16 %v1728
  %v1787 = vunpack.c.l.b16 %v1729
  %v1788 = vunpack.c.h.b16 %v1729
  %v1789 = vunpack.c.l.b16 %v1730
  %v1790 = vunpack.c.h.b16 %v1730
  %v1791 = vpack.c.b16 %v1761, %v1759
  %v1792 = vpack.c.b16 %v1762, %v1760
  %v1793 = vpack.c.b16 %v1765, %v1763
  %v1794 = vpack.c.b16 %v1766, %v1764
  %v1795 = vpack.c.b16 %v1769, %v1767
  %v1796 = vpack.c.b16 %v1770, %v1768
  %v1797 = vpack.c.b16 %v1773, %v1771
  %v1798 = vpack.c.b16 %v1774, %v1772
  %v1799 = vpack.c.b16 %v1777, %v1775
  %v1800 = vpack.c.b16 %v1778, %v1776
  %v1801 = vpack.c.b16 %v1781, %v1779
  %v1802 = vpack.c.b16 %v1782, %v1780
  %v1803 = vpack.c.b16 %v1785, %v1783
  %v1804 = vpack.c.b16 %v1786, %v1784
  %v1805 = vpack.c.b16 %v1789, %v1787
  %v1806 = vpack.c.b16 %v1790, %v1788
  %1823 = vmatprep.subr.bf16.mxu0 %v1806
  %1824 = vmatpush1.bf16.msra.mxu0 %v1805
  %1825 = vmatprep.subr.bf16.mxu0 %v1804
  %1826 = vmatpush1.bf16.msra.mxu0 %v1803
  %1827 = vmatprep.subr.bf16.mxu0 %v1802
  %1828 = vmatpush1.bf16.msra.mxu0 %v1801
  %1829 = vmatprep.subr.bf16.mxu0 %v1800
  %1830 = vmatpush1.bf16.msra.mxu0 %v1799
  %1831 = vmatprep.subr.bf16.mxu0 %v1798
  %1832 = vmatpush1.bf16.msra.mxu0 %v1797
  %1833 = vmatprep.subr.bf16.mxu0 %v1796
  %1834 = vmatpush1.bf16.msra.mxu0 %v1795
  %1835 = vmatprep.subr.bf16.mxu0 %v1794
  %1836 = vmatpush1.bf16.msra.mxu0 %v1793
  %1837 = vmatprep.subr.bf16.mxu0 %v1792
  %1838 = vmatpush1.bf16.msra.mxu0 %v1791
  %1839 = vmatprep.subr.bf16.mxu0 0
  %1840 = vmatpush2.bf16.msra.mxu0 0
  %1841 = vmatprep.subr.bf16.mxu0 0
  %1842 = vmatpush2.bf16.msra.mxu0 0
  %1843 = vmatprep.subr.bf16.mxu0 0
  %1844 = vmatpush2.bf16.msra.mxu0 0
  %1845 = vmatprep.subr.bf16.mxu0 0
  %1846 = vmatpush2.bf16.msra.mxu0 0
  %1847 = vmatprep.subr.bf16.mxu0 0
  %1848 = vmatpush2.bf16.msra.mxu0 0
  %1849 = vmatprep.subr.bf16.mxu0 0
  %1850 = vmatpush2.bf16.msra.mxu0 0
  %1851 = vmatprep.subr.bf16.mxu0 0
  %1852 = vmatpush2.bf16.msra.mxu0 0
  %1853 = vmatprep.subr.bf16.mxu0 0
  %1854 = vmatpush2.bf16.msra.mxu0 0
  %1855 = vmatprep.mubr.bf16.mxu0 0
  %1856 = vmatmul.mubr.bf16.gmra.mxu0 %v1713
  %v1857 = vpop.f32.mrf.mxu0
  %v1858 = vadd.f32 %v1736, %v1857
  %v1859 = vpop.f32.mrf.mxu0
  %v1860 = vadd.f32 %v1740, %v1859
  %v1861 = vpop.f32.mrf.mxu0
  %v1862 = vadd.f32 %v1736, %v1861
  %v1863 = vpop.f32.mrf.mxu0
  %v1864 = vadd.f32 %v1740, %v1863
  %1865 = vmatprep.mubr.bf16.mxu0 0
  %1866 = vmatmul.mubr.bf16.gmra.mxu0 %v1714
  %v1867 = vpop.f32.mrf.mxu0
  %v1868 = vadd.f32 %v1736, %v1867
  %v1869 = vpop.f32.mrf.mxu0
  %v1870 = vadd.f32 %v1740, %v1869
  %v1871 = vpop.f32.mrf.mxu0
  %v1872 = vadd.f32 %v1736, %v1871
  %v1873 = vpop.f32.mrf.mxu0
  %v1874 = vadd.f32 %v1740, %v1873
  %1875 = vdwg.mxu0
  %v1876 = vmax.f32 %v1858, 0.0
  %v1877 = vmax.f32 %v1860, 0.0
  %v1878 = vmax.f32 %v1862, 0.0
  %v1879 = vmax.f32 %v1864, 0.0
  %v1880 = vmax.f32 %v1868, 0.0
  %v1881 = vmax.f32 %v1870, 0.0
  %v1882 = vmax.f32 %v1872, 0.0
  %v1883 = vmax.f32 %v1874, 0.0
  %v1884 = vpack.c.bf16 %v1878, %v1876
  %v1885 = vpack.c.bf16 %v1879, %v1877
  %v1886 = vpack.c.bf16 %v1882, %v1880
  %v1887 = vpack.c.bf16 %v1883, %v1881
  %v1888 = vld [vmem:[%s10] sm:$0xf]
  %v1889 = vld [vmem:[%s10 + $0x4] sm:$0xf]
  %v1890 = vld [vmem:[%s10 + $0x8] sm:$0xf]
  %v1891 = vld [vmem:[%s10 + $0xc] sm:$0xf]
  %v1892 = vld [vmem:[%s10 + $0x10] sm:$0xf]
  %v1893 = vld [vmem:[%s10 + $0x14] sm:$0xf]
  %v1894 = vld [vmem:[%s10 + $0x18] sm:$0xf]
  %v1895 = vld [vmem:[%s10 + $0x1c] sm:$0xf]
  %v1896 = vld [vmem:[%s10 + $0x20] sm:$0xf]
  %v1897 = vld [vmem:[%s10 + $0x24] sm:$0xf]
  %v1898 = vld [vmem:[%s10 + $0x28] sm:$0xf]
  %v1899 = vld [vmem:[%s10 + $0x2c] sm:$0xf]
  %v1900 = vld [vmem:[%s10 + $0x30] sm:$0xf]
  %v1901 = vld [vmem:[%s10 + $0x34] sm:$0xf]
  %v1902 = vld [vmem:[%s10 + $0x38] sm:$0xf]
  %v1903 = vld [vmem:[%s10 + $0x3c] sm:$0xf]
  %v1904 = vld [vmem:[%s10 + $0x40] sm:$0xf]
  %v1905 = vld [vmem:[%s10 + $0x44] sm:$0xf]
  %v1906 = vld [vmem:[%s10 + $0x48] sm:$0xf]
  %v1907 = vld [vmem:[%s10 + $0x4c] sm:$0xf]
  %v1908 = vld [vmem:[%s10 + $0x50] sm:$0xf]
  %v1909 = vld [vmem:[%s10 + $0x54] sm:$0xf]
  %v1910 = vld [vmem:[%s10 + $0x58] sm:$0xf]
  %v1911 = vld [vmem:[%s10 + $0x5c] sm:$0xf]
  %v1912 = vld [vmem:[%s10 + $0x60] sm:$0xf]
  %v1913 = vld [vmem:[%s10 + $0x64] sm:$0xf]
  %v1914 = vld [vmem:[%s10 + $0x68] sm:$0xf]
  %v1915 = vld [vmem:[%s10 + $0x6c] sm:$0xf]
  %v1916 = vld [vmem:[%s10 + $0x70] sm:$0xf]
  %v1917 = vld [vmem:[%s10 + $0x74] sm:$0xf]
  %v1918 = vld [vmem:[%s10 + $0x78] sm:$0xf]
  %v1919 = vld [vmem:[%s10 + $0x7c] sm:$0xf]
  %v1920 = vld [vmem:[%s11] sm:$0x1]
  %v1922 = vlaneseq
  %v1923 = vshrl.u32 %v1922, 7
  %v1924 = vsub.s32 0, %v1923
  %v1925 = vrot.slane %v1920, %v1924
  %v1959 = vunpack.c.l.b16 %v1888
  %v1960 = vunpack.c.l.b16 %v1889
  %v1961 = vunpack.c.l.b16 %v1890
  %v1962 = vunpack.c.l.b16 %v1891
  %v1963 = vunpack.c.l.b16 %v1892
  %v1964 = vunpack.c.l.b16 %v1893
  %v1965 = vunpack.c.l.b16 %v1894
  %v1966 = vunpack.c.l.b16 %v1895
  %v1967 = vunpack.c.l.b16 %v1896
  %v1968 = vunpack.c.l.b16 %v1897
  %v1969 = vunpack.c.l.b16 %v1898
  %v1970 = vunpack.c.l.b16 %v1899
  %v1971 = vunpack.c.l.b16 %v1900
  %v1972 = vunpack.c.l.b16 %v1901
  %v1973 = vunpack.c.l.b16 %v1902
  %v1974 = vunpack.c.l.b16 %v1903
  %v1975 = vunpack.c.l.b16 %v1904
  %v1976 = vunpack.c.l.b16 %v1905
  %v1977 = vunpack.c.l.b16 %v1906
  %v1978 = vunpack.c.l.b16 %v1907
  %v1979 = vunpack.c.l.b16 %v1908
  %v1980 = vunpack.c.l.b16 %v1909
  %v1981 = vunpack.c.l.b16 %v1910
  %v1982 = vunpack.c.l.b16 %v1911
  %v1983 = vunpack.c.l.b16 %v1912
  %v1984 = vunpack.c.l.b16 %v1913
  %v1985 = vunpack.c.l.b16 %v1914
  %v1986 = vunpack.c.l.b16 %v1915
  %v1987 = vunpack.c.l.b16 %v1916
  %v1988 = vunpack.c.l.b16 %v1917
  %v1989 = vunpack.c.l.b16 %v1918
  %v1990 = vunpack.c.l.b16 %v1919
  %v1991 = vpack.c.b16 %v1960, %v1959
  %v1992 = vpack.c.b16 %v1962, %v1961
  %v1993 = vpack.c.b16 %v1964, %v1963
  %v1994 = vpack.c.b16 %v1966, %v1965
  %v1995 = vpack.c.b16 %v1968, %v1967
  %v1996 = vpack.c.b16 %v1970, %v1969
  %v1997 = vpack.c.b16 %v1972, %v1971
  %v1998 = vpack.c.b16 %v1974, %v1973
  %v1999 = vpack.c.b16 %v1976, %v1975
  %v2000 = vpack.c.b16 %v1978, %v1977
  %v2001 = vpack.c.b16 %v1980, %v1979
  %v2002 = vpack.c.b16 %v1982, %v1981
  %v2003 = vpack.c.b16 %v1984, %v1983
  %v2004 = vpack.c.b16 %v1986, %v1985
  %v2005 = vpack.c.b16 %v1988, %v1987
  %v2006 = vpack.c.b16 %v1990, %v1989
  %2023 = vmatprep.subr.bf16.mxu0 0
  %2024 = vmatpush1.bf16.msra.mxu0 %v1998
  %2025 = vmatprep.subr.bf16.mxu0 0
  %2026 = vmatpush1.bf16.msra.mxu0 %v1997
  %2027 = vmatprep.subr.bf16.mxu0 0
  %2028 = vmatpush1.bf16.msra.mxu0 %v1996
  %2029 = vmatprep.subr.bf16.mxu0 0
  %2030 = vmatpush1.bf16.msra.mxu0 %v1995
  %2031 = vmatprep.subr.bf16.mxu0 0
  %2032 = vmatpush1.bf16.msra.mxu0 %v1994
  %2033 = vmatprep.subr.bf16.mxu0 0
  %2034 = vmatpush1.bf16.msra.mxu0 %v1993
  %2035 = vmatprep.subr.bf16.mxu0 0
  %2036 = vmatpush1.bf16.msra.mxu0 %v1992
  %2037 = vmatprep.subr.bf16.mxu0 0
  %2038 = vmatpush1.bf16.msra.mxu0 %v1991
  %2039 = vmatprep.subr.bf16.mxu0 0
  %2040 = vmatpush2.bf16.msra.mxu0 %v2006
  %2041 = vmatprep.subr.bf16.mxu0 0
  %2042 = vmatpush2.bf16.msra.mxu0 %v2005
  %2043 = vmatprep.subr.bf16.mxu0 0
  %2044 = vmatpush2.bf16.msra.mxu0 %v2004
  %2045 = vmatprep.subr.bf16.mxu0 0
  %2046 = vmatpush2.bf16.msra.mxu0 %v2003
  %2047 = vmatprep.subr.bf16.mxu0 0
  %2048 = vmatpush2.bf16.msra.mxu0 %v2002
  %2049 = vmatprep.subr.bf16.mxu0 0
  %2050 = vmatpush2.bf16.msra.mxu0 %v2001
  %2051 = vmatprep.subr.bf16.mxu0 0
  %2052 = vmatpush2.bf16.msra.mxu0 %v2000
  %2053 = vmatprep.subr.bf16.mxu0 0
  %2054 = vmatpush2.bf16.msra.mxu0 %v1999
  %2055 = vmatprep.mubr.bf16.mxu0 %v1885
  %2056 = vmatmul.mubr.bf16.gmra.mxu0 %v1884
  %v2057 = vpop.f32.mrf.mxu0
  %v2058 = vadd.f32 %v1925, %v2057
  %v2059 = vpop.f32.mrf.mxu0
  %v2060 = vpop.f32.mrf.mxu0
  %v2061 = vadd.f32 %v1925, %v2060
  %v2062 = vpop.f32.mrf.mxu0
  %2063 = vmatprep.mubr.bf16.mxu0 %v1887
  %2064 = vmatmul.mubr.bf16.gmra.mxu0 %v1886
  %v2065 = vpop.f32.mrf.mxu0
  %v2066 = vadd.f32 %v1925, %v2065
  %v2067 = vpop.f32.mrf.mxu0
  %v2068 = vpop.f32.mrf.mxu0
  %v2069 = vadd.f32 %v1925, %v2068
  %v2070 = vpop.f32.mrf.mxu0
  %2071 = vdwg.mxu0
  %v2072 = vadd.f32 %v2058, %v1709
  %v2073 = vadd.f32 %v2061, %v1710
  %v2074 = vadd.f32 %v2066, %v1711
  %v2075 = vadd.f32 %v2069, %v1712
  %v2076 = vld [vmem:[%s12] sm:$0x1]
  %v2077 = vld [vmem:[%s13] sm:$0x1]
  %2078 = vadd.xlane.f32.xlu0 %v2072
  %v2079 = vpop.xlane.xlu0 %2078
  %2080 = vadd.xlane.f32.xlu0 %v2073
  %v2081 = vpop.xlane.xlu0 %2080
  %2082 = vadd.xlane.f32.xlu0 %v2074
  %v2083 = vpop.xlane.xlu0 %2082
  %2084 = vadd.xlane.f32.xlu0 %v2075
  %v2085 = vpop.xlane.xlu0 %2084
  %v2086 = vmul.f32 %v2079, %v1656
  %v2087 = vmul.f32 %v2081, %v1656
  %v2088 = vmul.f32 %v2083, %v1656
  %v2089 = vmul.f32 %v2085, %v1656
  %v2090 = vsub.f32 %v2072, %v2086
  %v2091 = vsub.f32 %v2073, %v2087
  %v2092 = vsub.f32 %v2074, %v2088
  %v2093 = vsub.f32 %v2075, %v2089
  %v2094 = vmul.f32 %v2090, %v2090
  %v2095 = vmul.f32 %v2091, %v2091
  %v2096 = vmul.f32 %v2092, %v2092
  %v2097 = vmul.f32 %v2093, %v2093
  %2098 = vadd.xlane.f32.xlu0 %v2094
  %v2099 = vpop.xlane.xlu0 %2098
  %2100 = vadd.xlane.f32.xlu0 %v2095
  %v2101 = vpop.xlane.xlu0 %2100
  %2102 = vadd.xlane.f32.xlu0 %v2096
  %v2103 = vpop.xlane.xlu0 %2102
  %2104 = vadd.xlane.f32.xlu0 %v2097
  %v2105 = vpop.xlane.xlu0 %2104
  %v2106 = vmul.f32 %v2099, %v1656
  %v2107 = vmul.f32 %v2101, %v1656
  %v2108 = vmul.f32 %v2103, %v1656
  %v2109 = vmul.f32 %v2105, %v1656
  %v2110 = vadd.f32 %v2106, 1e-05
  %v2111 = vadd.f32 %v2107, 1e-05
  %v2112 = vadd.f32 %v2108, 1e-05
  %v2113 = vadd.f32 %v2109, 1e-05
  %v2114 = vrsqrt.pop %v2110
  %v2115 = vrsqrt.pop %v2111
  %v2116 = vrsqrt.pop %v2112
  %v2117 = vrsqrt.pop %v2113
  %v2118 = vmul.f32 %v2090, %v2114
  %v2119 = vmul.f32 %v2091, %v2115
  %v2120 = vmul.f32 %v2092, %v2116
  %v2121 = vmul.f32 %v2093, %v2117
  %v2123 = vlaneseq
  %v2124 = vshrl.u32 %v2123, 7
  %v2125 = vsub.s32 0, %v2124
  %v2126 = vrot.slane %v2076, %v2125
  %v2128 = vmul.f32 %v2118, %v2126
  %v2129 = vmul.f32 %v2119, %v2126
  %v2130 = vmul.f32 %v2120, %v2126
  %v2131 = vmul.f32 %v2121, %v2126
  %v2133 = vlaneseq
  %v2134 = vshrl.u32 %v2133, 7
  %v2135 = vsub.s32 0, %v2134
  %v2136 = vrot.slane %v2077, %v2135
  %v2138 = vadd.f32 %v2128, %v2136
  %v2139 = vadd.f32 %v2129, %v2136
  %v2140 = vadd.f32 %v2130, %v2136
  %v2141 = vadd.f32 %v2131, %v2136
  %v2142 = vpack.c.bf16 %v2139, %v2138
  %v2143 = vpack.c.bf16 %v2141, %v2140
  %v2146 = vunpack.c.l.b16 %v2142
  %v2147 = vunpack.c.h.b16 %v2142
  %v2148 = vunpack.c.l.b16 %v2143
  %v2149 = vunpack.c.h.b16 %v2143
  %v2150 = vpack.c.b16 %v2146, %v2146
  %v2151 = vpack.c.b16 %v2147, %v2147
  %v2152 = vpack.c.b16 %v2148, %v2148
  %v2153 = vpack.c.b16 %v2149, %v2149
  %2158 = vst [vmem:[%s14] sm:$0xf] %v2150
  %2159 = vst [vmem:[%s14 + $0x4] sm:$0xf] %v2151
  %2160 = vst [vmem:[%s14 + $0x8] sm:$0xf] %v2152
  %2161 = vst [vmem:[%s14 + $0xc] sm:$0xf] %v2153
  // Predicated region
  $region58: #{custom_attention_transformer_block.8} parent=0 // pred_check
    _
  $region59: #{custom_attention_transformer_block.8} parent=0 // pred_check_branch
    %2163 = sbr.rel (0) target = $region61
  $region60: #{custom_attention_transformer_block.8} parent=0 // pred_region
    _
  $region61: #{custom_attention_transformer_block.8} parent=0 // pred_fallthru
    _
  // Predicated region
  $region62: #{custom_attention_transformer_block.8} parent=0 // pred_check
    _
  $region63: #{custom_attention_transformer_block.8} parent=0 // pred_check_branch
    %2165 = sbr.rel (0) target = $region65
  $region64: #{custom_attention_transformer_block.8} parent=0 // pred_region
    _
  $region65: #{custom_attention_transformer_block.8} parent=0 // pred_fallthru
    _

// kernel: custom_attention_transformer_block.7
$region0: #{custom_attention_transformer_block.7}
  #allocation0 [shape = 'u32[]', space=smem, size = 0x4, offset = 0x4, fixed_abs, tag = 'smem constant byte address 0x4 - core index']
  #allocation1 [shape = 'u32[144,128]{1,0:T(1,128)}', space=vmem, size = 0x12000, scoped, tag = 'internal scratch']
  %s0 = inlined_call_operand.vmem [shape: bf16[2,16,128], index: 0, kind: input, shape index: {}, may-alias: {0,14}]
  %s1 = inlined_call_operand.vmem [shape: bf16[2,16,16], index: 1, kind: input, shape index: {}]
  %s2 = inlined_call_operand.vmem [shape: bf16[128,384], index: 2, kind: input, shape index: {}]
  %s3 = inlined_call_operand.vmem [shape: f32[1,384], index: 3, kind: input, shape index: {}]
  %s4 = inlined_call_operand.hbm [shape: bf16[128,128], index: 4, kind: input, shape index: {}]
  %s5 = inlined_call_operand.vmem [shape: f32[1,128], index: 5, kind: input, shape index: {}]
  %s6 = inlined_call_operand.vmem [shape: f32[1,128], index: 6, kind: input, shape index: {}]
  %s7 = inlined_call_operand.vmem [shape: f32[1,128], index: 7, kind: input, shape index: {}]
  %s8 = inlined_call_operand.hbm [shape: bf16[128,256], index: 8, kind: input, shape index: {}]
  %s9 = inlined_call_operand.vmem [shape: f32[1,256], index: 9, kind: input, shape index: {}]
  %s10 = inlined_call_operand.hbm [shape: bf16[256,128], index: 10, kind: input, shape index: {}]
  %s11 = inlined_call_operand.vmem [shape: f32[1,128], index: 11, kind: input, shape index: {}]
  %s12 = inlined_call_operand.vmem [shape: f32[1,128], index: 12, kind: input, shape index: {}]
  %s13 = inlined_call_operand.vmem [shape: f32[1,128], index: 13, kind: input, shape index: {}]
  %s14 = inlined_call_operand.vmem [shape: bf16[2,16,128], index: 14, kind: output, shape index: {}, may-alias: {0,14}]
  %s15 = sld [smem:[#allocation0]]
  $region78: #{custom_attention_transformer_block.7} parent=0
    _
  %s17 = ssub.s32 1, %s15
  %s18 = scalar_select 0, %s17, %s15
  $region1: #{custom_attention_transformer_block.7} parent=0
    #allocation2 [shape = 'u8[32768]{0}', space=vmem, size = 0x8000, scoped, tag = 'input window, operand 4, single buffered']
    #allocation3 [shape = 's32[1]{0}', space=sflag, size = 0x4, scoped, tag = 'scoped memory for custom_attention_transformer_block.7']
    #allocation4 [shape = 'u8[65536]{0}', space=vmem, size = 0x10000, scoped, tag = 'input window, operand 8, single buffered']
    #allocation5 [shape = 's32[1]{0}', space=sflag, size = 0x4, scoped, tag = 'scoped memory for custom_attention_transformer_block.7']
    #allocation6 [shape = 'u8[65536]{0}', space=vmem, size = 0x10000, scoped, tag = 'input window, operand 10, single buffered']
    %19 = vsyncpa [#allocation3], 0
    %20 = vsyncpa [#allocation5], 0
    // Predicated region
    $region2: #{custom_attention_transformer_block.7} parent=1 // pred_check
      _
    $region3: #{custom_attention_transformer_block.7} parent=1 // pred_check_branch
      %22 = sbr.rel (0) target = $region5
    $region4: #{custom_attention_transformer_block.7} parent=1 // pred_region
      _
    $region5: #{custom_attention_transformer_block.7} parent=1 // pred_fallthru
      _
    // Predicated region
    $region6: #{custom_attention_transformer_block.7} parent=1 // pred_check
      _
    $region7: #{custom_attention_transformer_block.7} parent=1 // pred_check_branch
      %24 = sbr.rel (0) target = $region9
    $region8: #{custom_attention_transformer_block.7} parent=1 // pred_region
      _
    $region9: #{custom_attention_transformer_block.7} parent=1 // pred_fallthru
      _
    // Predicated region
    $region10: #{custom_attention_transformer_block.7} parent=1 // pred_check
      _
    $region11: #{custom_attention_transformer_block.7} parent=1 // pred_check_branch
      %26 = sbr.rel (0) target = $region13
    $region12: #{custom_attention_transformer_block.7} parent=1 // pred_region
      _
    $region13: #{custom_attention_transformer_block.7} parent=1 // pred_fallthru
      _
    // Predicated region
    $region14: #{custom_attention_transformer_block.7} parent=1 // pred_check
      _
    $region15: #{custom_attention_transformer_block.7} parent=1 // pred_check_branch
      %28 = sbr.rel (0) target = $region17
    $region16: #{custom_attention_transformer_block.7} parent=1 // pred_region
      _
    $region17: #{custom_attention_transformer_block.7} parent=1 // pred_fallthru
      _
    // Predicated region
    $region18: #{custom_attention_transformer_block.7} parent=1 // pred_check
      _
    $region19: #{custom_attention_transformer_block.7} parent=1 // pred_check_branch
      %30 = sbr.rel (0) target = $region21
    $region20: #{custom_attention_transformer_block.7} parent=1 // pred_region
      %s32 = ssub.s32 1024, 1024
      %33 = vsyncadd [#allocation3], %s32
      %s34 = sshll.u32 [#allocation2], 4
      %s35 = int_to_ptr.vmem [resolvable:$true] %s34
      %40 = dma.hbm_to_vmem [thread:$0]  %s4, 1024, %s35, [#allocation3], 64, 64, 4
    $region21: #{custom_attention_transformer_block.7} parent=1 // pred_fallthru
      _
    // Predicated region
    $region22: #{custom_attention_transformer_block.7} parent=1 // pred_check
      _
    $region23: #{custom_attention_transformer_block.7} parent=1 // pred_check_branch
      %42 = sbr.rel (0) target = $region25
    $region24: #{custom_attention_transformer_block.7} parent=1 // pred_region
      _
    $region25: #{custom_attention_transformer_block.7} parent=1 // pred_fallthru
      _
    // Predicated region
    $region26: #{custom_attention_transformer_block.7} parent=1 // pred_check
      _
    $region27: #{custom_attention_transformer_block.7} parent=1 // pred_check_branch
      %44 = sbr.rel (0) target = $region29
    $region28: #{custom_attention_transformer_block.7} parent=1 // pred_region
      _
    $region29: #{custom_attention_transformer_block.7} parent=1 // pred_fallthru
      _
    // Predicated region
    $region30: #{custom_attention_transformer_block.7} parent=1 // pred_check
      _
    $region31: #{custom_attention_transformer_block.7} parent=1 // pred_check_branch
      %46 = sbr.rel (0) target = $region33
    $region32: #{custom_attention_transformer_block.7} parent=1 // pred_region
      _
    $region33: #{custom_attention_transformer_block.7} parent=1 // pred_fallthru
      _
    // Predicated region
    $region34: #{custom_attention_transformer_block.7} parent=1 // pred_check
      _
    $region35: #{custom_attention_transformer_block.7} parent=1 // pred_check_branch
      %48 = sbr.rel (0) target = $region37
    $region36: #{custom_attention_transformer_block.7} parent=1 // pred_region
      %s50 = ssub.s32 2048, 2048
      %51 = vsyncadd [#allocation5], %s50
      %s52 = sshll.u32 [#allocation4], 4
      %s53 = int_to_ptr.vmem [resolvable:$true] %s52
      %58 = dma.hbm_to_vmem [thread:$0]  %s8, 2048, %s53, [#allocation5], 128, 128, 8
    $region37: #{custom_attention_transformer_block.7} parent=1 // pred_fallthru
      _
    // Predicated region
    $region38: #{custom_attention_transformer_block.7} parent=1 // pred_check
      _
    $region39: #{custom_attention_transformer_block.7} parent=1 // pred_check_branch
      %60 = sbr.rel (0) target = $region41
    $region40: #{custom_attention_transformer_block.7} parent=1 // pred_region
      _
    $region41: #{custom_attention_transformer_block.7} parent=1 // pred_fallthru
      _
    // Predicated region
    $region42: #{custom_attention_transformer_block.7} parent=1 // pred_check
      _
    $region43: #{custom_attention_transformer_block.7} parent=1 // pred_check_branch
      %62 = sbr.rel (0) target = $region45
    $region44: #{custom_attention_transformer_block.7} parent=1 // pred_region
      %s64 = ssub.s32 2048, 2048
      %65 = vsyncadd [#allocation5], %s64
      %s66 = sshll.u32 [#allocation6], 4
      %s67 = int_to_ptr.vmem [resolvable:$true] %s66
      %72 = dma.hbm_to_vmem [thread:$0]  %s10, 2048, %s67, [#allocation5], 64, 64, 4
    $region45: #{custom_attention_transformer_block.7} parent=1 // pred_fallthru
      _
    // Predicated region
    $region46: #{custom_attention_transformer_block.7} parent=1 // pred_check
      _
    $region47: #{custom_attention_transformer_block.7} parent=1 // pred_check_branch
      %74 = sbr.rel (0) target = $region49
    $region48: #{custom_attention_transformer_block.7} parent=1 // pred_region
      _
    $region49: #{custom_attention_transformer_block.7} parent=1 // pred_fallthru
      _
    // Predicated region
    $region50: #{custom_attention_transformer_block.7} parent=1 // pred_check
      _
    $region51: #{custom_attention_transformer_block.7} parent=1 // pred_check_branch
      %76 = sbr.rel (0) target = $region53
    $region52: #{custom_attention_transformer_block.7} parent=1 // pred_region
      _
    $region53: #{custom_attention_transformer_block.7} parent=1 // pred_fallthru
      _
    // Predicated region
    $region54: #{custom_attention_transformer_block.7} parent=1 // pred_check
      _
    $region55: #{custom_attention_transformer_block.7} parent=1 // pred_check_branch
      %78 = sbr.rel (0) target = $region57
    $region56: #{custom_attention_transformer_block.7} parent=1 // pred_region
      _
    $region57: #{custom_attention_transformer_block.7} parent=1 // pred_fallthru
      _
    // Predicated region
    $region58: #{custom_attention_transformer_block.7} parent=1 // pred_check
      _
    $region59: #{custom_attention_transformer_block.7} parent=1 // pred_check_branch
      %80 = sbr.rel (0) target = $region61
    $region60: #{custom_attention_transformer_block.7} parent=1 // pred_region
      %81 = dma.done [#allocation3], 1024
    $region61: #{custom_attention_transformer_block.7} parent=1 // pred_fallthru
      _
    // Predicated region
    $region62: #{custom_attention_transformer_block.7} parent=1 // pred_check
      _
    $region63: #{custom_attention_transformer_block.7} parent=1 // pred_check_branch
      %83 = sbr.rel (0) target = $region65
    $region64: #{custom_attention_transformer_block.7} parent=1 // pred_region
      %84 = dma.done [#allocation5], 2048
    $region65: #{custom_attention_transformer_block.7} parent=1 // pred_fallthru
      _
    // Predicated region
    $region66: #{custom_attention_transformer_block.7} parent=1 // pred_check
      _
    $region67: #{custom_attention_transformer_block.7} parent=1 // pred_check_branch
      %86 = sbr.rel (0) target = $region69
    $region68: #{custom_attention_transformer_block.7} parent=1 // pred_region
      %87 = dma.done [#allocation5], 2048
    $region69: #{custom_attention_transformer_block.7} parent=1 // pred_fallthru
      _
    %v89 = vld [vmem:[%s0] sm:$0xf]
    %v90 = vld [vmem:[%s0 + $0x4] sm:$0xf]
    %v91 = vld [vmem:[%s0 + $0x8] sm:$0xf]
    %v92 = vld [vmem:[%s0 + $0xc] sm:$0xf]
    %v93 = vunpack.c.l.bf16 %v89
    %v94 = vunpack.c.l.bf16 %v90
    %v95 = vunpack.c.l.bf16 %v91
    %v96 = vunpack.c.l.bf16 %v92
    %v97 = vld [vmem:[%s2] sm:$0xff]
    %v98 = vld [vmem:[%s2 + $0x8] sm:$0xf]
    %v99 = vld [vmem:[%s2 + $0xc] sm:$0xff]
    %v100 = vld [vmem:[%s2 + $0x14] sm:$0xf]
    %v101 = vld [vmem:[%s2 + $0x18] sm:$0xff]
    %v102 = vld [vmem:[%s2 + $0x20] sm:$0xf]
    %v103 = vld [vmem:[%s2 + $0x24] sm:$0xff]
    %v104 = vld [vmem:[%s2 + $0x2c] sm:$0xf]
    %v105 = vld [vmem:[%s2 + $0x30] sm:$0xff]
    %v106 = vld [vmem:[%s2 + $0x38] sm:$0xf]
    %v107 = vld [vmem:[%s2 + $0x3c] sm:$0xff]
    %v108 = vld [vmem:[%s2 + $0x44] sm:$0xf]
    %v109 = vld [vmem:[%s2 + $0x48] sm:$0xff]
    %v110 = vld [vmem:[%s2 + $0x50] sm:$0xf]
    %v111 = vld [vmem:[%s2 + $0x54] sm:$0xff]
    %v112 = vld [vmem:[%s2 + $0x5c] sm:$0xf]
    %v113 = vld [vmem:[%s2 + $0x60] sm:$0xff]
    %v114 = vld [vmem:[%s2 + $0x68] sm:$0xf]
    %v115 = vld [vmem:[%s2 + $0x6c] sm:$0xff]
    %v116 = vld [vmem:[%s2 + $0x74] sm:$0xf]
    %v117 = vld [vmem:[%s2 + $0x78] sm:$0xff]
    %v118 = vld [vmem:[%s2 + $0x80] sm:$0xf]
    %v119 = vld [vmem:[%s2 + $0x84] sm:$0xff]
    %v120 = vld [vmem:[%s2 + $0x8c] sm:$0xf]
    %v121 = vld [vmem:[%s2 + $0x90] sm:$0xff]
    %v122 = vld [vmem:[%s2 + $0x98] sm:$0xf]
    %v123 = vld [vmem:[%s2 + $0x9c] sm:$0xff]
    %v124 = vld [vmem:[%s2 + $0xa4] sm:$0xf]
    %v125 = vld [vmem:[%s2 + $0xa8] sm:$0xff]
    %v126 = vld [vmem:[%s2 + $0xb0] sm:$0xf]
    %v127 = vld [vmem:[%s2 + $0xb4] sm:$0xff]
    %v128 = vld [vmem:[%s2 + $0xbc] sm:$0xf]
    %v129 = vld [vmem:[%s3] sm:$0x7]
    %v131 = vlaneseq
    %v132 = vshrl.u32 %v131, 7
    %v133 = vsub.s32 0, %v132
    %v134 = vrot.slane %v129, %v133
    %v135 = vlaneseq
    %v136 = vshrl.u32 %v135, 7
    %v137 = vsub.s32 1, %v136
    %v138 = vrot.slane %v129, %v137
    %v139 = vlaneseq
    %v140 = vshrl.u32 %v139, 7
    %v141 = vsub.s32 2, %v140
    %v142 = vrot.slane %v129, %v141
    %v150 = vunpack.c.l.b16 %v89
    %v151 = vunpack.c.l.b16 %v90
    %v152 = vunpack.c.l.b16 %v91
    %v153 = vunpack.c.l.b16 %v92
    %v154 = vpack.c.b16 %v151, %v150
    %v155 = vpack.c.b16 %v153, %v152
    %v190 = vunpack.c.l.b16 %v97
    %v191 = vunpack.c.h.b16 %v97
    %v192 = vunpack.c.l.b16 %v98
    %v193 = vunpack.c.l.b16 %v99
    %v194 = vunpack.c.h.b16 %v99
    %v195 = vunpack.c.l.b16 %v100
    %v196 = vunpack.c.l.b16 %v101
    %v197 = vunpack.c.h.b16 %v101
    %v198 = vunpack.c.l.b16 %v102
    %v199 = vunpack.c.l.b16 %v103
    %v200 = vunpack.c.h.b16 %v103
    %v201 = vunpack.c.l.b16 %v104
    %v202 = vunpack.c.l.b16 %v105
    %v203 = vunpack.c.h.b16 %v105
    %v204 = vunpack.c.l.b16 %v106
    %v205 = vunpack.c.l.b16 %v107
    %v206 = vunpack.c.h.b16 %v107
    %v207 = vunpack.c.l.b16 %v108
    %v208 = vunpack.c.l.b16 %v109
    %v209 = vunpack.c.h.b16 %v109
    %v210 = vunpack.c.l.b16 %v110
    %v211 = vunpack.c.l.b16 %v111
    %v212 = vunpack.c.h.b16 %v111
    %v213 = vunpack.c.l.b16 %v112
    %v214 = vunpack.c.l.b16 %v113
    %v215 = vunpack.c.h.b16 %v113
    %v216 = vunpack.c.l.b16 %v114
    %v217 = vunpack.c.l.b16 %v115
    %v218 = vunpack.c.h.b16 %v115
    %v219 = vunpack.c.l.b16 %v116
    %v220 = vunpack.c.l.b16 %v117
    %v221 = vunpack.c.h.b16 %v117
    %v222 = vunpack.c.l.b16 %v118
    %v223 = vunpack.c.l.b16 %v119
    %v224 = vunpack.c.h.b16 %v119
    %v225 = vunpack.c.l.b16 %v120
    %v226 = vunpack.c.l.b16 %v121
    %v227 = vunpack.c.h.b16 %v121
    %v228 = vunpack.c.l.b16 %v122
    %v229 = vunpack.c.l.b16 %v123
    %v230 = vunpack.c.h.b16 %v123
    %v231 = vunpack.c.l.b16 %v124
    %v232 = vunpack.c.l.b16 %v125
    %v233 = vunpack.c.h.b16 %v125
    %v234 = vunpack.c.l.b16 %v126
    %v235 = vunpack.c.l.b16 %v127
    %v236 = vunpack.c.h.b16 %v127
    %v237 = vunpack.c.l.b16 %v128
    %v238 = vpack.c.b16 %v193, %v190
    %v239 = vpack.c.b16 %v194, %v191
    %v240 = vpack.c.b16 %v195, %v192
    %v241 = vpack.c.b16 %v199, %v196
    %v242 = vpack.c.b16 %v200, %v197
    %v243 = vpack.c.b16 %v201, %v198
    %v244 = vpack.c.b16 %v205, %v202
    %v245 = vpack.c.b16 %v206, %v203
    %v246 = vpack.c.b16 %v207, %v204
    %v247 = vpack.c.b16 %v211, %v208
    %v248 = vpack.c.b16 %v212, %v209
    %v249 = vpack.c.b16 %v213, %v210
    %v250 = vpack.c.b16 %v217, %v214
    %v251 = vpack.c.b16 %v218, %v215
    %v252 = vpack.c.b16 %v219, %v216
    %v253 = vpack.c.b16 %v223, %v220
    %v254 = vpack.c.b16 %v224, %v221
    %v255 = vpack.c.b16 %v225, %v222
    %v256 = vpack.c.b16 %v229, %v226
    %v257 = vpack.c.b16 %v230, %v227
    %v258 = vpack.c.b16 %v231, %v228
    %v259 = vpack.c.b16 %v235, %v232
    %v260 = vpack.c.b16 %v236, %v233
    %v261 = vpack.c.b16 %v237, %v234
    %286 = vmatprep.subr.bf16.mxu0 %v260
    %287 = vmatpush1.bf16.msra.mxu0 %v259
    %288 = vmatprep.subr.bf16.mxu0 %v257
    %289 = vmatpush1.bf16.msra.mxu0 %v256
    %290 = vmatprep.subr.bf16.mxu0 %v254
    %291 = vmatpush1.bf16.msra.mxu0 %v253
    %292 = vmatprep.subr.bf16.mxu0 %v251
    %293 = vmatpush1.bf16.msra.mxu0 %v250
    %294 = vmatprep.subr.bf16.mxu0 %v248
    %295 = vmatpush1.bf16.msra.mxu0 %v247
    %296 = vmatprep.subr.bf16.mxu0 %v245
    %297 = vmatpush1.bf16.msra.mxu0 %v244
    %298 = vmatprep.subr.bf16.mxu0 %v242
    %299 = vmatpush1.bf16.msra.mxu0 %v241
    %300 = vmatprep.subr.bf16.mxu0 %v239
    %301 = vmatpush1.bf16.msra.mxu0 %v238
    %302 = vmatprep.subr.bf16.mxu0 0
    %303 = vmatpush2.bf16.msra.mxu0 0
    %304 = vmatprep.subr.bf16.mxu0 0
    %305 = vmatpush2.bf16.msra.mxu0 0
    %306 = vmatprep.subr.bf16.mxu0 0
    %307 = vmatpush2.bf16.msra.mxu0 0
    %308 = vmatprep.subr.bf16.mxu0 0
    %309 = vmatpush2.bf16.msra.mxu0 0
    %310 = vmatprep.subr.bf16.mxu0 0
    %311 = vmatpush2.bf16.msra.mxu0 0
    %312 = vmatprep.subr.bf16.mxu0 0
    %313 = vmatpush2.bf16.msra.mxu0 0
    %314 = vmatprep.subr.bf16.mxu0 0
    %315 = vmatpush2.bf16.msra.mxu0 0
    %316 = vmatprep.subr.bf16.mxu0 0
    %317 = vmatpush2.bf16.msra.mxu0 0
    %318 = vmatprep.mubr.bf16.mxu0 0
    %319 = vmatmul.mubr.bf16.gmra.mxu0 %v154
    %v320 = vpop.f32.mrf.mxu0
    %v321 = vadd.f32 %v134, %v320
    %v322 = vpop.f32.mrf.mxu0
    %v323 = vadd.f32 %v138, %v322
    %v324 = vpop.f32.mrf.mxu0
    %v325 = vadd.f32 %v134, %v324
    %v326 = vpop.f32.mrf.mxu0
    %v327 = vadd.f32 %v138, %v326
    %328 = vmatprep.mubr.bf16.mxu0 0
    %329 = vmatmul.mubr.bf16.gmra.mxu0 %v155
    %v330 = vpop.f32.mrf.mxu0
    %v331 = vadd.f32 %v134, %v330
    %v332 = vpop.f32.mrf.mxu0
    %v333 = vadd.f32 %v138, %v332
    %v334 = vpop.f32.mrf.mxu0
    %v335 = vadd.f32 %v134, %v334
    %v336 = vpop.f32.mrf.mxu0
    %v337 = vadd.f32 %v138, %v336
    %338 = vdwg.mxu0
    %339 = vmatprep.subr.bf16.mxu0 0
    %340 = vmatpush1.bf16.msra.mxu0 %v261
    %341 = vmatprep.subr.bf16.mxu0 0
    %342 = vmatpush1.bf16.msra.mxu0 %v258
    %343 = vmatprep.subr.bf16.mxu0 0
    %344 = vmatpush1.bf16.msra.mxu0 %v255
    %345 = vmatprep.subr.bf16.mxu0 0
    %346 = vmatpush1.bf16.msra.mxu0 %v252
    %347 = vmatprep.subr.bf16.mxu0 0
    %348 = vmatpush1.bf16.msra.mxu0 %v249
    %349 = vmatprep.subr.bf16.mxu0 0
    %350 = vmatpush1.bf16.msra.mxu0 %v246
    %351 = vmatprep.subr.bf16.mxu0 0
    %352 = vmatpush1.bf16.msra.mxu0 %v243
    %353 = vmatprep.subr.bf16.mxu0 0
    %354 = vmatpush1.bf16.msra.mxu0 %v240
    %355 = vmatprep.subr.bf16.mxu0 0
    %356 = vmatpush2.bf16.msra.mxu0 0
    %357 = vmatprep.subr.bf16.mxu0 0
    %358 = vmatpush2.bf16.msra.mxu0 0
    %359 = vmatprep.subr.bf16.mxu0 0
    %360 = vmatpush2.bf16.msra.mxu0 0
    %361 = vmatprep.subr.bf16.mxu0 0
    %362 = vmatpush2.bf16.msra.mxu0 0
    %363 = vmatprep.subr.bf16.mxu0 0
    %364 = vmatpush2.bf16.msra.mxu0 0
    %365 = vmatprep.subr.bf16.mxu0 0
    %366 = vmatpush2.bf16.msra.mxu0 0
    %367 = vmatprep.subr.bf16.mxu0 0
    %368 = vmatpush2.bf16.msra.mxu0 0
    %369 = vmatprep.subr.bf16.mxu0 0
    %370 = vmatpush2.bf16.msra.mxu0 0
    %371 = vmatprep.mubr.bf16.mxu0 0
    %372 = vmatmul.mubr.bf16.gmra.mxu0 %v154
    %v373 = vpop.f32.mrf.mxu0
    %v374 = vadd.f32 %v142, %v373
    %v375 = vpop.f32.mrf.mxu0
    %v376 = vpop.f32.mrf.mxu0
    %v377 = vadd.f32 %v142, %v376
    %v378 = vpop.f32.mrf.mxu0
    %379 = vmatprep.mubr.bf16.mxu0 0
    %380 = vmatmul.mubr.bf16.gmra.mxu0 %v155
    %v381 = vpop.f32.mrf.mxu0
    %v382 = vadd.f32 %v142, %v381
    %v383 = vpop.f32.mrf.mxu0
    %v384 = vpop.f32.mrf.mxu0
    %v385 = vadd.f32 %v142, %v384
    %v386 = vpop.f32.mrf.mxu0
    %387 = vdwg.mxu0
    %v388 = vmul.f32 %v321, 0.17677669
    %v389 = vmul.f32 %v325, 0.17677669
    %v390 = vmul.f32 %v331, 0.17677669
    %v391 = vmul.f32 %v335, 0.17677669
    %v392 = vpack.c.bf16 %v389, %v388
    %v393 = vpack.c.bf16 %v391, %v390
    %v394 = vpack.c.bf16 %v327, %v323
    %v395 = vpack.c.bf16 %v337, %v333
    %v396 = vpack.c.bf16 %v377, %v374
    %v397 = vpack.c.bf16 %v385, %v382
    %v398 = vld [vmem:[%s1] sm:$0xf]
    %v399 = vld [vmem:[%s1 + $0x4] sm:$0xf]
    %v400 = vld [vmem:[%s1 + $0x8] sm:$0xf]
    %v401 = vld [vmem:[%s1 + $0xc] sm:$0xf]
    %v402 = vunpack.c.l.bf16 %v398
    %v403 = vunpack.c.l.bf16 %v399
    %v404 = vunpack.c.l.bf16 %v400
    %v405 = vunpack.c.l.bf16 %v401
    %v406 = vld [vmem:[#allocation2] sm:$0xf]
    %v407 = vld [vmem:[#allocation2 + $0x4] sm:$0xf]
    %v408 = vld [vmem:[#allocation2 + $0x8] sm:$0xf]
    %v409 = vld [vmem:[#allocation2 + $0xc] sm:$0xf]
    %v410 = vld [vmem:[#allocation2 + $0x10] sm:$0xf]
    %v411 = vld [vmem:[#allocation2 + $0x14] sm:$0xf]
    %v412 = vld [vmem:[#allocation2 + $0x18] sm:$0xf]
    %v413 = vld [vmem:[#allocation2 + $0x1c] sm:$0xf]
    %v414 = vld [vmem:[#allocation2 + $0x20] sm:$0xf]
    %v415 = vld [vmem:[#allocation2 + $0x24] sm:$0xf]
    %v416 = vld [vmem:[#allocation2 + $0x28] sm:$0xf]
    %v417 = vld [vmem:[#allocation2 + $0x2c] sm:$0xf]
    %v418 = vld [vmem:[#allocation2 + $0x30] sm:$0xf]
    %v419 = vld [vmem:[#allocation2 + $0x34] sm:$0xf]
    %v420 = vld [vmem:[#allocation2 + $0x38] sm:$0xf]
    %v421 = vld [vmem:[#allocation2 + $0x3c] sm:$0xf]
    %v422 = vld [vmem:[%s5] sm:$0x1]
    %vm423 = vcmask 261120
    %v425 = vsel %vm423, %v392, 0
    %v428 = vsel %vm423, %v394, 0
    %430 = vmatprep.subr.bf16.mxu0 0
    %431 = vmatpush1.bf16.xpose.msra.mxu0 0
    %432 = vmatprep.subr.bf16.mxu0 0
    %433 = vmatpush1.bf16.xpose.msra.mxu0 0
    %434 = vmatprep.subr.bf16.mxu0 0
    %435 = vmatpush1.bf16.xpose.msra.mxu0 0
    %436 = vmatprep.subr.bf16.mxu0 0
    %437 = vmatpush1.bf16.xpose.msra.mxu0 0
    %438 = vmatprep.subr.bf16.mxu0 0
    %439 = vmatpush1.bf16.xpose.msra.mxu0 0
    %440 = vmatprep.subr.bf16.mxu0 0
    %441 = vmatpush1.bf16.xpose.msra.mxu0 0
    %442 = vmatprep.subr.bf16.mxu0 0
    %443 = vmatpush1.bf16.xpose.msra.mxu0 0
    %444 = vmatprep.subr.bf16.mxu0 0
    %445 = vmatpush1.bf16.xpose.msra.mxu0 %v428
    %446 = vmatprep.subr.bf16.mxu0 0
    %447 = vmatpush2.bf16.xpose.msra.mxu0 0
    %448 = vmatprep.subr.bf16.mxu0 0
    %449 = vmatpush2.bf16.xpose.msra.mxu0 0
    %450 = vmatprep.subr.bf16.mxu0 0
    %451 = vmatpush2.bf16.xpose.msra.mxu0 0
    %452 = vmatprep.subr.bf16.mxu0 0
    %453 = vmatpush2.bf16.xpose.msra.mxu0 0
    %454 = vmatprep.subr.bf16.mxu0 0
    %455 = vmatpush2.bf16.xpose.msra.mxu0 0
    %456 = vmatprep.subr.bf16.mxu0 0
    %457 = vmatpush2.bf16.xpose.msra.mxu0 0
    %458 = vmatprep.subr.bf16.mxu0 0
    %459 = vmatpush2.bf16.xpose.msra.mxu0 0
    %460 = vmatprep.subr.bf16.mxu0 0
    %461 = vmatpush2.bf16.xpose.msra.mxu0 0
    %462 = vmatprep.mubr.bf16.mxu0 0
    %463 = vmatmul.mubr.bf16.gmra.mxu0 %v425
    %v464 = vpop.f32.mrf.mxu0
    %v465 = vadd.f32 %v402, %v464
    %v466 = vpop.f32.mrf.mxu0
    %v467 = vpop.f32.mrf.mxu0
    %v468 = vadd.f32 %v403, %v467
    %v469 = vpop.f32.mrf.mxu0
    %470 = vdwg.mxu0
    %v472 = vsel %vm423, %v393, 0
    %v475 = vsel %vm423, %v395, 0
    %477 = vmatprep.subr.bf16.mxu0 0
    %478 = vmatpush1.bf16.xpose.msra.mxu0 0
    %479 = vmatprep.subr.bf16.mxu0 0
    %480 = vmatpush1.bf16.xpose.msra.mxu0 0
    %481 = vmatprep.subr.bf16.mxu0 0
    %482 = vmatpush1.bf16.xpose.msra.mxu0 0
    %483 = vmatprep.subr.bf16.mxu0 0
    %484 = vmatpush1.bf16.xpose.msra.mxu0 0
    %485 = vmatprep.subr.bf16.mxu0 0
    %486 = vmatpush1.bf16.xpose.msra.mxu0 0
    %487 = vmatprep.subr.bf16.mxu0 0
    %488 = vmatpush1.bf16.xpose.msra.mxu0 0
    %489 = vmatprep.subr.bf16.mxu0 0
    %490 = vmatpush1.bf16.xpose.msra.mxu0 0
    %491 = vmatprep.subr.bf16.mxu0 0
    %492 = vmatpush1.bf16.xpose.msra.mxu0 %v475
    %493 = vmatprep.subr.bf16.mxu0 0
    %494 = vmatpush2.bf16.xpose.msra.mxu0 0
    %495 = vmatprep.subr.bf16.mxu0 0
    %496 = vmatpush2.bf16.xpose.msra.mxu0 0
    %497 = vmatprep.subr.bf16.mxu0 0
    %498 = vmatpush2.bf16.xpose.msra.mxu0 0
    %499 = vmatprep.subr.bf16.mxu0 0
    %500 = vmatpush2.bf16.xpose.msra.mxu0 0
    %501 = vmatprep.subr.bf16.mxu0 0
    %502 = vmatpush2.bf16.xpose.msra.mxu0 0
    %503 = vmatprep.subr.bf16.mxu0 0
    %504 = vmatpush2.bf16.xpose.msra.mxu0 0
    %505 = vmatprep.subr.bf16.mxu0 0
    %506 = vmatpush2.bf16.xpose.msra.mxu0 0
    %507 = vmatprep.subr.bf16.mxu0 0
    %508 = vmatpush2.bf16.xpose.msra.mxu0 0
    %509 = vmatprep.mubr.bf16.mxu0 0
    %510 = vmatmul.mubr.bf16.gmra.mxu0 %v472
    %v511 = vpop.f32.mrf.mxu0
    %v512 = vadd.f32 %v404, %v511
    %v513 = vpop.f32.mrf.mxu0
    %v514 = vpop.f32.mrf.mxu0
    %v515 = vadd.f32 %v405, %v514
    %v516 = vpop.f32.mrf.mxu0
    %517 = vdwg.mxu0
    %vm518 = vcmask 130048
    %v519 = vsel %vm518, %v465, -inf
    %520 = vmax.xlane.f32.xlu0 %v519
    %v521 = vpop.xlane.xlu0 %520
    %v522 = vsel %vm518, %v468, -inf
    %523 = vmax.xlane.f32.xlu0 %v522
    %v524 = vpop.xlane.xlu0 %523
    %v525 = vsel %vm518, %v512, -inf
    %526 = vmax.xlane.f32.xlu0 %v525
    %v527 = vpop.xlane.xlu0 %526
    %v528 = vsel %vm518, %v515, -inf
    %529 = vmax.xlane.f32.xlu0 %v528
    %v530 = vpop.xlane.xlu0 %529
    %v531 = vsub.f32 %v465, %v521
    %v532 = vsub.f32 %v468, %v524
    %v533 = vsub.f32 %v512, %v527
    %v534 = vsub.f32 %v515, %v530
    %v535 = vmul.f32 %v531, 1.442695
    %v536 = vpow.pop %v535
    %v537 = vmul.f32 %v532, 1.442695
    %v538 = vpow.pop %v537
    %v539 = vmul.f32 %v533, 1.442695
    %v540 = vpow.pop %v539
    %v541 = vmul.f32 %v534, 1.442695
    %v542 = vpow.pop %v541
    %v543 = vsel %vm518, %v536, 0.0
    %544 = vadd.xlane.f32.xlu0 %v543
    %v545 = vpop.xlane.xlu0 %544
    %v546 = vsel %vm518, %v538, 0.0
    %547 = vadd.xlane.f32.xlu0 %v546
    %v548 = vpop.xlane.xlu0 %547
    %v549 = vsel %vm518, %v540, 0.0
    %550 = vadd.xlane.f32.xlu0 %v549
    %v551 = vpop.xlane.xlu0 %550
    %v552 = vsel %vm518, %v542, 0.0
    %553 = vadd.xlane.f32.xlu0 %v552
    %v554 = vpop.xlane.xlu0 %553
    %v555 = vrcp.pop %v545
    %v556 = vrcp.pop %v548
    %v557 = vrcp.pop %v551
    %v558 = vrcp.pop %v554
    %v559 = vmul.f32 %v536, %v555
    %v560 = vmul.f32 %v538, %v556
    %v561 = vmul.f32 %v540, %v557
    %v562 = vmul.f32 %v542, %v558
    %v563 = vpack.c.bf16 %v560, %v559
    %v564 = vpack.c.bf16 %v562, %v561
    %v566 = vsel %vm518, %v563, 0
    %568 = vmatprep.subr.bf16.mxu0 0
    %569 = vmatpush1.bf16.msra.mxu0 0
    %570 = vmatprep.subr.bf16.mxu0 0
    %571 = vmatpush1.bf16.msra.mxu0 0
    %572 = vmatprep.subr.bf16.mxu0 0
    %573 = vmatpush1.bf16.msra.mxu0 0
    %574 = vmatprep.subr.bf16.mxu0 0
    %575 = vmatpush1.bf16.msra.mxu0 0
    %576 = vmatprep.subr.bf16.mxu0 0
    %577 = vmatpush1.bf16.msra.mxu0 0
    %578 = vmatprep.subr.bf16.mxu0 0
    %579 = vmatpush1.bf16.msra.mxu0 0
    %580 = vmatprep.subr.bf16.mxu0 0
    %581 = vmatpush1.bf16.msra.mxu0 0
    %582 = vmatprep.subr.bf16.mxu0 0
    %583 = vmatpush1.bf16.msra.mxu0 %v396
    %584 = vmatprep.subr.bf16.mxu0 0
    %585 = vmatpush2.bf16.msra.mxu0 0
    %586 = vmatprep.subr.bf16.mxu0 0
    %587 = vmatpush2.bf16.msra.mxu0 0
    %588 = vmatprep.subr.bf16.mxu0 0
    %589 = vmatpush2.bf16.msra.mxu0 0
    %590 = vmatprep.subr.bf16.mxu0 0
    %591 = vmatpush2.bf16.msra.mxu0 0
    %592 = vmatprep.subr.bf16.mxu0 0
    %593 = vmatpush2.bf16.msra.mxu0 0
    %594 = vmatprep.subr.bf16.mxu0 0
    %595 = vmatpush2.bf16.msra.mxu0 0
    %596 = vmatprep.subr.bf16.mxu0 0
    %597 = vmatpush2.bf16.msra.mxu0 0
    %598 = vmatprep.subr.bf16.mxu0 0
    %599 = vmatpush2.bf16.msra.mxu0 0
    %600 = vmatprep.mubr.bf16.mxu0 0
    %601 = vmatmul.mubr.bf16.gmra.mxu0 %v566
    %v602 = vpop.f32.mrf.mxu0
    %v603 = vadd.f32 0.0, %v602
    %v604 = vpop.f32.mrf.mxu0
    %v605 = vpop.f32.mrf.mxu0
    %v606 = vadd.f32 0.0, %v605
    %v607 = vpop.f32.mrf.mxu0
    %608 = vdwg.mxu0
    %v610 = vsel %vm518, %v564, 0
    %612 = vmatprep.subr.bf16.mxu0 0
    %613 = vmatpush1.bf16.msra.mxu0 0
    %614 = vmatprep.subr.bf16.mxu0 0
    %615 = vmatpush1.bf16.msra.mxu0 0
    %616 = vmatprep.subr.bf16.mxu0 0
    %617 = vmatpush1.bf16.msra.mxu0 0
    %618 = vmatprep.subr.bf16.mxu0 0
    %619 = vmatpush1.bf16.msra.mxu0 0
    %620 = vmatprep.subr.bf16.mxu0 0
    %621 = vmatpush1.bf16.msra.mxu0 0
    %622 = vmatprep.subr.bf16.mxu0 0
    %623 = vmatpush1.bf16.msra.mxu0 0
    %624 = vmatprep.subr.bf16.mxu0 0
    %625 = vmatpush1.bf16.msra.mxu0 0
    %626 = vmatprep.subr.bf16.mxu0 0
    %627 = vmatpush1.bf16.msra.mxu0 %v397
    %628 = vmatprep.subr.bf16.mxu0 0
    %629 = vmatpush2.bf16.msra.mxu0 0
    %630 = vmatprep.subr.bf16.mxu0 0
    %631 = vmatpush2.bf16.msra.mxu0 0
    %632 = vmatprep.subr.bf16.mxu0 0
    %633 = vmatpush2.bf16.msra.mxu0 0
    %634 = vmatprep.subr.bf16.mxu0 0
    %635 = vmatpush2.bf16.msra.mxu0 0
    %636 = vmatprep.subr.bf16.mxu0 0
    %637 = vmatpush2.bf16.msra.mxu0 0
    %638 = vmatprep.subr.bf16.mxu0 0
    %639 = vmatpush2.bf16.msra.mxu0 0
    %640 = vmatprep.subr.bf16.mxu0 0
    %641 = vmatpush2.bf16.msra.mxu0 0
    %642 = vmatprep.subr.bf16.mxu0 0
    %643 = vmatpush2.bf16.msra.mxu0 0
    %644 = vmatprep.mubr.bf16.mxu0 0
    %645 = vmatmul.mubr.bf16.gmra.mxu0 %v610
    %v646 = vpop.f32.mrf.mxu0
    %v647 = vadd.f32 0.0, %v646
    %v648 = vpop.f32.mrf.mxu0
    %v649 = vpop.f32.mrf.mxu0
    %v650 = vadd.f32 0.0, %v649
    %v651 = vpop.f32.mrf.mxu0
    %652 = vdwg.mxu0
    %v653 = vpack.c.bf16 %v606, %v603
    %v654 = vpack.c.bf16 %v650, %v647
    %v659 = vunpack.c.l.b16 %v406
    %v660 = vunpack.c.l.b16 %v407
    %v661 = vunpack.c.l.b16 %v408
    %v662 = vunpack.c.l.b16 %v409
    %v663 = vpack.c.b16 %v660, %v659
    %v664 = vpack.c.b16 %v662, %v661
    %v668 = vsel %vm423, %v653, 0
    %v671 = vsel %vm423, %v654, 0
    %673 = vmatprep.subr.bf16.mxu0 0
    %674 = vmatpush1.bf16.msra.mxu0 0
    %675 = vmatprep.subr.bf16.mxu0 0
    %676 = vmatpush1.bf16.msra.mxu0 0
    %677 = vmatprep.subr.bf16.mxu0 0
    %678 = vmatpush1.bf16.msra.mxu0 0
    %679 = vmatprep.subr.bf16.mxu0 0
    %680 = vmatpush1.bf16.msra.mxu0 0
    %681 = vmatprep.subr.bf16.mxu0 0
    %682 = vmatpush1.bf16.msra.mxu0 0
    %683 = vmatprep.subr.bf16.mxu0 0
    %684 = vmatpush1.bf16.msra.mxu0 0
    %685 = vmatprep.subr.bf16.mxu0 0
    %686 = vmatpush1.bf16.msra.mxu0 %v664
    %687 = vmatprep.subr.bf16.mxu0 0
    %688 = vmatpush1.bf16.msra.mxu0 %v663
    %689 = vmatprep.subr.bf16.mxu0 0
    %690 = vmatpush2.bf16.msra.mxu0 0
    %691 = vmatprep.subr.bf16.mxu0 0
    %692 = vmatpush2.bf16.msra.mxu0 0
    %693 = vmatprep.subr.bf16.mxu0 0
    %694 = vmatpush2.bf16.msra.mxu0 0
    %695 = vmatprep.subr.bf16.mxu0 0
    %696 = vmatpush2.bf16.msra.mxu0 0
    %697 = vmatprep.subr.bf16.mxu0 0
    %698 = vmatpush2.bf16.msra.mxu0 0
    %699 = vmatprep.subr.bf16.mxu0 0
    %700 = vmatpush2.bf16.msra.mxu0 0
    %701 = vmatprep.subr.bf16.mxu0 0
    %702 = vmatpush2.bf16.msra.mxu0 0
    %703 = vmatprep.subr.bf16.mxu0 0
    %704 = vmatpush2.bf16.msra.mxu0 0
    %705 = vmatprep.mubr.bf16.mxu0 0
    %706 = vmatmul.mubr.bf16.gmra.mxu0 %v668
    %v707 = vpop.f32.mrf.mxu0
    %v708 = vadd.f32 0.0, %v707
    %v709 = vpop.f32.mrf.mxu0
    %v710 = vpop.f32.mrf.mxu0
    %v711 = vadd.f32 0.0, %v710
    %v712 = vpop.f32.mrf.mxu0
    %713 = vmatprep.mubr.bf16.mxu0 0
    %714 = vmatmul.mubr.bf16.gmra.mxu0 %v671
    %v715 = vpop.f32.mrf.mxu0
    %v716 = vadd.f32 0.0, %v715
    %v717 = vpop.f32.mrf.mxu0
    %v718 = vpop.f32.mrf.mxu0
    %v719 = vadd.f32 0.0, %v718
    %v720 = vpop.f32.mrf.mxu0
    %721 = vdwg.mxu0
    %v723 = vlaneseq
    %v724 = vshrl.u32 %v723, 7
    %v725 = vsub.s32 0, %v724
    %v726 = vrot.slane %v422, %v725
    %v728 = vadd.f32 %v726, %v708
    %v729 = vadd.f32 %v726, %v711
    %v730 = vadd.f32 %v726, %v716
    %v731 = vadd.f32 %v726, %v719
    %733 = vrot.lane.b32.xlu0 %v392, 96
    %v734 = vpop.permute.xlu0 %733
    %736 = vrot.lane.b32.xlu0 %v394, 96
    %v737 = vpop.permute.xlu0 %736
    %v739 = vsel %vm423, %v734, 0
    %v742 = vsel %vm423, %v737, 0
    %744 = vmatprep.subr.bf16.mxu0 0
    %745 = vmatpush1.bf16.xpose.msra.mxu0 0
    %746 = vmatprep.subr.bf16.mxu0 0
    %747 = vmatpush1.bf16.xpose.msra.mxu0 0
    %748 = vmatprep.subr.bf16.mxu0 0
    %749 = vmatpush1.bf16.xpose.msra.mxu0 0
    %750 = vmatprep.subr.bf16.mxu0 0
    %751 = vmatpush1.bf16.xpose.msra.mxu0 0
    %752 = vmatprep.subr.bf16.mxu0 0
    %753 = vmatpush1.bf16.xpose.msra.mxu0 0
    %754 = vmatprep.subr.bf16.mxu0 0
    %755 = vmatpush1.bf16.xpose.msra.mxu0 0
    %756 = vmatprep.subr.bf16.mxu0 0
    %757 = vmatpush1.bf16.xpose.msra.mxu0 0
    %758 = vmatprep.subr.bf16.mxu0 0
    %759 = vmatpush1.bf16.xpose.msra.mxu0 %v742
    %760 = vmatprep.subr.bf16.mxu0 0
    %761 = vmatpush2.bf16.xpose.msra.mxu0 0
    %762 = vmatprep.subr.bf16.mxu0 0
    %763 = vmatpush2.bf16.xpose.msra.mxu0 0
    %764 = vmatprep.subr.bf16.mxu0 0
    %765 = vmatpush2.bf16.xpose.msra.mxu0 0
    %766 = vmatprep.subr.bf16.mxu0 0
    %767 = vmatpush2.bf16.xpose.msra.mxu0 0
    %768 = vmatprep.subr.bf16.mxu0 0
    %769 = vmatpush2.bf16.xpose.msra.mxu0 0
    %770 = vmatprep.subr.bf16.mxu0 0
    %771 = vmatpush2.bf16.xpose.msra.mxu0 0
    %772 = vmatprep.subr.bf16.mxu0 0
    %773 = vmatpush2.bf16.xpose.msra.mxu0 0
    %774 = vmatprep.subr.bf16.mxu0 0
    %775 = vmatpush2.bf16.xpose.msra.mxu0 0
    %776 = vmatprep.mubr.bf16.mxu0 0
    %777 = vmatmul.mubr.bf16.gmra.mxu0 %v739
    %v778 = vpop.f32.mrf.mxu0
    %v779 = vadd.f32 %v402, %v778
    %v780 = vpop.f32.mrf.mxu0
    %v781 = vpop.f32.mrf.mxu0
    %v782 = vadd.f32 %v403, %v781
    %v783 = vpop.f32.mrf.mxu0
    %784 = vdwg.mxu0
    %786 = vrot.lane.b32.xlu0 %v393, 96
    %v787 = vpop.permute.xlu0 %786
    %789 = vrot.lane.b32.xlu0 %v395, 96
    %v790 = vpop.permute.xlu0 %789
    %v792 = vsel %vm423, %v787, 0
    %v795 = vsel %vm423, %v790, 0
    %797 = vmatprep.subr.bf16.mxu0 0
    %798 = vmatpush1.bf16.xpose.msra.mxu0 0
    %799 = vmatprep.subr.bf16.mxu0 0
    %800 = vmatpush1.bf16.xpose.msra.mxu0 0
    %801 = vmatprep.subr.bf16.mxu0 0
    %802 = vmatpush1.bf16.xpose.msra.mxu0 0
    %803 = vmatprep.subr.bf16.mxu0 0
    %804 = vmatpush1.bf16.xpose.msra.mxu0 0
    %805 = vmatprep.subr.bf16.mxu0 0
    %806 = vmatpush1.bf16.xpose.msra.mxu0 0
    %807 = vmatprep.subr.bf16.mxu0 0
    %808 = vmatpush1.bf16.xpose.msra.mxu0 0
    %809 = vmatprep.subr.bf16.mxu0 0
    %810 = vmatpush1.bf16.xpose.msra.mxu0 0
    %811 = vmatprep.subr.bf16.mxu0 0
    %812 = vmatpush1.bf16.xpose.msra.mxu0 %v795
    %813 = vmatprep.subr.bf16.mxu0 0
    %814 = vmatpush2.bf16.xpose.msra.mxu0 0
    %815 = vmatprep.subr.bf16.mxu0 0
    %816 = vmatpush2.bf16.xpose.msra.mxu0 0
    %817 = vmatprep.subr.bf16.mxu0 0
    %818 = vmatpush2.bf16.xpose.msra.mxu0 0
    %819 = vmatprep.subr.bf16.mxu0 0
    %820 = vmatpush2.bf16.xpose.msra.mxu0 0
    %821 = vmatprep.subr.bf16.mxu0 0
    %822 = vmatpush2.bf16.xpose.msra.mxu0 0
    %823 = vmatprep.subr.bf16.mxu0 0
    %824 = vmatpush2.bf16.xpose.msra.mxu0 0
    %825 = vmatprep.subr.bf16.mxu0 0
    %826 = vmatpush2.bf16.xpose.msra.mxu0 0
    %827 = vmatprep.subr.bf16.mxu0 0
    %828 = vmatpush2.bf16.xpose.msra.mxu0 0
    %829 = vmatprep.mubr.bf16.mxu0 0
    %830 = vmatmul.mubr.bf16.gmra.mxu0 %v792
    %v831 = vpop.f32.mrf.mxu0
    %v832 = vadd.f32 %v404, %v831
    %v833 = vpop.f32.mrf.mxu0
    %v834 = vpop.f32.mrf.mxu0
    %v835 = vadd.f32 %v405, %v834
    %v836 = vpop.f32.mrf.mxu0
    %837 = vdwg.mxu0
    %v838 = vsel %vm518, %v779, -inf
    %839 = vmax.xlane.f32.xlu0 %v838
    %v840 = vpop.xlane.xlu0 %839
    %v841 = vsel %vm518, %v782, -inf
    %842 = vmax.xlane.f32.xlu0 %v841
    %v843 = vpop.xlane.xlu0 %842
    %v844 = vsel %vm518, %v832, -inf
    %845 = vmax.xlane.f32.xlu0 %v844
    %v846 = vpop.xlane.xlu0 %845
    %v847 = vsel %vm518, %v835, -inf
    %848 = vmax.xlane.f32.xlu0 %v847
    %v849 = vpop.xlane.xlu0 %848
    %v850 = vsub.f32 %v779, %v840
    %v851 = vsub.f32 %v782, %v843
    %v852 = vsub.f32 %v832, %v846
    %v853 = vsub.f32 %v835, %v849
    %v854 = vmul.f32 %v850, 1.442695
    %v855 = vpow.pop %v854
    %v856 = vmul.f32 %v851, 1.442695
    %v857 = vpow.pop %v856
    %v858 = vmul.f32 %v852, 1.442695
    %v859 = vpow.pop %v858
    %v860 = vmul.f32 %v853, 1.442695
    %v861 = vpow.pop %v860
    %v862 = vsel %vm518, %v855, 0.0
    %863 = vadd.xlane.f32.xlu0 %v862
    %v864 = vpop.xlane.xlu0 %863
    %v865 = vsel %vm518, %v857, 0.0
    %866 = vadd.xlane.f32.xlu0 %v865
    %v867 = vpop.xlane.xlu0 %866
    %v868 = vsel %vm518, %v859, 0.0
    %869 = vadd.xlane.f32.xlu0 %v868
    %v870 = vpop.xlane.xlu0 %869
    %v871 = vsel %vm518, %v861, 0.0
    %872 = vadd.xlane.f32.xlu0 %v871
    %v873 = vpop.xlane.xlu0 %872
    %v874 = vrcp.pop %v864
    %v875 = vrcp.pop %v867
    %v876 = vrcp.pop %v870
    %v877 = vrcp.pop %v873
    %v878 = vmul.f32 %v855, %v874
    %v879 = vmul.f32 %v857, %v875
    %v880 = vmul.f32 %v859, %v876
    %v881 = vmul.f32 %v861, %v877
    %v882 = vpack.c.bf16 %v879, %v878
    %v883 = vpack.c.bf16 %v881, %v880
    %885 = vrot.lane.b32.xlu0 %v396, 96
    %v886 = vpop.permute.xlu0 %885
    %v889 = vsel %vm518, %v882, 0
    %891 = vmatprep.subr.bf16.mxu0 0
    %892 = vmatpush1.bf16.msra.mxu0 0
    %893 = vmatprep.subr.bf16.mxu0 0
    %894 = vmatpush1.bf16.msra.mxu0 0
    %895 = vmatprep.subr.bf16.mxu0 0
    %896 = vmatpush1.bf16.msra.mxu0 0
    %897 = vmatprep.subr.bf16.mxu0 0
    %898 = vmatpush1.bf16.msra.mxu0 0
    %899 = vmatprep.subr.bf16.mxu0 0
    %900 = vmatpush1.bf16.msra.mxu0 0
    %901 = vmatprep.subr.bf16.mxu0 0
    %902 = vmatpush1.bf16.msra.mxu0 0
    %903 = vmatprep.subr.bf16.mxu0 0
    %904 = vmatpush1.bf16.msra.mxu0 0
    %905 = vmatprep.subr.bf16.mxu0 0
    %906 = vmatpush1.bf16.msra.mxu0 %v886
    %907 = vmatprep.subr.bf16.mxu0 0
    %908 = vmatpush2.bf16.msra.mxu0 0
    %909 = vmatprep.subr.bf16.mxu0 0
    %910 = vmatpush2.bf16.msra.mxu0 0
    %911 = vmatprep.subr.bf16.mxu0 0
    %912 = vmatpush2.bf16.msra.mxu0 0
    %913 = vmatprep.subr.bf16.mxu0 0
    %914 = vmatpush2.bf16.msra.mxu0 0
    %915 = vmatprep.subr.bf16.mxu0 0
    %916 = vmatpush2.bf16.msra.mxu0 0
    %917 = vmatprep.subr.bf16.mxu0 0
    %918 = vmatpush2.bf16.msra.mxu0 0
    %919 = vmatprep.subr.bf16.mxu0 0
    %920 = vmatpush2.bf16.msra.mxu0 0
    %921 = vmatprep.subr.bf16.mxu0 0
    %922 = vmatpush2.bf16.msra.mxu0 0
    %923 = vmatprep.mubr.bf16.mxu0 0
    %924 = vmatmul.mubr.bf16.gmra.mxu0 %v889
    %v925 = vpop.f32.mrf.mxu0
    %v926 = vadd.f32 0.0, %v925
    %v927 = vpop.f32.mrf.mxu0
    %v928 = vpop.f32.mrf.mxu0
    %v929 = vadd.f32 0.0, %v928
    %v930 = vpop.f32.mrf.mxu0
    %931 = vdwg.mxu0
    %933 = vrot.lane.b32.xlu0 %v397, 96
    %v934 = vpop.permute.xlu0 %933
    %v937 = vsel %vm518, %v883, 0
    %939 = vmatprep.subr.bf16.mxu0 0
    %940 = vmatpush1.bf16.msra.mxu0 0
    %941 = vmatprep.subr.bf16.mxu0 0
    %942 = vmatpush1.bf16.msra.mxu0 0
    %943 = vmatprep.subr.bf16.mxu0 0
    %944 = vmatpush1.bf16.msra.mxu0 0
    %945 = vmatprep.subr.bf16.mxu0 0
    %946 = vmatpush1.bf16.msra.mxu0 0
    %947 = vmatprep.subr.bf16.mxu0 0
    %948 = vmatpush1.bf16.msra.mxu0 0
    %949 = vmatprep.subr.bf16.mxu0 0
    %950 = vmatpush1.bf16.msra.mxu0 0
    %951 = vmatprep.subr.bf16.mxu0 0
    %952 = vmatpush1.bf16.msra.mxu0 0
    %953 = vmatprep.subr.bf16.mxu0 0
    %954 = vmatpush1.bf16.msra.mxu0 %v934
    %955 = vmatprep.subr.bf16.mxu0 0
    %956 = vmatpush2.bf16.msra.mxu0 0
    %957 = vmatprep.subr.bf16.mxu0 0
    %958 = vmatpush2.bf16.msra.mxu0 0
    %959 = vmatprep.subr.bf16.mxu0 0
    %960 = vmatpush2.bf16.msra.mxu0 0
    %961 = vmatprep.subr.bf16.mxu0 0
    %962 = vmatpush2.bf16.msra.mxu0 0
    %963 = vmatprep.subr.bf16.mxu0 0
    %964 = vmatpush2.bf16.msra.mxu0 0
    %965 = vmatprep.subr.bf16.mxu0 0
    %966 = vmatpush2.bf16.msra.mxu0 0
    %967 = vmatprep.subr.bf16.mxu0 0
    %968 = vmatpush2.bf16.msra.mxu0 0
    %969 = vmatprep.subr.bf16.mxu0 0
    %970 = vmatpush2.bf16.msra.mxu0 0
    %971 = vmatprep.mubr.bf16.mxu0 0
    %972 = vmatmul.mubr.bf16.gmra.mxu0 %v937
    %v973 = vpop.f32.mrf.mxu0
    %v974 = vadd.f32 0.0, %v973
    %v975 = vpop.f32.mrf.mxu0
    %v976 = vpop.f32.mrf.mxu0
    %v977 = vadd.f32 0.0, %v976
    %v978 = vpop.f32.mrf.mxu0
    %979 = vdwg.mxu0
    %v980 = vpack.c.bf16 %v929, %v926
    %v981 = vpack.c.bf16 %v977, %v974
    %v986 = vunpack.c.l.b16 %v410
    %v987 = vunpack.c.l.b16 %v411
    %v988 = vunpack.c.l.b16 %v412
    %v989 = vunpack.c.l.b16 %v413
    %v990 = vpack.c.b16 %v987, %v986
    %v991 = vpack.c.b16 %v989, %v988
    %v995 = vsel %vm423, %v980, 0
    %v998 = vsel %vm423, %v981, 0
    %1000 = vmatprep.subr.bf16.mxu0 0
    %1001 = vmatpush1.bf16.msra.mxu0 0
    %1002 = vmatprep.subr.bf16.mxu0 0
    %1003 = vmatpush1.bf16.msra.mxu0 0
    %1004 = vmatprep.subr.bf16.mxu0 0
    %1005 = vmatpush1.bf16.msra.mxu0 0
    %1006 = vmatprep.subr.bf16.mxu0 0
    %1007 = vmatpush1.bf16.msra.mxu0 0
    %1008 = vmatprep.subr.bf16.mxu0 0
    %1009 = vmatpush1.bf16.msra.mxu0 0
    %1010 = vmatprep.subr.bf16.mxu0 0
    %1011 = vmatpush1.bf16.msra.mxu0 0
    %1012 = vmatprep.subr.bf16.mxu0 0
    %1013 = vmatpush1.bf16.msra.mxu0 %v991
    %1014 = vmatprep.subr.bf16.mxu0 0
    %1015 = vmatpush1.bf16.msra.mxu0 %v990
    %1016 = vmatprep.subr.bf16.mxu0 0
    %1017 = vmatpush2.bf16.msra.mxu0 0
    %1018 = vmatprep.subr.bf16.mxu0 0
    %1019 = vmatpush2.bf16.msra.mxu0 0
    %1020 = vmatprep.subr.bf16.mxu0 0
    %1021 = vmatpush2.bf16.msra.mxu0 0
    %1022 = vmatprep.subr.bf16.mxu0 0
    %1023 = vmatpush2.bf16.msra.mxu0 0
    %1024 = vmatprep.subr.bf16.mxu0 0
    %1025 = vmatpush2.bf16.msra.mxu0 0
    %1026 = vmatprep.subr.bf16.mxu0 0
    %1027 = vmatpush2.bf16.msra.mxu0 0
    %1028 = vmatprep.subr.bf16.mxu0 0
    %1029 = vmatpush2.bf16.msra.mxu0 0
    %1030 = vmatprep.subr.bf16.mxu0 0
    %1031 = vmatpush2.bf16.msra.mxu0 0
    %1032 = vmatprep.mubr.bf16.mxu0 0
    %1033 = vmatmul.mubr.bf16.gmra.mxu0 %v995
    %v1034 = vpop.f32.mrf.mxu0
    %v1035 = vadd.f32 0.0, %v1034
    %v1036 = vpop.f32.mrf.mxu0
    %v1037 = vpop.f32.mrf.mxu0
    %v1038 = vadd.f32 0.0, %v1037
    %v1039 = vpop.f32.mrf.mxu0
    %1040 = vmatprep.mubr.bf16.mxu0 0
    %1041 = vmatmul.mubr.bf16.gmra.mxu0 %v998
    %v1042 = vpop.f32.mrf.mxu0
    %v1043 = vadd.f32 0.0, %v1042
    %v1044 = vpop.f32.mrf.mxu0
    %v1045 = vpop.f32.mrf.mxu0
    %v1046 = vadd.f32 0.0, %v1045
    %v1047 = vpop.f32.mrf.mxu0
    %1048 = vdwg.mxu0
    %v1049 = vadd.f32 %v728, %v1035
    %v1050 = vadd.f32 %v729, %v1038
    %v1051 = vadd.f32 %v730, %v1043
    %v1052 = vadd.f32 %v731, %v1046
    %1053 = vrot.lane.b32.xlu0 %v392, 64
    %v1054 = vpop.permute.xlu0 %1053
    %1055 = vrot.lane.b32.xlu0 %v394, 64
    %v1056 = vpop.permute.xlu0 %1055
    %v1058 = vsel %vm423, %v1054, 0
    %v1061 = vsel %vm423, %v1056, 0
    %1063 = vmatprep.subr.bf16.mxu0 0
    %1064 = vmatpush1.bf16.xpose.msra.mxu0 0
    %1065 = vmatprep.subr.bf16.mxu0 0
    %1066 = vmatpush1.bf16.xpose.msra.mxu0 0
    %1067 = vmatprep.subr.bf16.mxu0 0
    %1068 = vmatpush1.bf16.xpose.msra.mxu0 0
    %1069 = vmatprep.subr.bf16.mxu0 0
    %1070 = vmatpush1.bf16.xpose.msra.mxu0 0
    %1071 = vmatprep.subr.bf16.mxu0 0
    %1072 = vmatpush1.bf16.xpose.msra.mxu0 0
    %1073 = vmatprep.subr.bf16.mxu0 0
    %1074 = vmatpush1.bf16.xpose.msra.mxu0 0
    %1075 = vmatprep.subr.bf16.mxu0 0
    %1076 = vmatpush1.bf16.xpose.msra.mxu0 0
    %1077 = vmatprep.subr.bf16.mxu0 0
    %1078 = vmatpush1.bf16.xpose.msra.mxu0 %v1061
    %1079 = vmatprep.subr.bf16.mxu0 0
    %1080 = vmatpush2.bf16.xpose.msra.mxu0 0
    %1081 = vmatprep.subr.bf16.mxu0 0
    %1082 = vmatpush2.bf16.xpose.msra.mxu0 0
    %1083 = vmatprep.subr.bf16.mxu0 0
    %1084 = vmatpush2.bf16.xpose.msra.mxu0 0
    %1085 = vmatprep.subr.bf16.mxu0 0
    %1086 = vmatpush2.bf16.xpose.msra.mxu0 0
    %1087 = vmatprep.subr.bf16.mxu0 0
    %1088 = vmatpush2.bf16.xpose.msra.mxu0 0
    %1089 = vmatprep.subr.bf16.mxu0 0
    %1090 = vmatpush2.bf16.xpose.msra.mxu0 0
    %1091 = vmatprep.subr.bf16.mxu0 0
    %1092 = vmatpush2.bf16.xpose.msra.mxu0 0
    %1093 = vmatprep.subr.bf16.mxu0 0
    %1094 = vmatpush2.bf16.xpose.msra.mxu0 0
    %1095 = vmatprep.mubr.bf16.mxu0 0
    %1096 = vmatmul.mubr.bf16.gmra.mxu0 %v1058
    %v1097 = vpop.f32.mrf.mxu0
    %v1098 = vadd.f32 %v402, %v1097
    %v1099 = vpop.f32.mrf.mxu0
    %v1100 = vpop.f32.mrf.mxu0
    %v1101 = vadd.f32 %v403, %v1100
    %v1102 = vpop.f32.mrf.mxu0
    %1103 = vdwg.mxu0
    %1104 = vrot.lane.b32.xlu0 %v393, 64
    %v1105 = vpop.permute.xlu0 %1104
    %1106 = vrot.lane.b32.xlu0 %v395, 64
    %v1107 = vpop.permute.xlu0 %1106
    %v1109 = vsel %vm423, %v1105, 0
    %v1112 = vsel %vm423, %v1107, 0
    %1114 = vmatprep.subr.bf16.mxu0 0
    %1115 = vmatpush1.bf16.xpose.msra.mxu0 0
    %1116 = vmatprep.subr.bf16.mxu0 0
    %1117 = vmatpush1.bf16.xpose.msra.mxu0 0
    %1118 = vmatprep.subr.bf16.mxu0 0
    %1119 = vmatpush1.bf16.xpose.msra.mxu0 0
    %1120 = vmatprep.subr.bf16.mxu0 0
    %1121 = vmatpush1.bf16.xpose.msra.mxu0 0
    %1122 = vmatprep.subr.bf16.mxu0 0
    %1123 = vmatpush1.bf16.xpose.msra.mxu0 0
    %1124 = vmatprep.subr.bf16.mxu0 0
    %1125 = vmatpush1.bf16.xpose.msra.mxu0 0
    %1126 = vmatprep.subr.bf16.mxu0 0
    %1127 = vmatpush1.bf16.xpose.msra.mxu0 0
    %1128 = vmatprep.subr.bf16.mxu0 0
    %1129 = vmatpush1.bf16.xpose.msra.mxu0 %v1112
    %1130 = vmatprep.subr.bf16.mxu0 0
    %1131 = vmatpush2.bf16.xpose.msra.mxu0 0
    %1132 = vmatprep.subr.bf16.mxu0 0
    %1133 = vmatpush2.bf16.xpose.msra.mxu0 0
    %1134 = vmatprep.subr.bf16.mxu0 0
    %1135 = vmatpush2.bf16.xpose.msra.mxu0 0
    %1136 = vmatprep.subr.bf16.mxu0 0
    %1137 = vmatpush2.bf16.xpose.msra.mxu0 0
    %1138 = vmatprep.subr.bf16.mxu0 0
    %1139 = vmatpush2.bf16.xpose.msra.mxu0 0
    %1140 = vmatprep.subr.bf16.mxu0 0
    %1141 = vmatpush2.bf16.xpose.msra.mxu0 0
    %1142 = vmatprep.subr.bf16.mxu0 0
    %1143 = vmatpush2.bf16.xpose.msra.mxu0 0
    %1144 = vmatprep.subr.bf16.mxu0 0
    %1145 = vmatpush2.bf16.xpose.msra.mxu0 0
    %1146 = vmatprep.mubr.bf16.mxu0 0
    %1147 = vmatmul.mubr.bf16.gmra.mxu0 %v1109
    %v1148 = vpop.f32.mrf.mxu0
    %v1149 = vadd.f32 %v404, %v1148
    %v1150 = vpop.f32.mrf.mxu0
    %v1151 = vpop.f32.mrf.mxu0
    %v1152 = vadd.f32 %v405, %v1151
    %v1153 = vpop.f32.mrf.mxu0
    %1154 = vdwg.mxu0
    %v1155 = vsel %vm518, %v1098, -inf
    %1156 = vmax.xlane.f32.xlu0 %v1155
    %v1157 = vpop.xlane.xlu0 %1156
    %v1158 = vsel %vm518, %v1101, -inf
    %1159 = vmax.xlane.f32.xlu0 %v1158
    %v1160 = vpop.xlane.xlu0 %1159
    %v1161 = vsel %vm518, %v1149, -inf
    %1162 = vmax.xlane.f32.xlu0 %v1161
    %v1163 = vpop.xlane.xlu0 %1162
    %v1164 = vsel %vm518, %v1152, -inf
    %1165 = vmax.xlane.f32.xlu0 %v1164
    %v1166 = vpop.xlane.xlu0 %1165
    %v1167 = vsub.f32 %v1098, %v1157
    %v1168 = vsub.f32 %v1101, %v1160
    %v1169 = vsub.f32 %v1149, %v1163
    %v1170 = vsub.f32 %v1152, %v1166
    %v1171 = vmul.f32 %v1167, 1.442695
    %v1172 = vpow.pop %v1171
    %v1173 = vmul.f32 %v1168, 1.442695
    %v1174 = vpow.pop %v1173
    %v1175 = vmul.f32 %v1169, 1.442695
    %v1176 = vpow.pop %v1175
    %v1177 = vmul.f32 %v1170, 1.442695
    %v1178 = vpow.pop %v1177
    %v1179 = vsel %vm518, %v1172, 0.0
    %1180 = vadd.xlane.f32.xlu0 %v1179
    %v1181 = vpop.xlane.xlu0 %1180
    %v1182 = vsel %vm518, %v1174, 0.0
    %1183 = vadd.xlane.f32.xlu0 %v1182
    %v1184 = vpop.xlane.xlu0 %1183
    %v1185 = vsel %vm518, %v1176, 0.0
    %1186 = vadd.xlane.f32.xlu0 %v1185
    %v1187 = vpop.xlane.xlu0 %1186
    %v1188 = vsel %vm518, %v1178, 0.0
    %1189 = vadd.xlane.f32.xlu0 %v1188
    %v1190 = vpop.xlane.xlu0 %1189
    %v1191 = vrcp.pop %v1181
    %v1192 = vrcp.pop %v1184
    %v1193 = vrcp.pop %v1187
    %v1194 = vrcp.pop %v1190
    %v1195 = vmul.f32 %v1172, %v1191
    %v1196 = vmul.f32 %v1174, %v1192
    %v1197 = vmul.f32 %v1176, %v1193
    %v1198 = vmul.f32 %v1178, %v1194
    %v1199 = vpack.c.bf16 %v1196, %v1195
    %v1200 = vpack.c.bf16 %v1198, %v1197
    %1201 = vrot.lane.b32.xlu0 %v396, 64
    %v1202 = vpop.permute.xlu0 %1201
    %v1205 = vsel %vm518, %v1199, 0
    %1207 = vmatprep.subr.bf16.mxu0 0
    %1208 = vmatpush1.bf16.msra.mxu0 0
    %1209 = vmatprep.subr.bf16.mxu0 0
    %1210 = vmatpush1.bf16.msra.mxu0 0
    %1211 = vmatprep.subr.bf16.mxu0 0
    %1212 = vmatpush1.bf16.msra.mxu0 0
    %1213 = vmatprep.subr.bf16.mxu0 0
    %1214 = vmatpush1.bf16.msra.mxu0 0
    %1215 = vmatprep.subr.bf16.mxu0 0
    %1216 = vmatpush1.bf16.msra.mxu0 0
    %1217 = vmatprep.subr.bf16.mxu0 0
    %1218 = vmatpush1.bf16.msra.mxu0 0
    %1219 = vmatprep.subr.bf16.mxu0 0
    %1220 = vmatpush1.bf16.msra.mxu0 0
    %1221 = vmatprep.subr.bf16.mxu0 0
    %1222 = vmatpush1.bf16.msra.mxu0 %v1202
    %1223 = vmatprep.subr.bf16.mxu0 0
    %1224 = vmatpush2.bf16.msra.mxu0 0
    %1225 = vmatprep.subr.bf16.mxu0 0
    %1226 = vmatpush2.bf16.msra.mxu0 0
    %1227 = vmatprep.subr.bf16.mxu0 0
    %1228 = vmatpush2.bf16.msra.mxu0 0
    %1229 = vmatprep.subr.bf16.mxu0 0
    %1230 = vmatpush2.bf16.msra.mxu0 0
    %1231 = vmatprep.subr.bf16.mxu0 0
    %1232 = vmatpush2.bf16.msra.mxu0 0
    %1233 = vmatprep.subr.bf16.mxu0 0
    %1234 = vmatpush2.bf16.msra.mxu0 0
    %1235 = vmatprep.subr.bf16.mxu0 0
    %1236 = vmatpush2.bf16.msra.mxu0 0
    %1237 = vmatprep.subr.bf16.mxu0 0
    %1238 = vmatpush2.bf16.msra.mxu0 0
    %1239 = vmatprep.mubr.bf16.mxu0 0
    %1240 = vmatmul.mubr.bf16.gmra.mxu0 %v1205
    %v1241 = vpop.f32.mrf.mxu0
    %v1242 = vadd.f32 0.0, %v1241
    %v1243 = vpop.f32.mrf.mxu0
    %v1244 = vpop.f32.mrf.mxu0
    %v1245 = vadd.f32 0.0, %v1244
    %v1246 = vpop.f32.mrf.mxu0
    %1247 = vdwg.mxu0
    %1248 = vrot.lane.b32.xlu0 %v397, 64
    %v1249 = vpop.permute.xlu0 %1248
    %v1252 = vsel %vm518, %v1200, 0
    %1254 = vmatprep.subr.bf16.mxu0 0
    %1255 = vmatpush1.bf16.msra.mxu0 0
    %1256 = vmatprep.subr.bf16.mxu0 0
    %1257 = vmatpush1.bf16.msra.mxu0 0
    %1258 = vmatprep.subr.bf16.mxu0 0
    %1259 = vmatpush1.bf16.msra.mxu0 0
    %1260 = vmatprep.subr.bf16.mxu0 0
    %1261 = vmatpush1.bf16.msra.mxu0 0
    %1262 = vmatprep.subr.bf16.mxu0 0
    %1263 = vmatpush1.bf16.msra.mxu0 0
    %1264 = vmatprep.subr.bf16.mxu0 0
    %1265 = vmatpush1.bf16.msra.mxu0 0
    %1266 = vmatprep.subr.bf16.mxu0 0
    %1267 = vmatpush1.bf16.msra.mxu0 0
    %1268 = vmatprep.subr.bf16.mxu0 0
    %1269 = vmatpush1.bf16.msra.mxu0 %v1249
    %1270 = vmatprep.subr.bf16.mxu0 0
    %1271 = vmatpush2.bf16.msra.mxu0 0
    %1272 = vmatprep.subr.bf16.mxu0 0
    %1273 = vmatpush2.bf16.msra.mxu0 0
    %1274 = vmatprep.subr.bf16.mxu0 0
    %1275 = vmatpush2.bf16.msra.mxu0 0
    %1276 = vmatprep.subr.bf16.mxu0 0
    %1277 = vmatpush2.bf16.msra.mxu0 0
    %1278 = vmatprep.subr.bf16.mxu0 0
    %1279 = vmatpush2.bf16.msra.mxu0 0
    %1280 = vmatprep.subr.bf16.mxu0 0
    %1281 = vmatpush2.bf16.msra.mxu0 0
    %1282 = vmatprep.subr.bf16.mxu0 0
    %1283 = vmatpush2.bf16.msra.mxu0 0
    %1284 = vmatprep.subr.bf16.mxu0 0
    %1285 = vmatpush2.bf16.msra.mxu0 0
    %1286 = vmatprep.mubr.bf16.mxu0 0
    %1287 = vmatmul.mubr.bf16.gmra.mxu0 %v1252
    %v1288 = vpop.f32.mrf.mxu0
    %v1289 = vadd.f32 0.0, %v1288
    %v1290 = vpop.f32.mrf.mxu0
    %v1291 = vpop.f32.mrf.mxu0
    %v1292 = vadd.f32 0.0, %v1291
    %v1293 = vpop.f32.mrf.mxu0
    %1294 = vdwg.mxu0
    %v1295 = vpack.c.bf16 %v1245, %v1242
    %v1296 = vpack.c.bf16 %v1292, %v1289
    %v1301 = vunpack.c.l.b16 %v414
    %v1302 = vunpack.c.l.b16 %v415
    %v1303 = vunpack.c.l.b16 %v416
    %v1304 = vunpack.c.l.b16 %v417
    %v1305 = vpack.c.b16 %v1302, %v1301
    %v1306 = vpack.c.b16 %v1304, %v1303
    %v1310 = vsel %vm423, %v1295, 0
    %v1313 = vsel %vm423, %v1296, 0
    %1315 = vmatprep.subr.bf16.mxu0 0
    %1316 = vmatpush1.bf16.msra.mxu0 0
    %1317 = vmatprep.subr.bf16.mxu0 0
    %1318 = vmatpush1.bf16.msra.mxu0 0
    %1319 = vmatprep.subr.bf16.mxu0 0
    %1320 = vmatpush1.bf16.msra.mxu0 0
    %1321 = vmatprep.subr.bf16.mxu0 0
    %1322 = vmatpush1.bf16.msra.mxu0 0
    %1323 = vmatprep.subr.bf16.mxu0 0
    %1324 = vmatpush1.bf16.msra.mxu0 0
    %1325 = vmatprep.subr.bf16.mxu0 0
    %1326 = vmatpush1.bf16.msra.mxu0 0
    %1327 = vmatprep.subr.bf16.mxu0 0
    %1328 = vmatpush1.bf16.msra.mxu0 %v1306
    %1329 = vmatprep.subr.bf16.mxu0 0
    %1330 = vmatpush1.bf16.msra.mxu0 %v1305
    %1331 = vmatprep.subr.bf16.mxu0 0
    %1332 = vmatpush2.bf16.msra.mxu0 0
    %1333 = vmatprep.subr.bf16.mxu0 0
    %1334 = vmatpush2.bf16.msra.mxu0 0
    %1335 = vmatprep.subr.bf16.mxu0 0
    %1336 = vmatpush2.bf16.msra.mxu0 0
    %1337 = vmatprep.subr.bf16.mxu0 0
    %1338 = vmatpush2.bf16.msra.mxu0 0
    %1339 = vmatprep.subr.bf16.mxu0 0
    %1340 = vmatpush2.bf16.msra.mxu0 0
    %1341 = vmatprep.subr.bf16.mxu0 0
    %1342 = vmatpush2.bf16.msra.mxu0 0
    %1343 = vmatprep.subr.bf16.mxu0 0
    %1344 = vmatpush2.bf16.msra.mxu0 0
    %1345 = vmatprep.subr.bf16.mxu0 0
    %1346 = vmatpush2.bf16.msra.mxu0 0
    %1347 = vmatprep.mubr.bf16.mxu0 0
    %1348 = vmatmul.mubr.bf16.gmra.mxu0 %v1310
    %v1349 = vpop.f32.mrf.mxu0
    %v1350 = vadd.f32 0.0, %v1349
    %v1351 = vpop.f32.mrf.mxu0
    %v1352 = vpop.f32.mrf.mxu0
    %v1353 = vadd.f32 0.0, %v1352
    %v1354 = vpop.f32.mrf.mxu0
    %1355 = vmatprep.mubr.bf16.mxu0 0
    %1356 = vmatmul.mubr.bf16.gmra.mxu0 %v1313
    %v1357 = vpop.f32.mrf.mxu0
    %v1358 = vadd.f32 0.0, %v1357
    %v1359 = vpop.f32.mrf.mxu0
    %v1360 = vpop.f32.mrf.mxu0
    %v1361 = vadd.f32 0.0, %v1360
    %v1362 = vpop.f32.mrf.mxu0
    %1363 = vdwg.mxu0
    %v1364 = vadd.f32 %v1049, %v1350
    %v1365 = vadd.f32 %v1050, %v1353
    %v1366 = vadd.f32 %v1051, %v1358
    %v1367 = vadd.f32 %v1052, %v1361
    %1368 = vrot.lane.b32.xlu0 %v392, 32
    %v1369 = vpop.permute.xlu0 %1368
    %1370 = vrot.lane.b32.xlu0 %v394, 32
    %v1371 = vpop.permute.xlu0 %1370
    %v1373 = vsel %vm423, %v1369, 0
    %v1376 = vsel %vm423, %v1371, 0
    %1378 = vmatprep.subr.bf16.mxu0 0
    %1379 = vmatpush1.bf16.xpose.msra.mxu0 0
    %1380 = vmatprep.subr.bf16.mxu0 0
    %1381 = vmatpush1.bf16.xpose.msra.mxu0 0
    %1382 = vmatprep.subr.bf16.mxu0 0
    %1383 = vmatpush1.bf16.xpose.msra.mxu0 0
    %1384 = vmatprep.subr.bf16.mxu0 0
    %1385 = vmatpush1.bf16.xpose.msra.mxu0 0
    %1386 = vmatprep.subr.bf16.mxu0 0
    %1387 = vmatpush1.bf16.xpose.msra.mxu0 0
    %1388 = vmatprep.subr.bf16.mxu0 0
    %1389 = vmatpush1.bf16.xpose.msra.mxu0 0
    %1390 = vmatprep.subr.bf16.mxu0 0
    %1391 = vmatpush1.bf16.xpose.msra.mxu0 0
    %1392 = vmatprep.subr.bf16.mxu0 0
    %1393 = vmatpush1.bf16.xpose.msra.mxu0 %v1376
    %1394 = vmatprep.subr.bf16.mxu0 0
    %1395 = vmatpush2.bf16.xpose.msra.mxu0 0
    %1396 = vmatprep.subr.bf16.mxu0 0
    %1397 = vmatpush2.bf16.xpose.msra.mxu0 0
    %1398 = vmatprep.subr.bf16.mxu0 0
    %1399 = vmatpush2.bf16.xpose.msra.mxu0 0
    %1400 = vmatprep.subr.bf16.mxu0 0
    %1401 = vmatpush2.bf16.xpose.msra.mxu0 0
    %1402 = vmatprep.subr.bf16.mxu0 0
    %1403 = vmatpush2.bf16.xpose.msra.mxu0 0
    %1404 = vmatprep.subr.bf16.mxu0 0
    %1405 = vmatpush2.bf16.xpose.msra.mxu0 0
    %1406 = vmatprep.subr.bf16.mxu0 0
    %1407 = vmatpush2.bf16.xpose.msra.mxu0 0
    %1408 = vmatprep.subr.bf16.mxu0 0
    %1409 = vmatpush2.bf16.xpose.msra.mxu0 0
    %1410 = vmatprep.mubr.bf16.mxu0 0
    %1411 = vmatmul.mubr.bf16.gmra.mxu0 %v1373
    %v1412 = vpop.f32.mrf.mxu0
    %v1413 = vadd.f32 %v402, %v1412
    %v1414 = vpop.f32.mrf.mxu0
    %v1415 = vpop.f32.mrf.mxu0
    %v1416 = vadd.f32 %v403, %v1415
    %v1417 = vpop.f32.mrf.mxu0
    %1418 = vdwg.mxu0
    %1419 = vrot.lane.b32.xlu0 %v393, 32
    %v1420 = vpop.permute.xlu0 %1419
    %1421 = vrot.lane.b32.xlu0 %v395, 32
    %v1422 = vpop.permute.xlu0 %1421
    %v1424 = vsel %vm423, %v1420, 0
    %v1427 = vsel %vm423, %v1422, 0
    %1429 = vmatprep.subr.bf16.mxu0 0
    %1430 = vmatpush1.bf16.xpose.msra.mxu0 0
    %1431 = vmatprep.subr.bf16.mxu0 0
    %1432 = vmatpush1.bf16.xpose.msra.mxu0 0
    %1433 = vmatprep.subr.bf16.mxu0 0
    %1434 = vmatpush1.bf16.xpose.msra.mxu0 0
    %1435 = vmatprep.subr.bf16.mxu0 0
    %1436 = vmatpush1.bf16.xpose.msra.mxu0 0
    %1437 = vmatprep.subr.bf16.mxu0 0
    %1438 = vmatpush1.bf16.xpose.msra.mxu0 0
    %1439 = vmatprep.subr.bf16.mxu0 0
    %1440 = vmatpush1.bf16.xpose.msra.mxu0 0
    %1441 = vmatprep.subr.bf16.mxu0 0
    %1442 = vmatpush1.bf16.xpose.msra.mxu0 0
    %1443 = vmatprep.subr.bf16.mxu0 0
    %1444 = vmatpush1.bf16.xpose.msra.mxu0 %v1427
    %1445 = vmatprep.subr.bf16.mxu0 0
    %1446 = vmatpush2.bf16.xpose.msra.mxu0 0
    %1447 = vmatprep.subr.bf16.mxu0 0
    %1448 = vmatpush2.bf16.xpose.msra.mxu0 0
    %1449 = vmatprep.subr.bf16.mxu0 0
    %1450 = vmatpush2.bf16.xpose.msra.mxu0 0
    %1451 = vmatprep.subr.bf16.mxu0 0
    %1452 = vmatpush2.bf16.xpose.msra.mxu0 0
    %1453 = vmatprep.subr.bf16.mxu0 0
    %1454 = vmatpush2.bf16.xpose.msra.mxu0 0
    %1455 = vmatprep.subr.bf16.mxu0 0
    %1456 = vmatpush2.bf16.xpose.msra.mxu0 0
    %1457 = vmatprep.subr.bf16.mxu0 0
    %1458 = vmatpush2.bf16.xpose.msra.mxu0 0
    %1459 = vmatprep.subr.bf16.mxu0 0
    %1460 = vmatpush2.bf16.xpose.msra.mxu0 0
    %1461 = vmatprep.mubr.bf16.mxu0 0
    %1462 = vmatmul.mubr.bf16.gmra.mxu0 %v1424
    %v1463 = vpop.f32.mrf.mxu0
    %v1464 = vadd.f32 %v404, %v1463
    %v1465 = vpop.f32.mrf.mxu0
    %v1466 = vpop.f32.mrf.mxu0
    %v1467 = vadd.f32 %v405, %v1466
    %v1468 = vpop.f32.mrf.mxu0
    %1469 = vdwg.mxu0
    %v1470 = vsel %vm518, %v1413, -inf
    %1471 = vmax.xlane.f32.xlu0 %v1470
    %v1472 = vpop.xlane.xlu0 %1471
    %v1473 = vsel %vm518, %v1416, -inf
    %1474 = vmax.xlane.f32.xlu0 %v1473
    %v1475 = vpop.xlane.xlu0 %1474
    %v1476 = vsel %vm518, %v1464, -inf
    %1477 = vmax.xlane.f32.xlu0 %v1476
    %v1478 = vpop.xlane.xlu0 %1477
    %v1479 = vsel %vm518, %v1467, -inf
    %1480 = vmax.xlane.f32.xlu0 %v1479
    %v1481 = vpop.xlane.xlu0 %1480
    %v1482 = vsub.f32 %v1413, %v1472
    %v1483 = vsub.f32 %v1416, %v1475
    %v1484 = vsub.f32 %v1464, %v1478
    %v1485 = vsub.f32 %v1467, %v1481
    %v1486 = vmul.f32 %v1482, 1.442695
    %v1487 = vpow.pop %v1486
    %v1488 = vmul.f32 %v1483, 1.442695
    %v1489 = vpow.pop %v1488
    %v1490 = vmul.f32 %v1484, 1.442695
    %v1491 = vpow.pop %v1490
    %v1492 = vmul.f32 %v1485, 1.442695
    %v1493 = vpow.pop %v1492
    %v1494 = vsel %vm518, %v1487, 0.0
    %1495 = vadd.xlane.f32.xlu0 %v1494
    %v1496 = vpop.xlane.xlu0 %1495
    %v1497 = vsel %vm518, %v1489, 0.0
    %1498 = vadd.xlane.f32.xlu0 %v1497
    %v1499 = vpop.xlane.xlu0 %1498
    %v1500 = vsel %vm518, %v1491, 0.0
    %1501 = vadd.xlane.f32.xlu0 %v1500
    %v1502 = vpop.xlane.xlu0 %1501
    %v1503 = vsel %vm518, %v1493, 0.0
    %1504 = vadd.xlane.f32.xlu0 %v1503
    %v1505 = vpop.xlane.xlu0 %1504
    %v1506 = vrcp.pop %v1496
    %v1507 = vrcp.pop %v1499
    %v1508 = vrcp.pop %v1502
    %v1509 = vrcp.pop %v1505
    %v1510 = vmul.f32 %v1487, %v1506
    %v1511 = vmul.f32 %v1489, %v1507
    %v1512 = vmul.f32 %v1491, %v1508
    %v1513 = vmul.f32 %v1493, %v1509
    %v1514 = vpack.c.bf16 %v1511, %v1510
    %v1515 = vpack.c.bf16 %v1513, %v1512
    %1516 = vrot.lane.b32.xlu0 %v396, 32
    %v1517 = vpop.permute.xlu0 %1516
    %v1520 = vsel %vm518, %v1514, 0
    %1522 = vmatprep.subr.bf16.mxu0 0
    %1523 = vmatpush1.bf16.msra.mxu0 0
    %1524 = vmatprep.subr.bf16.mxu0 0
    %1525 = vmatpush1.bf16.msra.mxu0 0
    %1526 = vmatprep.subr.bf16.mxu0 0
    %1527 = vmatpush1.bf16.msra.mxu0 0
    %1528 = vmatprep.subr.bf16.mxu0 0
    %1529 = vmatpush1.bf16.msra.mxu0 0
    %1530 = vmatprep.subr.bf16.mxu0 0
    %1531 = vmatpush1.bf16.msra.mxu0 0
    %1532 = vmatprep.subr.bf16.mxu0 0
    %1533 = vmatpush1.bf16.msra.mxu0 0
    %1534 = vmatprep.subr.bf16.mxu0 0
    %1535 = vmatpush1.bf16.msra.mxu0 0
    %1536 = vmatprep.subr.bf16.mxu0 0
    %1537 = vmatpush1.bf16.msra.mxu0 %v1517
    %1538 = vmatprep.subr.bf16.mxu0 0
    %1539 = vmatpush2.bf16.msra.mxu0 0
    %1540 = vmatprep.subr.bf16.mxu0 0
    %1541 = vmatpush2.bf16.msra.mxu0 0
    %1542 = vmatprep.subr.bf16.mxu0 0
    %1543 = vmatpush2.bf16.msra.mxu0 0
    %1544 = vmatprep.subr.bf16.mxu0 0
    %1545 = vmatpush2.bf16.msra.mxu0 0
    %1546 = vmatprep.subr.bf16.mxu0 0
    %1547 = vmatpush2.bf16.msra.mxu0 0
    %1548 = vmatprep.subr.bf16.mxu0 0
    %1549 = vmatpush2.bf16.msra.mxu0 0
    %1550 = vmatprep.subr.bf16.mxu0 0
    %1551 = vmatpush2.bf16.msra.mxu0 0
    %1552 = vmatprep.subr.bf16.mxu0 0
    %1553 = vmatpush2.bf16.msra.mxu0 0
    %1554 = vmatprep.mubr.bf16.mxu0 0
    %1555 = vmatmul.mubr.bf16.gmra.mxu0 %v1520
    %v1556 = vpop.f32.mrf.mxu0
    %v1557 = vadd.f32 0.0, %v1556
    %v1558 = vpop.f32.mrf.mxu0
    %v1559 = vpop.f32.mrf.mxu0
    %v1560 = vadd.f32 0.0, %v1559
    %v1561 = vpop.f32.mrf.mxu0
    %1562 = vdwg.mxu0
    %1563 = vrot.lane.b32.xlu0 %v397, 32
    %v1564 = vpop.permute.xlu0 %1563
    %v1567 = vsel %vm518, %v1515, 0
    %1569 = vmatprep.subr.bf16.mxu0 0
    %1570 = vmatpush1.bf16.msra.mxu0 0
    %1571 = vmatprep.subr.bf16.mxu0 0
    %1572 = vmatpush1.bf16.msra.mxu0 0
    %1573 = vmatprep.subr.bf16.mxu0 0
    %1574 = vmatpush1.bf16.msra.mxu0 0
    %1575 = vmatprep.subr.bf16.mxu0 0
    %1576 = vmatpush1.bf16.msra.mxu0 0
    %1577 = vmatprep.subr.bf16.mxu0 0
    %1578 = vmatpush1.bf16.msra.mxu0 0
    %1579 = vmatprep.subr.bf16.mxu0 0
    %1580 = vmatpush1.bf16.msra.mxu0 0
    %1581 = vmatprep.subr.bf16.mxu0 0
    %1582 = vmatpush1.bf16.msra.mxu0 0
    %1583 = vmatprep.subr.bf16.mxu0 0
    %1584 = vmatpush1.bf16.msra.mxu0 %v1564
    %1585 = vmatprep.subr.bf16.mxu0 0
    %1586 = vmatpush2.bf16.msra.mxu0 0
    %1587 = vmatprep.subr.bf16.mxu0 0
    %1588 = vmatpush2.bf16.msra.mxu0 0
    %1589 = vmatprep.subr.bf16.mxu0 0
    %1590 = vmatpush2.bf16.msra.mxu0 0
    %1591 = vmatprep.subr.bf16.mxu0 0
    %1592 = vmatpush2.bf16.msra.mxu0 0
    %1593 = vmatprep.subr.bf16.mxu0 0
    %1594 = vmatpush2.bf16.msra.mxu0 0
    %1595 = vmatprep.subr.bf16.mxu0 0
    %1596 = vmatpush2.bf16.msra.mxu0 0
    %1597 = vmatprep.subr.bf16.mxu0 0
    %1598 = vmatpush2.bf16.msra.mxu0 0
    %1599 = vmatprep.subr.bf16.mxu0 0
    %1600 = vmatpush2.bf16.msra.mxu0 0
    %1601 = vmatprep.mubr.bf16.mxu0 0
    %1602 = vmatmul.mubr.bf16.gmra.mxu0 %v1567
    %v1603 = vpop.f32.mrf.mxu0
    %v1604 = vadd.f32 0.0, %v1603
    %v1605 = vpop.f32.mrf.mxu0
    %v1606 = vpop.f32.mrf.mxu0
    %v1607 = vadd.f32 0.0, %v1606
    %v1608 = vpop.f32.mrf.mxu0
    %1609 = vdwg.mxu0
    %v1610 = vpack.c.bf16 %v1560, %v1557
    %v1611 = vpack.c.bf16 %v1607, %v1604
    %v1616 = vunpack.c.l.b16 %v418
    %v1617 = vunpack.c.l.b16 %v419
    %v1618 = vunpack.c.l.b16 %v420
    %v1619 = vunpack.c.l.b16 %v421
    %v1620 = vpack.c.b16 %v1617, %v1616
    %v1621 = vpack.c.b16 %v1619, %v1618
    %v1625 = vsel %vm423, %v1610, 0
    %v1628 = vsel %vm423, %v1611, 0
    %1630 = vmatprep.subr.bf16.mxu0 0
    %1631 = vmatpush1.bf16.msra.mxu0 0
    %1632 = vmatprep.subr.bf16.mxu0 0
    %1633 = vmatpush1.bf16.msra.mxu0 0
    %1634 = vmatprep.subr.bf16.mxu0 0
    %1635 = vmatpush1.bf16.msra.mxu0 0
    %1636 = vmatprep.subr.bf16.mxu0 0
    %1637 = vmatpush1.bf16.msra.mxu0 0
    %1638 = vmatprep.subr.bf16.mxu0 0
    %1639 = vmatpush1.bf16.msra.mxu0 0
    %1640 = vmatprep.subr.bf16.mxu0 0
    %1641 = vmatpush1.bf16.msra.mxu0 0
    %1642 = vmatprep.subr.bf16.mxu0 0
    %1643 = vmatpush1.bf16.msra.mxu0 %v1621
    %1644 = vmatprep.subr.bf16.mxu0 0
    %1645 = vmatpush1.bf16.msra.mxu0 %v1620
    %1646 = vmatprep.subr.bf16.mxu0 0
    %1647 = vmatpush2.bf16.msra.mxu0 0
    %1648 = vmatprep.subr.bf16.mxu0 0
    %1649 = vmatpush2.bf16.msra.mxu0 0
    %1650 = vmatprep.subr.bf16.mxu0 0
    %1651 = vmatpush2.bf16.msra.mxu0 0
    %1652 = vmatprep.subr.bf16.mxu0 0
    %1653 = vmatpush2.bf16.msra.mxu0 0
    %1654 = vmatprep.subr.bf16.mxu0 0
    %1655 = vmatpush2.bf16.msra.mxu0 0
    %1656 = vmatprep.subr.bf16.mxu0 0
    %1657 = vmatpush2.bf16.msra.mxu0 0
    %1658 = vmatprep.subr.bf16.mxu0 0
    %1659 = vmatpush2.bf16.msra.mxu0 0
    %1660 = vmatprep.subr.bf16.mxu0 0
    %1661 = vmatpush2.bf16.msra.mxu0 0
    %1662 = vmatprep.mubr.bf16.mxu0 0
    %1663 = vmatmul.mubr.bf16.gmra.mxu0 %v1625
    %v1664 = vpop.f32.mrf.mxu0
    %v1665 = vadd.f32 0.0, %v1664
    %v1666 = vpop.f32.mrf.mxu0
    %v1667 = vpop.f32.mrf.mxu0
    %v1668 = vadd.f32 0.0, %v1667
    %v1669 = vpop.f32.mrf.mxu0
    %1670 = vmatprep.mubr.bf16.mxu0 0
    %1671 = vmatmul.mubr.bf16.gmra.mxu0 %v1628
    %v1672 = vpop.f32.mrf.mxu0
    %v1673 = vadd.f32 0.0, %v1672
    %v1674 = vpop.f32.mrf.mxu0
    %v1675 = vpop.f32.mrf.mxu0
    %v1676 = vadd.f32 0.0, %v1675
    %v1677 = vpop.f32.mrf.mxu0
    %1678 = vdwg.mxu0
    %v1679 = vadd.f32 %v1364, %v1665
    %v1680 = vadd.f32 %v1365, %v1668
    %v1681 = vadd.f32 %v1366, %v1673
    %v1682 = vadd.f32 %v1367, %v1676
    %v1683 = vadd.f32 %v1679, %v93
    %v1684 = vadd.f32 %v1680, %v94
    %v1685 = vadd.f32 %v1681, %v95
    %v1686 = vadd.f32 %v1682, %v96
    %v1687 = vld [vmem:[%s6] sm:$0x1]
    %v1688 = vld [vmem:[%s7] sm:$0x1]
    %1689 = vadd.xlane.f32.xlu0 %v1683
    %v1690 = vpop.xlane.xlu0 %1689
    %1691 = vadd.xlane.f32.xlu0 %v1684
    %v1692 = vpop.xlane.xlu0 %1691
    %1693 = vadd.xlane.f32.xlu0 %v1685
    %v1694 = vpop.xlane.xlu0 %1693
    %1695 = vadd.xlane.f32.xlu0 %v1686
    %v1696 = vpop.xlane.xlu0 %1695
    %v1697 = vrcp.pop 128.0
    %v1698 = vmul.f32 %v1690, %v1697
    %v1699 = vmul.f32 %v1692, %v1697
    %v1700 = vmul.f32 %v1694, %v1697
    %v1701 = vmul.f32 %v1696, %v1697
    %v1702 = vsub.f32 %v1683, %v1698
    %v1703 = vsub.f32 %v1684, %v1699
    %v1704 = vsub.f32 %v1685, %v1700
    %v1705 = vsub.f32 %v1686, %v1701
    %v1706 = vmul.f32 %v1702, %v1702
    %v1707 = vmul.f32 %v1703, %v1703
    %v1708 = vmul.f32 %v1704, %v1704
    %v1709 = vmul.f32 %v1705, %v1705
    %1710 = vadd.xlane.f32.xlu0 %v1706
    %v1711 = vpop.xlane.xlu0 %1710
    %1712 = vadd.xlane.f32.xlu0 %v1707
    %v1713 = vpop.xlane.xlu0 %1712
    %1714 = vadd.xlane.f32.xlu0 %v1708
    %v1715 = vpop.xlane.xlu0 %1714
    %1716 = vadd.xlane.f32.xlu0 %v1709
    %v1717 = vpop.xlane.xlu0 %1716
    %v1718 = vmul.f32 %v1711, %v1697
    %v1719 = vmul.f32 %v1713, %v1697
    %v1720 = vmul.f32 %v1715, %v1697
    %v1721 = vmul.f32 %v1717, %v1697
    %v1722 = vadd.f32 %v1718, 1e-05
    %v1723 = vadd.f32 %v1719, 1e-05
    %v1724 = vadd.f32 %v1720, 1e-05
    %v1725 = vadd.f32 %v1721, 1e-05
    %v1726 = vrsqrt.pop %v1722
    %v1727 = vrsqrt.pop %v1723
    %v1728 = vrsqrt.pop %v1724
    %v1729 = vrsqrt.pop %v1725
    %v1730 = vmul.f32 %v1702, %v1726
    %v1731 = vmul.f32 %v1703, %v1727
    %v1732 = vmul.f32 %v1704, %v1728
    %v1733 = vmul.f32 %v1705, %v1729
    %v1735 = vlaneseq
    %v1736 = vshrl.u32 %v1735, 7
    %v1737 = vsub.s32 0, %v1736
    %v1738 = vrot.slane %v1687, %v1737
    %v1740 = vmul.f32 %v1730, %v1738
    %v1741 = vmul.f32 %v1731, %v1738
    %v1742 = vmul.f32 %v1732, %v1738
    %v1743 = vmul.f32 %v1733, %v1738
    %v1745 = vlaneseq
    %v1746 = vshrl.u32 %v1745, 7
    %v1747 = vsub.s32 0, %v1746
    %v1748 = vrot.slane %v1688, %v1747
    %v1750 = vadd.f32 %v1740, %v1748
    %v1751 = vadd.f32 %v1741, %v1748
    %v1752 = vadd.f32 %v1742, %v1748
    %v1753 = vadd.f32 %v1743, %v1748
    %v1754 = vpack.c.bf16 %v1751, %v1750
    %v1755 = vpack.c.bf16 %v1753, %v1752
    %v1756 = vld [vmem:[#allocation4] sm:$0xff]
    %v1757 = vld [vmem:[#allocation4 + $0x8] sm:$0xff]
    %v1758 = vld [vmem:[#allocation4 + $0x10] sm:$0xff]
    %v1759 = vld [vmem:[#allocation4 + $0x18] sm:$0xff]
    %v1760 = vld [vmem:[#allocation4 + $0x20] sm:$0xff]
    %v1761 = vld [vmem:[#allocation4 + $0x28] sm:$0xff]
    %v1762 = vld [vmem:[#allocation4 + $0x30] sm:$0xff]
    %v1763 = vld [vmem:[#allocation4 + $0x38] sm:$0xff]
    %v1764 = vld [vmem:[#allocation4 + $0x40] sm:$0xff]
    %v1765 = vld [vmem:[#allocation4 + $0x48] sm:$0xff]
    %v1766 = vld [vmem:[#allocation4 + $0x50] sm:$0xff]
    %v1767 = vld [vmem:[#allocation4 + $0x58] sm:$0xff]
    %v1768 = vld [vmem:[#allocation4 + $0x60] sm:$0xff]
    %v1769 = vld [vmem:[#allocation4 + $0x68] sm:$0xff]
    %v1770 = vld [vmem:[#allocation4 + $0x70] sm:$0xff]
    %v1771 = vld [vmem:[#allocation4 + $0x78] sm:$0xff]
    %v1772 = vld [vmem:[%s9] sm:$0x3]
    %v1774 = vlaneseq
    %v1775 = vshrl.u32 %v1774, 7
    %v1776 = vsub.s32 0, %v1775
    %v1777 = vrot.slane %v1772, %v1776
    %v1778 = vlaneseq
    %v1779 = vshrl.u32 %v1778, 7
    %v1780 = vsub.s32 1, %v1779
    %v1781 = vrot.slane %v1772, %v1780
    %v1800 = vunpack.c.l.b16 %v1756
    %v1801 = vunpack.c.h.b16 %v1756
    %v1802 = vunpack.c.l.b16 %v1757
    %v1803 = vunpack.c.h.b16 %v1757
    %v1804 = vunpack.c.l.b16 %v1758
    %v1805 = vunpack.c.h.b16 %v1758
    %v1806 = vunpack.c.l.b16 %v1759
    %v1807 = vunpack.c.h.b16 %v1759
    %v1808 = vunpack.c.l.b16 %v1760
    %v1809 = vunpack.c.h.b16 %v1760
    %v1810 = vunpack.c.l.b16 %v1761
    %v1811 = vunpack.c.h.b16 %v1761
    %v1812 = vunpack.c.l.b16 %v1762
    %v1813 = vunpack.c.h.b16 %v1762
    %v1814 = vunpack.c.l.b16 %v1763
    %v1815 = vunpack.c.h.b16 %v1763
    %v1816 = vunpack.c.l.b16 %v1764
    %v1817 = vunpack.c.h.b16 %v1764
    %v1818 = vunpack.c.l.b16 %v1765
    %v1819 = vunpack.c.h.b16 %v1765
    %v1820 = vunpack.c.l.b16 %v1766
    %v1821 = vunpack.c.h.b16 %v1766
    %v1822 = vunpack.c.l.b16 %v1767
    %v1823 = vunpack.c.h.b16 %v1767
    %v1824 = vunpack.c.l.b16 %v1768
    %v1825 = vunpack.c.h.b16 %v1768
    %v1826 = vunpack.c.l.b16 %v1769
    %v1827 = vunpack.c.h.b16 %v1769
    %v1828 = vunpack.c.l.b16 %v1770
    %v1829 = vunpack.c.h.b16 %v1770
    %v1830 = vunpack.c.l.b16 %v1771
    %v1831 = vunpack.c.h.b16 %v1771
    %v1832 = vpack.c.b16 %v1802, %v1800
    %v1833 = vpack.c.b16 %v1803, %v1801
    %v1834 = vpack.c.b16 %v1806, %v1804
    %v1835 = vpack.c.b16 %v1807, %v1805
    %v1836 = vpack.c.b16 %v1810, %v1808
    %v1837 = vpack.c.b16 %v1811, %v1809
    %v1838 = vpack.c.b16 %v1814, %v1812
    %v1839 = vpack.c.b16 %v1815, %v1813
    %v1840 = vpack.c.b16 %v1818, %v1816
    %v1841 = vpack.c.b16 %v1819, %v1817
    %v1842 = vpack.c.b16 %v1822, %v1820
    %v1843 = vpack.c.b16 %v1823, %v1821
    %v1844 = vpack.c.b16 %v1826, %v1824
    %v1845 = vpack.c.b16 %v1827, %v1825
    %v1846 = vpack.c.b16 %v1830, %v1828
    %v1847 = vpack.c.b16 %v1831, %v1829
    %1864 = vmatprep.subr.bf16.mxu0 %v1847
    %1865 = vmatpush1.bf16.msra.mxu0 %v1846
    %1866 = vmatprep.subr.bf16.mxu0 %v1845
    %1867 = vmatpush1.bf16.msra.mxu0 %v1844
    %1868 = vmatprep.subr.bf16.mxu0 %v1843
    %1869 = vmatpush1.bf16.msra.mxu0 %v1842
    %1870 = vmatprep.subr.bf16.mxu0 %v1841
    %1871 = vmatpush1.bf16.msra.mxu0 %v1840
    %1872 = vmatprep.subr.bf16.mxu0 %v1839
    %1873 = vmatpush1.bf16.msra.mxu0 %v1838
    %1874 = vmatprep.subr.bf16.mxu0 %v1837
    %1875 = vmatpush1.bf16.msra.mxu0 %v1836
    %1876 = vmatprep.subr.bf16.mxu0 %v1835
    %1877 = vmatpush1.bf16.msra.mxu0 %v1834
    %1878 = vmatprep.subr.bf16.mxu0 %v1833
    %1879 = vmatpush1.bf16.msra.mxu0 %v1832
    %1880 = vmatprep.subr.bf16.mxu0 0
    %1881 = vmatpush2.bf16.msra.mxu0 0
    %1882 = vmatprep.subr.bf16.mxu0 0
    %1883 = vmatpush2.bf16.msra.mxu0 0
    %1884 = vmatprep.subr.bf16.mxu0 0
    %1885 = vmatpush2.bf16.msra.mxu0 0
    %1886 = vmatprep.subr.bf16.mxu0 0
    %1887 = vmatpush2.bf16.msra.mxu0 0
    %1888 = vmatprep.subr.bf16.mxu0 0
    %1889 = vmatpush2.bf16.msra.mxu0 0
    %1890 = vmatprep.subr.bf16.mxu0 0
    %1891 = vmatpush2.bf16.msra.mxu0 0
    %1892 = vmatprep.subr.bf16.mxu0 0
    %1893 = vmatpush2.bf16.msra.mxu0 0
    %1894 = vmatprep.subr.bf16.mxu0 0
    %1895 = vmatpush2.bf16.msra.mxu0 0
    %1896 = vmatprep.mubr.bf16.mxu0 0
    %1897 = vmatmul.mubr.bf16.gmra.mxu0 %v1754
    %v1898 = vpop.f32.mrf.mxu0
    %v1899 = vadd.f32 %v1777, %v1898
    %v1900 = vpop.f32.mrf.mxu0
    %v1901 = vadd.f32 %v1781, %v1900
    %v1902 = vpop.f32.mrf.mxu0
    %v1903 = vadd.f32 %v1777, %v1902
    %v1904 = vpop.f32.mrf.mxu0
    %v1905 = vadd.f32 %v1781, %v1904
    %1906 = vmatprep.mubr.bf16.mxu0 0
    %1907 = vmatmul.mubr.bf16.gmra.mxu0 %v1755
    %v1908 = vpop.f32.mrf.mxu0
    %v1909 = vadd.f32 %v1777, %v1908
    %v1910 = vpop.f32.mrf.mxu0
    %v1911 = vadd.f32 %v1781, %v1910
    %v1912 = vpop.f32.mrf.mxu0
    %v1913 = vadd.f32 %v1777, %v1912
    %v1914 = vpop.f32.mrf.mxu0
    %v1915 = vadd.f32 %v1781, %v1914
    %1916 = vdwg.mxu0
    %v1917 = vmax.f32 %v1899, 0.0
    %v1918 = vmax.f32 %v1901, 0.0
    %v1919 = vmax.f32 %v1903, 0.0
    %v1920 = vmax.f32 %v1905, 0.0
    %v1921 = vmax.f32 %v1909, 0.0
    %v1922 = vmax.f32 %v1911, 0.0
    %v1923 = vmax.f32 %v1913, 0.0
    %v1924 = vmax.f32 %v1915, 0.0
    %v1925 = vpack.c.bf16 %v1919, %v1917
    %v1926 = vpack.c.bf16 %v1920, %v1918
    %v1927 = vpack.c.bf16 %v1923, %v1921
    %v1928 = vpack.c.bf16 %v1924, %v1922
    %v1929 = vld [vmem:[#allocation6] sm:$0xf]
    %v1930 = vld [vmem:[#allocation6 + $0x4] sm:$0xf]
    %v1931 = vld [vmem:[#allocation6 + $0x8] sm:$0xf]
    %v1932 = vld [vmem:[#allocation6 + $0xc] sm:$0xf]
    %v1933 = vld [vmem:[#allocation6 + $0x10] sm:$0xf]
    %v1934 = vld [vmem:[#allocation6 + $0x14] sm:$0xf]
    %v1935 = vld [vmem:[#allocation6 + $0x18] sm:$0xf]
    %v1936 = vld [vmem:[#allocation6 + $0x1c] sm:$0xf]
    %v1937 = vld [vmem:[#allocation6 + $0x20] sm:$0xf]
    %v1938 = vld [vmem:[#allocation6 + $0x24] sm:$0xf]
    %v1939 = vld [vmem:[#allocation6 + $0x28] sm:$0xf]
    %v1940 = vld [vmem:[#allocation6 + $0x2c] sm:$0xf]
    %v1941 = vld [vmem:[#allocation6 + $0x30] sm:$0xf]
    %v1942 = vld [vmem:[#allocation6 + $0x34] sm:$0xf]
    %v1943 = vld [vmem:[#allocation6 + $0x38] sm:$0xf]
    %v1944 = vld [vmem:[#allocation6 + $0x3c] sm:$0xf]
    %v1945 = vld [vmem:[#allocation6 + $0x40] sm:$0xf]
    %v1946 = vld [vmem:[#allocation6 + $0x44] sm:$0xf]
    %v1947 = vld [vmem:[#allocation6 + $0x48] sm:$0xf]
    %v1948 = vld [vmem:[#allocation6 + $0x4c] sm:$0xf]
    %v1949 = vld [vmem:[#allocation6 + $0x50] sm:$0xf]
    %v1950 = vld [vmem:[#allocation6 + $0x54] sm:$0xf]
    %v1951 = vld [vmem:[#allocation6 + $0x58] sm:$0xf]
    %v1952 = vld [vmem:[#allocation6 + $0x5c] sm:$0xf]
    %v1953 = vld [vmem:[#allocation6 + $0x60] sm:$0xf]
    %v1954 = vld [vmem:[#allocation6 + $0x64] sm:$0xf]
    %v1955 = vld [vmem:[#allocation6 + $0x68] sm:$0xf]
    %v1956 = vld [vmem:[#allocation6 + $0x6c] sm:$0xf]
    %v1957 = vld [vmem:[#allocation6 + $0x70] sm:$0xf]
    %v1958 = vld [vmem:[#allocation6 + $0x74] sm:$0xf]
    %v1959 = vld [vmem:[#allocation6 + $0x78] sm:$0xf]
    %v1960 = vld [vmem:[#allocation6 + $0x7c] sm:$0xf]
    %v1961 = vld [vmem:[%s11] sm:$0x1]
    %v1963 = vlaneseq
    %v1964 = vshrl.u32 %v1963, 7
    %v1965 = vsub.s32 0, %v1964
    %v1966 = vrot.slane %v1961, %v1965
    %v2000 = vunpack.c.l.b16 %v1929
    %v2001 = vunpack.c.l.b16 %v1930
    %v2002 = vunpack.c.l.b16 %v1931
    %v2003 = vunpack.c.l.b16 %v1932
    %v2004 = vunpack.c.l.b16 %v1933
    %v2005 = vunpack.c.l.b16 %v1934
    %v2006 = vunpack.c.l.b16 %v1935
    %v2007 = vunpack.c.l.b16 %v1936
    %v2008 = vunpack.c.l.b16 %v1937
    %v2009 = vunpack.c.l.b16 %v1938
    %v2010 = vunpack.c.l.b16 %v1939
    %v2011 = vunpack.c.l.b16 %v1940
    %v2012 = vunpack.c.l.b16 %v1941
    %v2013 = vunpack.c.l.b16 %v1942
    %v2014 = vunpack.c.l.b16 %v1943
    %v2015 = vunpack.c.l.b16 %v1944
    %v2016 = vunpack.c.l.b16 %v1945
    %v2017 = vunpack.c.l.b16 %v1946
    %v2018 = vunpack.c.l.b16 %v1947
    %v2019 = vunpack.c.l.b16 %v1948
    %v2020 = vunpack.c.l.b16 %v1949
    %v2021 = vunpack.c.l.b16 %v1950
    %v2022 = vunpack.c.l.b16 %v1951
    %v2023 = vunpack.c.l.b16 %v1952
    %v2024 = vunpack.c.l.b16 %v1953
    %v2025 = vunpack.c.l.b16 %v1954
    %v2026 = vunpack.c.l.b16 %v1955
    %v2027 = vunpack.c.l.b16 %v1956
    %v2028 = vunpack.c.l.b16 %v1957
    %v2029 = vunpack.c.l.b16 %v1958
    %v2030 = vunpack.c.l.b16 %v1959
    %v2031 = vunpack.c.l.b16 %v1960
    %v2032 = vpack.c.b16 %v2001, %v2000
    %v2033 = vpack.c.b16 %v2003, %v2002
    %v2034 = vpack.c.b16 %v2005, %v2004
    %v2035 = vpack.c.b16 %v2007, %v2006
    %v2036 = vpack.c.b16 %v2009, %v2008
    %v2037 = vpack.c.b16 %v2011, %v2010
    %v2038 = vpack.c.b16 %v2013, %v2012
    %v2039 = vpack.c.b16 %v2015, %v2014
    %v2040 = vpack.c.b16 %v2017, %v2016
    %v2041 = vpack.c.b16 %v2019, %v2018
    %v2042 = vpack.c.b16 %v2021, %v2020
    %v2043 = vpack.c.b16 %v2023, %v2022
    %v2044 = vpack.c.b16 %v2025, %v2024
    %v2045 = vpack.c.b16 %v2027, %v2026
    %v2046 = vpack.c.b16 %v2029, %v2028
    %v2047 = vpack.c.b16 %v2031, %v2030
    %2064 = vmatprep.subr.bf16.mxu0 0
    %2065 = vmatpush1.bf16.msra.mxu0 %v2039
    %2066 = vmatprep.subr.bf16.mxu0 0
    %2067 = vmatpush1.bf16.msra.mxu0 %v2038
    %2068 = vmatprep.subr.bf16.mxu0 0
    %2069 = vmatpush1.bf16.msra.mxu0 %v2037
    %2070 = vmatprep.subr.bf16.mxu0 0
    %2071 = vmatpush1.bf16.msra.mxu0 %v2036
    %2072 = vmatprep.subr.bf16.mxu0 0
    %2073 = vmatpush1.bf16.msra.mxu0 %v2035
    %2074 = vmatprep.subr.bf16.mxu0 0
    %2075 = vmatpush1.bf16.msra.mxu0 %v2034
    %2076 = vmatprep.subr.bf16.mxu0 0
    %2077 = vmatpush1.bf16.msra.mxu0 %v2033
    %2078 = vmatprep.subr.bf16.mxu0 0
    %2079 = vmatpush1.bf16.msra.mxu0 %v2032
    %2080 = vmatprep.subr.bf16.mxu0 0
    %2081 = vmatpush2.bf16.msra.mxu0 %v2047
    %2082 = vmatprep.subr.bf16.mxu0 0
    %2083 = vmatpush2.bf16.msra.mxu0 %v2046
    %2084 = vmatprep.subr.bf16.mxu0 0
    %2085 = vmatpush2.bf16.msra.mxu0 %v2045
    %2086 = vmatprep.subr.bf16.mxu0 0
    %2087 = vmatpush2.bf16.msra.mxu0 %v2044
    %2088 = vmatprep.subr.bf16.mxu0 0
    %2089 = vmatpush2.bf16.msra.mxu0 %v2043
    %2090 = vmatprep.subr.bf16.mxu0 0
    %2091 = vmatpush2.bf16.msra.mxu0 %v2042
    %2092 = vmatprep.subr.bf16.mxu0 0
    %2093 = vmatpush2.bf16.msra.mxu0 %v2041
    %2094 = vmatprep.subr.bf16.mxu0 0
    %2095 = vmatpush2.bf16.msra.mxu0 %v2040
    %2096 = vmatprep.mubr.bf16.mxu0 %v1926
    %2097 = vmatmul.mubr.bf16.gmra.mxu0 %v1925
    %v2098 = vpop.f32.mrf.mxu0
    %v2099 = vadd.f32 %v1966, %v2098
    %v2100 = vpop.f32.mrf.mxu0
    %v2101 = vpop.f32.mrf.mxu0
    %v2102 = vadd.f32 %v1966, %v2101
    %v2103 = vpop.f32.mrf.mxu0
    %2104 = vmatprep.mubr.bf16.mxu0 %v1928
    %2105 = vmatmul.mubr.bf16.gmra.mxu0 %v1927
    %v2106 = vpop.f32.mrf.mxu0
    %v2107 = vadd.f32 %v1966, %v2106
    %v2108 = vpop.f32.mrf.mxu0
    %v2109 = vpop.f32.mrf.mxu0
    %v2110 = vadd.f32 %v1966, %v2109
    %v2111 = vpop.f32.mrf.mxu0
    %2112 = vdwg.mxu0
    %v2113 = vadd.f32 %v2099, %v1750
    %v2114 = vadd.f32 %v2102, %v1751
    %v2115 = vadd.f32 %v2107, %v1752
    %v2116 = vadd.f32 %v2110, %v1753
    %v2117 = vld [vmem:[%s12] sm:$0x1]
    %v2118 = vld [vmem:[%s13] sm:$0x1]
    %2119 = vadd.xlane.f32.xlu0 %v2113
    %v2120 = vpop.xlane.xlu0 %2119
    %2121 = vadd.xlane.f32.xlu0 %v2114
    %v2122 = vpop.xlane.xlu0 %2121
    %2123 = vadd.xlane.f32.xlu0 %v2115
    %v2124 = vpop.xlane.xlu0 %2123
    %2125 = vadd.xlane.f32.xlu0 %v2116
    %v2126 = vpop.xlane.xlu0 %2125
    %v2127 = vmul.f32 %v2120, %v1697
    %v2128 = vmul.f32 %v2122, %v1697
    %v2129 = vmul.f32 %v2124, %v1697
    %v2130 = vmul.f32 %v2126, %v1697
    %v2131 = vsub.f32 %v2113, %v2127
    %v2132 = vsub.f32 %v2114, %v2128
    %v2133 = vsub.f32 %v2115, %v2129
    %v2134 = vsub.f32 %v2116, %v2130
    %v2135 = vmul.f32 %v2131, %v2131
    %v2136 = vmul.f32 %v2132, %v2132
    %v2137 = vmul.f32 %v2133, %v2133
    %v2138 = vmul.f32 %v2134, %v2134
    %2139 = vadd.xlane.f32.xlu0 %v2135
    %v2140 = vpop.xlane.xlu0 %2139
    %2141 = vadd.xlane.f32.xlu0 %v2136
    %v2142 = vpop.xlane.xlu0 %2141
    %2143 = vadd.xlane.f32.xlu0 %v2137
    %v2144 = vpop.xlane.xlu0 %2143
    %2145 = vadd.xlane.f32.xlu0 %v2138
    %v2146 = vpop.xlane.xlu0 %2145
    %v2147 = vmul.f32 %v2140, %v1697
    %v2148 = vmul.f32 %v2142, %v1697
    %v2149 = vmul.f32 %v2144, %v1697
    %v2150 = vmul.f32 %v2146, %v1697
    %v2151 = vadd.f32 %v2147, 1e-05
    %v2152 = vadd.f32 %v2148, 1e-05
    %v2153 = vadd.f32 %v2149, 1e-05
    %v2154 = vadd.f32 %v2150, 1e-05
    %v2155 = vrsqrt.pop %v2151
    %v2156 = vrsqrt.pop %v2152
    %v2157 = vrsqrt.pop %v2153
    %v2158 = vrsqrt.pop %v2154
    %v2159 = vmul.f32 %v2131, %v2155
    %v2160 = vmul.f32 %v2132, %v2156
    %v2161 = vmul.f32 %v2133, %v2157
    %v2162 = vmul.f32 %v2134, %v2158
    %v2164 = vlaneseq
    %v2165 = vshrl.u32 %v2164, 7
    %v2166 = vsub.s32 0, %v2165
    %v2167 = vrot.slane %v2117, %v2166
    %v2169 = vmul.f32 %v2159, %v2167
    %v2170 = vmul.f32 %v2160, %v2167
    %v2171 = vmul.f32 %v2161, %v2167
    %v2172 = vmul.f32 %v2162, %v2167
    %v2174 = vlaneseq
    %v2175 = vshrl.u32 %v2174, 7
    %v2176 = vsub.s32 0, %v2175
    %v2177 = vrot.slane %v2118, %v2176
    %v2179 = vadd.f32 %v2169, %v2177
    %v2180 = vadd.f32 %v2170, %v2177
    %v2181 = vadd.f32 %v2171, %v2177
    %v2182 = vadd.f32 %v2172, %v2177
    %v2183 = vpack.c.bf16 %v2180, %v2179
    %v2184 = vpack.c.bf16 %v2182, %v2181
    %v2187 = vunpack.c.l.b16 %v2183
    %v2188 = vunpack.c.h.b16 %v2183
    %v2189 = vunpack.c.l.b16 %v2184
    %v2190 = vunpack.c.h.b16 %v2184
    %v2191 = vpack.c.b16 %v2187, %v2187
    %v2192 = vpack.c.b16 %v2188, %v2188
    %v2193 = vpack.c.b16 %v2189, %v2189
    %v2194 = vpack.c.b16 %v2190, %v2190
    %2199 = vst [vmem:[%s14] sm:$0xf] %v2191
    %2200 = vst [vmem:[%s14 + $0x4] sm:$0xf] %v2192
    %2201 = vst [vmem:[%s14 + $0x8] sm:$0xf] %v2193
    %2202 = vst [vmem:[%s14 + $0xc] sm:$0xf] %v2194
    // Predicated region
    $region70: #{custom_attention_transformer_block.7} parent=1 // pred_check
      _
    $region71: #{custom_attention_transformer_block.7} parent=1 // pred_check_branch
      %2204 = sbr.rel (0) target = $region73
    $region72: #{custom_attention_transformer_block.7} parent=1 // pred_region
      _
    $region73: #{custom_attention_transformer_block.7} parent=1 // pred_fallthru
      _
    // Predicated region
    $region74: #{custom_attention_transformer_block.7} parent=1 // pred_check
      _
    $region75: #{custom_attention_transformer_block.7} parent=1 // pred_check_branch
      %2206 = sbr.rel (0) target = $region77
    $region76: #{custom_attention_transformer_block.7} parent=1 // pred_region
      _
    $region77: #{custom_attention_transformer_block.7} parent=1 // pred_fallthru
      _
    %2207 = vsyncpa [#allocation3], 1
    %2208 = vsyncpa [#allocation5], 1

// kernel: custom_attention_transformer_block.9
$region0: #{custom_attention_transformer_block.9}
  #allocation0 [shape = 'u32[]', space=smem, size = 0x4, offset = 0x4, fixed_abs, tag = 'smem constant byte address 0x4 - core index']
  #allocation1 [shape = 'u32[144,128]{1,0:T(1,128)}', space=vmem, size = 0x12000, scoped, tag = 'internal scratch']
  %s0 = inlined_call_operand.vmem [shape: bf16[32,128], index: 0, kind: input, shape index: {}]
  %s1 = inlined_call_operand.vmem [shape: bf16[128,128], index: 1, kind: input, shape index: {}]
  %s2 = inlined_call_operand.vmem [shape: f32[1,128], index: 2, kind: input, shape index: {}]
  %s3 = inlined_call_operand.vmem [shape: bf16[128,128], index: 3, kind: input, shape index: {}]
  %s4 = inlined_call_operand.vmem [shape: f32[1,128], index: 4, kind: input, shape index: {}]
  %s5 = inlined_call_operand.vmem [shape: f32[32,128], index: 5, kind: output, shape index: {}]
  %s6 = sld [smem:[#allocation0]]
  $region30: #{custom_attention_transformer_block.9} parent=0
    _
  %s8 = ssub.s32 1, %s6
  %s9 = scalar_select 0, %s8, %s6
  // Predicated region
  $region2: #{custom_attention_transformer_block.9} parent=0 // pred_check
    _
  $region3: #{custom_attention_transformer_block.9} parent=0 // pred_check_branch
    %11 = sbr.rel (0) target = $region5
  $region4: #{custom_attention_transformer_block.9} parent=0 // pred_region
    _
  $region5: #{custom_attention_transformer_block.9} parent=0 // pred_fallthru
    _
  // Predicated region
  $region6: #{custom_attention_transformer_block.9} parent=0 // pred_check
    _
  $region7: #{custom_attention_transformer_block.9} parent=0 // pred_check_branch
    %13 = sbr.rel (0) target = $region9
  $region8: #{custom_attention_transformer_block.9} parent=0 // pred_region
    _
  $region9: #{custom_attention_transformer_block.9} parent=0 // pred_fallthru
    _
  // Predicated region
  $region10: #{custom_attention_transformer_block.9} parent=0 // pred_check
    _
  $region11: #{custom_attention_transformer_block.9} parent=0 // pred_check_branch
    %15 = sbr.rel (0) target = $region13
  $region12: #{custom_attention_transformer_block.9} parent=0 // pred_region
    _
  $region13: #{custom_attention_transformer_block.9} parent=0 // pred_fallthru
    _
  // Predicated region
  $region14: #{custom_attention_transformer_block.9} parent=0 // pred_check
    _
  $region15: #{custom_attention_transformer_block.9} parent=0 // pred_check_branch
    %17 = sbr.rel (0) target = $region17
  $region16: #{custom_attention_transformer_block.9} parent=0 // pred_region
    _
  $region17: #{custom_attention_transformer_block.9} parent=0 // pred_fallthru
    _
  // Predicated region
  $region18: #{custom_attention_transformer_block.9} parent=0 // pred_check
    _
  $region19: #{custom_attention_transformer_block.9} parent=0 // pred_check_branch
    %19 = sbr.rel (0) target = $region21
  $region20: #{custom_attention_transformer_block.9} parent=0 // pred_region
    _
  $region21: #{custom_attention_transformer_block.9} parent=0 // pred_fallthru
    _
  %v21 = vld [vmem:[%s0] sm:$0xf]
  %v22 = vld [vmem:[%s0 + $0x4] sm:$0xf]
  %v23 = vld [vmem:[%s0 + $0x8] sm:$0xf]
  %v24 = vld [vmem:[%s0 + $0xc] sm:$0xf]
  %v25 = vld [vmem:[%s1] sm:$0xf]
  %v26 = vld [vmem:[%s1 + $0x4] sm:$0xf]
  %v27 = vld [vmem:[%s1 + $0x8] sm:$0xf]
  %v28 = vld [vmem:[%s1 + $0xc] sm:$0xf]
  %v29 = vld [vmem:[%s1 + $0x10] sm:$0xf]
  %v30 = vld [vmem:[%s1 + $0x14] sm:$0xf]
  %v31 = vld [vmem:[%s1 + $0x18] sm:$0xf]
  %v32 = vld [vmem:[%s1 + $0x1c] sm:$0xf]
  %v33 = vld [vmem:[%s1 + $0x20] sm:$0xf]
  %v34 = vld [vmem:[%s1 + $0x24] sm:$0xf]
  %v35 = vld [vmem:[%s1 + $0x28] sm:$0xf]
  %v36 = vld [vmem:[%s1 + $0x2c] sm:$0xf]
  %v37 = vld [vmem:[%s1 + $0x30] sm:$0xf]
  %v38 = vld [vmem:[%s1 + $0x34] sm:$0xf]
  %v39 = vld [vmem:[%s1 + $0x38] sm:$0xf]
  %v40 = vld [vmem:[%s1 + $0x3c] sm:$0xf]
  %v41 = vld [vmem:[%s2] sm:$0x1]
  %v43 = vlaneseq
  %v44 = vshrl.u32 %v43, 7
  %v45 = vsub.s32 0, %v44
  %v46 = vrot.slane %v41, %v45
  %v52 = vunpack.c.l.b16 %v21
  %v53 = vunpack.c.l.b16 %v22
  %v54 = vunpack.c.l.b16 %v23
  %v55 = vunpack.c.l.b16 %v24
  %v56 = vpack.c.b16 %v53, %v52
  %v57 = vpack.c.b16 %v55, %v54
  %v76 = vunpack.c.l.b16 %v25
  %v77 = vunpack.c.l.b16 %v26
  %v78 = vunpack.c.l.b16 %v27
  %v79 = vunpack.c.l.b16 %v28
  %v80 = vunpack.c.l.b16 %v29
  %v81 = vunpack.c.l.b16 %v30
  %v82 = vunpack.c.l.b16 %v31
  %v83 = vunpack.c.l.b16 %v32
  %v84 = vunpack.c.l.b16 %v33
  %v85 = vunpack.c.l.b16 %v34
  %v86 = vunpack.c.l.b16 %v35
  %v87 = vunpack.c.l.b16 %v36
  %v88 = vunpack.c.l.b16 %v37
  %v89 = vunpack.c.l.b16 %v38
  %v90 = vunpack.c.l.b16 %v39
  %v91 = vunpack.c.l.b16 %v40
  %v92 = vpack.c.b16 %v77, %v76
  %v93 = vpack.c.b16 %v79, %v78
  %v94 = vpack.c.b16 %v81, %v80
  %v95 = vpack.c.b16 %v83, %v82
  %v96 = vpack.c.b16 %v85, %v84
  %v97 = vpack.c.b16 %v87, %v86
  %v98 = vpack.c.b16 %v89, %v88
  %v99 = vpack.c.b16 %v91, %v90
  %108 = vmatprep.subr.bf16.mxu0 0
  %109 = vmatpush1.bf16.msra.mxu0 %v99
  %110 = vmatprep.subr.bf16.mxu0 0
  %111 = vmatpush1.bf16.msra.mxu0 %v98
  %112 = vmatprep.subr.bf16.mxu0 0
  %113 = vmatpush1.bf16.msra.mxu0 %v97
  %114 = vmatprep.subr.bf16.mxu0 0
  %115 = vmatpush1.bf16.msra.mxu0 %v96
  %116 = vmatprep.subr.bf16.mxu0 0
  %117 = vmatpush1.bf16.msra.mxu0 %v95
  %118 = vmatprep.subr.bf16.mxu0 0
  %119 = vmatpush1.bf16.msra.mxu0 %v94
  %120 = vmatprep.subr.bf16.mxu0 0
  %121 = vmatpush1.bf16.msra.mxu0 %v93
  %122 = vmatprep.subr.bf16.mxu0 0
  %123 = vmatpush1.bf16.msra.mxu0 %v92
  %124 = vmatprep.subr.bf16.mxu0 0
  %125 = vmatpush2.bf16.msra.mxu0 0
  %126 = vmatprep.subr.bf16.mxu0 0
  %127 = vmatpush2.bf16.msra.mxu0 0
  %128 = vmatprep.subr.bf16.mxu0 0
  %129 = vmatpush2.bf16.msra.mxu0 0
  %130 = vmatprep.subr.bf16.mxu0 0
  %131 = vmatpush2.bf16.msra.mxu0 0
  %132 = vmatprep.subr.bf16.mxu0 0
  %133 = vmatpush2.bf16.msra.mxu0 0
  %134 = vmatprep.subr.bf16.mxu0 0
  %135 = vmatpush2.bf16.msra.mxu0 0
  %136 = vmatprep.subr.bf16.mxu0 0
  %137 = vmatpush2.bf16.msra.mxu0 0
  %138 = vmatprep.subr.bf16.mxu0 0
  %139 = vmatpush2.bf16.msra.mxu0 0
  %140 = vmatprep.mubr.bf16.mxu0 0
  %141 = vmatmul.mubr.bf16.gmra.mxu0 %v56
  %v142 = vpop.f32.mrf.mxu0
  %v143 = vadd.f32 %v46, %v142
  %v144 = vpop.f32.mrf.mxu0
  %v145 = vpop.f32.mrf.mxu0
  %v146 = vadd.f32 %v46, %v145
  %v147 = vpop.f32.mrf.mxu0
  %148 = vmatprep.mubr.bf16.mxu0 0
  %149 = vmatmul.mubr.bf16.gmra.mxu0 %v57
  %v150 = vpop.f32.mrf.mxu0
  %v151 = vadd.f32 %v46, %v150
  %v152 = vpop.f32.mrf.mxu0
  %v153 = vpop.f32.mrf.mxu0
  %v154 = vadd.f32 %v46, %v153
  %v155 = vpop.f32.mrf.mxu0
  %156 = vdwg.mxu0
  %v157 = vmax.f32 %v143, 0.0
  %v158 = vmax.f32 %v146, 0.0
  %v159 = vmax.f32 %v151, 0.0
  %v160 = vmax.f32 %v154, 0.0
  %v161 = vld [vmem:[%s3] sm:$0xf]
  %v162 = vld [vmem:[%s3 + $0x4] sm:$0xf]
  %v163 = vld [vmem:[%s3 + $0x8] sm:$0xf]
  %v164 = vld [vmem:[%s3 + $0xc] sm:$0xf]
  %v165 = vld [vmem:[%s3 + $0x10] sm:$0xf]
  %v166 = vld [vmem:[%s3 + $0x14] sm:$0xf]
  %v167 = vld [vmem:[%s3 + $0x18] sm:$0xf]
  %v168 = vld [vmem:[%s3 + $0x1c] sm:$0xf]
  %v169 = vld [vmem:[%s3 + $0x20] sm:$0xf]
  %v170 = vld [vmem:[%s3 + $0x24] sm:$0xf]
  %v171 = vld [vmem:[%s3 + $0x28] sm:$0xf]
  %v172 = vld [vmem:[%s3 + $0x2c] sm:$0xf]
  %v173 = vld [vmem:[%s3 + $0x30] sm:$0xf]
  %v174 = vld [vmem:[%s3 + $0x34] sm:$0xf]
  %v175 = vld [vmem:[%s3 + $0x38] sm:$0xf]
  %v176 = vld [vmem:[%s3 + $0x3c] sm:$0xf]
  %v177 = vld [vmem:[%s4] sm:$0x1]
  %v178 = vpack.c.bf16 %v158, %v157
  %v179 = vpack.c.bf16 %v160, %v159
  %v181 = vlaneseq
  %v182 = vshrl.u32 %v181, 7
  %v183 = vsub.s32 0, %v182
  %v184 = vrot.slane %v177, %v183
  %v202 = vunpack.c.l.b16 %v161
  %v203 = vunpack.c.l.b16 %v162
  %v204 = vunpack.c.l.b16 %v163
  %v205 = vunpack.c.l.b16 %v164
  %v206 = vunpack.c.l.b16 %v165
  %v207 = vunpack.c.l.b16 %v166
  %v208 = vunpack.c.l.b16 %v167
  %v209 = vunpack.c.l.b16 %v168
  %v210 = vunpack.c.l.b16 %v169
  %v211 = vunpack.c.l.b16 %v170
  %v212 = vunpack.c.l.b16 %v171
  %v213 = vunpack.c.l.b16 %v172
  %v214 = vunpack.c.l.b16 %v173
  %v215 = vunpack.c.l.b16 %v174
  %v216 = vunpack.c.l.b16 %v175
  %v217 = vunpack.c.l.b16 %v176
  %v218 = vpack.c.b16 %v203, %v202
  %v219 = vpack.c.b16 %v205, %v204
  %v220 = vpack.c.b16 %v207, %v206
  %v221 = vpack.c.b16 %v209, %v208
  %v222 = vpack.c.b16 %v211, %v210
  %v223 = vpack.c.b16 %v213, %v212
  %v224 = vpack.c.b16 %v215, %v214
  %v225 = vpack.c.b16 %v217, %v216
  %234 = vmatprep.subr.bf16.mxu0 0
  %235 = vmatpush1.bf16.msra.mxu0 %v225
  %236 = vmatprep.subr.bf16.mxu0 0
  %237 = vmatpush1.bf16.msra.mxu0 %v224
  %238 = vmatprep.subr.bf16.mxu0 0
  %239 = vmatpush1.bf16.msra.mxu0 %v223
  %240 = vmatprep.subr.bf16.mxu0 0
  %241 = vmatpush1.bf16.msra.mxu0 %v222
  %242 = vmatprep.subr.bf16.mxu0 0
  %243 = vmatpush1.bf16.msra.mxu0 %v221
  %244 = vmatprep.subr.bf16.mxu0 0
  %245 = vmatpush1.bf16.msra.mxu0 %v220
  %246 = vmatprep.subr.bf16.mxu0 0
  %247 = vmatpush1.bf16.msra.mxu0 %v219
  %248 = vmatprep.subr.bf16.mxu0 0
  %249 = vmatpush1.bf16.msra.mxu0 %v218
  %250 = vmatprep.subr.bf16.mxu0 0
  %251 = vmatpush2.bf16.msra.mxu0 0
  %252 = vmatprep.subr.bf16.mxu0 0
  %253 = vmatpush2.bf16.msra.mxu0 0
  %254 = vmatprep.subr.bf16.mxu0 0
  %255 = vmatpush2.bf16.msra.mxu0 0
  %256 = vmatprep.subr.bf16.mxu0 0
  %257 = vmatpush2.bf16.msra.mxu0 0
  %258 = vmatprep.subr.bf16.mxu0 0
  %259 = vmatpush2.bf16.msra.mxu0 0
  %260 = vmatprep.subr.bf16.mxu0 0
  %261 = vmatpush2.bf16.msra.mxu0 0
  %262 = vmatprep.subr.bf16.mxu0 0
  %263 = vmatpush2.bf16.msra.mxu0 0
  %264 = vmatprep.subr.bf16.mxu0 0
  %265 = vmatpush2.bf16.msra.mxu0 0
  %266 = vmatprep.mubr.bf16.mxu0 0
  %267 = vmatmul.mubr.bf16.gmra.mxu0 %v178
  %v268 = vpop.f32.mrf.mxu0
  %v269 = vadd.f32 %v184, %v268
  %v270 = vpop.f32.mrf.mxu0
  %v271 = vpop.f32.mrf.mxu0
  %v272 = vadd.f32 %v184, %v271
  %v273 = vpop.f32.mrf.mxu0
  %274 = vmatprep.mubr.bf16.mxu0 0
  %275 = vmatmul.mubr.bf16.gmra.mxu0 %v179
  %v276 = vpop.f32.mrf.mxu0
  %v277 = vadd.f32 %v184, %v276
  %v278 = vpop.f32.mrf.mxu0
  %v279 = vpop.f32.mrf.mxu0
  %v280 = vadd.f32 %v184, %v279
  %v281 = vpop.f32.mrf.mxu0
  %282 = vdwg.mxu0
  %283 = vst [vmem:[%s5] sm:$0xff] %v269
  %284 = vst [vmem:[%s5 + $0x8] sm:$0xff] %v272
  %285 = vst [vmem:[%s5 + $0x10] sm:$0xff] %v277
  %286 = vst [vmem:[%s5 + $0x18] sm:$0xff] %v280
  // Predicated region
  $region22: #{custom_attention_transformer_block.9} parent=0 // pred_check
    _
  $region23: #{custom_attention_transformer_block.9} parent=0 // pred_check_branch
    %288 = sbr.rel (0) target = $region25
  $region24: #{custom_attention_transformer_block.9} parent=0 // pred_region
    _
  $region25: #{custom_attention_transformer_block.9} parent=0 // pred_fallthru
    _
  // Predicated region
  $region26: #{custom_attention_transformer_block.9} parent=0 // pred_check
    _
  $region27: #{custom_attention_transformer_block.9} parent=0 // pred_check_branch
    %290 = sbr.rel (0) target = $region29
  $region28: #{custom_attention_transformer_block.9} parent=0 // pred_region
    _
  $region29: #{custom_attention_transformer_block.9} parent=0 // pred_fallthru
    _

</llo_original>
